<compile_context>
chip_gen: v6e
topology: v6e:2x2x1
jax: 0.10.0
libtpu: 0.0.40
codegen_flags: <defaults>
</compile_context>

<pallas_src>
import math

import jax
import jax.numpy as jnp
from jax import lax
from jax.experimental import pallas as pl
from jax.experimental.pallas import tpu as pltpu

_POS_ALPHA = 0.0005
_CHOL_JITTER = 1e-6          # relative diagonal jitter for f32 Cholesky


def _round_up(x, m):
    return ((x + m - 1) // m) * m


def _tpu_config():
    """Generation-aware knobs.  Unknown devices get the conservative (v7x-safe)
    settings, so a detection miss only costs a little performance."""
    kind = ""
    try:
        kind = jax.devices()[0].device_kind.lower()
    except Exception:
        pass
    dual_core = any(t in kind for t in ("v7", "7x", "v4", "v5p"))
    big_vmem = any(t in kind for t in ("v5e", "v5 lite", "v5lite", "v6", "trillium"))
    vmem_limit = (64 << 20) if big_vmem else (32 << 20)
    gram_buf_budget = (8 << 20) if big_vmem else (4 << 20)
    ga_target = 128 if ("v5" in kind or not kind) else 256
    return dual_core, vmem_limit, gram_buf_budget, ga_target


# ----------------------------------------------------------------------------
# Pallas kernel 1: class-balanced BCE, tiled + accumulated reduction.
#   grid = (nshards, steps); shard axis "parallel" (only >1 on dual-TC chips),
#   step axis "arbitrary" with a (1, 8, 128) vector partial sum held resident
#   in the output block.  Ragged tail handled by clamping the block index in
#   the index_map and masking by logical flat index (gated with pl.when so
#   interior tiles skip it).
# ----------------------------------------------------------------------------
def bce_kernel(cw_ref, n_ref, m_ref, p_ref, out_ref):
    s = pl.program_id(0)
    i = pl.program_id(1)
    nsteps = pl.num_programs(1)

    @pl.when(i == 0)
    def _():
        out_ref[...] = jnp.zeros_like(out_ref)

    w_neg = cw_ref[0]
    w_pos = cw_ref[1]
    n_valid = n_ref[0]

    m = m_ref[...]                                   # (tr, 128)
    p = jnp.clip(p_ref[...], 1e-7, 1.0 - 1e-7)       # clip BEFORE log (tail safety)
    elem = -(w_pos * m * jnp.log(p) + w_neg * (1.0 - m) * jnp.log(1.0 - p))

    tr, lanes = elem.shape
    row0 = (s * nsteps + i) * tr                     # logical first row of this tile
    tile_end = (row0 + tr) * lanes                   # one-past-last logical flat index

    def accum(e):
        # (tr,128) -> (tr//8, 8, 128) -> sum over vregs: pure VPU adds, no XLU.
        out_ref[...] = out_ref[...] + e.reshape(tr // 8, 8, lanes).sum(axis=0)[None]

    @pl.when(tile_end <= n_valid)
    def _():
        accum(elem)

    @pl.when(tile_end > n_valid)
    def _():
        # TODO(synk): flat index is int32; overflows for inputs > 2**31 elements.
        ridx = lax.broadcasted_iota(jnp.int32, elem.shape, 0) + row0
        cidx = lax.broadcasted_iota(jnp.int32, elem.shape, 1)
        flat = ridx * lanes + cidx
        accum(jnp.where(flat < n_valid, elem, 0.0))


def bce_class_balance(mask, pred, class_weight, tile_rows=1024):
    """Class-balanced BCE; pred is a probability map in [0, 1]."""
    dual_core, vmem_limit, _, _ = _tpu_config()
    nshards = 2 if dual_core else 1

    m_flat = jnp.ravel(mask).astype(jnp.float32)
    p_flat = jnp.ravel(pred).astype(jnp.float32)
    n = m_flat.shape[0]
    lanes = 128

    rows = -(-n // lanes)
    pad = rows * lanes - n
    if pad:
        # Rare ragged case only (n % 128 != 0); common case is copy-free.
        m_flat = jnp.pad(m_flat, (0, pad))
        p_flat = jnp.pad(p_flat, (0, pad))
    m2 = m_flat.reshape(rows, lanes)
    p2 = p_flat.reshape(rows, lanes)

    tr = max(8, min(tile_rows, _round_up(-(-rows // nshards), 8)))
    total_blocks = -(-rows // tr)
    steps = -(-total_blocks // nshards)

    n_arr = jnp.array([n], jnp.int32)
    cw = class_weight.astype(jnp.float32)

    def in_map(s, i):
        # Clamp so no block is fully out of range; the kernel masks by the
        # *logical* index, so clamped duplicates contribute exactly zero.
        return (jnp.minimum(s * steps + i, total_blocks - 1), 0)

    out = pl.pallas_call(
        bce_kernel,
        out_shape=jax.ShapeDtypeStruct((nshards, 8, 128), jnp.float32),
        grid=(nshards, steps),
        in_specs=[
            pl.BlockSpec(memory_space=pltpu.MemorySpace.SMEM),   # class_weight
            pl.BlockSpec(memory_space=pltpu.MemorySpace.SMEM),   # n (int32)
            pl.BlockSpec((tr, lanes), in_map),
            pl.BlockSpec((tr, lanes), in_map),
        ],
        out_specs=pl.BlockSpec((1, 8, 128), lambda s, i: (s, 0, 0)),
        compiler_params=pltpu.CompilerParams(
            dimension_semantics=("parallel", "arbitrary"),
            vmem_limit_bytes=vmem_limit,
        ),
        cost_estimate=pl.CostEstimate(
            flops=8 * rows * lanes,
            transcendentals=2 * rows * lanes,
            bytes_accessed=2 * rows * lanes * 4,
        ),
    )(cw, n_arr, m2, p2)

    return jnp.sum(out) / jnp.float32(n)


# ----------------------------------------------------------------------------
# Pallas kernel 2: batched (un-normalized, centered) Gram matrices for real_mi.
#   Inputs are the raw band tensors reshaped (free) to (BC*A, HW); each grid
#   step loads G groups = (G*A, HW) of mask and pred bands and computes
#     mm = M @ M^T - s_m s_m^T / HW
#     pp = P @ P^T - s_p s_p^T / HW
#     mp = M @ P^T - s_m s_p^T / HW
#   i.e. the centered Grams without ever materializing the centered copy.
#   The wrapper slices each group's (A, A) diagonal block back out.
# ----------------------------------------------------------------------------
def _gram(a, b):
    # a @ b^T without an explicit transpose (contract last dims).
    return lax.dot_general(a, b, (((1,), (1,)), ((), ())),
                           preferred_element_type=jnp.float32)


def mi_gram_kernel(m_ref, p_ref, mm_ref, pp_ref, mp_ref):
    m = m_ref[...]                                   # (GA, HW)
    p = p_ref[...]
    inv_hw = 1.0 / m.shape[-1]
    sm = jnp.sum(m, axis=-1, keepdims=True)          # (GA, 1)
    sp = jnp.sum(p, axis=-1, keepdims=True)
    mm_ref[...] = (_gram(m, m) - (sm * sm.T) * inv_hw)[None]
    pp_ref[...] = (_gram(p, p) - (sp * sp.T) * inv_hw)[None]
    mp_ref[...] = (_gram(m, p) - (sm * sp.T) * inv_hw)[None]


def _choose_gram_group(BC, A, HW, ga_target, buf_budget, dual_core):
    """Pick groups-per-block G so that G*A ~= MXU width, the (G*A, HW) block
    fits the per-buffer VMEM budget, G*A is sublane-aligned (multiple of 8) or
    covers the whole array, and dual-TC chips get at least 2 grid blocks."""
    align = 8 // math.gcd(A, 8)
    bytes_per_group = A * HW * 4
    g = min(max(1, ga_target // A), max(1, buf_budget // bytes_per_group), BC)
    if dual_core:
        g = min(g, max(1, -(-BC // 2)))
    if g >= BC:
        return BC
    g = (g // align) * align
    if g < align:
        g = align
    if g >= BC:
        return BC
    return g


def real_mi(mask_band, pred_band):
    """Matches CWMI_loss.real_mi (float32). Returns shape (B, C).
    Note: like the PyTorch reference, the covariance is NOT normalized by HW."""
    B, C, A, H, W = mask_band.shape
    HW = H * W
    BC = B * C
    dual_core, vmem_limit, buf_budget, ga_target = _tpu_config()

    # Free reshapes (contiguous), no concat / pad in HBM.
    m = mask_band.reshape(BC * A, HW).astype(jnp.float32)
    p = pred_band.reshape(BC * A, HW).astype(jnp.float32)

    g = _choose_gram_group(BC, A, HW, ga_target, buf_budget, dual_core)
    GA = g * A
    nb = -(-BC // g)

    flops = nb * 3 * 2 * GA * GA * HW
    bytes_accessed = 2 * BC * A * HW * 4 + 3 * nb * GA * GA * 4

    gram_mm, gram_pp, gram_mp = pl.pallas_call(
        mi_gram_kernel,
        out_shape=tuple(jax.ShapeDtypeStruct((nb, GA, GA), jnp.float32)
                        for _ in range(3)),
        grid=(nb,),
        in_specs=[
            pl.BlockSpec((GA, HW), lambda i: (i, 0)),
            pl.BlockSpec((GA, HW), lambda i: (i, 0)),
        ],
        out_specs=tuple(pl.BlockSpec((1, GA, GA), lambda i: (i, 0, 0))
                        for _ in range(3)),
        compiler_params=pltpu.CompilerParams(
            dimension_semantics=("parallel",),
            vmem_limit_bytes=vmem_limit,
        ),
        cost_estimate=pl.CostEstimate(
            flops=flops, transcendentals=0, bytes_accessed=bytes_accessed),
    )(m, p)

    def diag_blocks(gram):
        # (nb, GA, GA) -> per-group (A, A) diagonal blocks -> (BC, A, A).
        g5 = gram.reshape(nb, g, A, g, A)
        idx = jnp.arange(g)
        d = g5[:, idx, :, idx, :]                    # (g, nb, A, A)
        return jnp.moveaxis(d, 0, 1).reshape(nb * g, A, A)[:BC]

    var_mask = diag_blocks(gram_mm)
    var_pred = diag_blocks(gram_pp)
    cov = diag_blocks(gram_mp)

    eye = jnp.eye(A, dtype=jnp.float32)
    inv_cov_pred = jnp.linalg.inv(var_pred + eye * _POS_ALPHA)
    cond_cov = var_mask - cov @ inv_cov_pred @ jnp.swapaxes(cov, -1, -2)
    # Scale-relative diagonal jitter: f32 rounding can make cond_cov slightly
    # non-PSD (the reference ran in float64).
    diag_mean = jnp.mean(jnp.diagonal(cond_cov, axis1=-2, axis2=-1), axis=-1)
    cond_cov = cond_cov + eye * (_CHOL_JITTER * diag_mean + 1e-12)[:, None, None]
    chol = jnp.linalg.cholesky(cond_cov)
    mi = 2.0 * jnp.sum(
        jnp.log(jnp.diagonal(chol, axis1=-2, axis2=-1) + 1e-8), axis=-1)
    return mi.reshape(B, C)


# ----------------------------------------------------------------------------
# Synthetic deterministic steerable pyramid (glue, plain JAX)
# ----------------------------------------------------------------------------
def _oriented_filters(K, size=7, sigma=1.5):
    r = (size - 1) / 2.0
    ys, xs = jnp.meshgrid(
        jnp.arange(size, dtype=jnp.float32) - r,
        jnp.arange(size, dtype=jnp.float32) - r,
        indexing="ij",
    )
    g = jnp.exp(-(xs**2 + ys**2) / (2.0 * sigma**2))
    filts = []
    for k in range(K):
        theta = math.pi * k / K
        d = xs * math.cos(theta) + ys * math.sin(theta)
        f = -(d / (sigma**2)) * g              # oriented band-pass (zero mean)
        f = f / (jnp.sum(jnp.abs(f)) + 1e-8)
        filts.append(f)
    return jnp.stack(filts)[:, None, :, :]     # (K, 1, size, size)


def _avg_pool2(x):
    B, C, H, W = x.shape
    return x.reshape(B, C, H // 2, 2, W // 2, 2).mean(axis=(3, 5))


def steerable_pyramid(x, N=4, K=4):
    """Returns bands[i] ~ sp(x)[i+1] with shape (B, C, K, H/2^i, W/2^i)."""
    # TODO(synk): single-input-channel 7x7 conv maps poorly onto the MXU; a
    #             channel-batched / stencil Pallas formulation is future work.
    filters = _oriented_filters(K)
    bands = []
    cur = x.astype(jnp.float32)
    for _ in range(N):
        B, C, H, W = cur.shape
        xi = cur.reshape(B * C, 1, H, W)
        out = lax.conv_general_dilated(
            xi, filters, window_strides=(1, 1), padding="SAME",
            dimension_numbers=("NCHW", "OIHW", "NCHW"),
        )
        bands.append(out.reshape(B, C, K, H, W))
        cur = _avg_pool2(cur)
    return bands


# ----------------------------------------------------------------------------
# CWMI_loss forward (complex=False, CW_method='MI', select=None)
# ----------------------------------------------------------------------------
def cwmi_loss(mask, pred, w_map, class_weight, epoch=None,
              spN=4, spK=4, beta=1.0, lamb=0.9, mag=1.0, select=None):
    bce = bce_class_balance(mask, pred, class_weight)
    if epoch == 0:
        return bce

    sp_mask = steerable_pyramid(mask, N=spN, K=spK)
    sp_pred = steerable_pyramid(pred, N=spN, K=spK)

    # TODO(synk): the 4 per-level real_mi pallas_calls could be fused into one
    #             launch (pad HW to a common multiple of 128) for the coarse
    #             levels; left separate for clarity.
    mi_output = []
    for i in range(spN):
        mi_output.append(jnp.mean(real_mi(sp_mask[i], sp_pred[i])))

    loss = bce * lamb
    if select is None:
        for i in range(spN):
            loss = loss + math.pow(beta, spN - i - 1) * mi_output[i] * mag
    else:
        loss = loss + mi_output[select]
    return loss


# ----------------------------------------------------------------------------
if __name__ == "__main__":
    key = jax.random.PRNGKey(0)
    k1, k2 = jax.random.split(key)

    B, C, H, W = 2, 2, 64, 64
    base = jax.random.normal(k1, (B, C, H, W), jnp.float32)
    noise = jax.random.normal(k2, (B, C, H, W), jnp.float32)

    mask = jax.nn.sigmoid(2.0 * base)                 # soft target in [0, 1]
    pred = jax.nn.sigmoid(2.0 * base + 0.7 * noise)   # prediction in [0, 1]
    class_weight = jnp.array([0.3, 0.7], jnp.float32)

    @jax.jit
    def loss_fn(m, p, cw):
        return cwmi_loss(m, p, None, cw, epoch=None)

    loss = loss_fn(mask, pred, class_weight)
    jax.block_until_ready(loss)
    print("KERNEL_OK")
</pallas_src>

<mosaic_0001>
module attributes {stable_mosaic.version = 11 : i64} {
  func.func @mi_gram_kernel(%arg0: i32, %arg1: memref<16x4096xf32, #tpu.memory_space<vmem>>, %arg2: memref<16x4096xf32, #tpu.memory_space<vmem>>, %arg3: memref<1x16x16xf32, #tpu.memory_space<vmem>>, %arg4: memref<1x16x16xf32, #tpu.memory_space<vmem>>, %arg5: memref<1x16x16xf32, #tpu.memory_space<vmem>>) attributes {dimension_semantics = [#tpu.dimension_semantics<parallel>], iteration_bounds = array<i64: 1>, scalar_prefetch = 0 : i64, scratch_operands = 0 : i64, tpu.core_type = #tpu.core_type<tc>, window_params = [{transform_indices = @transform_0, window_bounds = array<i64: 16, 4096>}, {transform_indices = @transform_1, window_bounds = array<i64: 16, 4096>}, {transform_indices = @transform_2, window_bounds = array<i64: 1, 16, 16>}, {transform_indices = @transform_3, window_bounds = array<i64: 1, 16, 16>}, {transform_indices = @transform_4, window_bounds = array<i64: 1, 16, 16>}]} {
    %c0 = arith.constant 0 : index
    %c0_0 = arith.constant 0 : index
    %0 = vector.load %arg1[%c0, %c0_0] : memref<16x4096xf32, #tpu.memory_space<vmem>>, vector<16x4096xf32>
    %c0_1 = arith.constant 0 : index
    %c0_2 = arith.constant 0 : index
    %1 = vector.load %arg2[%c0_1, %c0_2] : memref<16x4096xf32, #tpu.memory_space<vmem>>, vector<16x4096xf32>
    %cst = arith.constant dense<0.000000e+00> : vector<16xf32>
    %2 = vector.multi_reduction <add>, %0, %cst [1] : vector<16x4096xf32> to vector<16xf32>
    %3 = vector.shape_cast %2 : vector<16xf32> to vector<16x1xf32>
    %cst_3 = arith.constant dense<0.000000e+00> : vector<16xf32>
    %4 = vector.multi_reduction <add>, %1, %cst_3 [1] : vector<16x4096xf32> to vector<16xf32>
    %5 = vector.shape_cast %4 : vector<16xf32> to vector<16x1xf32>
    %cst_4 = arith.constant dense<0.000000e+00> : vector<16x16xf32>
    %6 = tpu.matmul %0, %0, %cst_4 {dimension_numbers = #tpu.dot_dimension_numbers<[1], [1], [0], [0], [0, 0, 1, 0], [], []>} : vector<16x4096xf32>, vector<16x4096xf32>, vector<16x16xf32> -> vector<16x16xf32>
    %7 = tpu.transpose %3, [1, 0] : vector<16x1xf32> -> vector<1x16xf32>
    %8 = vector.broadcast %3 : vector<16x1xf32> to vector<16x16xf32>
    %9 = vector.broadcast %7 : vector<1x16xf32> to vector<16x16xf32>
    %10 = arith.mulf %8, %9 : vector<16x16xf32>
    %cst_5 = arith.constant 2.44140625E-4 : f32
    %11 = vector.broadcast %cst_5 : f32 to vector<16x16xf32>
    %12 = arith.mulf %10, %11 : vector<16x16xf32>
    %13 = arith.subf %6, %12 : vector<16x16xf32>
    %14 = vector.shape_cast %13 : vector<16x16xf32> to vector<1x16x16xf32>
    %c0_6 = arith.constant 0 : index
    %c0_7 = arith.constant 0 : index
    %c0_8 = arith.constant 0 : index
    %15 = vector.load %arg3[%c0_6, %c0_7, %c0_8] : memref<1x16x16xf32, #tpu.memory_space<vmem>>, vector<1x16x16xf32>
    tpu.vector_store %arg3[%c0_6, %c0_7, %c0_8], %14 {strides = array<i32>} : memref<1x16x16xf32, #tpu.memory_space<vmem>>, vector<1x16x16xf32>,
    %cst_9 = arith.constant dense<0.000000e+00> : vector<16x16xf32>
    %16 = tpu.matmul %1, %1, %cst_9 {dimension_numbers = #tpu.dot_dimension_numbers<[1], [1], [0], [0], [0, 0, 1, 0], [], []>} : vector<16x4096xf32>, vector<16x4096xf32>, vector<16x16xf32> -> vector<16x16xf32>
    %17 = tpu.transpose %5, [1, 0] : vector<16x1xf32> -> vector<1x16xf32>
    %18 = vector.broadcast %5 : vector<16x1xf32> to vector<16x16xf32>
    %19 = vector.broadcast %17 : vector<1x16xf32> to vector<16x16xf32>
    %20 = arith.mulf %18, %19 : vector<16x16xf32>
    %cst_10 = arith.constant 2.44140625E-4 : f32
    %21 = vector.broadcast %cst_10 : f32 to vector<16x16xf32>
    %22 = arith.mulf %20, %21 : vector<16x16xf32>
    %23 = arith.subf %16, %22 : vector<16x16xf32>
    %24 = vector.shape_cast %23 : vector<16x16xf32> to vector<1x16x16xf32>
    %c0_11 = arith.constant 0 : index
    %c0_12 = arith.constant 0 : index
    %c0_13 = arith.constant 0 : index
    %25 = vector.load %arg4[%c0_11, %c0_12, %c0_13] : memref<1x16x16xf32, #tpu.memory_space<vmem>>, vector<1x16x16xf32>
    tpu.vector_store %arg4[%c0_11, %c0_12, %c0_13], %24 {strides = array<i32>} : memref<1x16x16xf32, #tpu.memory_space<vmem>>, vector<1x16x16xf32>,
    %cst_14 = arith.constant dense<0.000000e+00> : vector<16x16xf32>
    %26 = tpu.matmul %0, %1, %cst_14 {dimension_numbers = #tpu.dot_dimension_numbers<[1], [1], [0], [0], [0, 0, 1, 0], [], []>} : vector<16x4096xf32>, vector<16x4096xf32>, vector<16x16xf32> -> vector<16x16xf32>
    %27 = tpu.transpose %5, [1, 0] : vector<16x1xf32> -> vector<1x16xf32>
    %28 = vector.broadcast %3 : vector<16x1xf32> to vector<16x16xf32>
    %29 = vector.broadcast %27 : vector<1x16xf32> to vector<16x16xf32>
    %30 = arith.mulf %28, %29 : vector<16x16xf32>
    %cst_15 = arith.constant 2.44140625E-4 : f32
    %31 = vector.broadcast %cst_15 : f32 to vector<16x16xf32>
    %32 = arith.mulf %30, %31 : vector<16x16xf32>
    %33 = arith.subf %26, %32 : vector<16x16xf32>
    %34 = vector.shape_cast %33 : vector<16x16xf32> to vector<1x16x16xf32>
    %c0_16 = arith.constant 0 : index
    %c0_17 = arith.constant 0 : index
    %c0_18 = arith.constant 0 : index
    %35 = vector.load %arg5[%c0_16, %c0_17, %c0_18] : memref<1x16x16xf32, #tpu.memory_space<vmem>>, vector<1x16x16xf32>
    tpu.vector_store %arg5[%c0_16, %c0_17, %c0_18], %34 {strides = array<i32>} : memref<1x16x16xf32, #tpu.memory_space<vmem>>, vector<1x16x16xf32>,
    return
  }
  func.func @transform_0(%arg0: i32) -> (i32, i32) {
    %c0_i32 = arith.constant 0 : i32
    %c0_i32_0 = arith.constant 0 : i32
    return %arg0, %c0_i32 : i32, i32
  }
  func.func @transform_1(%arg0: i32) -> (i32, i32) {
    %c0_i32 = arith.constant 0 : i32
    %c0_i32_0 = arith.constant 0 : i32
    return %arg0, %c0_i32 : i32, i32
  }
  func.func @transform_2(%arg0: i32) -> (i32, i32, i32) {
    %c0_i32 = arith.constant 0 : i32
    %c0_i32_0 = arith.constant 0 : i32
    %c0_i32_1 = arith.constant 0 : i32
    return %arg0, %c0_i32, %c0_i32_0 : i32, i32, i32
  }
  func.func @transform_3(%arg0: i32) -> (i32, i32, i32) {
    %c0_i32 = arith.constant 0 : i32
    %c0_i32_0 = arith.constant 0 : i32
    %c0_i32_1 = arith.constant 0 : i32
    return %arg0, %c0_i32, %c0_i32_0 : i32, i32, i32
  }
  func.func @transform_4(%arg0: i32) -> (i32, i32, i32) {
    %c0_i32 = arith.constant 0 : i32
    %c0_i32_0 = arith.constant 0 : i32
    %c0_i32_1 = arith.constant 0 : i32
    return %arg0, %c0_i32, %c0_i32_0 : i32, i32, i32
  }
}

module attributes {stable_mosaic.version = 11 : i64} {
  func.func @mi_gram_kernel(%arg0: i32, %arg1: memref<16x1024xf32, #tpu.memory_space<vmem>>, %arg2: memref<16x1024xf32, #tpu.memory_space<vmem>>, %arg3: memref<1x16x16xf32, #tpu.memory_space<vmem>>, %arg4: memref<1x16x16xf32, #tpu.memory_space<vmem>>, %arg5: memref<1x16x16xf32, #tpu.memory_space<vmem>>) attributes {dimension_semantics = [#tpu.dimension_semantics<parallel>], iteration_bounds = array<i64: 1>, scalar_prefetch = 0 : i64, scratch_operands = 0 : i64, tpu.core_type = #tpu.core_type<tc>, window_params = [{transform_indices = @transform_0, window_bounds = array<i64: 16, 1024>}, {transform_indices = @transform_1, window_bounds = array<i64: 16, 1024>}, {transform_indices = @transform_2, window_bounds = array<i64: 1, 16, 16>}, {transform_indices = @transform_3, window_bounds = array<i64: 1, 16, 16>}, {transform_indices = @transform_4, window_bounds = array<i64: 1, 16, 16>}]} {
    %c0 = arith.constant 0 : index
    %c0_0 = arith.constant 0 : index
    %0 = vector.load %arg1[%c0, %c0_0] : memref<16x1024xf32, #tpu.memory_space<vmem>>, vector<16x1024xf32>
    %c0_1 = arith.constant 0 : index
    %c0_2 = arith.constant 0 : index
    %1 = vector.load %arg2[%c0_1, %c0_2] : memref<16x1024xf32, #tpu.memory_space<vmem>>, vector<16x1024xf32>
    %cst = arith.constant dense<0.000000e+00> : vector<16xf32>
    %2 = vector.multi_reduction <add>, %0, %cst [1] : vector<16x1024xf32> to vector<16xf32>
    %3 = vector.shape_cast %2 : vector<16xf32> to vector<16x1xf32>
    %cst_3 = arith.constant dense<0.000000e+00> : vector<16xf32>
    %4 = vector.multi_reduction <add>, %1, %cst_3 [1] : vector<16x1024xf32> to vector<16xf32>
    %5 = vector.shape_cast %4 : vector<16xf32> to vector<16x1xf32>
    %cst_4 = arith.constant dense<0.000000e+00> : vector<16x16xf32>
    %6 = tpu.matmul %0, %0, %cst_4 {dimension_numbers = #tpu.dot_dimension_numbers<[1], [1], [0], [0], [0, 0, 1, 0], [], []>} : vector<16x1024xf32>, vector<16x1024xf32>, vector<16x16xf32> -> vector<16x16xf32>
    %7 = tpu.transpose %3, [1, 0] : vector<16x1xf32> -> vector<1x16xf32>
    %8 = vector.broadcast %3 : vector<16x1xf32> to vector<16x16xf32>
    %9 = vector.broadcast %7 : vector<1x16xf32> to vector<16x16xf32>
    %10 = arith.mulf %8, %9 : vector<16x16xf32>
    %cst_5 = arith.constant 9.765625E-4 : f32
    %11 = vector.broadcast %cst_5 : f32 to vector<16x16xf32>
    %12 = arith.mulf %10, %11 : vector<16x16xf32>
    %13 = arith.subf %6, %12 : vector<16x16xf32>
    %14 = vector.shape_cast %13 : vector<16x16xf32> to vector<1x16x16xf32>
    %c0_6 = arith.constant 0 : index
    %c0_7 = arith.constant 0 : index
    %c0_8 = arith.constant 0 : index
    %15 = vector.load %arg3[%c0_6, %c0_7, %c0_8] : memref<1x16x16xf32, #tpu.memory_space<vmem>>, vector<1x16x16xf32>
    tpu.vector_store %arg3[%c0_6, %c0_7, %c0_8], %14 {strides = array<i32>} : memref<1x16x16xf32, #tpu.memory_space<vmem>>, vector<1x16x16xf32>,
    %cst_9 = arith.constant dense<0.000000e+00> : vector<16x16xf32>
    %16 = tpu.matmul %1, %1, %cst_9 {dimension_numbers = #tpu.dot_dimension_numbers<[1], [1], [0], [0], [0, 0, 1, 0], [], []>} : vector<16x1024xf32>, vector<16x1024xf32>, vector<16x16xf32> -> vector<16x16xf32>
    %17 = tpu.transpose %5, [1, 0] : vector<16x1xf32> -> vector<1x16xf32>
    %18 = vector.broadcast %5 : vector<16x1xf32> to vector<16x16xf32>
    %19 = vector.broadcast %17 : vector<1x16xf32> to vector<16x16xf32>
    %20 = arith.mulf %18, %19 : vector<16x16xf32>
    %cst_10 = arith.constant 9.765625E-4 : f32
    %21 = vector.broadcast %cst_10 : f32 to vector<16x16xf32>
    %22 = arith.mulf %20, %21 : vector<16x16xf32>
    %23 = arith.subf %16, %22 : vector<16x16xf32>
    %24 = vector.shape_cast %23 : vector<16x16xf32> to vector<1x16x16xf32>
    %c0_11 = arith.constant 0 : index
    %c0_12 = arith.constant 0 : index
    %c0_13 = arith.constant 0 : index
    %25 = vector.load %arg4[%c0_11, %c0_12, %c0_13] : memref<1x16x16xf32, #tpu.memory_space<vmem>>, vector<1x16x16xf32>
    tpu.vector_store %arg4[%c0_11, %c0_12, %c0_13], %24 {strides = array<i32>} : memref<1x16x16xf32, #tpu.memory_space<vmem>>, vector<1x16x16xf32>,
    %cst_14 = arith.constant dense<0.000000e+00> : vector<16x16xf32>
    %26 = tpu.matmul %0, %1, %cst_14 {dimension_numbers = #tpu.dot_dimension_numbers<[1], [1], [0], [0], [0, 0, 1, 0], [], []>} : vector<16x1024xf32>, vector<16x1024xf32>, vector<16x16xf32> -> vector<16x16xf32>
    %27 = tpu.transpose %5, [1, 0] : vector<16x1xf32> -> vector<1x16xf32>
    %28 = vector.broadcast %3 : vector<16x1xf32> to vector<16x16xf32>
    %29 = vector.broadcast %27 : vector<1x16xf32> to vector<16x16xf32>
    %30 = arith.mulf %28, %29 : vector<16x16xf32>
    %cst_15 = arith.constant 9.765625E-4 : f32
    %31 = vector.broadcast %cst_15 : f32 to vector<16x16xf32>
    %32 = arith.mulf %30, %31 : vector<16x16xf32>
    %33 = arith.subf %26, %32 : vector<16x16xf32>
    %34 = vector.shape_cast %33 : vector<16x16xf32> to vector<1x16x16xf32>
    %c0_16 = arith.constant 0 : index
    %c0_17 = arith.constant 0 : index
    %c0_18 = arith.constant 0 : index
    %35 = vector.load %arg5[%c0_16, %c0_17, %c0_18] : memref<1x16x16xf32, #tpu.memory_space<vmem>>, vector<1x16x16xf32>
    tpu.vector_store %arg5[%c0_16, %c0_17, %c0_18], %34 {strides = array<i32>} : memref<1x16x16xf32, #tpu.memory_space<vmem>>, vector<1x16x16xf32>,
    return
  }
  func.func @transform_0(%arg0: i32) -> (i32, i32) {
    %c0_i32 = arith.constant 0 : i32
    %c0_i32_0 = arith.constant 0 : i32
    return %arg0, %c0_i32 : i32, i32
  }
  func.func @transform_1(%arg0: i32) -> (i32, i32) {
    %c0_i32 = arith.constant 0 : i32
    %c0_i32_0 = arith.constant 0 : i32
    return %arg0, %c0_i32 : i32, i32
  }
  func.func @transform_2(%arg0: i32) -> (i32, i32, i32) {
    %c0_i32 = arith.constant 0 : i32
    %c0_i32_0 = arith.constant 0 : i32
    %c0_i32_1 = arith.constant 0 : i32
    return %arg0, %c0_i32, %c0_i32_0 : i32, i32, i32
  }
  func.func @transform_3(%arg0: i32) -> (i32, i32, i32) {
    %c0_i32 = arith.constant 0 : i32
    %c0_i32_0 = arith.constant 0 : i32
    %c0_i32_1 = arith.constant 0 : i32
    return %arg0, %c0_i32, %c0_i32_0 : i32, i32, i32
  }
  func.func @transform_4(%arg0: i32) -> (i32, i32, i32) {
    %c0_i32 = arith.constant 0 : i32
    %c0_i32_0 = arith.constant 0 : i32
    %c0_i32_1 = arith.constant 0 : i32
    return %arg0, %c0_i32, %c0_i32_0 : i32, i32, i32
  }
}

module attributes {stable_mosaic.version = 11 : i64} {
  func.func @mi_gram_kernel(%arg0: i32, %arg1: memref<16x256xf32, #tpu.memory_space<vmem>>, %arg2: memref<16x256xf32, #tpu.memory_space<vmem>>, %arg3: memref<1x16x16xf32, #tpu.memory_space<vmem>>, %arg4: memref<1x16x16xf32, #tpu.memory_space<vmem>>, %arg5: memref<1x16x16xf32, #tpu.memory_space<vmem>>) attributes {dimension_semantics = [#tpu.dimension_semantics<parallel>], iteration_bounds = array<i64: 1>, scalar_prefetch = 0 : i64, scratch_operands = 0 : i64, tpu.core_type = #tpu.core_type<tc>, window_params = [{transform_indices = @transform_0, window_bounds = array<i64: 16, 256>}, {transform_indices = @transform_1, window_bounds = array<i64: 16, 256>}, {transform_indices = @transform_2, window_bounds = array<i64: 1, 16, 16>}, {transform_indices = @transform_3, window_bounds = array<i64: 1, 16, 16>}, {transform_indices = @transform_4, window_bounds = array<i64: 1, 16, 16>}]} {
    %c0 = arith.constant 0 : index
    %c0_0 = arith.constant 0 : index
    %0 = vector.load %arg1[%c0, %c0_0] : memref<16x256xf32, #tpu.memory_space<vmem>>, vector<16x256xf32>
    %c0_1 = arith.constant 0 : index
    %c0_2 = arith.constant 0 : index
    %1 = vector.load %arg2[%c0_1, %c0_2] : memref<16x256xf32, #tpu.memory_space<vmem>>, vector<16x256xf32>
    %cst = arith.constant dense<0.000000e+00> : vector<16xf32>
    %2 = vector.multi_reduction <add>, %0, %cst [1] : vector<16x256xf32> to vector<16xf32>
    %3 = vector.shape_cast %2 : vector<16xf32> to vector<16x1xf32>
    %cst_3 = arith.constant dense<0.000000e+00> : vector<16xf32>
    %4 = vector.multi_reduction <add>, %1, %cst_3 [1] : vector<16x256xf32> to vector<16xf32>
    %5 = vector.shape_cast %4 : vector<16xf32> to vector<16x1xf32>
    %cst_4 = arith.constant dense<0.000000e+00> : vector<16x16xf32>
    %6 = tpu.matmul %0, %0, %cst_4 {dimension_numbers = #tpu.dot_dimension_numbers<[1], [1], [0], [0], [0, 0, 1, 0], [], []>} : vector<16x256xf32>, vector<16x256xf32>, vector<16x16xf32> -> vector<16x16xf32>
    %7 = tpu.transpose %3, [1, 0] : vector<16x1xf32> -> vector<1x16xf32>
    %8 = vector.broadcast %3 : vector<16x1xf32> to vector<16x16xf32>
    %9 = vector.broadcast %7 : vector<1x16xf32> to vector<16x16xf32>
    %10 = arith.mulf %8, %9 : vector<16x16xf32>
    %cst_5 = arith.constant 3.906250e-03 : f32
    %11 = vector.broadcast %cst_5 : f32 to vector<16x16xf32>
    %12 = arith.mulf %10, %11 : vector<16x16xf32>
    %13 = arith.subf %6, %12 : vector<16x16xf32>
    %14 = vector.shape_cast %13 : vector<16x16xf32> to vector<1x16x16xf32>
    %c0_6 = arith.constant 0 : index
    %c0_7 = arith.constant 0 : index
    %c0_8 = arith.constant 0 : index
    %15 = vector.load %arg3[%c0_6, %c0_7, %c0_8] : memref<1x16x16xf32, #tpu.memory_space<vmem>>, vector<1x16x16xf32>
    tpu.vector_store %arg3[%c0_6, %c0_7, %c0_8], %14 {strides = array<i32>} : memref<1x16x16xf32, #tpu.memory_space<vmem>>, vector<1x16x16xf32>,
    %cst_9 = arith.constant dense<0.000000e+00> : vector<16x16xf32>
    %16 = tpu.matmul %1, %1, %cst_9 {dimension_numbers = #tpu.dot_dimension_numbers<[1], [1], [0], [0], [0, 0, 1, 0], [], []>} : vector<16x256xf32>, vector<16x256xf32>, vector<16x16xf32> -> vector<16x16xf32>
    %17 = tpu.transpose %5, [1, 0] : vector<16x1xf32> -> vector<1x16xf32>
    %18 = vector.broadcast %5 : vector<16x1xf32> to vector<16x16xf32>
    %19 = vector.broadcast %17 : vector<1x16xf32> to vector<16x16xf32>
    %20 = arith.mulf %18, %19 : vector<16x16xf32>
    %cst_10 = arith.constant 3.906250e-03 : f32
    %21 = vector.broadcast %cst_10 : f32 to vector<16x16xf32>
    %22 = arith.mulf %20, %21 : vector<16x16xf32>
    %23 = arith.subf %16, %22 : vector<16x16xf32>
    %24 = vector.shape_cast %23 : vector<16x16xf32> to vector<1x16x16xf32>
    %c0_11 = arith.constant 0 : index
    %c0_12 = arith.constant 0 : index
    %c0_13 = arith.constant 0 : index
    %25 = vector.load %arg4[%c0_11, %c0_12, %c0_13] : memref<1x16x16xf32, #tpu.memory_space<vmem>>, vector<1x16x16xf32>
    tpu.vector_store %arg4[%c0_11, %c0_12, %c0_13], %24 {strides = array<i32>} : memref<1x16x16xf32, #tpu.memory_space<vmem>>, vector<1x16x16xf32>,
    %cst_14 = arith.constant dense<0.000000e+00> : vector<16x16xf32>
    %26 = tpu.matmul %0, %1, %cst_14 {dimension_numbers = #tpu.dot_dimension_numbers<[1], [1], [0], [0], [0, 0, 1, 0], [], []>} : vector<16x256xf32>, vector<16x256xf32>, vector<16x16xf32> -> vector<16x16xf32>
    %27 = tpu.transpose %5, [1, 0] : vector<16x1xf32> -> vector<1x16xf32>
    %28 = vector.broadcast %3 : vector<16x1xf32> to vector<16x16xf32>
    %29 = vector.broadcast %27 : vector<1x16xf32> to vector<16x16xf32>
    %30 = arith.mulf %28, %29 : vector<16x16xf32>
    %cst_15 = arith.constant 3.906250e-03 : f32
    %31 = vector.broadcast %cst_15 : f32 to vector<16x16xf32>
    %32 = arith.mulf %30, %31 : vector<16x16xf32>
    %33 = arith.subf %26, %32 : vector<16x16xf32>
    %34 = vector.shape_cast %33 : vector<16x16xf32> to vector<1x16x16xf32>
    %c0_16 = arith.constant 0 : index
    %c0_17 = arith.constant 0 : index
    %c0_18 = arith.constant 0 : index
    %35 = vector.load %arg5[%c0_16, %c0_17, %c0_18] : memref<1x16x16xf32, #tpu.memory_space<vmem>>, vector<1x16x16xf32>
    tpu.vector_store %arg5[%c0_16, %c0_17, %c0_18], %34 {strides = array<i32>} : memref<1x16x16xf32, #tpu.memory_space<vmem>>, vector<1x16x16xf32>,
    return
  }
  func.func @transform_0(%arg0: i32) -> (i32, i32) {
    %c0_i32 = arith.constant 0 : i32
    %c0_i32_0 = arith.constant 0 : i32
    return %arg0, %c0_i32 : i32, i32
  }
  func.func @transform_1(%arg0: i32) -> (i32, i32) {
    %c0_i32 = arith.constant 0 : i32
    %c0_i32_0 = arith.constant 0 : i32
    return %arg0, %c0_i32 : i32, i32
  }
  func.func @transform_2(%arg0: i32) -> (i32, i32, i32) {
    %c0_i32 = arith.constant 0 : i32
    %c0_i32_0 = arith.constant 0 : i32
    %c0_i32_1 = arith.constant 0 : i32
    return %arg0, %c0_i32, %c0_i32_0 : i32, i32, i32
  }
  func.func @transform_3(%arg0: i32) -> (i32, i32, i32) {
    %c0_i32 = arith.constant 0 : i32
    %c0_i32_0 = arith.constant 0 : i32
    %c0_i32_1 = arith.constant 0 : i32
    return %arg0, %c0_i32, %c0_i32_0 : i32, i32, i32
  }
  func.func @transform_4(%arg0: i32) -> (i32, i32, i32) {
    %c0_i32 = arith.constant 0 : i32
    %c0_i32_0 = arith.constant 0 : i32
    %c0_i32_1 = arith.constant 0 : i32
    return %arg0, %c0_i32, %c0_i32_0 : i32, i32, i32
  }
}

module attributes {stable_mosaic.version = 11 : i64} {
  func.func @mi_gram_kernel(%arg0: i32, %arg1: memref<16x64xf32, #tpu.memory_space<vmem>>, %arg2: memref<16x64xf32, #tpu.memory_space<vmem>>, %arg3: memref<1x16x16xf32, #tpu.memory_space<vmem>>, %arg4: memref<1x16x16xf32, #tpu.memory_space<vmem>>, %arg5: memref<1x16x16xf32, #tpu.memory_space<vmem>>) attributes {dimension_semantics = [#tpu.dimension_semantics<parallel>], iteration_bounds = array<i64: 1>, scalar_prefetch = 0 : i64, scratch_operands = 0 : i64, tpu.core_type = #tpu.core_type<tc>, window_params = [{transform_indices = @transform_0, window_bounds = array<i64: 16, 64>}, {transform_indices = @transform_1, window_bounds = array<i64: 16, 64>}, {transform_indices = @transform_2, window_bounds = array<i64: 1, 16, 16>}, {transform_indices = @transform_3, window_bounds = array<i64: 1, 16, 16>}, {transform_indices = @transform_4, window_bounds = array<i64: 1, 16, 16>}]} {
    %c0 = arith.constant 0 : index
    %c0_0 = arith.constant 0 : index
    %0 = vector.load %arg1[%c0, %c0_0] : memref<16x64xf32, #tpu.memory_space<vmem>>, vector<16x64xf32>
    %c0_1 = arith.constant 0 : index
    %c0_2 = arith.constant 0 : index
    %1 = vector.load %arg2[%c0_1, %c0_2] : memref<16x64xf32, #tpu.memory_space<vmem>>, vector<16x64xf32>
    %cst = arith.constant dense<0.000000e+00> : vector<16xf32>
    %2 = vector.multi_reduction <add>, %0, %cst [1] : vector<16x64xf32> to vector<16xf32>
    %3 = vector.shape_cast %2 : vector<16xf32> to vector<16x1xf32>
    %cst_3 = arith.constant dense<0.000000e+00> : vector<16xf32>
    %4 = vector.multi_reduction <add>, %1, %cst_3 [1] : vector<16x64xf32> to vector<16xf32>
    %5 = vector.shape_cast %4 : vector<16xf32> to vector<16x1xf32>
    %cst_4 = arith.constant dense<0.000000e+00> : vector<16x16xf32>
    %6 = tpu.matmul %0, %0, %cst_4 {dimension_numbers = #tpu.dot_dimension_numbers<[1], [1], [0], [0], [0, 0, 1, 0], [], []>} : vector<16x64xf32>, vector<16x64xf32>, vector<16x16xf32> -> vector<16x16xf32>
    %7 = tpu.transpose %3, [1, 0] : vector<16x1xf32> -> vector<1x16xf32>
    %8 = vector.broadcast %3 : vector<16x1xf32> to vector<16x16xf32>
    %9 = vector.broadcast %7 : vector<1x16xf32> to vector<16x16xf32>
    %10 = arith.mulf %8, %9 : vector<16x16xf32>
    %cst_5 = arith.constant 1.562500e-02 : f32
    %11 = vector.broadcast %cst_5 : f32 to vector<16x16xf32>
    %12 = arith.mulf %10, %11 : vector<16x16xf32>
    %13 = arith.subf %6, %12 : vector<16x16xf32>
    %14 = vector.shape_cast %13 : vector<16x16xf32> to vector<1x16x16xf32>
    %c0_6 = arith.constant 0 : index
    %c0_7 = arith.constant 0 : index
    %c0_8 = arith.constant 0 : index
    %15 = vector.load %arg3[%c0_6, %c0_7, %c0_8] : memref<1x16x16xf32, #tpu.memory_space<vmem>>, vector<1x16x16xf32>
    tpu.vector_store %arg3[%c0_6, %c0_7, %c0_8], %14 {strides = array<i32>} : memref<1x16x16xf32, #tpu.memory_space<vmem>>, vector<1x16x16xf32>,
    %cst_9 = arith.constant dense<0.000000e+00> : vector<16x16xf32>
    %16 = tpu.matmul %1, %1, %cst_9 {dimension_numbers = #tpu.dot_dimension_numbers<[1], [1], [0], [0], [0, 0, 1, 0], [], []>} : vector<16x64xf32>, vector<16x64xf32>, vector<16x16xf32> -> vector<16x16xf32>
    %17 = tpu.transpose %5, [1, 0] : vector<16x1xf32> -> vector<1x16xf32>
    %18 = vector.broadcast %5 : vector<16x1xf32> to vector<16x16xf32>
    %19 = vector.broadcast %17 : vector<1x16xf32> to vector<16x16xf32>
    %20 = arith.mulf %18, %19 : vector<16x16xf32>
    %cst_10 = arith.constant 1.562500e-02 : f32
    %21 = vector.broadcast %cst_10 : f32 to vector<16x16xf32>
    %22 = arith.mulf %20, %21 : vector<16x16xf32>
    %23 = arith.subf %16, %22 : vector<16x16xf32>
    %24 = vector.shape_cast %23 : vector<16x16xf32> to vector<1x16x16xf32>
    %c0_11 = arith.constant 0 : index
    %c0_12 = arith.constant 0 : index
    %c0_13 = arith.constant 0 : index
    %25 = vector.load %arg4[%c0_11, %c0_12, %c0_13] : memref<1x16x16xf32, #tpu.memory_space<vmem>>, vector<1x16x16xf32>
    tpu.vector_store %arg4[%c0_11, %c0_12, %c0_13], %24 {strides = array<i32>} : memref<1x16x16xf32, #tpu.memory_space<vmem>>, vector<1x16x16xf32>,
    %cst_14 = arith.constant dense<0.000000e+00> : vector<16x16xf32>
    %26 = tpu.matmul %0, %1, %cst_14 {dimension_numbers = #tpu.dot_dimension_numbers<[1], [1], [0], [0], [0, 0, 1, 0], [], []>} : vector<16x64xf32>, vector<16x64xf32>, vector<16x16xf32> -> vector<16x16xf32>
    %27 = tpu.transpose %5, [1, 0] : vector<16x1xf32> -> vector<1x16xf32>
    %28 = vector.broadcast %3 : vector<16x1xf32> to vector<16x16xf32>
    %29 = vector.broadcast %27 : vector<1x16xf32> to vector<16x16xf32>
    %30 = arith.mulf %28, %29 : vector<16x16xf32>
    %cst_15 = arith.constant 1.562500e-02 : f32
    %31 = vector.broadcast %cst_15 : f32 to vector<16x16xf32>
    %32 = arith.mulf %30, %31 : vector<16x16xf32>
    %33 = arith.subf %26, %32 : vector<16x16xf32>
    %34 = vector.shape_cast %33 : vector<16x16xf32> to vector<1x16x16xf32>
    %c0_16 = arith.constant 0 : index
    %c0_17 = arith.constant 0 : index
    %c0_18 = arith.constant 0 : index
    %35 = vector.load %arg5[%c0_16, %c0_17, %c0_18] : memref<1x16x16xf32, #tpu.memory_space<vmem>>, vector<1x16x16xf32>
    tpu.vector_store %arg5[%c0_16, %c0_17, %c0_18], %34 {strides = array<i32>} : memref<1x16x16xf32, #tpu.memory_space<vmem>>, vector<1x16x16xf32>,
    return
  }
  func.func @transform_0(%arg0: i32) -> (i32, i32) {
    %c0_i32 = arith.constant 0 : i32
    %c0_i32_0 = arith.constant 0 : i32
    return %arg0, %c0_i32 : i32, i32
  }
  func.func @transform_1(%arg0: i32) -> (i32, i32) {
    %c0_i32 = arith.constant 0 : i32
    %c0_i32_0 = arith.constant 0 : i32
    return %arg0, %c0_i32 : i32, i32
  }
  func.func @transform_2(%arg0: i32) -> (i32, i32, i32) {
    %c0_i32 = arith.constant 0 : i32
    %c0_i32_0 = arith.constant 0 : i32
    %c0_i32_1 = arith.constant 0 : i32
    return %arg0, %c0_i32, %c0_i32_0 : i32, i32, i32
  }
  func.func @transform_3(%arg0: i32) -> (i32, i32, i32) {
    %c0_i32 = arith.constant 0 : i32
    %c0_i32_0 = arith.constant 0 : i32
    %c0_i32_1 = arith.constant 0 : i32
    return %arg0, %c0_i32, %c0_i32_0 : i32, i32, i32
  }
  func.func @transform_4(%arg0: i32) -> (i32, i32, i32) {
    %c0_i32 = arith.constant 0 : i32
    %c0_i32_0 = arith.constant 0 : i32
    %c0_i32_1 = arith.constant 0 : i32
    return %arg0, %c0_i32, %c0_i32_0 : i32, i32, i32
  }
}

module attributes {stable_mosaic.version = 11 : i64} {
  func.func @bce_kernel(%arg0: i32, %arg1: i32, %arg2: memref<2xf32, #tpu.memory_space<smem>>, %arg3: memref<1xi32, #tpu.memory_space<smem>>, %arg4: memref<128x128xf32, #tpu.memory_space<vmem>>, %arg5: memref<128x128xf32, #tpu.memory_space<vmem>>, %arg6: memref<1x8x128xf32, #tpu.memory_space<vmem>>) attributes {dimension_semantics = [#tpu.dimension_semantics<parallel>, #tpu.dimension_semantics<arbitrary>], iteration_bounds = array<i64: 1, 1>, scalar_prefetch = 0 : i64, scratch_operands = 0 : i64, tpu.core_type = #tpu.core_type<tc>, window_params = [{transform_indices = @transform_0, window_bounds = array<i64: 2>}, {transform_indices = @transform_1, window_bounds = array<i64: 1>}, {transform_indices = @transform_2, window_bounds = array<i64: 128, 128>}, {transform_indices = @transform_3, window_bounds = array<i64: 128, 128>}, {transform_indices = @transform_4, window_bounds = array<i64: 1, 8, 128>}]} {
    %c0_i32 = arith.constant 0 : i32
    %0 = arith.cmpi eq, %arg1, %c0_i32 : i32
    %1 = arith.extui %0 : i1 to i32
    %c0_i32_0 = arith.constant 0 : i32
    %2 = arith.cmpi ne, %1, %c0_i32_0 : i32
    scf.if %2 {
      %cst_14 = arith.constant 0.000000e+00 : f32
      %38 = vector.broadcast %cst_14 : f32 to vector<1x8x128xf32>
      %c0_15 = arith.constant 0 : index
      %c0_16 = arith.constant 0 : index
      %c0_17 = arith.constant 0 : index
      %39 = vector.load %arg6[%c0_15, %c0_16, %c0_17] : memref<1x8x128xf32, #tpu.memory_space<vmem>>, vector<1x8x128xf32>
      tpu.vector_store %arg6[%c0_15, %c0_16, %c0_17], %38 {strides = array<i32>} : memref<1x8x128xf32, #tpu.memory_space<vmem>>, vector<1x8x128xf32>,
    } else {
    }
    %c0 = arith.constant 0 : index
    %3 = memref.load %arg2[%c0] : memref<2xf32, #tpu.memory_space<smem>>
    %c1 = arith.constant 1 : index
    %4 = memref.load %arg2[%c1] : memref<2xf32, #tpu.memory_space<smem>>
    %c0_1 = arith.constant 0 : index
    %5 = memref.load %arg3[%c0_1] : memref<1xi32, #tpu.memory_space<smem>>
    %c0_2 = arith.constant 0 : index
    %c0_3 = arith.constant 0 : index
    %6 = vector.load %arg4[%c0_2, %c0_3] : memref<128x128xf32, #tpu.memory_space<vmem>>, vector<128x128xf32>
    %c0_4 = arith.constant 0 : index
    %c0_5 = arith.constant 0 : index
    %7 = vector.load %arg5[%c0_4, %c0_5] : memref<128x128xf32, #tpu.memory_space<vmem>>, vector<128x128xf32>
    %cst = arith.constant 1.000000e-07 : f32
    %cst_6 = arith.constant 0.99999988 : f32
    %8 = vector.broadcast %cst : f32 to vector<128x128xf32>
    %9 = arith.maximumf %8, %7 : vector<128x128xf32>
    %10 = vector.broadcast %cst_6 : f32 to vector<128x128xf32>
    %11 = arith.minimumf %10, %9 : vector<128x128xf32>
    %12 = vector.broadcast %4 : f32 to vector<128x128xf32>
    %13 = arith.mulf %12, %6 : vector<128x128xf32>
    %14 = math.log %11 : vector<128x128xf32>
    %15 = arith.mulf %13, %14 : vector<128x128xf32>
    %cst_7 = arith.constant 1.000000e+00 : f32
    %16 = vector.broadcast %cst_7 : f32 to vector<128x128xf32>
    %17 = arith.subf %16, %6 : vector<128x128xf32>
    %18 = vector.broadcast %3 : f32 to vector<128x128xf32>
    %19 = arith.mulf %18, %17 : vector<128x128xf32>
    %cst_8 = arith.constant 1.000000e+00 : f32
    %20 = vector.broadcast %cst_8 : f32 to vector<128x128xf32>
    %21 = arith.subf %20, %11 : vector<128x128xf32>
    %22 = math.log %21 : vector<128x128xf32>
    %23 = arith.mulf %19, %22 : vector<128x128xf32>
    %24 = arith.addf %15, %23 : vector<128x128xf32>
    %cst_9 = arith.constant 0.000000e+00 : f32
    %25 = vector.broadcast %cst_9 : f32 to vector<128x128xf32>
    %26 = arith.subf %25, %24 : vector<128x128xf32>
    %c1_i32 = arith.constant 1 : i32
    %27 = arith.muli %arg0, %c1_i32 : i32
    %28 = arith.addi %27, %arg1 : i32
    %c128_i32 = arith.constant 128 : i32
    %29 = arith.muli %28, %c128_i32 : i32
    %c128_i32_10 = arith.constant 128 : i32
    %30 = arith.addi %29, %c128_i32_10 : i32
    %c128_i32_11 = arith.constant 128 : i32
    %31 = arith.muli %30, %c128_i32_11 : i32
    %32 = arith.cmpi sle, %31, %5 : i32
    %33 = arith.extui %32 : i1 to i32
    %c0_i32_12 = arith.constant 0 : i32
    %34 = arith.cmpi ne, %33, %c0_i32_12 : i32
    scf.if %34 {
      %c0_14 = arith.constant 0 : index
      %c0_15 = arith.constant 0 : index
      %c0_16 = arith.constant 0 : index
      %38 = vector.load %arg6[%c0_14, %c0_15, %c0_16] : memref<1x8x128xf32, #tpu.memory_space<vmem>>, vector<1x8x128xf32>
      %39 = vector.shape_cast %26 : vector<128x128xf32> to vector<16x8x128xf32>
      %cst_17 = arith.constant dense<0.000000e+00> : vector<8x128xf32>
      %40 = vector.multi_reduction <add>, %39, %cst_17 [0] : vector<16x8x128xf32> to vector<8x128xf32>
      %41 = vector.shape_cast %40 : vector<8x128xf32> to vector<1x8x128xf32>
      %42 = arith.addf %38, %41 : vector<1x8x128xf32>
      %c0_18 = arith.constant 0 : index
      %c0_19 = arith.constant 0 : index
      %c0_20 = arith.constant 0 : index
      %43 = vector.load %arg6[%c0_18, %c0_19, %c0_20] : memref<1x8x128xf32, #tpu.memory_space<vmem>>, vector<1x8x128xf32>
      tpu.vector_store %arg6[%c0_18, %c0_19, %c0_20], %42 {strides = array<i32>} : memref<1x8x128xf32, #tpu.memory_space<vmem>>, vector<1x8x128xf32>,
    } else {
    }
    %35 = arith.cmpi sgt, %31, %5 : i32
    %36 = arith.extui %35 : i1 to i32
    %c0_i32_13 = arith.constant 0 : i32
    %37 = arith.cmpi ne, %36, %c0_i32_13 : i32
    scf.if %37 {
      %38 = tpu.iota {dimensions = array<i32: 0>} : vector<128x128xi32>
      %39 = vector.broadcast %29 : i32 to vector<128x128xi32>
      %40 = arith.addi %38, %39 : vector<128x128xi32>
      %41 = tpu.iota {dimensions = array<i32: 1>} : vector<128x128xi32>
      %c128_i32_14 = arith.constant 128 : i32
      %42 = vector.broadcast %c128_i32_14 : i32 to vector<128x128xi32>
      %43 = arith.muli %40, %42 : vector<128x128xi32>
      %44 = arith.addi %43, %41 : vector<128x128xi32>
      %45 = vector.broadcast %5 : i32 to vector<128x128xi32>
      %46 = arith.cmpi slt, %44, %45 : vector<128x128xi32>
      %cst_15 = arith.constant 0.000000e+00 : f32
      %47 = vector.broadcast %cst_15 : f32 to vector<128x128xf32>
      %48 = arith.select %46, %26, %47 : vector<128x128xi1>, vector<128x128xf32>
      %c0_16 = arith.constant 0 : index
      %c0_17 = arith.constant 0 : index
      %c0_18 = arith.constant 0 : index
      %49 = vector.load %arg6[%c0_16, %c0_17, %c0_18] : memref<1x8x128xf32, #tpu.memory_space<vmem>>, vector<1x8x128xf32>
      %50 = vector.shape_cast %48 : vector<128x128xf32> to vector<16x8x128xf32>
      %cst_19 = arith.constant dense<0.000000e+00> : vector<8x128xf32>
      %51 = vector.multi_reduction <add>, %50, %cst_19 [0] : vector<16x8x128xf32> to vector<8x128xf32>
      %52 = vector.shape_cast %51 : vector<8x128xf32> to vector<1x8x128xf32>
      %53 = arith.addf %49, %52 : vector<1x8x128xf32>
      %c0_20 = arith.constant 0 : index
      %c0_21 = arith.constant 0 : index
      %c0_22 = arith.constant 0 : index
      %54 = vector.load %arg6[%c0_20, %c0_21, %c0_22] : memref<1x8x128xf32, #tpu.memory_space<vmem>>, vector<1x8x128xf32>
      tpu.vector_store %arg6[%c0_20, %c0_21, %c0_22], %53 {strides = array<i32>} : memref<1x8x128xf32, #tpu.memory_space<vmem>>, vector<1x8x128xf32>,
    } else {
    }
    return
  }
  func.func @transform_0(%arg0: i32, %arg1: i32) -> i32 {
    %c0_i32 = arith.constant 0 : i32
    %c0_i32_0 = arith.constant 0 : i32
    return %c0_i32 : i32
  }
  func.func @transform_1(%arg0: i32, %arg1: i32) -> i32 {
    %c0_i32 = arith.constant 0 : i32
    %c0_i32_0 = arith.constant 0 : i32
    return %c0_i32 : i32
  }
  func.func @transform_2(%arg0: i32, %arg1: i32) -> (i32, i32) {
    %c1_i32 = arith.constant 1 : i32
    %0 = arith.muli %arg0, %c1_i32 : i32
    %1 = arith.addi %0, %arg1 : i32
    %c0_i32 = arith.constant 0 : i32
    %2 = arith.minsi %1, %c0_i32 : i32
    %c0_i32_0 = arith.constant 0 : i32
    %c0_i32_1 = arith.constant 0 : i32
    return %2, %c0_i32_0 : i32, i32
  }
  func.func @transform_3(%arg0: i32, %arg1: i32) -> (i32, i32) {
    %c1_i32 = arith.constant 1 : i32
    %0 = arith.muli %arg0, %c1_i32 : i32
    %1 = arith.addi %0, %arg1 : i32
    %c0_i32 = arith.constant 0 : i32
    %2 = arith.minsi %1, %c0_i32 : i32
    %c0_i32_0 = arith.constant 0 : i32
    %c0_i32_1 = arith.constant 0 : i32
    return %2, %c0_i32_0 : i32, i32
  }
  func.func @transform_4(%arg0: i32, %arg1: i32) -> (i32, i32, i32) {
    %c0_i32 = arith.constant 0 : i32
    %c0_i32_0 = arith.constant 0 : i32
    %c0_i32_1 = arith.constant 0 : i32
    return %arg0, %c0_i32, %c0_i32_0 : i32, i32, i32
  }
}

</mosaic_0001>

<llo_original>
// kernel: loss_fn.6
$region0: #{loss_fn.6}
  #allocation0 [shape = 'u32[]', space=smem, size = 0x4, offset = 0x4, fixed_abs, tag = 'smem constant byte address 0x4 - core index']
  #allocation1 [shape = 'u32[144,128]{1,0:T(1,128)}', space=vmem, size = 0x12000, scoped, tag = 'internal scratch']
  %s0 = inlined_call_operand.vmem [shape: f32[16,4096], index: 0, kind: input, shape index: {}]
  %s1 = inlined_call_operand.vmem [shape: f32[16,4096], index: 1, kind: input, shape index: {}]
  %s2 = inlined_call_operand.vmem [shape: f32[1,16,16], index: 2, kind: output, shape index: {0}]
  %s3 = inlined_call_operand.vmem [shape: f32[1,16,16], index: 3, kind: output, shape index: {1}]
  %s4 = inlined_call_operand.vmem [shape: f32[1,16,16], index: 4, kind: output, shape index: {2}]
  %5 = xla_tuple %s2, %s3, %s4
  %s6 = sld [smem:[#allocation0]]
  $region34: #{loss_fn.6} parent=0
    _
  %s8 = ssub.s32 1, %s6
  %s9 = scalar_select 0, %s8, %s6
  // Predicated region
  $region2: #{loss_fn.6} parent=0 // pred_check
    _
  $region3: #{loss_fn.6} parent=0 // pred_check_branch
    %11 = sbr.rel (0) target = $region5
  $region4: #{loss_fn.6} parent=0 // pred_region
    _
  $region5: #{loss_fn.6} parent=0 // pred_fallthru
    _
  // Predicated region
  $region6: #{loss_fn.6} parent=0 // pred_check
    _
  $region7: #{loss_fn.6} parent=0 // pred_check_branch
    %13 = sbr.rel (0) target = $region9
  $region8: #{loss_fn.6} parent=0 // pred_region
    _
  $region9: #{loss_fn.6} parent=0 // pred_fallthru
    _
  %v14 = vld [vmem:[%s0] sm:$0xff]
  %v15 = vld [vmem:[%s0 + $0x8] sm:$0xff]
  %v16 = vld [vmem:[%s0 + $0x10] sm:$0xff]
  %v17 = vld [vmem:[%s0 + $0x18] sm:$0xff]
  %v18 = vld [vmem:[%s0 + $0x20] sm:$0xff]
  %v19 = vld [vmem:[%s0 + $0x28] sm:$0xff]
  %v20 = vld [vmem:[%s0 + $0x30] sm:$0xff]
  %v21 = vld [vmem:[%s0 + $0x38] sm:$0xff]
  %v22 = vld [vmem:[%s0 + $0x40] sm:$0xff]
  %v23 = vld [vmem:[%s0 + $0x48] sm:$0xff]
  %v24 = vld [vmem:[%s0 + $0x50] sm:$0xff]
  %v25 = vld [vmem:[%s0 + $0x58] sm:$0xff]
  %v26 = vld [vmem:[%s0 + $0x60] sm:$0xff]
  %v27 = vld [vmem:[%s0 + $0x68] sm:$0xff]
  %v28 = vld [vmem:[%s0 + $0x70] sm:$0xff]
  %v29 = vld [vmem:[%s0 + $0x78] sm:$0xff]
  %v30 = vld [vmem:[%s0 + $0x80] sm:$0xff]
  %v31 = vld [vmem:[%s0 + $0x88] sm:$0xff]
  %v32 = vld [vmem:[%s0 + $0x90] sm:$0xff]
  %v33 = vld [vmem:[%s0 + $0x98] sm:$0xff]
  %v34 = vld [vmem:[%s0 + $0xa0] sm:$0xff]
  %v35 = vld [vmem:[%s0 + $0xa8] sm:$0xff]
  %v36 = vld [vmem:[%s0 + $0xb0] sm:$0xff]
  %v37 = vld [vmem:[%s0 + $0xb8] sm:$0xff]
  %v38 = vld [vmem:[%s0 + $0xc0] sm:$0xff]
  %v39 = vld [vmem:[%s0 + $0xc8] sm:$0xff]
  %v40 = vld [vmem:[%s0 + $0xd0] sm:$0xff]
  %v41 = vld [vmem:[%s0 + $0xd8] sm:$0xff]
  %v42 = vld [vmem:[%s0 + $0xe0] sm:$0xff]
  %v43 = vld [vmem:[%s0 + $0xe8] sm:$0xff]
  %v44 = vld [vmem:[%s0 + $0xf0] sm:$0xff]
  %v45 = vld [vmem:[%s0 + $0xf8] sm:$0xff]
  %v46 = vld [vmem:[%s0 + $0x100] sm:$0xff]
  %v47 = vld [vmem:[%s0 + $0x108] sm:$0xff]
  %v48 = vld [vmem:[%s0 + $0x110] sm:$0xff]
  %v49 = vld [vmem:[%s0 + $0x118] sm:$0xff]
  %v50 = vld [vmem:[%s0 + $0x120] sm:$0xff]
  %v51 = vld [vmem:[%s0 + $0x128] sm:$0xff]
  %v52 = vld [vmem:[%s0 + $0x130] sm:$0xff]
  %v53 = vld [vmem:[%s0 + $0x138] sm:$0xff]
  %v54 = vld [vmem:[%s0 + $0x140] sm:$0xff]
  %v55 = vld [vmem:[%s0 + $0x148] sm:$0xff]
  %v56 = vld [vmem:[%s0 + $0x150] sm:$0xff]
  %v57 = vld [vmem:[%s0 + $0x158] sm:$0xff]
  %v58 = vld [vmem:[%s0 + $0x160] sm:$0xff]
  %v59 = vld [vmem:[%s0 + $0x168] sm:$0xff]
  %v60 = vld [vmem:[%s0 + $0x170] sm:$0xff]
  %v61 = vld [vmem:[%s0 + $0x178] sm:$0xff]
  %v62 = vld [vmem:[%s0 + $0x180] sm:$0xff]
  %v63 = vld [vmem:[%s0 + $0x188] sm:$0xff]
  %v64 = vld [vmem:[%s0 + $0x190] sm:$0xff]
  %v65 = vld [vmem:[%s0 + $0x198] sm:$0xff]
  %v66 = vld [vmem:[%s0 + $0x1a0] sm:$0xff]
  %v67 = vld [vmem:[%s0 + $0x1a8] sm:$0xff]
  %v68 = vld [vmem:[%s0 + $0x1b0] sm:$0xff]
  %v69 = vld [vmem:[%s0 + $0x1b8] sm:$0xff]
  %v70 = vld [vmem:[%s0 + $0x1c0] sm:$0xff]
  %v71 = vld [vmem:[%s0 + $0x1c8] sm:$0xff]
  %v72 = vld [vmem:[%s0 + $0x1d0] sm:$0xff]
  %v73 = vld [vmem:[%s0 + $0x1d8] sm:$0xff]
  %v74 = vld [vmem:[%s0 + $0x1e0] sm:$0xff]
  %v75 = vld [vmem:[%s0 + $0x1e8] sm:$0xff]
  %v76 = vld [vmem:[%s0 + $0x1f0] sm:$0xff]
  %v77 = vld [vmem:[%s0 + $0x1f8] sm:$0xff]
  %v78 = vld [vmem:[%s1] sm:$0xff]
  %v79 = vld [vmem:[%s1 + $0x8] sm:$0xff]
  %v80 = vld [vmem:[%s1 + $0x10] sm:$0xff]
  %v81 = vld [vmem:[%s1 + $0x18] sm:$0xff]
  %v82 = vld [vmem:[%s1 + $0x20] sm:$0xff]
  %v83 = vld [vmem:[%s1 + $0x28] sm:$0xff]
  %v84 = vld [vmem:[%s1 + $0x30] sm:$0xff]
  %v85 = vld [vmem:[%s1 + $0x38] sm:$0xff]
  %v86 = vld [vmem:[%s1 + $0x40] sm:$0xff]
  %v87 = vld [vmem:[%s1 + $0x48] sm:$0xff]
  %v88 = vld [vmem:[%s1 + $0x50] sm:$0xff]
  %v89 = vld [vmem:[%s1 + $0x58] sm:$0xff]
  %v90 = vld [vmem:[%s1 + $0x60] sm:$0xff]
  %v91 = vld [vmem:[%s1 + $0x68] sm:$0xff]
  %v92 = vld [vmem:[%s1 + $0x70] sm:$0xff]
  %v93 = vld [vmem:[%s1 + $0x78] sm:$0xff]
  %v94 = vld [vmem:[%s1 + $0x80] sm:$0xff]
  %v95 = vld [vmem:[%s1 + $0x88] sm:$0xff]
  %v96 = vld [vmem:[%s1 + $0x90] sm:$0xff]
  %v97 = vld [vmem:[%s1 + $0x98] sm:$0xff]
  %v98 = vld [vmem:[%s1 + $0xa0] sm:$0xff]
  %v99 = vld [vmem:[%s1 + $0xa8] sm:$0xff]
  %v100 = vld [vmem:[%s1 + $0xb0] sm:$0xff]
  %v101 = vld [vmem:[%s1 + $0xb8] sm:$0xff]
  %v102 = vld [vmem:[%s1 + $0xc0] sm:$0xff]
  %v103 = vld [vmem:[%s1 + $0xc8] sm:$0xff]
  %v104 = vld [vmem:[%s1 + $0xd0] sm:$0xff]
  %v105 = vld [vmem:[%s1 + $0xd8] sm:$0xff]
  %v106 = vld [vmem:[%s1 + $0xe0] sm:$0xff]
  %v107 = vld [vmem:[%s1 + $0xe8] sm:$0xff]
  %v108 = vld [vmem:[%s1 + $0xf0] sm:$0xff]
  %v109 = vld [vmem:[%s1 + $0xf8] sm:$0xff]
  %v110 = vld [vmem:[%s1 + $0x100] sm:$0xff]
  %v111 = vld [vmem:[%s1 + $0x108] sm:$0xff]
  %v112 = vld [vmem:[%s1 + $0x110] sm:$0xff]
  %v113 = vld [vmem:[%s1 + $0x118] sm:$0xff]
  %v114 = vld [vmem:[%s1 + $0x120] sm:$0xff]
  %v115 = vld [vmem:[%s1 + $0x128] sm:$0xff]
  %v116 = vld [vmem:[%s1 + $0x130] sm:$0xff]
  %v117 = vld [vmem:[%s1 + $0x138] sm:$0xff]
  %v118 = vld [vmem:[%s1 + $0x140] sm:$0xff]
  %v119 = vld [vmem:[%s1 + $0x148] sm:$0xff]
  %v120 = vld [vmem:[%s1 + $0x150] sm:$0xff]
  %v121 = vld [vmem:[%s1 + $0x158] sm:$0xff]
  %v122 = vld [vmem:[%s1 + $0x160] sm:$0xff]
  %v123 = vld [vmem:[%s1 + $0x168] sm:$0xff]
  %v124 = vld [vmem:[%s1 + $0x170] sm:$0xff]
  %v125 = vld [vmem:[%s1 + $0x178] sm:$0xff]
  %v126 = vld [vmem:[%s1 + $0x180] sm:$0xff]
  %v127 = vld [vmem:[%s1 + $0x188] sm:$0xff]
  %v128 = vld [vmem:[%s1 + $0x190] sm:$0xff]
  %v129 = vld [vmem:[%s1 + $0x198] sm:$0xff]
  %v130 = vld [vmem:[%s1 + $0x1a0] sm:$0xff]
  %v131 = vld [vmem:[%s1 + $0x1a8] sm:$0xff]
  %v132 = vld [vmem:[%s1 + $0x1b0] sm:$0xff]
  %v133 = vld [vmem:[%s1 + $0x1b8] sm:$0xff]
  %v134 = vld [vmem:[%s1 + $0x1c0] sm:$0xff]
  %v135 = vld [vmem:[%s1 + $0x1c8] sm:$0xff]
  %v136 = vld [vmem:[%s1 + $0x1d0] sm:$0xff]
  %v137 = vld [vmem:[%s1 + $0x1d8] sm:$0xff]
  %v138 = vld [vmem:[%s1 + $0x1e0] sm:$0xff]
  %v139 = vld [vmem:[%s1 + $0x1e8] sm:$0xff]
  %v140 = vld [vmem:[%s1 + $0x1f0] sm:$0xff]
  %v141 = vld [vmem:[%s1 + $0x1f8] sm:$0xff]
  %v142 = vadd.f32 %v14, %v15
  %v143 = vadd.f32 %v142, %v16
  %v144 = vadd.f32 %v143, %v17
  %v145 = vadd.f32 %v144, %v18
  %v146 = vadd.f32 %v145, %v19
  %v147 = vadd.f32 %v146, %v20
  %v148 = vadd.f32 %v147, %v21
  %v149 = vadd.f32 %v148, %v22
  %v150 = vadd.f32 %v149, %v23
  %v151 = vadd.f32 %v150, %v24
  %v152 = vadd.f32 %v151, %v25
  %v153 = vadd.f32 %v152, %v26
  %v154 = vadd.f32 %v153, %v27
  %v155 = vadd.f32 %v154, %v28
  %v156 = vadd.f32 %v155, %v29
  %v157 = vadd.f32 %v156, %v30
  %v158 = vadd.f32 %v157, %v31
  %v159 = vadd.f32 %v158, %v32
  %v160 = vadd.f32 %v159, %v33
  %v161 = vadd.f32 %v160, %v34
  %v162 = vadd.f32 %v161, %v35
  %v163 = vadd.f32 %v162, %v36
  %v164 = vadd.f32 %v163, %v37
  %v165 = vadd.f32 %v164, %v38
  %v166 = vadd.f32 %v165, %v39
  %v167 = vadd.f32 %v166, %v40
  %v168 = vadd.f32 %v167, %v41
  %v169 = vadd.f32 %v168, %v42
  %v170 = vadd.f32 %v169, %v43
  %v171 = vadd.f32 %v170, %v44
  %v172 = vadd.f32 %v171, %v45
  %173 = vadd.xlane.f32.xlu0 %v172
  %v174 = vpop.xlane.xlu0 %173
  %v175 = vadd.f32 %v46, %v47
  %v176 = vadd.f32 %v175, %v48
  %v177 = vadd.f32 %v176, %v49
  %v178 = vadd.f32 %v177, %v50
  %v179 = vadd.f32 %v178, %v51
  %v180 = vadd.f32 %v179, %v52
  %v181 = vadd.f32 %v180, %v53
  %v182 = vadd.f32 %v181, %v54
  %v183 = vadd.f32 %v182, %v55
  %v184 = vadd.f32 %v183, %v56
  %v185 = vadd.f32 %v184, %v57
  %v186 = vadd.f32 %v185, %v58
  %v187 = vadd.f32 %v186, %v59
  %v188 = vadd.f32 %v187, %v60
  %v189 = vadd.f32 %v188, %v61
  %v190 = vadd.f32 %v189, %v62
  %v191 = vadd.f32 %v190, %v63
  %v192 = vadd.f32 %v191, %v64
  %v193 = vadd.f32 %v192, %v65
  %v194 = vadd.f32 %v193, %v66
  %v195 = vadd.f32 %v194, %v67
  %v196 = vadd.f32 %v195, %v68
  %v197 = vadd.f32 %v196, %v69
  %v198 = vadd.f32 %v197, %v70
  %v199 = vadd.f32 %v198, %v71
  %v200 = vadd.f32 %v199, %v72
  %v201 = vadd.f32 %v200, %v73
  %v202 = vadd.f32 %v201, %v74
  %v203 = vadd.f32 %v202, %v75
  %v204 = vadd.f32 %v203, %v76
  %v205 = vadd.f32 %v204, %v77
  %206 = vadd.xlane.f32.xlu0 %v205
  %v207 = vpop.xlane.xlu0 %206
  %v208 = vadd.f32 %v78, %v79
  %v209 = vadd.f32 %v208, %v80
  %v210 = vadd.f32 %v209, %v81
  %v211 = vadd.f32 %v210, %v82
  %v212 = vadd.f32 %v211, %v83
  %v213 = vadd.f32 %v212, %v84
  %v214 = vadd.f32 %v213, %v85
  %v215 = vadd.f32 %v214, %v86
  %v216 = vadd.f32 %v215, %v87
  %v217 = vadd.f32 %v216, %v88
  %v218 = vadd.f32 %v217, %v89
  %v219 = vadd.f32 %v218, %v90
  %v220 = vadd.f32 %v219, %v91
  %v221 = vadd.f32 %v220, %v92
  %v222 = vadd.f32 %v221, %v93
  %v223 = vadd.f32 %v222, %v94
  %v224 = vadd.f32 %v223, %v95
  %v225 = vadd.f32 %v224, %v96
  %v226 = vadd.f32 %v225, %v97
  %v227 = vadd.f32 %v226, %v98
  %v228 = vadd.f32 %v227, %v99
  %v229 = vadd.f32 %v228, %v100
  %v230 = vadd.f32 %v229, %v101
  %v231 = vadd.f32 %v230, %v102
  %v232 = vadd.f32 %v231, %v103
  %v233 = vadd.f32 %v232, %v104
  %v234 = vadd.f32 %v233, %v105
  %v235 = vadd.f32 %v234, %v106
  %v236 = vadd.f32 %v235, %v107
  %v237 = vadd.f32 %v236, %v108
  %v238 = vadd.f32 %v237, %v109
  %239 = vadd.xlane.f32.xlu0 %v238
  %v240 = vpop.xlane.xlu0 %239
  %v241 = vadd.f32 %v110, %v111
  %v242 = vadd.f32 %v241, %v112
  %v243 = vadd.f32 %v242, %v113
  %v244 = vadd.f32 %v243, %v114
  %v245 = vadd.f32 %v244, %v115
  %v246 = vadd.f32 %v245, %v116
  %v247 = vadd.f32 %v246, %v117
  %v248 = vadd.f32 %v247, %v118
  %v249 = vadd.f32 %v248, %v119
  %v250 = vadd.f32 %v249, %v120
  %v251 = vadd.f32 %v250, %v121
  %v252 = vadd.f32 %v251, %v122
  %v253 = vadd.f32 %v252, %v123
  %v254 = vadd.f32 %v253, %v124
  %v255 = vadd.f32 %v254, %v125
  %v256 = vadd.f32 %v255, %v126
  %v257 = vadd.f32 %v256, %v127
  %v258 = vadd.f32 %v257, %v128
  %v259 = vadd.f32 %v258, %v129
  %v260 = vadd.f32 %v259, %v130
  %v261 = vadd.f32 %v260, %v131
  %v262 = vadd.f32 %v261, %v132
  %v263 = vadd.f32 %v262, %v133
  %v264 = vadd.f32 %v263, %v134
  %v265 = vadd.f32 %v264, %v135
  %v266 = vadd.f32 %v265, %v136
  %v267 = vadd.f32 %v266, %v137
  %v268 = vadd.f32 %v267, %v138
  %v269 = vadd.f32 %v268, %v139
  %v270 = vadd.f32 %v269, %v140
  %v271 = vadd.f32 %v270, %v141
  %272 = vadd.xlane.f32.xlu0 %v271
  %v273 = vpop.xlane.xlu0 %272
  %274 = vmatprep.subr.mxu0 0.0
  %275 = vmatpush1.xpose.msra.mxu0 0.0
  %276 = vmatprep.subr.mxu0 0.0
  %277 = vmatpush1.xpose.msra.mxu0 0.0
  %278 = vmatprep.subr.mxu0 0.0
  %279 = vmatpush1.xpose.msra.mxu0 0.0
  %280 = vmatprep.subr.mxu0 0.0
  %281 = vmatpush1.xpose.msra.mxu0 0.0
  %282 = vmatprep.subr.mxu0 0.0
  %283 = vmatpush1.xpose.msra.mxu0 0.0
  %284 = vmatprep.subr.mxu0 0.0
  %285 = vmatpush1.xpose.msra.mxu0 0.0
  %286 = vmatprep.subr.mxu0 0.0
  %287 = vmatpush1.xpose.msra.mxu0 0.0
  %288 = vmatprep.subr.mxu0 0.0
  %289 = vmatpush1.xpose.msra.mxu0 0.0
  %290 = vmatprep.subr.mxu0 0.0
  %291 = vmatpush1.xpose.msra.mxu0 0.0
  %292 = vmatprep.subr.mxu0 0.0
  %293 = vmatpush1.xpose.msra.mxu0 0.0
  %294 = vmatprep.subr.mxu0 0.0
  %295 = vmatpush1.xpose.msra.mxu0 0.0
  %296 = vmatprep.subr.mxu0 0.0
  %297 = vmatpush1.xpose.msra.mxu0 0.0
  %298 = vmatprep.subr.mxu0 0.0
  %299 = vmatpush1.xpose.msra.mxu0 0.0
  %300 = vmatprep.subr.mxu0 0.0
  %301 = vmatpush1.xpose.msra.mxu0 0.0
  %302 = vmatprep.subr.mxu0 %v47
  %303 = vmatpush1.xpose.msra.mxu0 %v46
  %304 = vmatprep.subr.mxu0 %v15
  %305 = vmatpush1.xpose.msra.mxu0 %v14
  %306 = vmatprep.subr.mxu0 0.0
  %307 = vmatpush2.xpose.msra.mxu0 0.0
  %308 = vmatprep.subr.mxu0 0.0
  %309 = vmatpush2.xpose.msra.mxu0 0.0
  %310 = vmatprep.subr.mxu0 0.0
  %311 = vmatpush2.xpose.msra.mxu0 0.0
  %312 = vmatprep.subr.mxu0 0.0
  %313 = vmatpush2.xpose.msra.mxu0 0.0
  %314 = vmatprep.subr.mxu0 0.0
  %315 = vmatpush2.xpose.msra.mxu0 0.0
  %316 = vmatprep.subr.mxu0 0.0
  %317 = vmatpush2.xpose.msra.mxu0 0.0
  %318 = vmatprep.subr.mxu0 0.0
  %319 = vmatpush2.xpose.msra.mxu0 0.0
  %320 = vmatprep.subr.mxu0 0.0
  %321 = vmatpush2.xpose.msra.mxu0 0.0
  %322 = vmatprep.subr.mxu0 0.0
  %323 = vmatpush2.xpose.msra.mxu0 0.0
  %324 = vmatprep.subr.mxu0 0.0
  %325 = vmatpush2.xpose.msra.mxu0 0.0
  %326 = vmatprep.subr.mxu0 0.0
  %327 = vmatpush2.xpose.msra.mxu0 0.0
  %328 = vmatprep.subr.mxu0 0.0
  %329 = vmatpush2.xpose.msra.mxu0 0.0
  %330 = vmatprep.subr.mxu0 0.0
  %331 = vmatpush2.xpose.msra.mxu0 0.0
  %332 = vmatprep.subr.mxu0 0.0
  %333 = vmatpush2.xpose.msra.mxu0 0.0
  %334 = vmatprep.subr.mxu0 0.0
  %335 = vmatpush2.xpose.msra.mxu0 0.0
  %336 = vmatprep.subr.mxu0 0.0
  %337 = vmatpush2.xpose.msra.mxu0 0.0
  %338 = vmatprep.mubr.f32.mxu0 %v15
  %339 = vmatmul.mubr.f32.gmra.mxu0 %v14
  %v340 = vpop.f32.mrf.mxu0
  %v341 = vadd.f32 0.0, %v340
  %v342 = vpop.f32.mrf.mxu0
  %343 = vmatprep.mubr.f32.mxu0 %v47
  %344 = vmatmul.mubr.f32.gmra.mxu0 %v46
  %v345 = vpop.f32.mrf.mxu0
  %v346 = vadd.f32 0.0, %v345
  %v347 = vpop.f32.mrf.mxu0
  %348 = vdwg.mxu0
  %349 = vmatprep.subr.mxu0 0.0
  %350 = vmatpush1.xpose.msra.mxu0 0.0
  %351 = vmatprep.subr.mxu0 0.0
  %352 = vmatpush1.xpose.msra.mxu0 0.0
  %353 = vmatprep.subr.mxu0 0.0
  %354 = vmatpush1.xpose.msra.mxu0 0.0
  %355 = vmatprep.subr.mxu0 0.0
  %356 = vmatpush1.xpose.msra.mxu0 0.0
  %357 = vmatprep.subr.mxu0 0.0
  %358 = vmatpush1.xpose.msra.mxu0 0.0
  %359 = vmatprep.subr.mxu0 0.0
  %360 = vmatpush1.xpose.msra.mxu0 0.0
  %361 = vmatprep.subr.mxu0 0.0
  %362 = vmatpush1.xpose.msra.mxu0 0.0
  %363 = vmatprep.subr.mxu0 0.0
  %364 = vmatpush1.xpose.msra.mxu0 0.0
  %365 = vmatprep.subr.mxu0 0.0
  %366 = vmatpush1.xpose.msra.mxu0 0.0
  %367 = vmatprep.subr.mxu0 0.0
  %368 = vmatpush1.xpose.msra.mxu0 0.0
  %369 = vmatprep.subr.mxu0 0.0
  %370 = vmatpush1.xpose.msra.mxu0 0.0
  %371 = vmatprep.subr.mxu0 0.0
  %372 = vmatpush1.xpose.msra.mxu0 0.0
  %373 = vmatprep.subr.mxu0 0.0
  %374 = vmatpush1.xpose.msra.mxu0 0.0
  %375 = vmatprep.subr.mxu0 0.0
  %376 = vmatpush1.xpose.msra.mxu0 0.0
  %377 = vmatprep.subr.mxu0 %v49
  %378 = vmatpush1.xpose.msra.mxu0 %v48
  %379 = vmatprep.subr.mxu0 %v17
  %380 = vmatpush1.xpose.msra.mxu0 %v16
  %381 = vmatprep.subr.mxu0 0.0
  %382 = vmatpush2.xpose.msra.mxu0 0.0
  %383 = vmatprep.subr.mxu0 0.0
  %384 = vmatpush2.xpose.msra.mxu0 0.0
  %385 = vmatprep.subr.mxu0 0.0
  %386 = vmatpush2.xpose.msra.mxu0 0.0
  %387 = vmatprep.subr.mxu0 0.0
  %388 = vmatpush2.xpose.msra.mxu0 0.0
  %389 = vmatprep.subr.mxu0 0.0
  %390 = vmatpush2.xpose.msra.mxu0 0.0
  %391 = vmatprep.subr.mxu0 0.0
  %392 = vmatpush2.xpose.msra.mxu0 0.0
  %393 = vmatprep.subr.mxu0 0.0
  %394 = vmatpush2.xpose.msra.mxu0 0.0
  %395 = vmatprep.subr.mxu0 0.0
  %396 = vmatpush2.xpose.msra.mxu0 0.0
  %397 = vmatprep.subr.mxu0 0.0
  %398 = vmatpush2.xpose.msra.mxu0 0.0
  %399 = vmatprep.subr.mxu0 0.0
  %400 = vmatpush2.xpose.msra.mxu0 0.0
  %401 = vmatprep.subr.mxu0 0.0
  %402 = vmatpush2.xpose.msra.mxu0 0.0
  %403 = vmatprep.subr.mxu0 0.0
  %404 = vmatpush2.xpose.msra.mxu0 0.0
  %405 = vmatprep.subr.mxu0 0.0
  %406 = vmatpush2.xpose.msra.mxu0 0.0
  %407 = vmatprep.subr.mxu0 0.0
  %408 = vmatpush2.xpose.msra.mxu0 0.0
  %409 = vmatprep.subr.mxu0 0.0
  %410 = vmatpush2.xpose.msra.mxu0 0.0
  %411 = vmatprep.subr.mxu0 0.0
  %412 = vmatpush2.xpose.msra.mxu0 0.0
  %413 = vmatprep.mubr.f32.mxu0 %v17
  %414 = vmatmul.mubr.f32.gmra.mxu0 %v16
  %v415 = vpop.f32.mrf.mxu0
  %v416 = vadd.f32 %v341, %v415
  %v417 = vpop.f32.mrf.mxu0
  %418 = vmatprep.mubr.f32.mxu0 %v49
  %419 = vmatmul.mubr.f32.gmra.mxu0 %v48
  %v420 = vpop.f32.mrf.mxu0
  %v421 = vadd.f32 %v346, %v420
  %v422 = vpop.f32.mrf.mxu0
  %423 = vdwg.mxu0
  %424 = vmatprep.subr.mxu0 0.0
  %425 = vmatpush1.xpose.msra.mxu0 0.0
  %426 = vmatprep.subr.mxu0 0.0
  %427 = vmatpush1.xpose.msra.mxu0 0.0
  %428 = vmatprep.subr.mxu0 0.0
  %429 = vmatpush1.xpose.msra.mxu0 0.0
  %430 = vmatprep.subr.mxu0 0.0
  %431 = vmatpush1.xpose.msra.mxu0 0.0
  %432 = vmatprep.subr.mxu0 0.0
  %433 = vmatpush1.xpose.msra.mxu0 0.0
  %434 = vmatprep.subr.mxu0 0.0
  %435 = vmatpush1.xpose.msra.mxu0 0.0
  %436 = vmatprep.subr.mxu0 0.0
  %437 = vmatpush1.xpose.msra.mxu0 0.0
  %438 = vmatprep.subr.mxu0 0.0
  %439 = vmatpush1.xpose.msra.mxu0 0.0
  %440 = vmatprep.subr.mxu0 0.0
  %441 = vmatpush1.xpose.msra.mxu0 0.0
  %442 = vmatprep.subr.mxu0 0.0
  %443 = vmatpush1.xpose.msra.mxu0 0.0
  %444 = vmatprep.subr.mxu0 0.0
  %445 = vmatpush1.xpose.msra.mxu0 0.0
  %446 = vmatprep.subr.mxu0 0.0
  %447 = vmatpush1.xpose.msra.mxu0 0.0
  %448 = vmatprep.subr.mxu0 0.0
  %449 = vmatpush1.xpose.msra.mxu0 0.0
  %450 = vmatprep.subr.mxu0 0.0
  %451 = vmatpush1.xpose.msra.mxu0 0.0
  %452 = vmatprep.subr.mxu0 %v51
  %453 = vmatpush1.xpose.msra.mxu0 %v50
  %454 = vmatprep.subr.mxu0 %v19
  %455 = vmatpush1.xpose.msra.mxu0 %v18
  %456 = vmatprep.subr.mxu0 0.0
  %457 = vmatpush2.xpose.msra.mxu0 0.0
  %458 = vmatprep.subr.mxu0 0.0
  %459 = vmatpush2.xpose.msra.mxu0 0.0
  %460 = vmatprep.subr.mxu0 0.0
  %461 = vmatpush2.xpose.msra.mxu0 0.0
  %462 = vmatprep.subr.mxu0 0.0
  %463 = vmatpush2.xpose.msra.mxu0 0.0
  %464 = vmatprep.subr.mxu0 0.0
  %465 = vmatpush2.xpose.msra.mxu0 0.0
  %466 = vmatprep.subr.mxu0 0.0
  %467 = vmatpush2.xpose.msra.mxu0 0.0
  %468 = vmatprep.subr.mxu0 0.0
  %469 = vmatpush2.xpose.msra.mxu0 0.0
  %470 = vmatprep.subr.mxu0 0.0
  %471 = vmatpush2.xpose.msra.mxu0 0.0
  %472 = vmatprep.subr.mxu0 0.0
  %473 = vmatpush2.xpose.msra.mxu0 0.0
  %474 = vmatprep.subr.mxu0 0.0
  %475 = vmatpush2.xpose.msra.mxu0 0.0
  %476 = vmatprep.subr.mxu0 0.0
  %477 = vmatpush2.xpose.msra.mxu0 0.0
  %478 = vmatprep.subr.mxu0 0.0
  %479 = vmatpush2.xpose.msra.mxu0 0.0
  %480 = vmatprep.subr.mxu0 0.0
  %481 = vmatpush2.xpose.msra.mxu0 0.0
  %482 = vmatprep.subr.mxu0 0.0
  %483 = vmatpush2.xpose.msra.mxu0 0.0
  %484 = vmatprep.subr.mxu0 0.0
  %485 = vmatpush2.xpose.msra.mxu0 0.0
  %486 = vmatprep.subr.mxu0 0.0
  %487 = vmatpush2.xpose.msra.mxu0 0.0
  %488 = vmatprep.mubr.f32.mxu0 %v19
  %489 = vmatmul.mubr.f32.gmra.mxu0 %v18
  %v490 = vpop.f32.mrf.mxu0
  %v491 = vadd.f32 %v416, %v490
  %v492 = vpop.f32.mrf.mxu0
  %493 = vmatprep.mubr.f32.mxu0 %v51
  %494 = vmatmul.mubr.f32.gmra.mxu0 %v50
  %v495 = vpop.f32.mrf.mxu0
  %v496 = vadd.f32 %v421, %v495
  %v497 = vpop.f32.mrf.mxu0
  %498 = vdwg.mxu0
  %499 = vmatprep.subr.mxu0 0.0
  %500 = vmatpush1.xpose.msra.mxu0 0.0
  %501 = vmatprep.subr.mxu0 0.0
  %502 = vmatpush1.xpose.msra.mxu0 0.0
  %503 = vmatprep.subr.mxu0 0.0
  %504 = vmatpush1.xpose.msra.mxu0 0.0
  %505 = vmatprep.subr.mxu0 0.0
  %506 = vmatpush1.xpose.msra.mxu0 0.0
  %507 = vmatprep.subr.mxu0 0.0
  %508 = vmatpush1.xpose.msra.mxu0 0.0
  %509 = vmatprep.subr.mxu0 0.0
  %510 = vmatpush1.xpose.msra.mxu0 0.0
  %511 = vmatprep.subr.mxu0 0.0
  %512 = vmatpush1.xpose.msra.mxu0 0.0
  %513 = vmatprep.subr.mxu0 0.0
  %514 = vmatpush1.xpose.msra.mxu0 0.0
  %515 = vmatprep.subr.mxu0 0.0
  %516 = vmatpush1.xpose.msra.mxu0 0.0
  %517 = vmatprep.subr.mxu0 0.0
  %518 = vmatpush1.xpose.msra.mxu0 0.0
  %519 = vmatprep.subr.mxu0 0.0
  %520 = vmatpush1.xpose.msra.mxu0 0.0
  %521 = vmatprep.subr.mxu0 0.0
  %522 = vmatpush1.xpose.msra.mxu0 0.0
  %523 = vmatprep.subr.mxu0 0.0
  %524 = vmatpush1.xpose.msra.mxu0 0.0
  %525 = vmatprep.subr.mxu0 0.0
  %526 = vmatpush1.xpose.msra.mxu0 0.0
  %527 = vmatprep.subr.mxu0 %v53
  %528 = vmatpush1.xpose.msra.mxu0 %v52
  %529 = vmatprep.subr.mxu0 %v21
  %530 = vmatpush1.xpose.msra.mxu0 %v20
  %531 = vmatprep.subr.mxu0 0.0
  %532 = vmatpush2.xpose.msra.mxu0 0.0
  %533 = vmatprep.subr.mxu0 0.0
  %534 = vmatpush2.xpose.msra.mxu0 0.0
  %535 = vmatprep.subr.mxu0 0.0
  %536 = vmatpush2.xpose.msra.mxu0 0.0
  %537 = vmatprep.subr.mxu0 0.0
  %538 = vmatpush2.xpose.msra.mxu0 0.0
  %539 = vmatprep.subr.mxu0 0.0
  %540 = vmatpush2.xpose.msra.mxu0 0.0
  %541 = vmatprep.subr.mxu0 0.0
  %542 = vmatpush2.xpose.msra.mxu0 0.0
  %543 = vmatprep.subr.mxu0 0.0
  %544 = vmatpush2.xpose.msra.mxu0 0.0
  %545 = vmatprep.subr.mxu0 0.0
  %546 = vmatpush2.xpose.msra.mxu0 0.0
  %547 = vmatprep.subr.mxu0 0.0
  %548 = vmatpush2.xpose.msra.mxu0 0.0
  %549 = vmatprep.subr.mxu0 0.0
  %550 = vmatpush2.xpose.msra.mxu0 0.0
  %551 = vmatprep.subr.mxu0 0.0
  %552 = vmatpush2.xpose.msra.mxu0 0.0
  %553 = vmatprep.subr.mxu0 0.0
  %554 = vmatpush2.xpose.msra.mxu0 0.0
  %555 = vmatprep.subr.mxu0 0.0
  %556 = vmatpush2.xpose.msra.mxu0 0.0
  %557 = vmatprep.subr.mxu0 0.0
  %558 = vmatpush2.xpose.msra.mxu0 0.0
  %559 = vmatprep.subr.mxu0 0.0
  %560 = vmatpush2.xpose.msra.mxu0 0.0
  %561 = vmatprep.subr.mxu0 0.0
  %562 = vmatpush2.xpose.msra.mxu0 0.0
  %563 = vmatprep.mubr.f32.mxu0 %v21
  %564 = vmatmul.mubr.f32.gmra.mxu0 %v20
  %v565 = vpop.f32.mrf.mxu0
  %v566 = vadd.f32 %v491, %v565
  %v567 = vpop.f32.mrf.mxu0
  %568 = vmatprep.mubr.f32.mxu0 %v53
  %569 = vmatmul.mubr.f32.gmra.mxu0 %v52
  %v570 = vpop.f32.mrf.mxu0
  %v571 = vadd.f32 %v496, %v570
  %v572 = vpop.f32.mrf.mxu0
  %573 = vdwg.mxu0
  %574 = vmatprep.subr.mxu0 0.0
  %575 = vmatpush1.xpose.msra.mxu0 0.0
  %576 = vmatprep.subr.mxu0 0.0
  %577 = vmatpush1.xpose.msra.mxu0 0.0
  %578 = vmatprep.subr.mxu0 0.0
  %579 = vmatpush1.xpose.msra.mxu0 0.0
  %580 = vmatprep.subr.mxu0 0.0
  %581 = vmatpush1.xpose.msra.mxu0 0.0
  %582 = vmatprep.subr.mxu0 0.0
  %583 = vmatpush1.xpose.msra.mxu0 0.0
  %584 = vmatprep.subr.mxu0 0.0
  %585 = vmatpush1.xpose.msra.mxu0 0.0
  %586 = vmatprep.subr.mxu0 0.0
  %587 = vmatpush1.xpose.msra.mxu0 0.0
  %588 = vmatprep.subr.mxu0 0.0
  %589 = vmatpush1.xpose.msra.mxu0 0.0
  %590 = vmatprep.subr.mxu0 0.0
  %591 = vmatpush1.xpose.msra.mxu0 0.0
  %592 = vmatprep.subr.mxu0 0.0
  %593 = vmatpush1.xpose.msra.mxu0 0.0
  %594 = vmatprep.subr.mxu0 0.0
  %595 = vmatpush1.xpose.msra.mxu0 0.0
  %596 = vmatprep.subr.mxu0 0.0
  %597 = vmatpush1.xpose.msra.mxu0 0.0
  %598 = vmatprep.subr.mxu0 0.0
  %599 = vmatpush1.xpose.msra.mxu0 0.0
  %600 = vmatprep.subr.mxu0 0.0
  %601 = vmatpush1.xpose.msra.mxu0 0.0
  %602 = vmatprep.subr.mxu0 %v55
  %603 = vmatpush1.xpose.msra.mxu0 %v54
  %604 = vmatprep.subr.mxu0 %v23
  %605 = vmatpush1.xpose.msra.mxu0 %v22
  %606 = vmatprep.subr.mxu0 0.0
  %607 = vmatpush2.xpose.msra.mxu0 0.0
  %608 = vmatprep.subr.mxu0 0.0
  %609 = vmatpush2.xpose.msra.mxu0 0.0
  %610 = vmatprep.subr.mxu0 0.0
  %611 = vmatpush2.xpose.msra.mxu0 0.0
  %612 = vmatprep.subr.mxu0 0.0
  %613 = vmatpush2.xpose.msra.mxu0 0.0
  %614 = vmatprep.subr.mxu0 0.0
  %615 = vmatpush2.xpose.msra.mxu0 0.0
  %616 = vmatprep.subr.mxu0 0.0
  %617 = vmatpush2.xpose.msra.mxu0 0.0
  %618 = vmatprep.subr.mxu0 0.0
  %619 = vmatpush2.xpose.msra.mxu0 0.0
  %620 = vmatprep.subr.mxu0 0.0
  %621 = vmatpush2.xpose.msra.mxu0 0.0
  %622 = vmatprep.subr.mxu0 0.0
  %623 = vmatpush2.xpose.msra.mxu0 0.0
  %624 = vmatprep.subr.mxu0 0.0
  %625 = vmatpush2.xpose.msra.mxu0 0.0
  %626 = vmatprep.subr.mxu0 0.0
  %627 = vmatpush2.xpose.msra.mxu0 0.0
  %628 = vmatprep.subr.mxu0 0.0
  %629 = vmatpush2.xpose.msra.mxu0 0.0
  %630 = vmatprep.subr.mxu0 0.0
  %631 = vmatpush2.xpose.msra.mxu0 0.0
  %632 = vmatprep.subr.mxu0 0.0
  %633 = vmatpush2.xpose.msra.mxu0 0.0
  %634 = vmatprep.subr.mxu0 0.0
  %635 = vmatpush2.xpose.msra.mxu0 0.0
  %636 = vmatprep.subr.mxu0 0.0
  %637 = vmatpush2.xpose.msra.mxu0 0.0
  %638 = vmatprep.mubr.f32.mxu0 %v23
  %639 = vmatmul.mubr.f32.gmra.mxu0 %v22
  %v640 = vpop.f32.mrf.mxu0
  %v641 = vadd.f32 %v566, %v640
  %v642 = vpop.f32.mrf.mxu0
  %643 = vmatprep.mubr.f32.mxu0 %v55
  %644 = vmatmul.mubr.f32.gmra.mxu0 %v54
  %v645 = vpop.f32.mrf.mxu0
  %v646 = vadd.f32 %v571, %v645
  %v647 = vpop.f32.mrf.mxu0
  %648 = vdwg.mxu0
  %649 = vmatprep.subr.mxu0 0.0
  %650 = vmatpush1.xpose.msra.mxu0 0.0
  %651 = vmatprep.subr.mxu0 0.0
  %652 = vmatpush1.xpose.msra.mxu0 0.0
  %653 = vmatprep.subr.mxu0 0.0
  %654 = vmatpush1.xpose.msra.mxu0 0.0
  %655 = vmatprep.subr.mxu0 0.0
  %656 = vmatpush1.xpose.msra.mxu0 0.0
  %657 = vmatprep.subr.mxu0 0.0
  %658 = vmatpush1.xpose.msra.mxu0 0.0
  %659 = vmatprep.subr.mxu0 0.0
  %660 = vmatpush1.xpose.msra.mxu0 0.0
  %661 = vmatprep.subr.mxu0 0.0
  %662 = vmatpush1.xpose.msra.mxu0 0.0
  %663 = vmatprep.subr.mxu0 0.0
  %664 = vmatpush1.xpose.msra.mxu0 0.0
  %665 = vmatprep.subr.mxu0 0.0
  %666 = vmatpush1.xpose.msra.mxu0 0.0
  %667 = vmatprep.subr.mxu0 0.0
  %668 = vmatpush1.xpose.msra.mxu0 0.0
  %669 = vmatprep.subr.mxu0 0.0
  %670 = vmatpush1.xpose.msra.mxu0 0.0
  %671 = vmatprep.subr.mxu0 0.0
  %672 = vmatpush1.xpose.msra.mxu0 0.0
  %673 = vmatprep.subr.mxu0 0.0
  %674 = vmatpush1.xpose.msra.mxu0 0.0
  %675 = vmatprep.subr.mxu0 0.0
  %676 = vmatpush1.xpose.msra.mxu0 0.0
  %677 = vmatprep.subr.mxu0 %v57
  %678 = vmatpush1.xpose.msra.mxu0 %v56
  %679 = vmatprep.subr.mxu0 %v25
  %680 = vmatpush1.xpose.msra.mxu0 %v24
  %681 = vmatprep.subr.mxu0 0.0
  %682 = vmatpush2.xpose.msra.mxu0 0.0
  %683 = vmatprep.subr.mxu0 0.0
  %684 = vmatpush2.xpose.msra.mxu0 0.0
  %685 = vmatprep.subr.mxu0 0.0
  %686 = vmatpush2.xpose.msra.mxu0 0.0
  %687 = vmatprep.subr.mxu0 0.0
  %688 = vmatpush2.xpose.msra.mxu0 0.0
  %689 = vmatprep.subr.mxu0 0.0
  %690 = vmatpush2.xpose.msra.mxu0 0.0
  %691 = vmatprep.subr.mxu0 0.0
  %692 = vmatpush2.xpose.msra.mxu0 0.0
  %693 = vmatprep.subr.mxu0 0.0
  %694 = vmatpush2.xpose.msra.mxu0 0.0
  %695 = vmatprep.subr.mxu0 0.0
  %696 = vmatpush2.xpose.msra.mxu0 0.0
  %697 = vmatprep.subr.mxu0 0.0
  %698 = vmatpush2.xpose.msra.mxu0 0.0
  %699 = vmatprep.subr.mxu0 0.0
  %700 = vmatpush2.xpose.msra.mxu0 0.0
  %701 = vmatprep.subr.mxu0 0.0
  %702 = vmatpush2.xpose.msra.mxu0 0.0
  %703 = vmatprep.subr.mxu0 0.0
  %704 = vmatpush2.xpose.msra.mxu0 0.0
  %705 = vmatprep.subr.mxu0 0.0
  %706 = vmatpush2.xpose.msra.mxu0 0.0
  %707 = vmatprep.subr.mxu0 0.0
  %708 = vmatpush2.xpose.msra.mxu0 0.0
  %709 = vmatprep.subr.mxu0 0.0
  %710 = vmatpush2.xpose.msra.mxu0 0.0
  %711 = vmatprep.subr.mxu0 0.0
  %712 = vmatpush2.xpose.msra.mxu0 0.0
  %713 = vmatprep.mubr.f32.mxu0 %v25
  %714 = vmatmul.mubr.f32.gmra.mxu0 %v24
  %v715 = vpop.f32.mrf.mxu0
  %v716 = vadd.f32 %v641, %v715
  %v717 = vpop.f32.mrf.mxu0
  %718 = vmatprep.mubr.f32.mxu0 %v57
  %719 = vmatmul.mubr.f32.gmra.mxu0 %v56
  %v720 = vpop.f32.mrf.mxu0
  %v721 = vadd.f32 %v646, %v720
  %v722 = vpop.f32.mrf.mxu0
  %723 = vdwg.mxu0
  %724 = vmatprep.subr.mxu0 0.0
  %725 = vmatpush1.xpose.msra.mxu0 0.0
  %726 = vmatprep.subr.mxu0 0.0
  %727 = vmatpush1.xpose.msra.mxu0 0.0
  %728 = vmatprep.subr.mxu0 0.0
  %729 = vmatpush1.xpose.msra.mxu0 0.0
  %730 = vmatprep.subr.mxu0 0.0
  %731 = vmatpush1.xpose.msra.mxu0 0.0
  %732 = vmatprep.subr.mxu0 0.0
  %733 = vmatpush1.xpose.msra.mxu0 0.0
  %734 = vmatprep.subr.mxu0 0.0
  %735 = vmatpush1.xpose.msra.mxu0 0.0
  %736 = vmatprep.subr.mxu0 0.0
  %737 = vmatpush1.xpose.msra.mxu0 0.0
  %738 = vmatprep.subr.mxu0 0.0
  %739 = vmatpush1.xpose.msra.mxu0 0.0
  %740 = vmatprep.subr.mxu0 0.0
  %741 = vmatpush1.xpose.msra.mxu0 0.0
  %742 = vmatprep.subr.mxu0 0.0
  %743 = vmatpush1.xpose.msra.mxu0 0.0
  %744 = vmatprep.subr.mxu0 0.0
  %745 = vmatpush1.xpose.msra.mxu0 0.0
  %746 = vmatprep.subr.mxu0 0.0
  %747 = vmatpush1.xpose.msra.mxu0 0.0
  %748 = vmatprep.subr.mxu0 0.0
  %749 = vmatpush1.xpose.msra.mxu0 0.0
  %750 = vmatprep.subr.mxu0 0.0
  %751 = vmatpush1.xpose.msra.mxu0 0.0
  %752 = vmatprep.subr.mxu0 %v59
  %753 = vmatpush1.xpose.msra.mxu0 %v58
  %754 = vmatprep.subr.mxu0 %v27
  %755 = vmatpush1.xpose.msra.mxu0 %v26
  %756 = vmatprep.subr.mxu0 0.0
  %757 = vmatpush2.xpose.msra.mxu0 0.0
  %758 = vmatprep.subr.mxu0 0.0
  %759 = vmatpush2.xpose.msra.mxu0 0.0
  %760 = vmatprep.subr.mxu0 0.0
  %761 = vmatpush2.xpose.msra.mxu0 0.0
  %762 = vmatprep.subr.mxu0 0.0
  %763 = vmatpush2.xpose.msra.mxu0 0.0
  %764 = vmatprep.subr.mxu0 0.0
  %765 = vmatpush2.xpose.msra.mxu0 0.0
  %766 = vmatprep.subr.mxu0 0.0
  %767 = vmatpush2.xpose.msra.mxu0 0.0
  %768 = vmatprep.subr.mxu0 0.0
  %769 = vmatpush2.xpose.msra.mxu0 0.0
  %770 = vmatprep.subr.mxu0 0.0
  %771 = vmatpush2.xpose.msra.mxu0 0.0
  %772 = vmatprep.subr.mxu0 0.0
  %773 = vmatpush2.xpose.msra.mxu0 0.0
  %774 = vmatprep.subr.mxu0 0.0
  %775 = vmatpush2.xpose.msra.mxu0 0.0
  %776 = vmatprep.subr.mxu0 0.0
  %777 = vmatpush2.xpose.msra.mxu0 0.0
  %778 = vmatprep.subr.mxu0 0.0
  %779 = vmatpush2.xpose.msra.mxu0 0.0
  %780 = vmatprep.subr.mxu0 0.0
  %781 = vmatpush2.xpose.msra.mxu0 0.0
  %782 = vmatprep.subr.mxu0 0.0
  %783 = vmatpush2.xpose.msra.mxu0 0.0
  %784 = vmatprep.subr.mxu0 0.0
  %785 = vmatpush2.xpose.msra.mxu0 0.0
  %786 = vmatprep.subr.mxu0 0.0
  %787 = vmatpush2.xpose.msra.mxu0 0.0
  %788 = vmatprep.mubr.f32.mxu0 %v27
  %789 = vmatmul.mubr.f32.gmra.mxu0 %v26
  %v790 = vpop.f32.mrf.mxu0
  %v791 = vadd.f32 %v716, %v790
  %v792 = vpop.f32.mrf.mxu0
  %793 = vmatprep.mubr.f32.mxu0 %v59
  %794 = vmatmul.mubr.f32.gmra.mxu0 %v58
  %v795 = vpop.f32.mrf.mxu0
  %v796 = vadd.f32 %v721, %v795
  %v797 = vpop.f32.mrf.mxu0
  %798 = vdwg.mxu0
  %799 = vmatprep.subr.mxu0 0.0
  %800 = vmatpush1.xpose.msra.mxu0 0.0
  %801 = vmatprep.subr.mxu0 0.0
  %802 = vmatpush1.xpose.msra.mxu0 0.0
  %803 = vmatprep.subr.mxu0 0.0
  %804 = vmatpush1.xpose.msra.mxu0 0.0
  %805 = vmatprep.subr.mxu0 0.0
  %806 = vmatpush1.xpose.msra.mxu0 0.0
  %807 = vmatprep.subr.mxu0 0.0
  %808 = vmatpush1.xpose.msra.mxu0 0.0
  %809 = vmatprep.subr.mxu0 0.0
  %810 = vmatpush1.xpose.msra.mxu0 0.0
  %811 = vmatprep.subr.mxu0 0.0
  %812 = vmatpush1.xpose.msra.mxu0 0.0
  %813 = vmatprep.subr.mxu0 0.0
  %814 = vmatpush1.xpose.msra.mxu0 0.0
  %815 = vmatprep.subr.mxu0 0.0
  %816 = vmatpush1.xpose.msra.mxu0 0.0
  %817 = vmatprep.subr.mxu0 0.0
  %818 = vmatpush1.xpose.msra.mxu0 0.0
  %819 = vmatprep.subr.mxu0 0.0
  %820 = vmatpush1.xpose.msra.mxu0 0.0
  %821 = vmatprep.subr.mxu0 0.0
  %822 = vmatpush1.xpose.msra.mxu0 0.0
  %823 = vmatprep.subr.mxu0 0.0
  %824 = vmatpush1.xpose.msra.mxu0 0.0
  %825 = vmatprep.subr.mxu0 0.0
  %826 = vmatpush1.xpose.msra.mxu0 0.0
  %827 = vmatprep.subr.mxu0 %v61
  %828 = vmatpush1.xpose.msra.mxu0 %v60
  %829 = vmatprep.subr.mxu0 %v29
  %830 = vmatpush1.xpose.msra.mxu0 %v28
  %831 = vmatprep.subr.mxu0 0.0
  %832 = vmatpush2.xpose.msra.mxu0 0.0
  %833 = vmatprep.subr.mxu0 0.0
  %834 = vmatpush2.xpose.msra.mxu0 0.0
  %835 = vmatprep.subr.mxu0 0.0
  %836 = vmatpush2.xpose.msra.mxu0 0.0
  %837 = vmatprep.subr.mxu0 0.0
  %838 = vmatpush2.xpose.msra.mxu0 0.0
  %839 = vmatprep.subr.mxu0 0.0
  %840 = vmatpush2.xpose.msra.mxu0 0.0
  %841 = vmatprep.subr.mxu0 0.0
  %842 = vmatpush2.xpose.msra.mxu0 0.0
  %843 = vmatprep.subr.mxu0 0.0
  %844 = vmatpush2.xpose.msra.mxu0 0.0
  %845 = vmatprep.subr.mxu0 0.0
  %846 = vmatpush2.xpose.msra.mxu0 0.0
  %847 = vmatprep.subr.mxu0 0.0
  %848 = vmatpush2.xpose.msra.mxu0 0.0
  %849 = vmatprep.subr.mxu0 0.0
  %850 = vmatpush2.xpose.msra.mxu0 0.0
  %851 = vmatprep.subr.mxu0 0.0
  %852 = vmatpush2.xpose.msra.mxu0 0.0
  %853 = vmatprep.subr.mxu0 0.0
  %854 = vmatpush2.xpose.msra.mxu0 0.0
  %855 = vmatprep.subr.mxu0 0.0
  %856 = vmatpush2.xpose.msra.mxu0 0.0
  %857 = vmatprep.subr.mxu0 0.0
  %858 = vmatpush2.xpose.msra.mxu0 0.0
  %859 = vmatprep.subr.mxu0 0.0
  %860 = vmatpush2.xpose.msra.mxu0 0.0
  %861 = vmatprep.subr.mxu0 0.0
  %862 = vmatpush2.xpose.msra.mxu0 0.0
  %863 = vmatprep.mubr.f32.mxu0 %v29
  %864 = vmatmul.mubr.f32.gmra.mxu0 %v28
  %v865 = vpop.f32.mrf.mxu0
  %v866 = vadd.f32 %v791, %v865
  %v867 = vpop.f32.mrf.mxu0
  %868 = vmatprep.mubr.f32.mxu0 %v61
  %869 = vmatmul.mubr.f32.gmra.mxu0 %v60
  %v870 = vpop.f32.mrf.mxu0
  %v871 = vadd.f32 %v796, %v870
  %v872 = vpop.f32.mrf.mxu0
  %873 = vdwg.mxu0
  %874 = vmatprep.subr.mxu0 0.0
  %875 = vmatpush1.xpose.msra.mxu0 0.0
  %876 = vmatprep.subr.mxu0 0.0
  %877 = vmatpush1.xpose.msra.mxu0 0.0
  %878 = vmatprep.subr.mxu0 0.0
  %879 = vmatpush1.xpose.msra.mxu0 0.0
  %880 = vmatprep.subr.mxu0 0.0
  %881 = vmatpush1.xpose.msra.mxu0 0.0
  %882 = vmatprep.subr.mxu0 0.0
  %883 = vmatpush1.xpose.msra.mxu0 0.0
  %884 = vmatprep.subr.mxu0 0.0
  %885 = vmatpush1.xpose.msra.mxu0 0.0
  %886 = vmatprep.subr.mxu0 0.0
  %887 = vmatpush1.xpose.msra.mxu0 0.0
  %888 = vmatprep.subr.mxu0 0.0
  %889 = vmatpush1.xpose.msra.mxu0 0.0
  %890 = vmatprep.subr.mxu0 0.0
  %891 = vmatpush1.xpose.msra.mxu0 0.0
  %892 = vmatprep.subr.mxu0 0.0
  %893 = vmatpush1.xpose.msra.mxu0 0.0
  %894 = vmatprep.subr.mxu0 0.0
  %895 = vmatpush1.xpose.msra.mxu0 0.0
  %896 = vmatprep.subr.mxu0 0.0
  %897 = vmatpush1.xpose.msra.mxu0 0.0
  %898 = vmatprep.subr.mxu0 0.0
  %899 = vmatpush1.xpose.msra.mxu0 0.0
  %900 = vmatprep.subr.mxu0 0.0
  %901 = vmatpush1.xpose.msra.mxu0 0.0
  %902 = vmatprep.subr.mxu0 %v63
  %903 = vmatpush1.xpose.msra.mxu0 %v62
  %904 = vmatprep.subr.mxu0 %v31
  %905 = vmatpush1.xpose.msra.mxu0 %v30
  %906 = vmatprep.subr.mxu0 0.0
  %907 = vmatpush2.xpose.msra.mxu0 0.0
  %908 = vmatprep.subr.mxu0 0.0
  %909 = vmatpush2.xpose.msra.mxu0 0.0
  %910 = vmatprep.subr.mxu0 0.0
  %911 = vmatpush2.xpose.msra.mxu0 0.0
  %912 = vmatprep.subr.mxu0 0.0
  %913 = vmatpush2.xpose.msra.mxu0 0.0
  %914 = vmatprep.subr.mxu0 0.0
  %915 = vmatpush2.xpose.msra.mxu0 0.0
  %916 = vmatprep.subr.mxu0 0.0
  %917 = vmatpush2.xpose.msra.mxu0 0.0
  %918 = vmatprep.subr.mxu0 0.0
  %919 = vmatpush2.xpose.msra.mxu0 0.0
  %920 = vmatprep.subr.mxu0 0.0
  %921 = vmatpush2.xpose.msra.mxu0 0.0
  %922 = vmatprep.subr.mxu0 0.0
  %923 = vmatpush2.xpose.msra.mxu0 0.0
  %924 = vmatprep.subr.mxu0 0.0
  %925 = vmatpush2.xpose.msra.mxu0 0.0
  %926 = vmatprep.subr.mxu0 0.0
  %927 = vmatpush2.xpose.msra.mxu0 0.0
  %928 = vmatprep.subr.mxu0 0.0
  %929 = vmatpush2.xpose.msra.mxu0 0.0
  %930 = vmatprep.subr.mxu0 0.0
  %931 = vmatpush2.xpose.msra.mxu0 0.0
  %932 = vmatprep.subr.mxu0 0.0
  %933 = vmatpush2.xpose.msra.mxu0 0.0
  %934 = vmatprep.subr.mxu0 0.0
  %935 = vmatpush2.xpose.msra.mxu0 0.0
  %936 = vmatprep.subr.mxu0 0.0
  %937 = vmatpush2.xpose.msra.mxu0 0.0
  %938 = vmatprep.mubr.f32.mxu0 %v31
  %939 = vmatmul.mubr.f32.gmra.mxu0 %v30
  %v940 = vpop.f32.mrf.mxu0
  %v941 = vadd.f32 %v866, %v940
  %v942 = vpop.f32.mrf.mxu0
  %943 = vmatprep.mubr.f32.mxu0 %v63
  %944 = vmatmul.mubr.f32.gmra.mxu0 %v62
  %v945 = vpop.f32.mrf.mxu0
  %v946 = vadd.f32 %v871, %v945
  %v947 = vpop.f32.mrf.mxu0
  %948 = vdwg.mxu0
  %949 = vmatprep.subr.mxu0 0.0
  %950 = vmatpush1.xpose.msra.mxu0 0.0
  %951 = vmatprep.subr.mxu0 0.0
  %952 = vmatpush1.xpose.msra.mxu0 0.0
  %953 = vmatprep.subr.mxu0 0.0
  %954 = vmatpush1.xpose.msra.mxu0 0.0
  %955 = vmatprep.subr.mxu0 0.0
  %956 = vmatpush1.xpose.msra.mxu0 0.0
  %957 = vmatprep.subr.mxu0 0.0
  %958 = vmatpush1.xpose.msra.mxu0 0.0
  %959 = vmatprep.subr.mxu0 0.0
  %960 = vmatpush1.xpose.msra.mxu0 0.0
  %961 = vmatprep.subr.mxu0 0.0
  %962 = vmatpush1.xpose.msra.mxu0 0.0
  %963 = vmatprep.subr.mxu0 0.0
  %964 = vmatpush1.xpose.msra.mxu0 0.0
  %965 = vmatprep.subr.mxu0 0.0
  %966 = vmatpush1.xpose.msra.mxu0 0.0
  %967 = vmatprep.subr.mxu0 0.0
  %968 = vmatpush1.xpose.msra.mxu0 0.0
  %969 = vmatprep.subr.mxu0 0.0
  %970 = vmatpush1.xpose.msra.mxu0 0.0
  %971 = vmatprep.subr.mxu0 0.0
  %972 = vmatpush1.xpose.msra.mxu0 0.0
  %973 = vmatprep.subr.mxu0 0.0
  %974 = vmatpush1.xpose.msra.mxu0 0.0
  %975 = vmatprep.subr.mxu0 0.0
  %976 = vmatpush1.xpose.msra.mxu0 0.0
  %977 = vmatprep.subr.mxu0 %v65
  %978 = vmatpush1.xpose.msra.mxu0 %v64
  %979 = vmatprep.subr.mxu0 %v33
  %980 = vmatpush1.xpose.msra.mxu0 %v32
  %981 = vmatprep.subr.mxu0 0.0
  %982 = vmatpush2.xpose.msra.mxu0 0.0
  %983 = vmatprep.subr.mxu0 0.0
  %984 = vmatpush2.xpose.msra.mxu0 0.0
  %985 = vmatprep.subr.mxu0 0.0
  %986 = vmatpush2.xpose.msra.mxu0 0.0
  %987 = vmatprep.subr.mxu0 0.0
  %988 = vmatpush2.xpose.msra.mxu0 0.0
  %989 = vmatprep.subr.mxu0 0.0
  %990 = vmatpush2.xpose.msra.mxu0 0.0
  %991 = vmatprep.subr.mxu0 0.0
  %992 = vmatpush2.xpose.msra.mxu0 0.0
  %993 = vmatprep.subr.mxu0 0.0
  %994 = vmatpush2.xpose.msra.mxu0 0.0
  %995 = vmatprep.subr.mxu0 0.0
  %996 = vmatpush2.xpose.msra.mxu0 0.0
  %997 = vmatprep.subr.mxu0 0.0
  %998 = vmatpush2.xpose.msra.mxu0 0.0
  %999 = vmatprep.subr.mxu0 0.0
  %1000 = vmatpush2.xpose.msra.mxu0 0.0
  %1001 = vmatprep.subr.mxu0 0.0
  %1002 = vmatpush2.xpose.msra.mxu0 0.0
  %1003 = vmatprep.subr.mxu0 0.0
  %1004 = vmatpush2.xpose.msra.mxu0 0.0
  %1005 = vmatprep.subr.mxu0 0.0
  %1006 = vmatpush2.xpose.msra.mxu0 0.0
  %1007 = vmatprep.subr.mxu0 0.0
  %1008 = vmatpush2.xpose.msra.mxu0 0.0
  %1009 = vmatprep.subr.mxu0 0.0
  %1010 = vmatpush2.xpose.msra.mxu0 0.0
  %1011 = vmatprep.subr.mxu0 0.0
  %1012 = vmatpush2.xpose.msra.mxu0 0.0
  %1013 = vmatprep.mubr.f32.mxu0 %v33
  %1014 = vmatmul.mubr.f32.gmra.mxu0 %v32
  %v1015 = vpop.f32.mrf.mxu0
  %v1016 = vadd.f32 %v941, %v1015
  %v1017 = vpop.f32.mrf.mxu0
  %1018 = vmatprep.mubr.f32.mxu0 %v65
  %1019 = vmatmul.mubr.f32.gmra.mxu0 %v64
  %v1020 = vpop.f32.mrf.mxu0
  %v1021 = vadd.f32 %v946, %v1020
  %v1022 = vpop.f32.mrf.mxu0
  %1023 = vdwg.mxu0
  %1024 = vmatprep.subr.mxu0 0.0
  %1025 = vmatpush1.xpose.msra.mxu0 0.0
  %1026 = vmatprep.subr.mxu0 0.0
  %1027 = vmatpush1.xpose.msra.mxu0 0.0
  %1028 = vmatprep.subr.mxu0 0.0
  %1029 = vmatpush1.xpose.msra.mxu0 0.0
  %1030 = vmatprep.subr.mxu0 0.0
  %1031 = vmatpush1.xpose.msra.mxu0 0.0
  %1032 = vmatprep.subr.mxu0 0.0
  %1033 = vmatpush1.xpose.msra.mxu0 0.0
  %1034 = vmatprep.subr.mxu0 0.0
  %1035 = vmatpush1.xpose.msra.mxu0 0.0
  %1036 = vmatprep.subr.mxu0 0.0
  %1037 = vmatpush1.xpose.msra.mxu0 0.0
  %1038 = vmatprep.subr.mxu0 0.0
  %1039 = vmatpush1.xpose.msra.mxu0 0.0
  %1040 = vmatprep.subr.mxu0 0.0
  %1041 = vmatpush1.xpose.msra.mxu0 0.0
  %1042 = vmatprep.subr.mxu0 0.0
  %1043 = vmatpush1.xpose.msra.mxu0 0.0
  %1044 = vmatprep.subr.mxu0 0.0
  %1045 = vmatpush1.xpose.msra.mxu0 0.0
  %1046 = vmatprep.subr.mxu0 0.0
  %1047 = vmatpush1.xpose.msra.mxu0 0.0
  %1048 = vmatprep.subr.mxu0 0.0
  %1049 = vmatpush1.xpose.msra.mxu0 0.0
  %1050 = vmatprep.subr.mxu0 0.0
  %1051 = vmatpush1.xpose.msra.mxu0 0.0
  %1052 = vmatprep.subr.mxu0 %v67
  %1053 = vmatpush1.xpose.msra.mxu0 %v66
  %1054 = vmatprep.subr.mxu0 %v35
  %1055 = vmatpush1.xpose.msra.mxu0 %v34
  %1056 = vmatprep.subr.mxu0 0.0
  %1057 = vmatpush2.xpose.msra.mxu0 0.0
  %1058 = vmatprep.subr.mxu0 0.0
  %1059 = vmatpush2.xpose.msra.mxu0 0.0
  %1060 = vmatprep.subr.mxu0 0.0
  %1061 = vmatpush2.xpose.msra.mxu0 0.0
  %1062 = vmatprep.subr.mxu0 0.0
  %1063 = vmatpush2.xpose.msra.mxu0 0.0
  %1064 = vmatprep.subr.mxu0 0.0
  %1065 = vmatpush2.xpose.msra.mxu0 0.0
  %1066 = vmatprep.subr.mxu0 0.0
  %1067 = vmatpush2.xpose.msra.mxu0 0.0
  %1068 = vmatprep.subr.mxu0 0.0
  %1069 = vmatpush2.xpose.msra.mxu0 0.0
  %1070 = vmatprep.subr.mxu0 0.0
  %1071 = vmatpush2.xpose.msra.mxu0 0.0
  %1072 = vmatprep.subr.mxu0 0.0
  %1073 = vmatpush2.xpose.msra.mxu0 0.0
  %1074 = vmatprep.subr.mxu0 0.0
  %1075 = vmatpush2.xpose.msra.mxu0 0.0
  %1076 = vmatprep.subr.mxu0 0.0
  %1077 = vmatpush2.xpose.msra.mxu0 0.0
  %1078 = vmatprep.subr.mxu0 0.0
  %1079 = vmatpush2.xpose.msra.mxu0 0.0
  %1080 = vmatprep.subr.mxu0 0.0
  %1081 = vmatpush2.xpose.msra.mxu0 0.0
  %1082 = vmatprep.subr.mxu0 0.0
  %1083 = vmatpush2.xpose.msra.mxu0 0.0
  %1084 = vmatprep.subr.mxu0 0.0
  %1085 = vmatpush2.xpose.msra.mxu0 0.0
  %1086 = vmatprep.subr.mxu0 0.0
  %1087 = vmatpush2.xpose.msra.mxu0 0.0
  %1088 = vmatprep.mubr.f32.mxu0 %v35
  %1089 = vmatmul.mubr.f32.gmra.mxu0 %v34
  %v1090 = vpop.f32.mrf.mxu0
  %v1091 = vadd.f32 %v1016, %v1090
  %v1092 = vpop.f32.mrf.mxu0
  %1093 = vmatprep.mubr.f32.mxu0 %v67
  %1094 = vmatmul.mubr.f32.gmra.mxu0 %v66
  %v1095 = vpop.f32.mrf.mxu0
  %v1096 = vadd.f32 %v1021, %v1095
  %v1097 = vpop.f32.mrf.mxu0
  %1098 = vdwg.mxu0
  %1099 = vmatprep.subr.mxu0 0.0
  %1100 = vmatpush1.xpose.msra.mxu0 0.0
  %1101 = vmatprep.subr.mxu0 0.0
  %1102 = vmatpush1.xpose.msra.mxu0 0.0
  %1103 = vmatprep.subr.mxu0 0.0
  %1104 = vmatpush1.xpose.msra.mxu0 0.0
  %1105 = vmatprep.subr.mxu0 0.0
  %1106 = vmatpush1.xpose.msra.mxu0 0.0
  %1107 = vmatprep.subr.mxu0 0.0
  %1108 = vmatpush1.xpose.msra.mxu0 0.0
  %1109 = vmatprep.subr.mxu0 0.0
  %1110 = vmatpush1.xpose.msra.mxu0 0.0
  %1111 = vmatprep.subr.mxu0 0.0
  %1112 = vmatpush1.xpose.msra.mxu0 0.0
  %1113 = vmatprep.subr.mxu0 0.0
  %1114 = vmatpush1.xpose.msra.mxu0 0.0
  %1115 = vmatprep.subr.mxu0 0.0
  %1116 = vmatpush1.xpose.msra.mxu0 0.0
  %1117 = vmatprep.subr.mxu0 0.0
  %1118 = vmatpush1.xpose.msra.mxu0 0.0
  %1119 = vmatprep.subr.mxu0 0.0
  %1120 = vmatpush1.xpose.msra.mxu0 0.0
  %1121 = vmatprep.subr.mxu0 0.0
  %1122 = vmatpush1.xpose.msra.mxu0 0.0
  %1123 = vmatprep.subr.mxu0 0.0
  %1124 = vmatpush1.xpose.msra.mxu0 0.0
  %1125 = vmatprep.subr.mxu0 0.0
  %1126 = vmatpush1.xpose.msra.mxu0 0.0
  %1127 = vmatprep.subr.mxu0 %v69
  %1128 = vmatpush1.xpose.msra.mxu0 %v68
  %1129 = vmatprep.subr.mxu0 %v37
  %1130 = vmatpush1.xpose.msra.mxu0 %v36
  %1131 = vmatprep.subr.mxu0 0.0
  %1132 = vmatpush2.xpose.msra.mxu0 0.0
  %1133 = vmatprep.subr.mxu0 0.0
  %1134 = vmatpush2.xpose.msra.mxu0 0.0
  %1135 = vmatprep.subr.mxu0 0.0
  %1136 = vmatpush2.xpose.msra.mxu0 0.0
  %1137 = vmatprep.subr.mxu0 0.0
  %1138 = vmatpush2.xpose.msra.mxu0 0.0
  %1139 = vmatprep.subr.mxu0 0.0
  %1140 = vmatpush2.xpose.msra.mxu0 0.0
  %1141 = vmatprep.subr.mxu0 0.0
  %1142 = vmatpush2.xpose.msra.mxu0 0.0
  %1143 = vmatprep.subr.mxu0 0.0
  %1144 = vmatpush2.xpose.msra.mxu0 0.0
  %1145 = vmatprep.subr.mxu0 0.0
  %1146 = vmatpush2.xpose.msra.mxu0 0.0
  %1147 = vmatprep.subr.mxu0 0.0
  %1148 = vmatpush2.xpose.msra.mxu0 0.0
  %1149 = vmatprep.subr.mxu0 0.0
  %1150 = vmatpush2.xpose.msra.mxu0 0.0
  %1151 = vmatprep.subr.mxu0 0.0
  %1152 = vmatpush2.xpose.msra.mxu0 0.0
  %1153 = vmatprep.subr.mxu0 0.0
  %1154 = vmatpush2.xpose.msra.mxu0 0.0
  %1155 = vmatprep.subr.mxu0 0.0
  %1156 = vmatpush2.xpose.msra.mxu0 0.0
  %1157 = vmatprep.subr.mxu0 0.0
  %1158 = vmatpush2.xpose.msra.mxu0 0.0
  %1159 = vmatprep.subr.mxu0 0.0
  %1160 = vmatpush2.xpose.msra.mxu0 0.0
  %1161 = vmatprep.subr.mxu0 0.0
  %1162 = vmatpush2.xpose.msra.mxu0 0.0
  %1163 = vmatprep.mubr.f32.mxu0 %v37
  %1164 = vmatmul.mubr.f32.gmra.mxu0 %v36
  %v1165 = vpop.f32.mrf.mxu0
  %v1166 = vadd.f32 %v1091, %v1165
  %v1167 = vpop.f32.mrf.mxu0
  %1168 = vmatprep.mubr.f32.mxu0 %v69
  %1169 = vmatmul.mubr.f32.gmra.mxu0 %v68
  %v1170 = vpop.f32.mrf.mxu0
  %v1171 = vadd.f32 %v1096, %v1170
  %v1172 = vpop.f32.mrf.mxu0
  %1173 = vdwg.mxu0
  %1174 = vmatprep.subr.mxu0 0.0
  %1175 = vmatpush1.xpose.msra.mxu0 0.0
  %1176 = vmatprep.subr.mxu0 0.0
  %1177 = vmatpush1.xpose.msra.mxu0 0.0
  %1178 = vmatprep.subr.mxu0 0.0
  %1179 = vmatpush1.xpose.msra.mxu0 0.0
  %1180 = vmatprep.subr.mxu0 0.0
  %1181 = vmatpush1.xpose.msra.mxu0 0.0
  %1182 = vmatprep.subr.mxu0 0.0
  %1183 = vmatpush1.xpose.msra.mxu0 0.0
  %1184 = vmatprep.subr.mxu0 0.0
  %1185 = vmatpush1.xpose.msra.mxu0 0.0
  %1186 = vmatprep.subr.mxu0 0.0
  %1187 = vmatpush1.xpose.msra.mxu0 0.0
  %1188 = vmatprep.subr.mxu0 0.0
  %1189 = vmatpush1.xpose.msra.mxu0 0.0
  %1190 = vmatprep.subr.mxu0 0.0
  %1191 = vmatpush1.xpose.msra.mxu0 0.0
  %1192 = vmatprep.subr.mxu0 0.0
  %1193 = vmatpush1.xpose.msra.mxu0 0.0
  %1194 = vmatprep.subr.mxu0 0.0
  %1195 = vmatpush1.xpose.msra.mxu0 0.0
  %1196 = vmatprep.subr.mxu0 0.0
  %1197 = vmatpush1.xpose.msra.mxu0 0.0
  %1198 = vmatprep.subr.mxu0 0.0
  %1199 = vmatpush1.xpose.msra.mxu0 0.0
  %1200 = vmatprep.subr.mxu0 0.0
  %1201 = vmatpush1.xpose.msra.mxu0 0.0
  %1202 = vmatprep.subr.mxu0 %v71
  %1203 = vmatpush1.xpose.msra.mxu0 %v70
  %1204 = vmatprep.subr.mxu0 %v39
  %1205 = vmatpush1.xpose.msra.mxu0 %v38
  %1206 = vmatprep.subr.mxu0 0.0
  %1207 = vmatpush2.xpose.msra.mxu0 0.0
  %1208 = vmatprep.subr.mxu0 0.0
  %1209 = vmatpush2.xpose.msra.mxu0 0.0
  %1210 = vmatprep.subr.mxu0 0.0
  %1211 = vmatpush2.xpose.msra.mxu0 0.0
  %1212 = vmatprep.subr.mxu0 0.0
  %1213 = vmatpush2.xpose.msra.mxu0 0.0
  %1214 = vmatprep.subr.mxu0 0.0
  %1215 = vmatpush2.xpose.msra.mxu0 0.0
  %1216 = vmatprep.subr.mxu0 0.0
  %1217 = vmatpush2.xpose.msra.mxu0 0.0
  %1218 = vmatprep.subr.mxu0 0.0
  %1219 = vmatpush2.xpose.msra.mxu0 0.0
  %1220 = vmatprep.subr.mxu0 0.0
  %1221 = vmatpush2.xpose.msra.mxu0 0.0
  %1222 = vmatprep.subr.mxu0 0.0
  %1223 = vmatpush2.xpose.msra.mxu0 0.0
  %1224 = vmatprep.subr.mxu0 0.0
  %1225 = vmatpush2.xpose.msra.mxu0 0.0
  %1226 = vmatprep.subr.mxu0 0.0
  %1227 = vmatpush2.xpose.msra.mxu0 0.0
  %1228 = vmatprep.subr.mxu0 0.0
  %1229 = vmatpush2.xpose.msra.mxu0 0.0
  %1230 = vmatprep.subr.mxu0 0.0
  %1231 = vmatpush2.xpose.msra.mxu0 0.0
  %1232 = vmatprep.subr.mxu0 0.0
  %1233 = vmatpush2.xpose.msra.mxu0 0.0
  %1234 = vmatprep.subr.mxu0 0.0
  %1235 = vmatpush2.xpose.msra.mxu0 0.0
  %1236 = vmatprep.subr.mxu0 0.0
  %1237 = vmatpush2.xpose.msra.mxu0 0.0
  %1238 = vmatprep.mubr.f32.mxu0 %v39
  %1239 = vmatmul.mubr.f32.gmra.mxu0 %v38
  %v1240 = vpop.f32.mrf.mxu0
  %v1241 = vadd.f32 %v1166, %v1240
  %v1242 = vpop.f32.mrf.mxu0
  %1243 = vmatprep.mubr.f32.mxu0 %v71
  %1244 = vmatmul.mubr.f32.gmra.mxu0 %v70
  %v1245 = vpop.f32.mrf.mxu0
  %v1246 = vadd.f32 %v1171, %v1245
  %v1247 = vpop.f32.mrf.mxu0
  %1248 = vdwg.mxu0
  %1249 = vmatprep.subr.mxu0 0.0
  %1250 = vmatpush1.xpose.msra.mxu0 0.0
  %1251 = vmatprep.subr.mxu0 0.0
  %1252 = vmatpush1.xpose.msra.mxu0 0.0
  %1253 = vmatprep.subr.mxu0 0.0
  %1254 = vmatpush1.xpose.msra.mxu0 0.0
  %1255 = vmatprep.subr.mxu0 0.0
  %1256 = vmatpush1.xpose.msra.mxu0 0.0
  %1257 = vmatprep.subr.mxu0 0.0
  %1258 = vmatpush1.xpose.msra.mxu0 0.0
  %1259 = vmatprep.subr.mxu0 0.0
  %1260 = vmatpush1.xpose.msra.mxu0 0.0
  %1261 = vmatprep.subr.mxu0 0.0
  %1262 = vmatpush1.xpose.msra.mxu0 0.0
  %1263 = vmatprep.subr.mxu0 0.0
  %1264 = vmatpush1.xpose.msra.mxu0 0.0
  %1265 = vmatprep.subr.mxu0 0.0
  %1266 = vmatpush1.xpose.msra.mxu0 0.0
  %1267 = vmatprep.subr.mxu0 0.0
  %1268 = vmatpush1.xpose.msra.mxu0 0.0
  %1269 = vmatprep.subr.mxu0 0.0
  %1270 = vmatpush1.xpose.msra.mxu0 0.0
  %1271 = vmatprep.subr.mxu0 0.0
  %1272 = vmatpush1.xpose.msra.mxu0 0.0
  %1273 = vmatprep.subr.mxu0 0.0
  %1274 = vmatpush1.xpose.msra.mxu0 0.0
  %1275 = vmatprep.subr.mxu0 0.0
  %1276 = vmatpush1.xpose.msra.mxu0 0.0
  %1277 = vmatprep.subr.mxu0 %v73
  %1278 = vmatpush1.xpose.msra.mxu0 %v72
  %1279 = vmatprep.subr.mxu0 %v41
  %1280 = vmatpush1.xpose.msra.mxu0 %v40
  %1281 = vmatprep.subr.mxu0 0.0
  %1282 = vmatpush2.xpose.msra.mxu0 0.0
  %1283 = vmatprep.subr.mxu0 0.0
  %1284 = vmatpush2.xpose.msra.mxu0 0.0
  %1285 = vmatprep.subr.mxu0 0.0
  %1286 = vmatpush2.xpose.msra.mxu0 0.0
  %1287 = vmatprep.subr.mxu0 0.0
  %1288 = vmatpush2.xpose.msra.mxu0 0.0
  %1289 = vmatprep.subr.mxu0 0.0
  %1290 = vmatpush2.xpose.msra.mxu0 0.0
  %1291 = vmatprep.subr.mxu0 0.0
  %1292 = vmatpush2.xpose.msra.mxu0 0.0
  %1293 = vmatprep.subr.mxu0 0.0
  %1294 = vmatpush2.xpose.msra.mxu0 0.0
  %1295 = vmatprep.subr.mxu0 0.0
  %1296 = vmatpush2.xpose.msra.mxu0 0.0
  %1297 = vmatprep.subr.mxu0 0.0
  %1298 = vmatpush2.xpose.msra.mxu0 0.0
  %1299 = vmatprep.subr.mxu0 0.0
  %1300 = vmatpush2.xpose.msra.mxu0 0.0
  %1301 = vmatprep.subr.mxu0 0.0
  %1302 = vmatpush2.xpose.msra.mxu0 0.0
  %1303 = vmatprep.subr.mxu0 0.0
  %1304 = vmatpush2.xpose.msra.mxu0 0.0
  %1305 = vmatprep.subr.mxu0 0.0
  %1306 = vmatpush2.xpose.msra.mxu0 0.0
  %1307 = vmatprep.subr.mxu0 0.0
  %1308 = vmatpush2.xpose.msra.mxu0 0.0
  %1309 = vmatprep.subr.mxu0 0.0
  %1310 = vmatpush2.xpose.msra.mxu0 0.0
  %1311 = vmatprep.subr.mxu0 0.0
  %1312 = vmatpush2.xpose.msra.mxu0 0.0
  %1313 = vmatprep.mubr.f32.mxu0 %v41
  %1314 = vmatmul.mubr.f32.gmra.mxu0 %v40
  %v1315 = vpop.f32.mrf.mxu0
  %v1316 = vadd.f32 %v1241, %v1315
  %v1317 = vpop.f32.mrf.mxu0
  %1318 = vmatprep.mubr.f32.mxu0 %v73
  %1319 = vmatmul.mubr.f32.gmra.mxu0 %v72
  %v1320 = vpop.f32.mrf.mxu0
  %v1321 = vadd.f32 %v1246, %v1320
  %v1322 = vpop.f32.mrf.mxu0
  %1323 = vdwg.mxu0
  %1324 = vmatprep.subr.mxu0 0.0
  %1325 = vmatpush1.xpose.msra.mxu0 0.0
  %1326 = vmatprep.subr.mxu0 0.0
  %1327 = vmatpush1.xpose.msra.mxu0 0.0
  %1328 = vmatprep.subr.mxu0 0.0
  %1329 = vmatpush1.xpose.msra.mxu0 0.0
  %1330 = vmatprep.subr.mxu0 0.0
  %1331 = vmatpush1.xpose.msra.mxu0 0.0
  %1332 = vmatprep.subr.mxu0 0.0
  %1333 = vmatpush1.xpose.msra.mxu0 0.0
  %1334 = vmatprep.subr.mxu0 0.0
  %1335 = vmatpush1.xpose.msra.mxu0 0.0
  %1336 = vmatprep.subr.mxu0 0.0
  %1337 = vmatpush1.xpose.msra.mxu0 0.0
  %1338 = vmatprep.subr.mxu0 0.0
  %1339 = vmatpush1.xpose.msra.mxu0 0.0
  %1340 = vmatprep.subr.mxu0 0.0
  %1341 = vmatpush1.xpose.msra.mxu0 0.0
  %1342 = vmatprep.subr.mxu0 0.0
  %1343 = vmatpush1.xpose.msra.mxu0 0.0
  %1344 = vmatprep.subr.mxu0 0.0
  %1345 = vmatpush1.xpose.msra.mxu0 0.0
  %1346 = vmatprep.subr.mxu0 0.0
  %1347 = vmatpush1.xpose.msra.mxu0 0.0
  %1348 = vmatprep.subr.mxu0 0.0
  %1349 = vmatpush1.xpose.msra.mxu0 0.0
  %1350 = vmatprep.subr.mxu0 0.0
  %1351 = vmatpush1.xpose.msra.mxu0 0.0
  %1352 = vmatprep.subr.mxu0 %v75
  %1353 = vmatpush1.xpose.msra.mxu0 %v74
  %1354 = vmatprep.subr.mxu0 %v43
  %1355 = vmatpush1.xpose.msra.mxu0 %v42
  %1356 = vmatprep.subr.mxu0 0.0
  %1357 = vmatpush2.xpose.msra.mxu0 0.0
  %1358 = vmatprep.subr.mxu0 0.0
  %1359 = vmatpush2.xpose.msra.mxu0 0.0
  %1360 = vmatprep.subr.mxu0 0.0
  %1361 = vmatpush2.xpose.msra.mxu0 0.0
  %1362 = vmatprep.subr.mxu0 0.0
  %1363 = vmatpush2.xpose.msra.mxu0 0.0
  %1364 = vmatprep.subr.mxu0 0.0
  %1365 = vmatpush2.xpose.msra.mxu0 0.0
  %1366 = vmatprep.subr.mxu0 0.0
  %1367 = vmatpush2.xpose.msra.mxu0 0.0
  %1368 = vmatprep.subr.mxu0 0.0
  %1369 = vmatpush2.xpose.msra.mxu0 0.0
  %1370 = vmatprep.subr.mxu0 0.0
  %1371 = vmatpush2.xpose.msra.mxu0 0.0
  %1372 = vmatprep.subr.mxu0 0.0
  %1373 = vmatpush2.xpose.msra.mxu0 0.0
  %1374 = vmatprep.subr.mxu0 0.0
  %1375 = vmatpush2.xpose.msra.mxu0 0.0
  %1376 = vmatprep.subr.mxu0 0.0
  %1377 = vmatpush2.xpose.msra.mxu0 0.0
  %1378 = vmatprep.subr.mxu0 0.0
  %1379 = vmatpush2.xpose.msra.mxu0 0.0
  %1380 = vmatprep.subr.mxu0 0.0
  %1381 = vmatpush2.xpose.msra.mxu0 0.0
  %1382 = vmatprep.subr.mxu0 0.0
  %1383 = vmatpush2.xpose.msra.mxu0 0.0
  %1384 = vmatprep.subr.mxu0 0.0
  %1385 = vmatpush2.xpose.msra.mxu0 0.0
  %1386 = vmatprep.subr.mxu0 0.0
  %1387 = vmatpush2.xpose.msra.mxu0 0.0
  %1388 = vmatprep.mubr.f32.mxu0 %v43
  %1389 = vmatmul.mubr.f32.gmra.mxu0 %v42
  %v1390 = vpop.f32.mrf.mxu0
  %v1391 = vadd.f32 %v1316, %v1390
  %v1392 = vpop.f32.mrf.mxu0
  %1393 = vmatprep.mubr.f32.mxu0 %v75
  %1394 = vmatmul.mubr.f32.gmra.mxu0 %v74
  %v1395 = vpop.f32.mrf.mxu0
  %v1396 = vadd.f32 %v1321, %v1395
  %v1397 = vpop.f32.mrf.mxu0
  %1398 = vdwg.mxu0
  %1399 = vmatprep.subr.mxu0 0.0
  %1400 = vmatpush1.xpose.msra.mxu0 0.0
  %1401 = vmatprep.subr.mxu0 0.0
  %1402 = vmatpush1.xpose.msra.mxu0 0.0
  %1403 = vmatprep.subr.mxu0 0.0
  %1404 = vmatpush1.xpose.msra.mxu0 0.0
  %1405 = vmatprep.subr.mxu0 0.0
  %1406 = vmatpush1.xpose.msra.mxu0 0.0
  %1407 = vmatprep.subr.mxu0 0.0
  %1408 = vmatpush1.xpose.msra.mxu0 0.0
  %1409 = vmatprep.subr.mxu0 0.0
  %1410 = vmatpush1.xpose.msra.mxu0 0.0
  %1411 = vmatprep.subr.mxu0 0.0
  %1412 = vmatpush1.xpose.msra.mxu0 0.0
  %1413 = vmatprep.subr.mxu0 0.0
  %1414 = vmatpush1.xpose.msra.mxu0 0.0
  %1415 = vmatprep.subr.mxu0 0.0
  %1416 = vmatpush1.xpose.msra.mxu0 0.0
  %1417 = vmatprep.subr.mxu0 0.0
  %1418 = vmatpush1.xpose.msra.mxu0 0.0
  %1419 = vmatprep.subr.mxu0 0.0
  %1420 = vmatpush1.xpose.msra.mxu0 0.0
  %1421 = vmatprep.subr.mxu0 0.0
  %1422 = vmatpush1.xpose.msra.mxu0 0.0
  %1423 = vmatprep.subr.mxu0 0.0
  %1424 = vmatpush1.xpose.msra.mxu0 0.0
  %1425 = vmatprep.subr.mxu0 0.0
  %1426 = vmatpush1.xpose.msra.mxu0 0.0
  %1427 = vmatprep.subr.mxu0 %v77
  %1428 = vmatpush1.xpose.msra.mxu0 %v76
  %1429 = vmatprep.subr.mxu0 %v45
  %1430 = vmatpush1.xpose.msra.mxu0 %v44
  %1431 = vmatprep.subr.mxu0 0.0
  %1432 = vmatpush2.xpose.msra.mxu0 0.0
  %1433 = vmatprep.subr.mxu0 0.0
  %1434 = vmatpush2.xpose.msra.mxu0 0.0
  %1435 = vmatprep.subr.mxu0 0.0
  %1436 = vmatpush2.xpose.msra.mxu0 0.0
  %1437 = vmatprep.subr.mxu0 0.0
  %1438 = vmatpush2.xpose.msra.mxu0 0.0
  %1439 = vmatprep.subr.mxu0 0.0
  %1440 = vmatpush2.xpose.msra.mxu0 0.0
  %1441 = vmatprep.subr.mxu0 0.0
  %1442 = vmatpush2.xpose.msra.mxu0 0.0
  %1443 = vmatprep.subr.mxu0 0.0
  %1444 = vmatpush2.xpose.msra.mxu0 0.0
  %1445 = vmatprep.subr.mxu0 0.0
  %1446 = vmatpush2.xpose.msra.mxu0 0.0
  %1447 = vmatprep.subr.mxu0 0.0
  %1448 = vmatpush2.xpose.msra.mxu0 0.0
  %1449 = vmatprep.subr.mxu0 0.0
  %1450 = vmatpush2.xpose.msra.mxu0 0.0
  %1451 = vmatprep.subr.mxu0 0.0
  %1452 = vmatpush2.xpose.msra.mxu0 0.0
  %1453 = vmatprep.subr.mxu0 0.0
  %1454 = vmatpush2.xpose.msra.mxu0 0.0
  %1455 = vmatprep.subr.mxu0 0.0
  %1456 = vmatpush2.xpose.msra.mxu0 0.0
  %1457 = vmatprep.subr.mxu0 0.0
  %1458 = vmatpush2.xpose.msra.mxu0 0.0
  %1459 = vmatprep.subr.mxu0 0.0
  %1460 = vmatpush2.xpose.msra.mxu0 0.0
  %1461 = vmatprep.subr.mxu0 0.0
  %1462 = vmatpush2.xpose.msra.mxu0 0.0
  %1463 = vmatprep.mubr.f32.mxu0 %v45
  %1464 = vmatmul.mubr.f32.gmra.mxu0 %v44
  %v1465 = vpop.f32.mrf.mxu0
  %v1466 = vadd.f32 %v1391, %v1465
  %v1467 = vpop.f32.mrf.mxu0
  %1468 = vmatprep.mubr.f32.mxu0 %v77
  %1469 = vmatmul.mubr.f32.gmra.mxu0 %v76
  %v1470 = vpop.f32.mrf.mxu0
  %v1471 = vadd.f32 %v1396, %v1470
  %v1472 = vpop.f32.mrf.mxu0
  %1473 = vdwg.mxu0
  %1474 = vxpose.xlu0.b32.start [1/16] %v174, 128
  %1475 = vxpose.xlu0.b32.cont [2/16] %v207, 128
  %1476 = vxpose.xlu0.b32.cont [3/16] 0.0, 128
  %1477 = vxpose.xlu0.b32.cont [4/16] 0.0, 128
  %1478 = vxpose.xlu0.b32.cont [5/16] 0.0, 128
  %1479 = vxpose.xlu0.b32.cont [6/16] 0.0, 128
  %1480 = vxpose.xlu0.b32.cont [7/16] 0.0, 128
  %1481 = vxpose.xlu0.b32.cont [8/16] 0.0, 128
  %1482 = vxpose.xlu0.b32.cont [9/16] 0.0, 128
  %1483 = vxpose.xlu0.b32.cont [10/16] 0.0, 128
  %1484 = vxpose.xlu0.b32.cont [11/16] 0.0, 128
  %1485 = vxpose.xlu0.b32.cont [12/16] 0.0, 128
  %1486 = vxpose.xlu0.b32.cont [13/16] 0.0, 128
  %1487 = vxpose.xlu0.b32.cont [14/16] 0.0, 128
  %1488 = vxpose.xlu0.b32.cont [15/16] 0.0, 128
  %1489 = vxpose.xlu0.b32.end [16/16] 0.0, 128
  %v1490 = vpop.trf.xlu0
  %v1491 = vpop.trf.xlu0
  %v1492 = vpop.trf.xlu0
  %v1493 = vpop.trf.xlu0
  %v1494 = vpop.trf.xlu0
  %v1495 = vpop.trf.xlu0
  %v1496 = vpop.trf.xlu0
  %v1497 = vpop.trf.xlu0
  %v1498 = vpop.trf.xlu0
  %v1499 = vpop.trf.xlu0
  %v1500 = vpop.trf.xlu0
  %v1501 = vpop.trf.xlu0
  %v1502 = vpop.trf.xlu0
  %v1503 = vpop.trf.xlu0
  %v1504 = vpop.trf.xlu0
  %v1505 = vpop.trf.xlu0
  %v1506 = vlaneseq
  %v1507 = vshrl.u32 %v1506, 7
  %v1508 = vsub.s32 0, %v1507
  %v1509 = vrot.slane %v1490, %v1508
  %v1510 = vmul.f32 %v174, %v1509
  %v1511 = vmul.f32 %v207, %v1509
  %v1512 = vmul.f32 %v1510, 0.00024414063
  %v1513 = vmul.f32 %v1511, 0.00024414063
  %v1514 = vsub.f32 %v1466, %v1512
  %v1515 = vsub.f32 %v1471, %v1513
  %vm1516 = vcmask 130048
  %1517 = vst.msk [vmem:[%s2] sm:$0xff] %vm1516, %v1514
  %1518 = vst.msk [vmem:[%s2 + $0x8] sm:$0xff] %vm1516, %v1515
  %1519 = vmatprep.subr.mxu0 0.0
  %1520 = vmatpush1.xpose.msra.mxu0 0.0
  %1521 = vmatprep.subr.mxu0 0.0
  %1522 = vmatpush1.xpose.msra.mxu0 0.0
  %1523 = vmatprep.subr.mxu0 0.0
  %1524 = vmatpush1.xpose.msra.mxu0 0.0
  %1525 = vmatprep.subr.mxu0 0.0
  %1526 = vmatpush1.xpose.msra.mxu0 0.0
  %1527 = vmatprep.subr.mxu0 0.0
  %1528 = vmatpush1.xpose.msra.mxu0 0.0
  %1529 = vmatprep.subr.mxu0 0.0
  %1530 = vmatpush1.xpose.msra.mxu0 0.0
  %1531 = vmatprep.subr.mxu0 0.0
  %1532 = vmatpush1.xpose.msra.mxu0 0.0
  %1533 = vmatprep.subr.mxu0 0.0
  %1534 = vmatpush1.xpose.msra.mxu0 0.0
  %1535 = vmatprep.subr.mxu0 0.0
  %1536 = vmatpush1.xpose.msra.mxu0 0.0
  %1537 = vmatprep.subr.mxu0 0.0
  %1538 = vmatpush1.xpose.msra.mxu0 0.0
  %1539 = vmatprep.subr.mxu0 0.0
  %1540 = vmatpush1.xpose.msra.mxu0 0.0
  %1541 = vmatprep.subr.mxu0 0.0
  %1542 = vmatpush1.xpose.msra.mxu0 0.0
  %1543 = vmatprep.subr.mxu0 0.0
  %1544 = vmatpush1.xpose.msra.mxu0 0.0
  %1545 = vmatprep.subr.mxu0 0.0
  %1546 = vmatpush1.xpose.msra.mxu0 0.0
  %1547 = vmatprep.subr.mxu0 %v111
  %1548 = vmatpush1.xpose.msra.mxu0 %v110
  %1549 = vmatprep.subr.mxu0 %v79
  %1550 = vmatpush1.xpose.msra.mxu0 %v78
  %1551 = vmatprep.subr.mxu0 0.0
  %1552 = vmatpush2.xpose.msra.mxu0 0.0
  %1553 = vmatprep.subr.mxu0 0.0
  %1554 = vmatpush2.xpose.msra.mxu0 0.0
  %1555 = vmatprep.subr.mxu0 0.0
  %1556 = vmatpush2.xpose.msra.mxu0 0.0
  %1557 = vmatprep.subr.mxu0 0.0
  %1558 = vmatpush2.xpose.msra.mxu0 0.0
  %1559 = vmatprep.subr.mxu0 0.0
  %1560 = vmatpush2.xpose.msra.mxu0 0.0
  %1561 = vmatprep.subr.mxu0 0.0
  %1562 = vmatpush2.xpose.msra.mxu0 0.0
  %1563 = vmatprep.subr.mxu0 0.0
  %1564 = vmatpush2.xpose.msra.mxu0 0.0
  %1565 = vmatprep.subr.mxu0 0.0
  %1566 = vmatpush2.xpose.msra.mxu0 0.0
  %1567 = vmatprep.subr.mxu0 0.0
  %1568 = vmatpush2.xpose.msra.mxu0 0.0
  %1569 = vmatprep.subr.mxu0 0.0
  %1570 = vmatpush2.xpose.msra.mxu0 0.0
  %1571 = vmatprep.subr.mxu0 0.0
  %1572 = vmatpush2.xpose.msra.mxu0 0.0
  %1573 = vmatprep.subr.mxu0 0.0
  %1574 = vmatpush2.xpose.msra.mxu0 0.0
  %1575 = vmatprep.subr.mxu0 0.0
  %1576 = vmatpush2.xpose.msra.mxu0 0.0
  %1577 = vmatprep.subr.mxu0 0.0
  %1578 = vmatpush2.xpose.msra.mxu0 0.0
  %1579 = vmatprep.subr.mxu0 0.0
  %1580 = vmatpush2.xpose.msra.mxu0 0.0
  %1581 = vmatprep.subr.mxu0 0.0
  %1582 = vmatpush2.xpose.msra.mxu0 0.0
  %1583 = vmatprep.mubr.f32.mxu0 %v79
  %1584 = vmatmul.mubr.f32.gmra.mxu0 %v78
  %v1585 = vpop.f32.mrf.mxu0
  %v1586 = vadd.f32 0.0, %v1585
  %v1587 = vpop.f32.mrf.mxu0
  %1588 = vmatprep.mubr.f32.mxu0 %v111
  %1589 = vmatmul.mubr.f32.gmra.mxu0 %v110
  %v1590 = vpop.f32.mrf.mxu0
  %v1591 = vadd.f32 0.0, %v1590
  %v1592 = vpop.f32.mrf.mxu0
  %1593 = vdwg.mxu0
  %1594 = vmatprep.subr.mxu0 0.0
  %1595 = vmatpush1.xpose.msra.mxu0 0.0
  %1596 = vmatprep.subr.mxu0 0.0
  %1597 = vmatpush1.xpose.msra.mxu0 0.0
  %1598 = vmatprep.subr.mxu0 0.0
  %1599 = vmatpush1.xpose.msra.mxu0 0.0
  %1600 = vmatprep.subr.mxu0 0.0
  %1601 = vmatpush1.xpose.msra.mxu0 0.0
  %1602 = vmatprep.subr.mxu0 0.0
  %1603 = vmatpush1.xpose.msra.mxu0 0.0
  %1604 = vmatprep.subr.mxu0 0.0
  %1605 = vmatpush1.xpose.msra.mxu0 0.0
  %1606 = vmatprep.subr.mxu0 0.0
  %1607 = vmatpush1.xpose.msra.mxu0 0.0
  %1608 = vmatprep.subr.mxu0 0.0
  %1609 = vmatpush1.xpose.msra.mxu0 0.0
  %1610 = vmatprep.subr.mxu0 0.0
  %1611 = vmatpush1.xpose.msra.mxu0 0.0
  %1612 = vmatprep.subr.mxu0 0.0
  %1613 = vmatpush1.xpose.msra.mxu0 0.0
  %1614 = vmatprep.subr.mxu0 0.0
  %1615 = vmatpush1.xpose.msra.mxu0 0.0
  %1616 = vmatprep.subr.mxu0 0.0
  %1617 = vmatpush1.xpose.msra.mxu0 0.0
  %1618 = vmatprep.subr.mxu0 0.0
  %1619 = vmatpush1.xpose.msra.mxu0 0.0
  %1620 = vmatprep.subr.mxu0 0.0
  %1621 = vmatpush1.xpose.msra.mxu0 0.0
  %1622 = vmatprep.subr.mxu0 %v113
  %1623 = vmatpush1.xpose.msra.mxu0 %v112
  %1624 = vmatprep.subr.mxu0 %v81
  %1625 = vmatpush1.xpose.msra.mxu0 %v80
  %1626 = vmatprep.subr.mxu0 0.0
  %1627 = vmatpush2.xpose.msra.mxu0 0.0
  %1628 = vmatprep.subr.mxu0 0.0
  %1629 = vmatpush2.xpose.msra.mxu0 0.0
  %1630 = vmatprep.subr.mxu0 0.0
  %1631 = vmatpush2.xpose.msra.mxu0 0.0
  %1632 = vmatprep.subr.mxu0 0.0
  %1633 = vmatpush2.xpose.msra.mxu0 0.0
  %1634 = vmatprep.subr.mxu0 0.0
  %1635 = vmatpush2.xpose.msra.mxu0 0.0
  %1636 = vmatprep.subr.mxu0 0.0
  %1637 = vmatpush2.xpose.msra.mxu0 0.0
  %1638 = vmatprep.subr.mxu0 0.0
  %1639 = vmatpush2.xpose.msra.mxu0 0.0
  %1640 = vmatprep.subr.mxu0 0.0
  %1641 = vmatpush2.xpose.msra.mxu0 0.0
  %1642 = vmatprep.subr.mxu0 0.0
  %1643 = vmatpush2.xpose.msra.mxu0 0.0
  %1644 = vmatprep.subr.mxu0 0.0
  %1645 = vmatpush2.xpose.msra.mxu0 0.0
  %1646 = vmatprep.subr.mxu0 0.0
  %1647 = vmatpush2.xpose.msra.mxu0 0.0
  %1648 = vmatprep.subr.mxu0 0.0
  %1649 = vmatpush2.xpose.msra.mxu0 0.0
  %1650 = vmatprep.subr.mxu0 0.0
  %1651 = vmatpush2.xpose.msra.mxu0 0.0
  %1652 = vmatprep.subr.mxu0 0.0
  %1653 = vmatpush2.xpose.msra.mxu0 0.0
  %1654 = vmatprep.subr.mxu0 0.0
  %1655 = vmatpush2.xpose.msra.mxu0 0.0
  %1656 = vmatprep.subr.mxu0 0.0
  %1657 = vmatpush2.xpose.msra.mxu0 0.0
  %1658 = vmatprep.mubr.f32.mxu0 %v81
  %1659 = vmatmul.mubr.f32.gmra.mxu0 %v80
  %v1660 = vpop.f32.mrf.mxu0
  %v1661 = vadd.f32 %v1586, %v1660
  %v1662 = vpop.f32.mrf.mxu0
  %1663 = vmatprep.mubr.f32.mxu0 %v113
  %1664 = vmatmul.mubr.f32.gmra.mxu0 %v112
  %v1665 = vpop.f32.mrf.mxu0
  %v1666 = vadd.f32 %v1591, %v1665
  %v1667 = vpop.f32.mrf.mxu0
  %1668 = vdwg.mxu0
  %1669 = vmatprep.subr.mxu0 0.0
  %1670 = vmatpush1.xpose.msra.mxu0 0.0
  %1671 = vmatprep.subr.mxu0 0.0
  %1672 = vmatpush1.xpose.msra.mxu0 0.0
  %1673 = vmatprep.subr.mxu0 0.0
  %1674 = vmatpush1.xpose.msra.mxu0 0.0
  %1675 = vmatprep.subr.mxu0 0.0
  %1676 = vmatpush1.xpose.msra.mxu0 0.0
  %1677 = vmatprep.subr.mxu0 0.0
  %1678 = vmatpush1.xpose.msra.mxu0 0.0
  %1679 = vmatprep.subr.mxu0 0.0
  %1680 = vmatpush1.xpose.msra.mxu0 0.0
  %1681 = vmatprep.subr.mxu0 0.0
  %1682 = vmatpush1.xpose.msra.mxu0 0.0
  %1683 = vmatprep.subr.mxu0 0.0
  %1684 = vmatpush1.xpose.msra.mxu0 0.0
  %1685 = vmatprep.subr.mxu0 0.0
  %1686 = vmatpush1.xpose.msra.mxu0 0.0
  %1687 = vmatprep.subr.mxu0 0.0
  %1688 = vmatpush1.xpose.msra.mxu0 0.0
  %1689 = vmatprep.subr.mxu0 0.0
  %1690 = vmatpush1.xpose.msra.mxu0 0.0
  %1691 = vmatprep.subr.mxu0 0.0
  %1692 = vmatpush1.xpose.msra.mxu0 0.0
  %1693 = vmatprep.subr.mxu0 0.0
  %1694 = vmatpush1.xpose.msra.mxu0 0.0
  %1695 = vmatprep.subr.mxu0 0.0
  %1696 = vmatpush1.xpose.msra.mxu0 0.0
  %1697 = vmatprep.subr.mxu0 %v115
  %1698 = vmatpush1.xpose.msra.mxu0 %v114
  %1699 = vmatprep.subr.mxu0 %v83
  %1700 = vmatpush1.xpose.msra.mxu0 %v82
  %1701 = vmatprep.subr.mxu0 0.0
  %1702 = vmatpush2.xpose.msra.mxu0 0.0
  %1703 = vmatprep.subr.mxu0 0.0
  %1704 = vmatpush2.xpose.msra.mxu0 0.0
  %1705 = vmatprep.subr.mxu0 0.0
  %1706 = vmatpush2.xpose.msra.mxu0 0.0
  %1707 = vmatprep.subr.mxu0 0.0
  %1708 = vmatpush2.xpose.msra.mxu0 0.0
  %1709 = vmatprep.subr.mxu0 0.0
  %1710 = vmatpush2.xpose.msra.mxu0 0.0
  %1711 = vmatprep.subr.mxu0 0.0
  %1712 = vmatpush2.xpose.msra.mxu0 0.0
  %1713 = vmatprep.subr.mxu0 0.0
  %1714 = vmatpush2.xpose.msra.mxu0 0.0
  %1715 = vmatprep.subr.mxu0 0.0
  %1716 = vmatpush2.xpose.msra.mxu0 0.0
  %1717 = vmatprep.subr.mxu0 0.0
  %1718 = vmatpush2.xpose.msra.mxu0 0.0
  %1719 = vmatprep.subr.mxu0 0.0
  %1720 = vmatpush2.xpose.msra.mxu0 0.0
  %1721 = vmatprep.subr.mxu0 0.0
  %1722 = vmatpush2.xpose.msra.mxu0 0.0
  %1723 = vmatprep.subr.mxu0 0.0
  %1724 = vmatpush2.xpose.msra.mxu0 0.0
  %1725 = vmatprep.subr.mxu0 0.0
  %1726 = vmatpush2.xpose.msra.mxu0 0.0
  %1727 = vmatprep.subr.mxu0 0.0
  %1728 = vmatpush2.xpose.msra.mxu0 0.0
  %1729 = vmatprep.subr.mxu0 0.0
  %1730 = vmatpush2.xpose.msra.mxu0 0.0
  %1731 = vmatprep.subr.mxu0 0.0
  %1732 = vmatpush2.xpose.msra.mxu0 0.0
  %1733 = vmatprep.mubr.f32.mxu0 %v83
  %1734 = vmatmul.mubr.f32.gmra.mxu0 %v82
  %v1735 = vpop.f32.mrf.mxu0
  %v1736 = vadd.f32 %v1661, %v1735
  %v1737 = vpop.f32.mrf.mxu0
  %1738 = vmatprep.mubr.f32.mxu0 %v115
  %1739 = vmatmul.mubr.f32.gmra.mxu0 %v114
  %v1740 = vpop.f32.mrf.mxu0
  %v1741 = vadd.f32 %v1666, %v1740
  %v1742 = vpop.f32.mrf.mxu0
  %1743 = vdwg.mxu0
  %1744 = vmatprep.subr.mxu0 0.0
  %1745 = vmatpush1.xpose.msra.mxu0 0.0
  %1746 = vmatprep.subr.mxu0 0.0
  %1747 = vmatpush1.xpose.msra.mxu0 0.0
  %1748 = vmatprep.subr.mxu0 0.0
  %1749 = vmatpush1.xpose.msra.mxu0 0.0
  %1750 = vmatprep.subr.mxu0 0.0
  %1751 = vmatpush1.xpose.msra.mxu0 0.0
  %1752 = vmatprep.subr.mxu0 0.0
  %1753 = vmatpush1.xpose.msra.mxu0 0.0
  %1754 = vmatprep.subr.mxu0 0.0
  %1755 = vmatpush1.xpose.msra.mxu0 0.0
  %1756 = vmatprep.subr.mxu0 0.0
  %1757 = vmatpush1.xpose.msra.mxu0 0.0
  %1758 = vmatprep.subr.mxu0 0.0
  %1759 = vmatpush1.xpose.msra.mxu0 0.0
  %1760 = vmatprep.subr.mxu0 0.0
  %1761 = vmatpush1.xpose.msra.mxu0 0.0
  %1762 = vmatprep.subr.mxu0 0.0
  %1763 = vmatpush1.xpose.msra.mxu0 0.0
  %1764 = vmatprep.subr.mxu0 0.0
  %1765 = vmatpush1.xpose.msra.mxu0 0.0
  %1766 = vmatprep.subr.mxu0 0.0
  %1767 = vmatpush1.xpose.msra.mxu0 0.0
  %1768 = vmatprep.subr.mxu0 0.0
  %1769 = vmatpush1.xpose.msra.mxu0 0.0
  %1770 = vmatprep.subr.mxu0 0.0
  %1771 = vmatpush1.xpose.msra.mxu0 0.0
  %1772 = vmatprep.subr.mxu0 %v117
  %1773 = vmatpush1.xpose.msra.mxu0 %v116
  %1774 = vmatprep.subr.mxu0 %v85
  %1775 = vmatpush1.xpose.msra.mxu0 %v84
  %1776 = vmatprep.subr.mxu0 0.0
  %1777 = vmatpush2.xpose.msra.mxu0 0.0
  %1778 = vmatprep.subr.mxu0 0.0
  %1779 = vmatpush2.xpose.msra.mxu0 0.0
  %1780 = vmatprep.subr.mxu0 0.0
  %1781 = vmatpush2.xpose.msra.mxu0 0.0
  %1782 = vmatprep.subr.mxu0 0.0
  %1783 = vmatpush2.xpose.msra.mxu0 0.0
  %1784 = vmatprep.subr.mxu0 0.0
  %1785 = vmatpush2.xpose.msra.mxu0 0.0
  %1786 = vmatprep.subr.mxu0 0.0
  %1787 = vmatpush2.xpose.msra.mxu0 0.0
  %1788 = vmatprep.subr.mxu0 0.0
  %1789 = vmatpush2.xpose.msra.mxu0 0.0
  %1790 = vmatprep.subr.mxu0 0.0
  %1791 = vmatpush2.xpose.msra.mxu0 0.0
  %1792 = vmatprep.subr.mxu0 0.0
  %1793 = vmatpush2.xpose.msra.mxu0 0.0
  %1794 = vmatprep.subr.mxu0 0.0
  %1795 = vmatpush2.xpose.msra.mxu0 0.0
  %1796 = vmatprep.subr.mxu0 0.0
  %1797 = vmatpush2.xpose.msra.mxu0 0.0
  %1798 = vmatprep.subr.mxu0 0.0
  %1799 = vmatpush2.xpose.msra.mxu0 0.0
  %1800 = vmatprep.subr.mxu0 0.0
  %1801 = vmatpush2.xpose.msra.mxu0 0.0
  %1802 = vmatprep.subr.mxu0 0.0
  %1803 = vmatpush2.xpose.msra.mxu0 0.0
  %1804 = vmatprep.subr.mxu0 0.0
  %1805 = vmatpush2.xpose.msra.mxu0 0.0
  %1806 = vmatprep.subr.mxu0 0.0
  %1807 = vmatpush2.xpose.msra.mxu0 0.0
  %1808 = vmatprep.mubr.f32.mxu0 %v85
  %1809 = vmatmul.mubr.f32.gmra.mxu0 %v84
  %v1810 = vpop.f32.mrf.mxu0
  %v1811 = vadd.f32 %v1736, %v1810
  %v1812 = vpop.f32.mrf.mxu0
  %1813 = vmatprep.mubr.f32.mxu0 %v117
  %1814 = vmatmul.mubr.f32.gmra.mxu0 %v116
  %v1815 = vpop.f32.mrf.mxu0
  %v1816 = vadd.f32 %v1741, %v1815
  %v1817 = vpop.f32.mrf.mxu0
  %1818 = vdwg.mxu0
  %1819 = vmatprep.subr.mxu0 0.0
  %1820 = vmatpush1.xpose.msra.mxu0 0.0
  %1821 = vmatprep.subr.mxu0 0.0
  %1822 = vmatpush1.xpose.msra.mxu0 0.0
  %1823 = vmatprep.subr.mxu0 0.0
  %1824 = vmatpush1.xpose.msra.mxu0 0.0
  %1825 = vmatprep.subr.mxu0 0.0
  %1826 = vmatpush1.xpose.msra.mxu0 0.0
  %1827 = vmatprep.subr.mxu0 0.0
  %1828 = vmatpush1.xpose.msra.mxu0 0.0
  %1829 = vmatprep.subr.mxu0 0.0
  %1830 = vmatpush1.xpose.msra.mxu0 0.0
  %1831 = vmatprep.subr.mxu0 0.0
  %1832 = vmatpush1.xpose.msra.mxu0 0.0
  %1833 = vmatprep.subr.mxu0 0.0
  %1834 = vmatpush1.xpose.msra.mxu0 0.0
  %1835 = vmatprep.subr.mxu0 0.0
  %1836 = vmatpush1.xpose.msra.mxu0 0.0
  %1837 = vmatprep.subr.mxu0 0.0
  %1838 = vmatpush1.xpose.msra.mxu0 0.0
  %1839 = vmatprep.subr.mxu0 0.0
  %1840 = vmatpush1.xpose.msra.mxu0 0.0
  %1841 = vmatprep.subr.mxu0 0.0
  %1842 = vmatpush1.xpose.msra.mxu0 0.0
  %1843 = vmatprep.subr.mxu0 0.0
  %1844 = vmatpush1.xpose.msra.mxu0 0.0
  %1845 = vmatprep.subr.mxu0 0.0
  %1846 = vmatpush1.xpose.msra.mxu0 0.0
  %1847 = vmatprep.subr.mxu0 %v119
  %1848 = vmatpush1.xpose.msra.mxu0 %v118
  %1849 = vmatprep.subr.mxu0 %v87
  %1850 = vmatpush1.xpose.msra.mxu0 %v86
  %1851 = vmatprep.subr.mxu0 0.0
  %1852 = vmatpush2.xpose.msra.mxu0 0.0
  %1853 = vmatprep.subr.mxu0 0.0
  %1854 = vmatpush2.xpose.msra.mxu0 0.0
  %1855 = vmatprep.subr.mxu0 0.0
  %1856 = vmatpush2.xpose.msra.mxu0 0.0
  %1857 = vmatprep.subr.mxu0 0.0
  %1858 = vmatpush2.xpose.msra.mxu0 0.0
  %1859 = vmatprep.subr.mxu0 0.0
  %1860 = vmatpush2.xpose.msra.mxu0 0.0
  %1861 = vmatprep.subr.mxu0 0.0
  %1862 = vmatpush2.xpose.msra.mxu0 0.0
  %1863 = vmatprep.subr.mxu0 0.0
  %1864 = vmatpush2.xpose.msra.mxu0 0.0
  %1865 = vmatprep.subr.mxu0 0.0
  %1866 = vmatpush2.xpose.msra.mxu0 0.0
  %1867 = vmatprep.subr.mxu0 0.0
  %1868 = vmatpush2.xpose.msra.mxu0 0.0
  %1869 = vmatprep.subr.mxu0 0.0
  %1870 = vmatpush2.xpose.msra.mxu0 0.0
  %1871 = vmatprep.subr.mxu0 0.0
  %1872 = vmatpush2.xpose.msra.mxu0 0.0
  %1873 = vmatprep.subr.mxu0 0.0
  %1874 = vmatpush2.xpose.msra.mxu0 0.0
  %1875 = vmatprep.subr.mxu0 0.0
  %1876 = vmatpush2.xpose.msra.mxu0 0.0
  %1877 = vmatprep.subr.mxu0 0.0
  %1878 = vmatpush2.xpose.msra.mxu0 0.0
  %1879 = vmatprep.subr.mxu0 0.0
  %1880 = vmatpush2.xpose.msra.mxu0 0.0
  %1881 = vmatprep.subr.mxu0 0.0
  %1882 = vmatpush2.xpose.msra.mxu0 0.0
  %1883 = vmatprep.mubr.f32.mxu0 %v87
  %1884 = vmatmul.mubr.f32.gmra.mxu0 %v86
  %v1885 = vpop.f32.mrf.mxu0
  %v1886 = vadd.f32 %v1811, %v1885
  %v1887 = vpop.f32.mrf.mxu0
  %1888 = vmatprep.mubr.f32.mxu0 %v119
  %1889 = vmatmul.mubr.f32.gmra.mxu0 %v118
  %v1890 = vpop.f32.mrf.mxu0
  %v1891 = vadd.f32 %v1816, %v1890
  %v1892 = vpop.f32.mrf.mxu0
  %1893 = vdwg.mxu0
  %1894 = vmatprep.subr.mxu0 0.0
  %1895 = vmatpush1.xpose.msra.mxu0 0.0
  %1896 = vmatprep.subr.mxu0 0.0
  %1897 = vmatpush1.xpose.msra.mxu0 0.0
  %1898 = vmatprep.subr.mxu0 0.0
  %1899 = vmatpush1.xpose.msra.mxu0 0.0
  %1900 = vmatprep.subr.mxu0 0.0
  %1901 = vmatpush1.xpose.msra.mxu0 0.0
  %1902 = vmatprep.subr.mxu0 0.0
  %1903 = vmatpush1.xpose.msra.mxu0 0.0
  %1904 = vmatprep.subr.mxu0 0.0
  %1905 = vmatpush1.xpose.msra.mxu0 0.0
  %1906 = vmatprep.subr.mxu0 0.0
  %1907 = vmatpush1.xpose.msra.mxu0 0.0
  %1908 = vmatprep.subr.mxu0 0.0
  %1909 = vmatpush1.xpose.msra.mxu0 0.0
  %1910 = vmatprep.subr.mxu0 0.0
  %1911 = vmatpush1.xpose.msra.mxu0 0.0
  %1912 = vmatprep.subr.mxu0 0.0
  %1913 = vmatpush1.xpose.msra.mxu0 0.0
  %1914 = vmatprep.subr.mxu0 0.0
  %1915 = vmatpush1.xpose.msra.mxu0 0.0
  %1916 = vmatprep.subr.mxu0 0.0
  %1917 = vmatpush1.xpose.msra.mxu0 0.0
  %1918 = vmatprep.subr.mxu0 0.0
  %1919 = vmatpush1.xpose.msra.mxu0 0.0
  %1920 = vmatprep.subr.mxu0 0.0
  %1921 = vmatpush1.xpose.msra.mxu0 0.0
  %1922 = vmatprep.subr.mxu0 %v121
  %1923 = vmatpush1.xpose.msra.mxu0 %v120
  %1924 = vmatprep.subr.mxu0 %v89
  %1925 = vmatpush1.xpose.msra.mxu0 %v88
  %1926 = vmatprep.subr.mxu0 0.0
  %1927 = vmatpush2.xpose.msra.mxu0 0.0
  %1928 = vmatprep.subr.mxu0 0.0
  %1929 = vmatpush2.xpose.msra.mxu0 0.0
  %1930 = vmatprep.subr.mxu0 0.0
  %1931 = vmatpush2.xpose.msra.mxu0 0.0
  %1932 = vmatprep.subr.mxu0 0.0
  %1933 = vmatpush2.xpose.msra.mxu0 0.0
  %1934 = vmatprep.subr.mxu0 0.0
  %1935 = vmatpush2.xpose.msra.mxu0 0.0
  %1936 = vmatprep.subr.mxu0 0.0
  %1937 = vmatpush2.xpose.msra.mxu0 0.0
  %1938 = vmatprep.subr.mxu0 0.0
  %1939 = vmatpush2.xpose.msra.mxu0 0.0
  %1940 = vmatprep.subr.mxu0 0.0
  %1941 = vmatpush2.xpose.msra.mxu0 0.0
  %1942 = vmatprep.subr.mxu0 0.0
  %1943 = vmatpush2.xpose.msra.mxu0 0.0
  %1944 = vmatprep.subr.mxu0 0.0
  %1945 = vmatpush2.xpose.msra.mxu0 0.0
  %1946 = vmatprep.subr.mxu0 0.0
  %1947 = vmatpush2.xpose.msra.mxu0 0.0
  %1948 = vmatprep.subr.mxu0 0.0
  %1949 = vmatpush2.xpose.msra.mxu0 0.0
  %1950 = vmatprep.subr.mxu0 0.0
  %1951 = vmatpush2.xpose.msra.mxu0 0.0
  %1952 = vmatprep.subr.mxu0 0.0
  %1953 = vmatpush2.xpose.msra.mxu0 0.0
  %1954 = vmatprep.subr.mxu0 0.0
  %1955 = vmatpush2.xpose.msra.mxu0 0.0
  %1956 = vmatprep.subr.mxu0 0.0
  %1957 = vmatpush2.xpose.msra.mxu0 0.0
  %1958 = vmatprep.mubr.f32.mxu0 %v89
  %1959 = vmatmul.mubr.f32.gmra.mxu0 %v88
  %v1960 = vpop.f32.mrf.mxu0
  %v1961 = vadd.f32 %v1886, %v1960
  %v1962 = vpop.f32.mrf.mxu0
  %1963 = vmatprep.mubr.f32.mxu0 %v121
  %1964 = vmatmul.mubr.f32.gmra.mxu0 %v120
  %v1965 = vpop.f32.mrf.mxu0
  %v1966 = vadd.f32 %v1891, %v1965
  %v1967 = vpop.f32.mrf.mxu0
  %1968 = vdwg.mxu0
  %1969 = vmatprep.subr.mxu0 0.0
  %1970 = vmatpush1.xpose.msra.mxu0 0.0
  %1971 = vmatprep.subr.mxu0 0.0
  %1972 = vmatpush1.xpose.msra.mxu0 0.0
  %1973 = vmatprep.subr.mxu0 0.0
  %1974 = vmatpush1.xpose.msra.mxu0 0.0
  %1975 = vmatprep.subr.mxu0 0.0
  %1976 = vmatpush1.xpose.msra.mxu0 0.0
  %1977 = vmatprep.subr.mxu0 0.0
  %1978 = vmatpush1.xpose.msra.mxu0 0.0
  %1979 = vmatprep.subr.mxu0 0.0
  %1980 = vmatpush1.xpose.msra.mxu0 0.0
  %1981 = vmatprep.subr.mxu0 0.0
  %1982 = vmatpush1.xpose.msra.mxu0 0.0
  %1983 = vmatprep.subr.mxu0 0.0
  %1984 = vmatpush1.xpose.msra.mxu0 0.0
  %1985 = vmatprep.subr.mxu0 0.0
  %1986 = vmatpush1.xpose.msra.mxu0 0.0
  %1987 = vmatprep.subr.mxu0 0.0
  %1988 = vmatpush1.xpose.msra.mxu0 0.0
  %1989 = vmatprep.subr.mxu0 0.0
  %1990 = vmatpush1.xpose.msra.mxu0 0.0
  %1991 = vmatprep.subr.mxu0 0.0
  %1992 = vmatpush1.xpose.msra.mxu0 0.0
  %1993 = vmatprep.subr.mxu0 0.0
  %1994 = vmatpush1.xpose.msra.mxu0 0.0
  %1995 = vmatprep.subr.mxu0 0.0
  %1996 = vmatpush1.xpose.msra.mxu0 0.0
  %1997 = vmatprep.subr.mxu0 %v123
  %1998 = vmatpush1.xpose.msra.mxu0 %v122
  %1999 = vmatprep.subr.mxu0 %v91
  %2000 = vmatpush1.xpose.msra.mxu0 %v90
  %2001 = vmatprep.subr.mxu0 0.0
  %2002 = vmatpush2.xpose.msra.mxu0 0.0
  %2003 = vmatprep.subr.mxu0 0.0
  %2004 = vmatpush2.xpose.msra.mxu0 0.0
  %2005 = vmatprep.subr.mxu0 0.0
  %2006 = vmatpush2.xpose.msra.mxu0 0.0
  %2007 = vmatprep.subr.mxu0 0.0
  %2008 = vmatpush2.xpose.msra.mxu0 0.0
  %2009 = vmatprep.subr.mxu0 0.0
  %2010 = vmatpush2.xpose.msra.mxu0 0.0
  %2011 = vmatprep.subr.mxu0 0.0
  %2012 = vmatpush2.xpose.msra.mxu0 0.0
  %2013 = vmatprep.subr.mxu0 0.0
  %2014 = vmatpush2.xpose.msra.mxu0 0.0
  %2015 = vmatprep.subr.mxu0 0.0
  %2016 = vmatpush2.xpose.msra.mxu0 0.0
  %2017 = vmatprep.subr.mxu0 0.0
  %2018 = vmatpush2.xpose.msra.mxu0 0.0
  %2019 = vmatprep.subr.mxu0 0.0
  %2020 = vmatpush2.xpose.msra.mxu0 0.0
  %2021 = vmatprep.subr.mxu0 0.0
  %2022 = vmatpush2.xpose.msra.mxu0 0.0
  %2023 = vmatprep.subr.mxu0 0.0
  %2024 = vmatpush2.xpose.msra.mxu0 0.0
  %2025 = vmatprep.subr.mxu0 0.0
  %2026 = vmatpush2.xpose.msra.mxu0 0.0
  %2027 = vmatprep.subr.mxu0 0.0
  %2028 = vmatpush2.xpose.msra.mxu0 0.0
  %2029 = vmatprep.subr.mxu0 0.0
  %2030 = vmatpush2.xpose.msra.mxu0 0.0
  %2031 = vmatprep.subr.mxu0 0.0
  %2032 = vmatpush2.xpose.msra.mxu0 0.0
  %2033 = vmatprep.mubr.f32.mxu0 %v91
  %2034 = vmatmul.mubr.f32.gmra.mxu0 %v90
  %v2035 = vpop.f32.mrf.mxu0
  %v2036 = vadd.f32 %v1961, %v2035
  %v2037 = vpop.f32.mrf.mxu0
  %2038 = vmatprep.mubr.f32.mxu0 %v123
  %2039 = vmatmul.mubr.f32.gmra.mxu0 %v122
  %v2040 = vpop.f32.mrf.mxu0
  %v2041 = vadd.f32 %v1966, %v2040
  %v2042 = vpop.f32.mrf.mxu0
  %2043 = vdwg.mxu0
  %2044 = vmatprep.subr.mxu0 0.0
  %2045 = vmatpush1.xpose.msra.mxu0 0.0
  %2046 = vmatprep.subr.mxu0 0.0
  %2047 = vmatpush1.xpose.msra.mxu0 0.0
  %2048 = vmatprep.subr.mxu0 0.0
  %2049 = vmatpush1.xpose.msra.mxu0 0.0
  %2050 = vmatprep.subr.mxu0 0.0
  %2051 = vmatpush1.xpose.msra.mxu0 0.0
  %2052 = vmatprep.subr.mxu0 0.0
  %2053 = vmatpush1.xpose.msra.mxu0 0.0
  %2054 = vmatprep.subr.mxu0 0.0
  %2055 = vmatpush1.xpose.msra.mxu0 0.0
  %2056 = vmatprep.subr.mxu0 0.0
  %2057 = vmatpush1.xpose.msra.mxu0 0.0
  %2058 = vmatprep.subr.mxu0 0.0
  %2059 = vmatpush1.xpose.msra.mxu0 0.0
  %2060 = vmatprep.subr.mxu0 0.0
  %2061 = vmatpush1.xpose.msra.mxu0 0.0
  %2062 = vmatprep.subr.mxu0 0.0
  %2063 = vmatpush1.xpose.msra.mxu0 0.0
  %2064 = vmatprep.subr.mxu0 0.0
  %2065 = vmatpush1.xpose.msra.mxu0 0.0
  %2066 = vmatprep.subr.mxu0 0.0
  %2067 = vmatpush1.xpose.msra.mxu0 0.0
  %2068 = vmatprep.subr.mxu0 0.0
  %2069 = vmatpush1.xpose.msra.mxu0 0.0
  %2070 = vmatprep.subr.mxu0 0.0
  %2071 = vmatpush1.xpose.msra.mxu0 0.0
  %2072 = vmatprep.subr.mxu0 %v125
  %2073 = vmatpush1.xpose.msra.mxu0 %v124
  %2074 = vmatprep.subr.mxu0 %v93
  %2075 = vmatpush1.xpose.msra.mxu0 %v92
  %2076 = vmatprep.subr.mxu0 0.0
  %2077 = vmatpush2.xpose.msra.mxu0 0.0
  %2078 = vmatprep.subr.mxu0 0.0
  %2079 = vmatpush2.xpose.msra.mxu0 0.0
  %2080 = vmatprep.subr.mxu0 0.0
  %2081 = vmatpush2.xpose.msra.mxu0 0.0
  %2082 = vmatprep.subr.mxu0 0.0
  %2083 = vmatpush2.xpose.msra.mxu0 0.0
  %2084 = vmatprep.subr.mxu0 0.0
  %2085 = vmatpush2.xpose.msra.mxu0 0.0
  %2086 = vmatprep.subr.mxu0 0.0
  %2087 = vmatpush2.xpose.msra.mxu0 0.0
  %2088 = vmatprep.subr.mxu0 0.0
  %2089 = vmatpush2.xpose.msra.mxu0 0.0
  %2090 = vmatprep.subr.mxu0 0.0
  %2091 = vmatpush2.xpose.msra.mxu0 0.0
  %2092 = vmatprep.subr.mxu0 0.0
  %2093 = vmatpush2.xpose.msra.mxu0 0.0
  %2094 = vmatprep.subr.mxu0 0.0
  %2095 = vmatpush2.xpose.msra.mxu0 0.0
  %2096 = vmatprep.subr.mxu0 0.0
  %2097 = vmatpush2.xpose.msra.mxu0 0.0
  %2098 = vmatprep.subr.mxu0 0.0
  %2099 = vmatpush2.xpose.msra.mxu0 0.0
  %2100 = vmatprep.subr.mxu0 0.0
  %2101 = vmatpush2.xpose.msra.mxu0 0.0
  %2102 = vmatprep.subr.mxu0 0.0
  %2103 = vmatpush2.xpose.msra.mxu0 0.0
  %2104 = vmatprep.subr.mxu0 0.0
  %2105 = vmatpush2.xpose.msra.mxu0 0.0
  %2106 = vmatprep.subr.mxu0 0.0
  %2107 = vmatpush2.xpose.msra.mxu0 0.0
  %2108 = vmatprep.mubr.f32.mxu0 %v93
  %2109 = vmatmul.mubr.f32.gmra.mxu0 %v92
  %v2110 = vpop.f32.mrf.mxu0
  %v2111 = vadd.f32 %v2036, %v2110
  %v2112 = vpop.f32.mrf.mxu0
  %2113 = vmatprep.mubr.f32.mxu0 %v125
  %2114 = vmatmul.mubr.f32.gmra.mxu0 %v124
  %v2115 = vpop.f32.mrf.mxu0
  %v2116 = vadd.f32 %v2041, %v2115
  %v2117 = vpop.f32.mrf.mxu0
  %2118 = vdwg.mxu0
  %2119 = vmatprep.subr.mxu0 0.0
  %2120 = vmatpush1.xpose.msra.mxu0 0.0
  %2121 = vmatprep.subr.mxu0 0.0
  %2122 = vmatpush1.xpose.msra.mxu0 0.0
  %2123 = vmatprep.subr.mxu0 0.0
  %2124 = vmatpush1.xpose.msra.mxu0 0.0
  %2125 = vmatprep.subr.mxu0 0.0
  %2126 = vmatpush1.xpose.msra.mxu0 0.0
  %2127 = vmatprep.subr.mxu0 0.0
  %2128 = vmatpush1.xpose.msra.mxu0 0.0
  %2129 = vmatprep.subr.mxu0 0.0
  %2130 = vmatpush1.xpose.msra.mxu0 0.0
  %2131 = vmatprep.subr.mxu0 0.0
  %2132 = vmatpush1.xpose.msra.mxu0 0.0
  %2133 = vmatprep.subr.mxu0 0.0
  %2134 = vmatpush1.xpose.msra.mxu0 0.0
  %2135 = vmatprep.subr.mxu0 0.0
  %2136 = vmatpush1.xpose.msra.mxu0 0.0
  %2137 = vmatprep.subr.mxu0 0.0
  %2138 = vmatpush1.xpose.msra.mxu0 0.0
  %2139 = vmatprep.subr.mxu0 0.0
  %2140 = vmatpush1.xpose.msra.mxu0 0.0
  %2141 = vmatprep.subr.mxu0 0.0
  %2142 = vmatpush1.xpose.msra.mxu0 0.0
  %2143 = vmatprep.subr.mxu0 0.0
  %2144 = vmatpush1.xpose.msra.mxu0 0.0
  %2145 = vmatprep.subr.mxu0 0.0
  %2146 = vmatpush1.xpose.msra.mxu0 0.0
  %2147 = vmatprep.subr.mxu0 %v127
  %2148 = vmatpush1.xpose.msra.mxu0 %v126
  %2149 = vmatprep.subr.mxu0 %v95
  %2150 = vmatpush1.xpose.msra.mxu0 %v94
  %2151 = vmatprep.subr.mxu0 0.0
  %2152 = vmatpush2.xpose.msra.mxu0 0.0
  %2153 = vmatprep.subr.mxu0 0.0
  %2154 = vmatpush2.xpose.msra.mxu0 0.0
  %2155 = vmatprep.subr.mxu0 0.0
  %2156 = vmatpush2.xpose.msra.mxu0 0.0
  %2157 = vmatprep.subr.mxu0 0.0
  %2158 = vmatpush2.xpose.msra.mxu0 0.0
  %2159 = vmatprep.subr.mxu0 0.0
  %2160 = vmatpush2.xpose.msra.mxu0 0.0
  %2161 = vmatprep.subr.mxu0 0.0
  %2162 = vmatpush2.xpose.msra.mxu0 0.0
  %2163 = vmatprep.subr.mxu0 0.0
  %2164 = vmatpush2.xpose.msra.mxu0 0.0
  %2165 = vmatprep.subr.mxu0 0.0
  %2166 = vmatpush2.xpose.msra.mxu0 0.0
  %2167 = vmatprep.subr.mxu0 0.0
  %2168 = vmatpush2.xpose.msra.mxu0 0.0
  %2169 = vmatprep.subr.mxu0 0.0
  %2170 = vmatpush2.xpose.msra.mxu0 0.0
  %2171 = vmatprep.subr.mxu0 0.0
  %2172 = vmatpush2.xpose.msra.mxu0 0.0
  %2173 = vmatprep.subr.mxu0 0.0
  %2174 = vmatpush2.xpose.msra.mxu0 0.0
  %2175 = vmatprep.subr.mxu0 0.0
  %2176 = vmatpush2.xpose.msra.mxu0 0.0
  %2177 = vmatprep.subr.mxu0 0.0
  %2178 = vmatpush2.xpose.msra.mxu0 0.0
  %2179 = vmatprep.subr.mxu0 0.0
  %2180 = vmatpush2.xpose.msra.mxu0 0.0
  %2181 = vmatprep.subr.mxu0 0.0
  %2182 = vmatpush2.xpose.msra.mxu0 0.0
  %2183 = vmatprep.mubr.f32.mxu0 %v95
  %2184 = vmatmul.mubr.f32.gmra.mxu0 %v94
  %v2185 = vpop.f32.mrf.mxu0
  %v2186 = vadd.f32 %v2111, %v2185
  %v2187 = vpop.f32.mrf.mxu0
  %2188 = vmatprep.mubr.f32.mxu0 %v127
  %2189 = vmatmul.mubr.f32.gmra.mxu0 %v126
  %v2190 = vpop.f32.mrf.mxu0
  %v2191 = vadd.f32 %v2116, %v2190
  %v2192 = vpop.f32.mrf.mxu0
  %2193 = vdwg.mxu0
  %2194 = vmatprep.subr.mxu0 0.0
  %2195 = vmatpush1.xpose.msra.mxu0 0.0
  %2196 = vmatprep.subr.mxu0 0.0
  %2197 = vmatpush1.xpose.msra.mxu0 0.0
  %2198 = vmatprep.subr.mxu0 0.0
  %2199 = vmatpush1.xpose.msra.mxu0 0.0
  %2200 = vmatprep.subr.mxu0 0.0
  %2201 = vmatpush1.xpose.msra.mxu0 0.0
  %2202 = vmatprep.subr.mxu0 0.0
  %2203 = vmatpush1.xpose.msra.mxu0 0.0
  %2204 = vmatprep.subr.mxu0 0.0
  %2205 = vmatpush1.xpose.msra.mxu0 0.0
  %2206 = vmatprep.subr.mxu0 0.0
  %2207 = vmatpush1.xpose.msra.mxu0 0.0
  %2208 = vmatprep.subr.mxu0 0.0
  %2209 = vmatpush1.xpose.msra.mxu0 0.0
  %2210 = vmatprep.subr.mxu0 0.0
  %2211 = vmatpush1.xpose.msra.mxu0 0.0
  %2212 = vmatprep.subr.mxu0 0.0
  %2213 = vmatpush1.xpose.msra.mxu0 0.0
  %2214 = vmatprep.subr.mxu0 0.0
  %2215 = vmatpush1.xpose.msra.mxu0 0.0
  %2216 = vmatprep.subr.mxu0 0.0
  %2217 = vmatpush1.xpose.msra.mxu0 0.0
  %2218 = vmatprep.subr.mxu0 0.0
  %2219 = vmatpush1.xpose.msra.mxu0 0.0
  %2220 = vmatprep.subr.mxu0 0.0
  %2221 = vmatpush1.xpose.msra.mxu0 0.0
  %2222 = vmatprep.subr.mxu0 %v129
  %2223 = vmatpush1.xpose.msra.mxu0 %v128
  %2224 = vmatprep.subr.mxu0 %v97
  %2225 = vmatpush1.xpose.msra.mxu0 %v96
  %2226 = vmatprep.subr.mxu0 0.0
  %2227 = vmatpush2.xpose.msra.mxu0 0.0
  %2228 = vmatprep.subr.mxu0 0.0
  %2229 = vmatpush2.xpose.msra.mxu0 0.0
  %2230 = vmatprep.subr.mxu0 0.0
  %2231 = vmatpush2.xpose.msra.mxu0 0.0
  %2232 = vmatprep.subr.mxu0 0.0
  %2233 = vmatpush2.xpose.msra.mxu0 0.0
  %2234 = vmatprep.subr.mxu0 0.0
  %2235 = vmatpush2.xpose.msra.mxu0 0.0
  %2236 = vmatprep.subr.mxu0 0.0
  %2237 = vmatpush2.xpose.msra.mxu0 0.0
  %2238 = vmatprep.subr.mxu0 0.0
  %2239 = vmatpush2.xpose.msra.mxu0 0.0
  %2240 = vmatprep.subr.mxu0 0.0
  %2241 = vmatpush2.xpose.msra.mxu0 0.0
  %2242 = vmatprep.subr.mxu0 0.0
  %2243 = vmatpush2.xpose.msra.mxu0 0.0
  %2244 = vmatprep.subr.mxu0 0.0
  %2245 = vmatpush2.xpose.msra.mxu0 0.0
  %2246 = vmatprep.subr.mxu0 0.0
  %2247 = vmatpush2.xpose.msra.mxu0 0.0
  %2248 = vmatprep.subr.mxu0 0.0
  %2249 = vmatpush2.xpose.msra.mxu0 0.0
  %2250 = vmatprep.subr.mxu0 0.0
  %2251 = vmatpush2.xpose.msra.mxu0 0.0
  %2252 = vmatprep.subr.mxu0 0.0
  %2253 = vmatpush2.xpose.msra.mxu0 0.0
  %2254 = vmatprep.subr.mxu0 0.0
  %2255 = vmatpush2.xpose.msra.mxu0 0.0
  %2256 = vmatprep.subr.mxu0 0.0
  %2257 = vmatpush2.xpose.msra.mxu0 0.0
  %2258 = vmatprep.mubr.f32.mxu0 %v97
  %2259 = vmatmul.mubr.f32.gmra.mxu0 %v96
  %v2260 = vpop.f32.mrf.mxu0
  %v2261 = vadd.f32 %v2186, %v2260
  %v2262 = vpop.f32.mrf.mxu0
  %2263 = vmatprep.mubr.f32.mxu0 %v129
  %2264 = vmatmul.mubr.f32.gmra.mxu0 %v128
  %v2265 = vpop.f32.mrf.mxu0
  %v2266 = vadd.f32 %v2191, %v2265
  %v2267 = vpop.f32.mrf.mxu0
  %2268 = vdwg.mxu0
  %2269 = vmatprep.subr.mxu0 0.0
  %2270 = vmatpush1.xpose.msra.mxu0 0.0
  %2271 = vmatprep.subr.mxu0 0.0
  %2272 = vmatpush1.xpose.msra.mxu0 0.0
  %2273 = vmatprep.subr.mxu0 0.0
  %2274 = vmatpush1.xpose.msra.mxu0 0.0
  %2275 = vmatprep.subr.mxu0 0.0
  %2276 = vmatpush1.xpose.msra.mxu0 0.0
  %2277 = vmatprep.subr.mxu0 0.0
  %2278 = vmatpush1.xpose.msra.mxu0 0.0
  %2279 = vmatprep.subr.mxu0 0.0
  %2280 = vmatpush1.xpose.msra.mxu0 0.0
  %2281 = vmatprep.subr.mxu0 0.0
  %2282 = vmatpush1.xpose.msra.mxu0 0.0
  %2283 = vmatprep.subr.mxu0 0.0
  %2284 = vmatpush1.xpose.msra.mxu0 0.0
  %2285 = vmatprep.subr.mxu0 0.0
  %2286 = vmatpush1.xpose.msra.mxu0 0.0
  %2287 = vmatprep.subr.mxu0 0.0
  %2288 = vmatpush1.xpose.msra.mxu0 0.0
  %2289 = vmatprep.subr.mxu0 0.0
  %2290 = vmatpush1.xpose.msra.mxu0 0.0
  %2291 = vmatprep.subr.mxu0 0.0
  %2292 = vmatpush1.xpose.msra.mxu0 0.0
  %2293 = vmatprep.subr.mxu0 0.0
  %2294 = vmatpush1.xpose.msra.mxu0 0.0
  %2295 = vmatprep.subr.mxu0 0.0
  %2296 = vmatpush1.xpose.msra.mxu0 0.0
  %2297 = vmatprep.subr.mxu0 %v131
  %2298 = vmatpush1.xpose.msra.mxu0 %v130
  %2299 = vmatprep.subr.mxu0 %v99
  %2300 = vmatpush1.xpose.msra.mxu0 %v98
  %2301 = vmatprep.subr.mxu0 0.0
  %2302 = vmatpush2.xpose.msra.mxu0 0.0
  %2303 = vmatprep.subr.mxu0 0.0
  %2304 = vmatpush2.xpose.msra.mxu0 0.0
  %2305 = vmatprep.subr.mxu0 0.0
  %2306 = vmatpush2.xpose.msra.mxu0 0.0
  %2307 = vmatprep.subr.mxu0 0.0
  %2308 = vmatpush2.xpose.msra.mxu0 0.0
  %2309 = vmatprep.subr.mxu0 0.0
  %2310 = vmatpush2.xpose.msra.mxu0 0.0
  %2311 = vmatprep.subr.mxu0 0.0
  %2312 = vmatpush2.xpose.msra.mxu0 0.0
  %2313 = vmatprep.subr.mxu0 0.0
  %2314 = vmatpush2.xpose.msra.mxu0 0.0
  %2315 = vmatprep.subr.mxu0 0.0
  %2316 = vmatpush2.xpose.msra.mxu0 0.0
  %2317 = vmatprep.subr.mxu0 0.0
  %2318 = vmatpush2.xpose.msra.mxu0 0.0
  %2319 = vmatprep.subr.mxu0 0.0
  %2320 = vmatpush2.xpose.msra.mxu0 0.0
  %2321 = vmatprep.subr.mxu0 0.0
  %2322 = vmatpush2.xpose.msra.mxu0 0.0
  %2323 = vmatprep.subr.mxu0 0.0
  %2324 = vmatpush2.xpose.msra.mxu0 0.0
  %2325 = vmatprep.subr.mxu0 0.0
  %2326 = vmatpush2.xpose.msra.mxu0 0.0
  %2327 = vmatprep.subr.mxu0 0.0
  %2328 = vmatpush2.xpose.msra.mxu0 0.0
  %2329 = vmatprep.subr.mxu0 0.0
  %2330 = vmatpush2.xpose.msra.mxu0 0.0
  %2331 = vmatprep.subr.mxu0 0.0
  %2332 = vmatpush2.xpose.msra.mxu0 0.0
  %2333 = vmatprep.mubr.f32.mxu0 %v99
  %2334 = vmatmul.mubr.f32.gmra.mxu0 %v98
  %v2335 = vpop.f32.mrf.mxu0
  %v2336 = vadd.f32 %v2261, %v2335
  %v2337 = vpop.f32.mrf.mxu0
  %2338 = vmatprep.mubr.f32.mxu0 %v131
  %2339 = vmatmul.mubr.f32.gmra.mxu0 %v130
  %v2340 = vpop.f32.mrf.mxu0
  %v2341 = vadd.f32 %v2266, %v2340
  %v2342 = vpop.f32.mrf.mxu0
  %2343 = vdwg.mxu0
  %2344 = vmatprep.subr.mxu0 0.0
  %2345 = vmatpush1.xpose.msra.mxu0 0.0
  %2346 = vmatprep.subr.mxu0 0.0
  %2347 = vmatpush1.xpose.msra.mxu0 0.0
  %2348 = vmatprep.subr.mxu0 0.0
  %2349 = vmatpush1.xpose.msra.mxu0 0.0
  %2350 = vmatprep.subr.mxu0 0.0
  %2351 = vmatpush1.xpose.msra.mxu0 0.0
  %2352 = vmatprep.subr.mxu0 0.0
  %2353 = vmatpush1.xpose.msra.mxu0 0.0
  %2354 = vmatprep.subr.mxu0 0.0
  %2355 = vmatpush1.xpose.msra.mxu0 0.0
  %2356 = vmatprep.subr.mxu0 0.0
  %2357 = vmatpush1.xpose.msra.mxu0 0.0
  %2358 = vmatprep.subr.mxu0 0.0
  %2359 = vmatpush1.xpose.msra.mxu0 0.0
  %2360 = vmatprep.subr.mxu0 0.0
  %2361 = vmatpush1.xpose.msra.mxu0 0.0
  %2362 = vmatprep.subr.mxu0 0.0
  %2363 = vmatpush1.xpose.msra.mxu0 0.0
  %2364 = vmatprep.subr.mxu0 0.0
  %2365 = vmatpush1.xpose.msra.mxu0 0.0
  %2366 = vmatprep.subr.mxu0 0.0
  %2367 = vmatpush1.xpose.msra.mxu0 0.0
  %2368 = vmatprep.subr.mxu0 0.0
  %2369 = vmatpush1.xpose.msra.mxu0 0.0
  %2370 = vmatprep.subr.mxu0 0.0
  %2371 = vmatpush1.xpose.msra.mxu0 0.0
  %2372 = vmatprep.subr.mxu0 %v133
  %2373 = vmatpush1.xpose.msra.mxu0 %v132
  %2374 = vmatprep.subr.mxu0 %v101
  %2375 = vmatpush1.xpose.msra.mxu0 %v100
  %2376 = vmatprep.subr.mxu0 0.0
  %2377 = vmatpush2.xpose.msra.mxu0 0.0
  %2378 = vmatprep.subr.mxu0 0.0
  %2379 = vmatpush2.xpose.msra.mxu0 0.0
  %2380 = vmatprep.subr.mxu0 0.0
  %2381 = vmatpush2.xpose.msra.mxu0 0.0
  %2382 = vmatprep.subr.mxu0 0.0
  %2383 = vmatpush2.xpose.msra.mxu0 0.0
  %2384 = vmatprep.subr.mxu0 0.0
  %2385 = vmatpush2.xpose.msra.mxu0 0.0
  %2386 = vmatprep.subr.mxu0 0.0
  %2387 = vmatpush2.xpose.msra.mxu0 0.0
  %2388 = vmatprep.subr.mxu0 0.0
  %2389 = vmatpush2.xpose.msra.mxu0 0.0
  %2390 = vmatprep.subr.mxu0 0.0
  %2391 = vmatpush2.xpose.msra.mxu0 0.0
  %2392 = vmatprep.subr.mxu0 0.0
  %2393 = vmatpush2.xpose.msra.mxu0 0.0
  %2394 = vmatprep.subr.mxu0 0.0
  %2395 = vmatpush2.xpose.msra.mxu0 0.0
  %2396 = vmatprep.subr.mxu0 0.0
  %2397 = vmatpush2.xpose.msra.mxu0 0.0
  %2398 = vmatprep.subr.mxu0 0.0
  %2399 = vmatpush2.xpose.msra.mxu0 0.0
  %2400 = vmatprep.subr.mxu0 0.0
  %2401 = vmatpush2.xpose.msra.mxu0 0.0
  %2402 = vmatprep.subr.mxu0 0.0
  %2403 = vmatpush2.xpose.msra.mxu0 0.0
  %2404 = vmatprep.subr.mxu0 0.0
  %2405 = vmatpush2.xpose.msra.mxu0 0.0
  %2406 = vmatprep.subr.mxu0 0.0
  %2407 = vmatpush2.xpose.msra.mxu0 0.0
  %2408 = vmatprep.mubr.f32.mxu0 %v101
  %2409 = vmatmul.mubr.f32.gmra.mxu0 %v100
  %v2410 = vpop.f32.mrf.mxu0
  %v2411 = vadd.f32 %v2336, %v2410
  %v2412 = vpop.f32.mrf.mxu0
  %2413 = vmatprep.mubr.f32.mxu0 %v133
  %2414 = vmatmul.mubr.f32.gmra.mxu0 %v132
  %v2415 = vpop.f32.mrf.mxu0
  %v2416 = vadd.f32 %v2341, %v2415
  %v2417 = vpop.f32.mrf.mxu0
  %2418 = vdwg.mxu0
  %2419 = vmatprep.subr.mxu0 0.0
  %2420 = vmatpush1.xpose.msra.mxu0 0.0
  %2421 = vmatprep.subr.mxu0 0.0
  %2422 = vmatpush1.xpose.msra.mxu0 0.0
  %2423 = vmatprep.subr.mxu0 0.0
  %2424 = vmatpush1.xpose.msra.mxu0 0.0
  %2425 = vmatprep.subr.mxu0 0.0
  %2426 = vmatpush1.xpose.msra.mxu0 0.0
  %2427 = vmatprep.subr.mxu0 0.0
  %2428 = vmatpush1.xpose.msra.mxu0 0.0
  %2429 = vmatprep.subr.mxu0 0.0
  %2430 = vmatpush1.xpose.msra.mxu0 0.0
  %2431 = vmatprep.subr.mxu0 0.0
  %2432 = vmatpush1.xpose.msra.mxu0 0.0
  %2433 = vmatprep.subr.mxu0 0.0
  %2434 = vmatpush1.xpose.msra.mxu0 0.0
  %2435 = vmatprep.subr.mxu0 0.0
  %2436 = vmatpush1.xpose.msra.mxu0 0.0
  %2437 = vmatprep.subr.mxu0 0.0
  %2438 = vmatpush1.xpose.msra.mxu0 0.0
  %2439 = vmatprep.subr.mxu0 0.0
  %2440 = vmatpush1.xpose.msra.mxu0 0.0
  %2441 = vmatprep.subr.mxu0 0.0
  %2442 = vmatpush1.xpose.msra.mxu0 0.0
  %2443 = vmatprep.subr.mxu0 0.0
  %2444 = vmatpush1.xpose.msra.mxu0 0.0
  %2445 = vmatprep.subr.mxu0 0.0
  %2446 = vmatpush1.xpose.msra.mxu0 0.0
  %2447 = vmatprep.subr.mxu0 %v135
  %2448 = vmatpush1.xpose.msra.mxu0 %v134
  %2449 = vmatprep.subr.mxu0 %v103
  %2450 = vmatpush1.xpose.msra.mxu0 %v102
  %2451 = vmatprep.subr.mxu0 0.0
  %2452 = vmatpush2.xpose.msra.mxu0 0.0
  %2453 = vmatprep.subr.mxu0 0.0
  %2454 = vmatpush2.xpose.msra.mxu0 0.0
  %2455 = vmatprep.subr.mxu0 0.0
  %2456 = vmatpush2.xpose.msra.mxu0 0.0
  %2457 = vmatprep.subr.mxu0 0.0
  %2458 = vmatpush2.xpose.msra.mxu0 0.0
  %2459 = vmatprep.subr.mxu0 0.0
  %2460 = vmatpush2.xpose.msra.mxu0 0.0
  %2461 = vmatprep.subr.mxu0 0.0
  %2462 = vmatpush2.xpose.msra.mxu0 0.0
  %2463 = vmatprep.subr.mxu0 0.0
  %2464 = vmatpush2.xpose.msra.mxu0 0.0
  %2465 = vmatprep.subr.mxu0 0.0
  %2466 = vmatpush2.xpose.msra.mxu0 0.0
  %2467 = vmatprep.subr.mxu0 0.0
  %2468 = vmatpush2.xpose.msra.mxu0 0.0
  %2469 = vmatprep.subr.mxu0 0.0
  %2470 = vmatpush2.xpose.msra.mxu0 0.0
  %2471 = vmatprep.subr.mxu0 0.0
  %2472 = vmatpush2.xpose.msra.mxu0 0.0
  %2473 = vmatprep.subr.mxu0 0.0
  %2474 = vmatpush2.xpose.msra.mxu0 0.0
  %2475 = vmatprep.subr.mxu0 0.0
  %2476 = vmatpush2.xpose.msra.mxu0 0.0
  %2477 = vmatprep.subr.mxu0 0.0
  %2478 = vmatpush2.xpose.msra.mxu0 0.0
  %2479 = vmatprep.subr.mxu0 0.0
  %2480 = vmatpush2.xpose.msra.mxu0 0.0
  %2481 = vmatprep.subr.mxu0 0.0
  %2482 = vmatpush2.xpose.msra.mxu0 0.0
  %2483 = vmatprep.mubr.f32.mxu0 %v103
  %2484 = vmatmul.mubr.f32.gmra.mxu0 %v102
  %v2485 = vpop.f32.mrf.mxu0
  %v2486 = vadd.f32 %v2411, %v2485
  %v2487 = vpop.f32.mrf.mxu0
  %2488 = vmatprep.mubr.f32.mxu0 %v135
  %2489 = vmatmul.mubr.f32.gmra.mxu0 %v134
  %v2490 = vpop.f32.mrf.mxu0
  %v2491 = vadd.f32 %v2416, %v2490
  %v2492 = vpop.f32.mrf.mxu0
  %2493 = vdwg.mxu0
  %2494 = vmatprep.subr.mxu0 0.0
  %2495 = vmatpush1.xpose.msra.mxu0 0.0
  %2496 = vmatprep.subr.mxu0 0.0
  %2497 = vmatpush1.xpose.msra.mxu0 0.0
  %2498 = vmatprep.subr.mxu0 0.0
  %2499 = vmatpush1.xpose.msra.mxu0 0.0
  %2500 = vmatprep.subr.mxu0 0.0
  %2501 = vmatpush1.xpose.msra.mxu0 0.0
  %2502 = vmatprep.subr.mxu0 0.0
  %2503 = vmatpush1.xpose.msra.mxu0 0.0
  %2504 = vmatprep.subr.mxu0 0.0
  %2505 = vmatpush1.xpose.msra.mxu0 0.0
  %2506 = vmatprep.subr.mxu0 0.0
  %2507 = vmatpush1.xpose.msra.mxu0 0.0
  %2508 = vmatprep.subr.mxu0 0.0
  %2509 = vmatpush1.xpose.msra.mxu0 0.0
  %2510 = vmatprep.subr.mxu0 0.0
  %2511 = vmatpush1.xpose.msra.mxu0 0.0
  %2512 = vmatprep.subr.mxu0 0.0
  %2513 = vmatpush1.xpose.msra.mxu0 0.0
  %2514 = vmatprep.subr.mxu0 0.0
  %2515 = vmatpush1.xpose.msra.mxu0 0.0
  %2516 = vmatprep.subr.mxu0 0.0
  %2517 = vmatpush1.xpose.msra.mxu0 0.0
  %2518 = vmatprep.subr.mxu0 0.0
  %2519 = vmatpush1.xpose.msra.mxu0 0.0
  %2520 = vmatprep.subr.mxu0 0.0
  %2521 = vmatpush1.xpose.msra.mxu0 0.0
  %2522 = vmatprep.subr.mxu0 %v137
  %2523 = vmatpush1.xpose.msra.mxu0 %v136
  %2524 = vmatprep.subr.mxu0 %v105
  %2525 = vmatpush1.xpose.msra.mxu0 %v104
  %2526 = vmatprep.subr.mxu0 0.0
  %2527 = vmatpush2.xpose.msra.mxu0 0.0
  %2528 = vmatprep.subr.mxu0 0.0
  %2529 = vmatpush2.xpose.msra.mxu0 0.0
  %2530 = vmatprep.subr.mxu0 0.0
  %2531 = vmatpush2.xpose.msra.mxu0 0.0
  %2532 = vmatprep.subr.mxu0 0.0
  %2533 = vmatpush2.xpose.msra.mxu0 0.0
  %2534 = vmatprep.subr.mxu0 0.0
  %2535 = vmatpush2.xpose.msra.mxu0 0.0
  %2536 = vmatprep.subr.mxu0 0.0
  %2537 = vmatpush2.xpose.msra.mxu0 0.0
  %2538 = vmatprep.subr.mxu0 0.0
  %2539 = vmatpush2.xpose.msra.mxu0 0.0
  %2540 = vmatprep.subr.mxu0 0.0
  %2541 = vmatpush2.xpose.msra.mxu0 0.0
  %2542 = vmatprep.subr.mxu0 0.0
  %2543 = vmatpush2.xpose.msra.mxu0 0.0
  %2544 = vmatprep.subr.mxu0 0.0
  %2545 = vmatpush2.xpose.msra.mxu0 0.0
  %2546 = vmatprep.subr.mxu0 0.0
  %2547 = vmatpush2.xpose.msra.mxu0 0.0
  %2548 = vmatprep.subr.mxu0 0.0
  %2549 = vmatpush2.xpose.msra.mxu0 0.0
  %2550 = vmatprep.subr.mxu0 0.0
  %2551 = vmatpush2.xpose.msra.mxu0 0.0
  %2552 = vmatprep.subr.mxu0 0.0
  %2553 = vmatpush2.xpose.msra.mxu0 0.0
  %2554 = vmatprep.subr.mxu0 0.0
  %2555 = vmatpush2.xpose.msra.mxu0 0.0
  %2556 = vmatprep.subr.mxu0 0.0
  %2557 = vmatpush2.xpose.msra.mxu0 0.0
  %2558 = vmatprep.mubr.f32.mxu0 %v105
  %2559 = vmatmul.mubr.f32.gmra.mxu0 %v104
  %v2560 = vpop.f32.mrf.mxu0
  %v2561 = vadd.f32 %v2486, %v2560
  %v2562 = vpop.f32.mrf.mxu0
  %2563 = vmatprep.mubr.f32.mxu0 %v137
  %2564 = vmatmul.mubr.f32.gmra.mxu0 %v136
  %v2565 = vpop.f32.mrf.mxu0
  %v2566 = vadd.f32 %v2491, %v2565
  %v2567 = vpop.f32.mrf.mxu0
  %2568 = vdwg.mxu0
  %2569 = vmatprep.subr.mxu0 0.0
  %2570 = vmatpush1.xpose.msra.mxu0 0.0
  %2571 = vmatprep.subr.mxu0 0.0
  %2572 = vmatpush1.xpose.msra.mxu0 0.0
  %2573 = vmatprep.subr.mxu0 0.0
  %2574 = vmatpush1.xpose.msra.mxu0 0.0
  %2575 = vmatprep.subr.mxu0 0.0
  %2576 = vmatpush1.xpose.msra.mxu0 0.0
  %2577 = vmatprep.subr.mxu0 0.0
  %2578 = vmatpush1.xpose.msra.mxu0 0.0
  %2579 = vmatprep.subr.mxu0 0.0
  %2580 = vmatpush1.xpose.msra.mxu0 0.0
  %2581 = vmatprep.subr.mxu0 0.0
  %2582 = vmatpush1.xpose.msra.mxu0 0.0
  %2583 = vmatprep.subr.mxu0 0.0
  %2584 = vmatpush1.xpose.msra.mxu0 0.0
  %2585 = vmatprep.subr.mxu0 0.0
  %2586 = vmatpush1.xpose.msra.mxu0 0.0
  %2587 = vmatprep.subr.mxu0 0.0
  %2588 = vmatpush1.xpose.msra.mxu0 0.0
  %2589 = vmatprep.subr.mxu0 0.0
  %2590 = vmatpush1.xpose.msra.mxu0 0.0
  %2591 = vmatprep.subr.mxu0 0.0
  %2592 = vmatpush1.xpose.msra.mxu0 0.0
  %2593 = vmatprep.subr.mxu0 0.0
  %2594 = vmatpush1.xpose.msra.mxu0 0.0
  %2595 = vmatprep.subr.mxu0 0.0
  %2596 = vmatpush1.xpose.msra.mxu0 0.0
  %2597 = vmatprep.subr.mxu0 %v139
  %2598 = vmatpush1.xpose.msra.mxu0 %v138
  %2599 = vmatprep.subr.mxu0 %v107
  %2600 = vmatpush1.xpose.msra.mxu0 %v106
  %2601 = vmatprep.subr.mxu0 0.0
  %2602 = vmatpush2.xpose.msra.mxu0 0.0
  %2603 = vmatprep.subr.mxu0 0.0
  %2604 = vmatpush2.xpose.msra.mxu0 0.0
  %2605 = vmatprep.subr.mxu0 0.0
  %2606 = vmatpush2.xpose.msra.mxu0 0.0
  %2607 = vmatprep.subr.mxu0 0.0
  %2608 = vmatpush2.xpose.msra.mxu0 0.0
  %2609 = vmatprep.subr.mxu0 0.0
  %2610 = vmatpush2.xpose.msra.mxu0 0.0
  %2611 = vmatprep.subr.mxu0 0.0
  %2612 = vmatpush2.xpose.msra.mxu0 0.0
  %2613 = vmatprep.subr.mxu0 0.0
  %2614 = vmatpush2.xpose.msra.mxu0 0.0
  %2615 = vmatprep.subr.mxu0 0.0
  %2616 = vmatpush2.xpose.msra.mxu0 0.0
  %2617 = vmatprep.subr.mxu0 0.0
  %2618 = vmatpush2.xpose.msra.mxu0 0.0
  %2619 = vmatprep.subr.mxu0 0.0
  %2620 = vmatpush2.xpose.msra.mxu0 0.0
  %2621 = vmatprep.subr.mxu0 0.0
  %2622 = vmatpush2.xpose.msra.mxu0 0.0
  %2623 = vmatprep.subr.mxu0 0.0
  %2624 = vmatpush2.xpose.msra.mxu0 0.0
  %2625 = vmatprep.subr.mxu0 0.0
  %2626 = vmatpush2.xpose.msra.mxu0 0.0
  %2627 = vmatprep.subr.mxu0 0.0
  %2628 = vmatpush2.xpose.msra.mxu0 0.0
  %2629 = vmatprep.subr.mxu0 0.0
  %2630 = vmatpush2.xpose.msra.mxu0 0.0
  %2631 = vmatprep.subr.mxu0 0.0
  %2632 = vmatpush2.xpose.msra.mxu0 0.0
  %2633 = vmatprep.mubr.f32.mxu0 %v107
  %2634 = vmatmul.mubr.f32.gmra.mxu0 %v106
  %v2635 = vpop.f32.mrf.mxu0
  %v2636 = vadd.f32 %v2561, %v2635
  %v2637 = vpop.f32.mrf.mxu0
  %2638 = vmatprep.mubr.f32.mxu0 %v139
  %2639 = vmatmul.mubr.f32.gmra.mxu0 %v138
  %v2640 = vpop.f32.mrf.mxu0
  %v2641 = vadd.f32 %v2566, %v2640
  %v2642 = vpop.f32.mrf.mxu0
  %2643 = vdwg.mxu0
  %2644 = vmatprep.subr.mxu0 0.0
  %2645 = vmatpush1.xpose.msra.mxu0 0.0
  %2646 = vmatprep.subr.mxu0 0.0
  %2647 = vmatpush1.xpose.msra.mxu0 0.0
  %2648 = vmatprep.subr.mxu0 0.0
  %2649 = vmatpush1.xpose.msra.mxu0 0.0
  %2650 = vmatprep.subr.mxu0 0.0
  %2651 = vmatpush1.xpose.msra.mxu0 0.0
  %2652 = vmatprep.subr.mxu0 0.0
  %2653 = vmatpush1.xpose.msra.mxu0 0.0
  %2654 = vmatprep.subr.mxu0 0.0
  %2655 = vmatpush1.xpose.msra.mxu0 0.0
  %2656 = vmatprep.subr.mxu0 0.0
  %2657 = vmatpush1.xpose.msra.mxu0 0.0
  %2658 = vmatprep.subr.mxu0 0.0
  %2659 = vmatpush1.xpose.msra.mxu0 0.0
  %2660 = vmatprep.subr.mxu0 0.0
  %2661 = vmatpush1.xpose.msra.mxu0 0.0
  %2662 = vmatprep.subr.mxu0 0.0
  %2663 = vmatpush1.xpose.msra.mxu0 0.0
  %2664 = vmatprep.subr.mxu0 0.0
  %2665 = vmatpush1.xpose.msra.mxu0 0.0
  %2666 = vmatprep.subr.mxu0 0.0
  %2667 = vmatpush1.xpose.msra.mxu0 0.0
  %2668 = vmatprep.subr.mxu0 0.0
  %2669 = vmatpush1.xpose.msra.mxu0 0.0
  %2670 = vmatprep.subr.mxu0 0.0
  %2671 = vmatpush1.xpose.msra.mxu0 0.0
  %2672 = vmatprep.subr.mxu0 %v141
  %2673 = vmatpush1.xpose.msra.mxu0 %v140
  %2674 = vmatprep.subr.mxu0 %v109
  %2675 = vmatpush1.xpose.msra.mxu0 %v108
  %2676 = vmatprep.subr.mxu0 0.0
  %2677 = vmatpush2.xpose.msra.mxu0 0.0
  %2678 = vmatprep.subr.mxu0 0.0
  %2679 = vmatpush2.xpose.msra.mxu0 0.0
  %2680 = vmatprep.subr.mxu0 0.0
  %2681 = vmatpush2.xpose.msra.mxu0 0.0
  %2682 = vmatprep.subr.mxu0 0.0
  %2683 = vmatpush2.xpose.msra.mxu0 0.0
  %2684 = vmatprep.subr.mxu0 0.0
  %2685 = vmatpush2.xpose.msra.mxu0 0.0
  %2686 = vmatprep.subr.mxu0 0.0
  %2687 = vmatpush2.xpose.msra.mxu0 0.0
  %2688 = vmatprep.subr.mxu0 0.0
  %2689 = vmatpush2.xpose.msra.mxu0 0.0
  %2690 = vmatprep.subr.mxu0 0.0
  %2691 = vmatpush2.xpose.msra.mxu0 0.0
  %2692 = vmatprep.subr.mxu0 0.0
  %2693 = vmatpush2.xpose.msra.mxu0 0.0
  %2694 = vmatprep.subr.mxu0 0.0
  %2695 = vmatpush2.xpose.msra.mxu0 0.0
  %2696 = vmatprep.subr.mxu0 0.0
  %2697 = vmatpush2.xpose.msra.mxu0 0.0
  %2698 = vmatprep.subr.mxu0 0.0
  %2699 = vmatpush2.xpose.msra.mxu0 0.0
  %2700 = vmatprep.subr.mxu0 0.0
  %2701 = vmatpush2.xpose.msra.mxu0 0.0
  %2702 = vmatprep.subr.mxu0 0.0
  %2703 = vmatpush2.xpose.msra.mxu0 0.0
  %2704 = vmatprep.subr.mxu0 0.0
  %2705 = vmatpush2.xpose.msra.mxu0 0.0
  %2706 = vmatprep.subr.mxu0 0.0
  %2707 = vmatpush2.xpose.msra.mxu0 0.0
  %2708 = vmatprep.mubr.f32.mxu0 %v109
  %2709 = vmatmul.mubr.f32.gmra.mxu0 %v108
  %v2710 = vpop.f32.mrf.mxu0
  %v2711 = vadd.f32 %v2636, %v2710
  %v2712 = vpop.f32.mrf.mxu0
  %2713 = vmatprep.mubr.f32.mxu0 %v141
  %2714 = vmatmul.mubr.f32.gmra.mxu0 %v140
  %v2715 = vpop.f32.mrf.mxu0
  %v2716 = vadd.f32 %v2641, %v2715
  %v2717 = vpop.f32.mrf.mxu0
  %2718 = vdwg.mxu0
  %2719 = vxpose.xlu0.b32.start [1/16] %v240, 128
  %2720 = vxpose.xlu0.b32.cont [2/16] %v273, 128
  %2721 = vxpose.xlu0.b32.cont [3/16] 0.0, 128
  %2722 = vxpose.xlu0.b32.cont [4/16] 0.0, 128
  %2723 = vxpose.xlu0.b32.cont [5/16] 0.0, 128
  %2724 = vxpose.xlu0.b32.cont [6/16] 0.0, 128
  %2725 = vxpose.xlu0.b32.cont [7/16] 0.0, 128
  %2726 = vxpose.xlu0.b32.cont [8/16] 0.0, 128
  %2727 = vxpose.xlu0.b32.cont [9/16] 0.0, 128
  %2728 = vxpose.xlu0.b32.cont [10/16] 0.0, 128
  %2729 = vxpose.xlu0.b32.cont [11/16] 0.0, 128
  %2730 = vxpose.xlu0.b32.cont [12/16] 0.0, 128
  %2731 = vxpose.xlu0.b32.cont [13/16] 0.0, 128
  %2732 = vxpose.xlu0.b32.cont [14/16] 0.0, 128
  %2733 = vxpose.xlu0.b32.cont [15/16] 0.0, 128
  %2734 = vxpose.xlu0.b32.end [16/16] 0.0, 128
  %v2735 = vpop.trf.xlu0
  %v2736 = vpop.trf.xlu0
  %v2737 = vpop.trf.xlu0
  %v2738 = vpop.trf.xlu0
  %v2739 = vpop.trf.xlu0
  %v2740 = vpop.trf.xlu0
  %v2741 = vpop.trf.xlu0
  %v2742 = vpop.trf.xlu0
  %v2743 = vpop.trf.xlu0
  %v2744 = vpop.trf.xlu0
  %v2745 = vpop.trf.xlu0
  %v2746 = vpop.trf.xlu0
  %v2747 = vpop.trf.xlu0
  %v2748 = vpop.trf.xlu0
  %v2749 = vpop.trf.xlu0
  %v2750 = vpop.trf.xlu0
  %v2751 = vlaneseq
  %v2752 = vshrl.u32 %v2751, 7
  %v2753 = vsub.s32 0, %v2752
  %v2754 = vrot.slane %v2735, %v2753
  %v2755 = vmul.f32 %v240, %v2754
  %v2756 = vmul.f32 %v273, %v2754
  %v2757 = vmul.f32 %v2755, 0.00024414063
  %v2758 = vmul.f32 %v2756, 0.00024414063
  %v2759 = vsub.f32 %v2711, %v2757
  %v2760 = vsub.f32 %v2716, %v2758
  %2761 = vst.msk [vmem:[%s3] sm:$0xff] %vm1516, %v2759
  %2762 = vst.msk [vmem:[%s3 + $0x8] sm:$0xff] %vm1516, %v2760
  %2763 = vmatprep.subr.mxu0 0.0
  %2764 = vmatpush1.xpose.msra.mxu0 0.0
  %2765 = vmatprep.subr.mxu0 0.0
  %2766 = vmatpush1.xpose.msra.mxu0 0.0
  %2767 = vmatprep.subr.mxu0 0.0
  %2768 = vmatpush1.xpose.msra.mxu0 0.0
  %2769 = vmatprep.subr.mxu0 0.0
  %2770 = vmatpush1.xpose.msra.mxu0 0.0
  %2771 = vmatprep.subr.mxu0 0.0
  %2772 = vmatpush1.xpose.msra.mxu0 0.0
  %2773 = vmatprep.subr.mxu0 0.0
  %2774 = vmatpush1.xpose.msra.mxu0 0.0
  %2775 = vmatprep.subr.mxu0 0.0
  %2776 = vmatpush1.xpose.msra.mxu0 0.0
  %2777 = vmatprep.subr.mxu0 0.0
  %2778 = vmatpush1.xpose.msra.mxu0 0.0
  %2779 = vmatprep.subr.mxu0 0.0
  %2780 = vmatpush1.xpose.msra.mxu0 0.0
  %2781 = vmatprep.subr.mxu0 0.0
  %2782 = vmatpush1.xpose.msra.mxu0 0.0
  %2783 = vmatprep.subr.mxu0 0.0
  %2784 = vmatpush1.xpose.msra.mxu0 0.0
  %2785 = vmatprep.subr.mxu0 0.0
  %2786 = vmatpush1.xpose.msra.mxu0 0.0
  %2787 = vmatprep.subr.mxu0 0.0
  %2788 = vmatpush1.xpose.msra.mxu0 0.0
  %2789 = vmatprep.subr.mxu0 0.0
  %2790 = vmatpush1.xpose.msra.mxu0 0.0
  %2791 = vmatprep.subr.mxu0 %v111
  %2792 = vmatpush1.xpose.msra.mxu0 %v110
  %2793 = vmatprep.subr.mxu0 %v79
  %2794 = vmatpush1.xpose.msra.mxu0 %v78
  %2795 = vmatprep.subr.mxu0 0.0
  %2796 = vmatpush2.xpose.msra.mxu0 0.0
  %2797 = vmatprep.subr.mxu0 0.0
  %2798 = vmatpush2.xpose.msra.mxu0 0.0
  %2799 = vmatprep.subr.mxu0 0.0
  %2800 = vmatpush2.xpose.msra.mxu0 0.0
  %2801 = vmatprep.subr.mxu0 0.0
  %2802 = vmatpush2.xpose.msra.mxu0 0.0
  %2803 = vmatprep.subr.mxu0 0.0
  %2804 = vmatpush2.xpose.msra.mxu0 0.0
  %2805 = vmatprep.subr.mxu0 0.0
  %2806 = vmatpush2.xpose.msra.mxu0 0.0
  %2807 = vmatprep.subr.mxu0 0.0
  %2808 = vmatpush2.xpose.msra.mxu0 0.0
  %2809 = vmatprep.subr.mxu0 0.0
  %2810 = vmatpush2.xpose.msra.mxu0 0.0
  %2811 = vmatprep.subr.mxu0 0.0
  %2812 = vmatpush2.xpose.msra.mxu0 0.0
  %2813 = vmatprep.subr.mxu0 0.0
  %2814 = vmatpush2.xpose.msra.mxu0 0.0
  %2815 = vmatprep.subr.mxu0 0.0
  %2816 = vmatpush2.xpose.msra.mxu0 0.0
  %2817 = vmatprep.subr.mxu0 0.0
  %2818 = vmatpush2.xpose.msra.mxu0 0.0
  %2819 = vmatprep.subr.mxu0 0.0
  %2820 = vmatpush2.xpose.msra.mxu0 0.0
  %2821 = vmatprep.subr.mxu0 0.0
  %2822 = vmatpush2.xpose.msra.mxu0 0.0
  %2823 = vmatprep.subr.mxu0 0.0
  %2824 = vmatpush2.xpose.msra.mxu0 0.0
  %2825 = vmatprep.subr.mxu0 0.0
  %2826 = vmatpush2.xpose.msra.mxu0 0.0
  %2827 = vmatprep.mubr.f32.mxu0 %v15
  %2828 = vmatmul.mubr.f32.gmra.mxu0 %v14
  %v2829 = vpop.f32.mrf.mxu0
  %v2830 = vadd.f32 0.0, %v2829
  %v2831 = vpop.f32.mrf.mxu0
  %2832 = vmatprep.mubr.f32.mxu0 %v47
  %2833 = vmatmul.mubr.f32.gmra.mxu0 %v46
  %v2834 = vpop.f32.mrf.mxu0
  %v2835 = vadd.f32 0.0, %v2834
  %v2836 = vpop.f32.mrf.mxu0
  %2837 = vdwg.mxu0
  %2838 = vmatprep.subr.mxu0 0.0
  %2839 = vmatpush1.xpose.msra.mxu0 0.0
  %2840 = vmatprep.subr.mxu0 0.0
  %2841 = vmatpush1.xpose.msra.mxu0 0.0
  %2842 = vmatprep.subr.mxu0 0.0
  %2843 = vmatpush1.xpose.msra.mxu0 0.0
  %2844 = vmatprep.subr.mxu0 0.0
  %2845 = vmatpush1.xpose.msra.mxu0 0.0
  %2846 = vmatprep.subr.mxu0 0.0
  %2847 = vmatpush1.xpose.msra.mxu0 0.0
  %2848 = vmatprep.subr.mxu0 0.0
  %2849 = vmatpush1.xpose.msra.mxu0 0.0
  %2850 = vmatprep.subr.mxu0 0.0
  %2851 = vmatpush1.xpose.msra.mxu0 0.0
  %2852 = vmatprep.subr.mxu0 0.0
  %2853 = vmatpush1.xpose.msra.mxu0 0.0
  %2854 = vmatprep.subr.mxu0 0.0
  %2855 = vmatpush1.xpose.msra.mxu0 0.0
  %2856 = vmatprep.subr.mxu0 0.0
  %2857 = vmatpush1.xpose.msra.mxu0 0.0
  %2858 = vmatprep.subr.mxu0 0.0
  %2859 = vmatpush1.xpose.msra.mxu0 0.0
  %2860 = vmatprep.subr.mxu0 0.0
  %2861 = vmatpush1.xpose.msra.mxu0 0.0
  %2862 = vmatprep.subr.mxu0 0.0
  %2863 = vmatpush1.xpose.msra.mxu0 0.0
  %2864 = vmatprep.subr.mxu0 0.0
  %2865 = vmatpush1.xpose.msra.mxu0 0.0
  %2866 = vmatprep.subr.mxu0 %v113
  %2867 = vmatpush1.xpose.msra.mxu0 %v112
  %2868 = vmatprep.subr.mxu0 %v81
  %2869 = vmatpush1.xpose.msra.mxu0 %v80
  %2870 = vmatprep.subr.mxu0 0.0
  %2871 = vmatpush2.xpose.msra.mxu0 0.0
  %2872 = vmatprep.subr.mxu0 0.0
  %2873 = vmatpush2.xpose.msra.mxu0 0.0
  %2874 = vmatprep.subr.mxu0 0.0
  %2875 = vmatpush2.xpose.msra.mxu0 0.0
  %2876 = vmatprep.subr.mxu0 0.0
  %2877 = vmatpush2.xpose.msra.mxu0 0.0
  %2878 = vmatprep.subr.mxu0 0.0
  %2879 = vmatpush2.xpose.msra.mxu0 0.0
  %2880 = vmatprep.subr.mxu0 0.0
  %2881 = vmatpush2.xpose.msra.mxu0 0.0
  %2882 = vmatprep.subr.mxu0 0.0
  %2883 = vmatpush2.xpose.msra.mxu0 0.0
  %2884 = vmatprep.subr.mxu0 0.0
  %2885 = vmatpush2.xpose.msra.mxu0 0.0
  %2886 = vmatprep.subr.mxu0 0.0
  %2887 = vmatpush2.xpose.msra.mxu0 0.0
  %2888 = vmatprep.subr.mxu0 0.0
  %2889 = vmatpush2.xpose.msra.mxu0 0.0
  %2890 = vmatprep.subr.mxu0 0.0
  %2891 = vmatpush2.xpose.msra.mxu0 0.0
  %2892 = vmatprep.subr.mxu0 0.0
  %2893 = vmatpush2.xpose.msra.mxu0 0.0
  %2894 = vmatprep.subr.mxu0 0.0
  %2895 = vmatpush2.xpose.msra.mxu0 0.0
  %2896 = vmatprep.subr.mxu0 0.0
  %2897 = vmatpush2.xpose.msra.mxu0 0.0
  %2898 = vmatprep.subr.mxu0 0.0
  %2899 = vmatpush2.xpose.msra.mxu0 0.0
  %2900 = vmatprep.subr.mxu0 0.0
  %2901 = vmatpush2.xpose.msra.mxu0 0.0
  %2902 = vmatprep.mubr.f32.mxu0 %v17
  %2903 = vmatmul.mubr.f32.gmra.mxu0 %v16
  %v2904 = vpop.f32.mrf.mxu0
  %v2905 = vadd.f32 %v2830, %v2904
  %v2906 = vpop.f32.mrf.mxu0
  %2907 = vmatprep.mubr.f32.mxu0 %v49
  %2908 = vmatmul.mubr.f32.gmra.mxu0 %v48
  %v2909 = vpop.f32.mrf.mxu0
  %v2910 = vadd.f32 %v2835, %v2909
  %v2911 = vpop.f32.mrf.mxu0
  %2912 = vdwg.mxu0
  %2913 = vmatprep.subr.mxu0 0.0
  %2914 = vmatpush1.xpose.msra.mxu0 0.0
  %2915 = vmatprep.subr.mxu0 0.0
  %2916 = vmatpush1.xpose.msra.mxu0 0.0
  %2917 = vmatprep.subr.mxu0 0.0
  %2918 = vmatpush1.xpose.msra.mxu0 0.0
  %2919 = vmatprep.subr.mxu0 0.0
  %2920 = vmatpush1.xpose.msra.mxu0 0.0
  %2921 = vmatprep.subr.mxu0 0.0
  %2922 = vmatpush1.xpose.msra.mxu0 0.0
  %2923 = vmatprep.subr.mxu0 0.0
  %2924 = vmatpush1.xpose.msra.mxu0 0.0
  %2925 = vmatprep.subr.mxu0 0.0
  %2926 = vmatpush1.xpose.msra.mxu0 0.0
  %2927 = vmatprep.subr.mxu0 0.0
  %2928 = vmatpush1.xpose.msra.mxu0 0.0
  %2929 = vmatprep.subr.mxu0 0.0
  %2930 = vmatpush1.xpose.msra.mxu0 0.0
  %2931 = vmatprep.subr.mxu0 0.0
  %2932 = vmatpush1.xpose.msra.mxu0 0.0
  %2933 = vmatprep.subr.mxu0 0.0
  %2934 = vmatpush1.xpose.msra.mxu0 0.0
  %2935 = vmatprep.subr.mxu0 0.0
  %2936 = vmatpush1.xpose.msra.mxu0 0.0
  %2937 = vmatprep.subr.mxu0 0.0
  %2938 = vmatpush1.xpose.msra.mxu0 0.0
  %2939 = vmatprep.subr.mxu0 0.0
  %2940 = vmatpush1.xpose.msra.mxu0 0.0
  %2941 = vmatprep.subr.mxu0 %v115
  %2942 = vmatpush1.xpose.msra.mxu0 %v114
  %2943 = vmatprep.subr.mxu0 %v83
  %2944 = vmatpush1.xpose.msra.mxu0 %v82
  %2945 = vmatprep.subr.mxu0 0.0
  %2946 = vmatpush2.xpose.msra.mxu0 0.0
  %2947 = vmatprep.subr.mxu0 0.0
  %2948 = vmatpush2.xpose.msra.mxu0 0.0
  %2949 = vmatprep.subr.mxu0 0.0
  %2950 = vmatpush2.xpose.msra.mxu0 0.0
  %2951 = vmatprep.subr.mxu0 0.0
  %2952 = vmatpush2.xpose.msra.mxu0 0.0
  %2953 = vmatprep.subr.mxu0 0.0
  %2954 = vmatpush2.xpose.msra.mxu0 0.0
  %2955 = vmatprep.subr.mxu0 0.0
  %2956 = vmatpush2.xpose.msra.mxu0 0.0
  %2957 = vmatprep.subr.mxu0 0.0
  %2958 = vmatpush2.xpose.msra.mxu0 0.0
  %2959 = vmatprep.subr.mxu0 0.0
  %2960 = vmatpush2.xpose.msra.mxu0 0.0
  %2961 = vmatprep.subr.mxu0 0.0
  %2962 = vmatpush2.xpose.msra.mxu0 0.0
  %2963 = vmatprep.subr.mxu0 0.0
  %2964 = vmatpush2.xpose.msra.mxu0 0.0
  %2965 = vmatprep.subr.mxu0 0.0
  %2966 = vmatpush2.xpose.msra.mxu0 0.0
  %2967 = vmatprep.subr.mxu0 0.0
  %2968 = vmatpush2.xpose.msra.mxu0 0.0
  %2969 = vmatprep.subr.mxu0 0.0
  %2970 = vmatpush2.xpose.msra.mxu0 0.0
  %2971 = vmatprep.subr.mxu0 0.0
  %2972 = vmatpush2.xpose.msra.mxu0 0.0
  %2973 = vmatprep.subr.mxu0 0.0
  %2974 = vmatpush2.xpose.msra.mxu0 0.0
  %2975 = vmatprep.subr.mxu0 0.0
  %2976 = vmatpush2.xpose.msra.mxu0 0.0
  %2977 = vmatprep.mubr.f32.mxu0 %v19
  %2978 = vmatmul.mubr.f32.gmra.mxu0 %v18
  %v2979 = vpop.f32.mrf.mxu0
  %v2980 = vadd.f32 %v2905, %v2979
  %v2981 = vpop.f32.mrf.mxu0
  %2982 = vmatprep.mubr.f32.mxu0 %v51
  %2983 = vmatmul.mubr.f32.gmra.mxu0 %v50
  %v2984 = vpop.f32.mrf.mxu0
  %v2985 = vadd.f32 %v2910, %v2984
  %v2986 = vpop.f32.mrf.mxu0
  %2987 = vdwg.mxu0
  %2988 = vmatprep.subr.mxu0 0.0
  %2989 = vmatpush1.xpose.msra.mxu0 0.0
  %2990 = vmatprep.subr.mxu0 0.0
  %2991 = vmatpush1.xpose.msra.mxu0 0.0
  %2992 = vmatprep.subr.mxu0 0.0
  %2993 = vmatpush1.xpose.msra.mxu0 0.0
  %2994 = vmatprep.subr.mxu0 0.0
  %2995 = vmatpush1.xpose.msra.mxu0 0.0
  %2996 = vmatprep.subr.mxu0 0.0
  %2997 = vmatpush1.xpose.msra.mxu0 0.0
  %2998 = vmatprep.subr.mxu0 0.0
  %2999 = vmatpush1.xpose.msra.mxu0 0.0
  %3000 = vmatprep.subr.mxu0 0.0
  %3001 = vmatpush1.xpose.msra.mxu0 0.0
  %3002 = vmatprep.subr.mxu0 0.0
  %3003 = vmatpush1.xpose.msra.mxu0 0.0
  %3004 = vmatprep.subr.mxu0 0.0
  %3005 = vmatpush1.xpose.msra.mxu0 0.0
  %3006 = vmatprep.subr.mxu0 0.0
  %3007 = vmatpush1.xpose.msra.mxu0 0.0
  %3008 = vmatprep.subr.mxu0 0.0
  %3009 = vmatpush1.xpose.msra.mxu0 0.0
  %3010 = vmatprep.subr.mxu0 0.0
  %3011 = vmatpush1.xpose.msra.mxu0 0.0
  %3012 = vmatprep.subr.mxu0 0.0
  %3013 = vmatpush1.xpose.msra.mxu0 0.0
  %3014 = vmatprep.subr.mxu0 0.0
  %3015 = vmatpush1.xpose.msra.mxu0 0.0
  %3016 = vmatprep.subr.mxu0 %v117
  %3017 = vmatpush1.xpose.msra.mxu0 %v116
  %3018 = vmatprep.subr.mxu0 %v85
  %3019 = vmatpush1.xpose.msra.mxu0 %v84
  %3020 = vmatprep.subr.mxu0 0.0
  %3021 = vmatpush2.xpose.msra.mxu0 0.0
  %3022 = vmatprep.subr.mxu0 0.0
  %3023 = vmatpush2.xpose.msra.mxu0 0.0
  %3024 = vmatprep.subr.mxu0 0.0
  %3025 = vmatpush2.xpose.msra.mxu0 0.0
  %3026 = vmatprep.subr.mxu0 0.0
  %3027 = vmatpush2.xpose.msra.mxu0 0.0
  %3028 = vmatprep.subr.mxu0 0.0
  %3029 = vmatpush2.xpose.msra.mxu0 0.0
  %3030 = vmatprep.subr.mxu0 0.0
  %3031 = vmatpush2.xpose.msra.mxu0 0.0
  %3032 = vmatprep.subr.mxu0 0.0
  %3033 = vmatpush2.xpose.msra.mxu0 0.0
  %3034 = vmatprep.subr.mxu0 0.0
  %3035 = vmatpush2.xpose.msra.mxu0 0.0
  %3036 = vmatprep.subr.mxu0 0.0
  %3037 = vmatpush2.xpose.msra.mxu0 0.0
  %3038 = vmatprep.subr.mxu0 0.0
  %3039 = vmatpush2.xpose.msra.mxu0 0.0
  %3040 = vmatprep.subr.mxu0 0.0
  %3041 = vmatpush2.xpose.msra.mxu0 0.0
  %3042 = vmatprep.subr.mxu0 0.0
  %3043 = vmatpush2.xpose.msra.mxu0 0.0
  %3044 = vmatprep.subr.mxu0 0.0
  %3045 = vmatpush2.xpose.msra.mxu0 0.0
  %3046 = vmatprep.subr.mxu0 0.0
  %3047 = vmatpush2.xpose.msra.mxu0 0.0
  %3048 = vmatprep.subr.mxu0 0.0
  %3049 = vmatpush2.xpose.msra.mxu0 0.0
  %3050 = vmatprep.subr.mxu0 0.0
  %3051 = vmatpush2.xpose.msra.mxu0 0.0
  %3052 = vmatprep.mubr.f32.mxu0 %v21
  %3053 = vmatmul.mubr.f32.gmra.mxu0 %v20
  %v3054 = vpop.f32.mrf.mxu0
  %v3055 = vadd.f32 %v2980, %v3054
  %v3056 = vpop.f32.mrf.mxu0
  %3057 = vmatprep.mubr.f32.mxu0 %v53
  %3058 = vmatmul.mubr.f32.gmra.mxu0 %v52
  %v3059 = vpop.f32.mrf.mxu0
  %v3060 = vadd.f32 %v2985, %v3059
  %v3061 = vpop.f32.mrf.mxu0
  %3062 = vdwg.mxu0
  %3063 = vmatprep.subr.mxu0 0.0
  %3064 = vmatpush1.xpose.msra.mxu0 0.0
  %3065 = vmatprep.subr.mxu0 0.0
  %3066 = vmatpush1.xpose.msra.mxu0 0.0
  %3067 = vmatprep.subr.mxu0 0.0
  %3068 = vmatpush1.xpose.msra.mxu0 0.0
  %3069 = vmatprep.subr.mxu0 0.0
  %3070 = vmatpush1.xpose.msra.mxu0 0.0
  %3071 = vmatprep.subr.mxu0 0.0
  %3072 = vmatpush1.xpose.msra.mxu0 0.0
  %3073 = vmatprep.subr.mxu0 0.0
  %3074 = vmatpush1.xpose.msra.mxu0 0.0
  %3075 = vmatprep.subr.mxu0 0.0
  %3076 = vmatpush1.xpose.msra.mxu0 0.0
  %3077 = vmatprep.subr.mxu0 0.0
  %3078 = vmatpush1.xpose.msra.mxu0 0.0
  %3079 = vmatprep.subr.mxu0 0.0
  %3080 = vmatpush1.xpose.msra.mxu0 0.0
  %3081 = vmatprep.subr.mxu0 0.0
  %3082 = vmatpush1.xpose.msra.mxu0 0.0
  %3083 = vmatprep.subr.mxu0 0.0
  %3084 = vmatpush1.xpose.msra.mxu0 0.0
  %3085 = vmatprep.subr.mxu0 0.0
  %3086 = vmatpush1.xpose.msra.mxu0 0.0
  %3087 = vmatprep.subr.mxu0 0.0
  %3088 = vmatpush1.xpose.msra.mxu0 0.0
  %3089 = vmatprep.subr.mxu0 0.0
  %3090 = vmatpush1.xpose.msra.mxu0 0.0
  %3091 = vmatprep.subr.mxu0 %v119
  %3092 = vmatpush1.xpose.msra.mxu0 %v118
  %3093 = vmatprep.subr.mxu0 %v87
  %3094 = vmatpush1.xpose.msra.mxu0 %v86
  %3095 = vmatprep.subr.mxu0 0.0
  %3096 = vmatpush2.xpose.msra.mxu0 0.0
  %3097 = vmatprep.subr.mxu0 0.0
  %3098 = vmatpush2.xpose.msra.mxu0 0.0
  %3099 = vmatprep.subr.mxu0 0.0
  %3100 = vmatpush2.xpose.msra.mxu0 0.0
  %3101 = vmatprep.subr.mxu0 0.0
  %3102 = vmatpush2.xpose.msra.mxu0 0.0
  %3103 = vmatprep.subr.mxu0 0.0
  %3104 = vmatpush2.xpose.msra.mxu0 0.0
  %3105 = vmatprep.subr.mxu0 0.0
  %3106 = vmatpush2.xpose.msra.mxu0 0.0
  %3107 = vmatprep.subr.mxu0 0.0
  %3108 = vmatpush2.xpose.msra.mxu0 0.0
  %3109 = vmatprep.subr.mxu0 0.0
  %3110 = vmatpush2.xpose.msra.mxu0 0.0
  %3111 = vmatprep.subr.mxu0 0.0
  %3112 = vmatpush2.xpose.msra.mxu0 0.0
  %3113 = vmatprep.subr.mxu0 0.0
  %3114 = vmatpush2.xpose.msra.mxu0 0.0
  %3115 = vmatprep.subr.mxu0 0.0
  %3116 = vmatpush2.xpose.msra.mxu0 0.0
  %3117 = vmatprep.subr.mxu0 0.0
  %3118 = vmatpush2.xpose.msra.mxu0 0.0
  %3119 = vmatprep.subr.mxu0 0.0
  %3120 = vmatpush2.xpose.msra.mxu0 0.0
  %3121 = vmatprep.subr.mxu0 0.0
  %3122 = vmatpush2.xpose.msra.mxu0 0.0
  %3123 = vmatprep.subr.mxu0 0.0
  %3124 = vmatpush2.xpose.msra.mxu0 0.0
  %3125 = vmatprep.subr.mxu0 0.0
  %3126 = vmatpush2.xpose.msra.mxu0 0.0
  %3127 = vmatprep.mubr.f32.mxu0 %v23
  %3128 = vmatmul.mubr.f32.gmra.mxu0 %v22
  %v3129 = vpop.f32.mrf.mxu0
  %v3130 = vadd.f32 %v3055, %v3129
  %v3131 = vpop.f32.mrf.mxu0
  %3132 = vmatprep.mubr.f32.mxu0 %v55
  %3133 = vmatmul.mubr.f32.gmra.mxu0 %v54
  %v3134 = vpop.f32.mrf.mxu0
  %v3135 = vadd.f32 %v3060, %v3134
  %v3136 = vpop.f32.mrf.mxu0
  %3137 = vdwg.mxu0
  %3138 = vmatprep.subr.mxu0 0.0
  %3139 = vmatpush1.xpose.msra.mxu0 0.0
  %3140 = vmatprep.subr.mxu0 0.0
  %3141 = vmatpush1.xpose.msra.mxu0 0.0
  %3142 = vmatprep.subr.mxu0 0.0
  %3143 = vmatpush1.xpose.msra.mxu0 0.0
  %3144 = vmatprep.subr.mxu0 0.0
  %3145 = vmatpush1.xpose.msra.mxu0 0.0
  %3146 = vmatprep.subr.mxu0 0.0
  %3147 = vmatpush1.xpose.msra.mxu0 0.0
  %3148 = vmatprep.subr.mxu0 0.0
  %3149 = vmatpush1.xpose.msra.mxu0 0.0
  %3150 = vmatprep.subr.mxu0 0.0
  %3151 = vmatpush1.xpose.msra.mxu0 0.0
  %3152 = vmatprep.subr.mxu0 0.0
  %3153 = vmatpush1.xpose.msra.mxu0 0.0
  %3154 = vmatprep.subr.mxu0 0.0
  %3155 = vmatpush1.xpose.msra.mxu0 0.0
  %3156 = vmatprep.subr.mxu0 0.0
  %3157 = vmatpush1.xpose.msra.mxu0 0.0
  %3158 = vmatprep.subr.mxu0 0.0
  %3159 = vmatpush1.xpose.msra.mxu0 0.0
  %3160 = vmatprep.subr.mxu0 0.0
  %3161 = vmatpush1.xpose.msra.mxu0 0.0
  %3162 = vmatprep.subr.mxu0 0.0
  %3163 = vmatpush1.xpose.msra.mxu0 0.0
  %3164 = vmatprep.subr.mxu0 0.0
  %3165 = vmatpush1.xpose.msra.mxu0 0.0
  %3166 = vmatprep.subr.mxu0 %v121
  %3167 = vmatpush1.xpose.msra.mxu0 %v120
  %3168 = vmatprep.subr.mxu0 %v89
  %3169 = vmatpush1.xpose.msra.mxu0 %v88
  %3170 = vmatprep.subr.mxu0 0.0
  %3171 = vmatpush2.xpose.msra.mxu0 0.0
  %3172 = vmatprep.subr.mxu0 0.0
  %3173 = vmatpush2.xpose.msra.mxu0 0.0
  %3174 = vmatprep.subr.mxu0 0.0
  %3175 = vmatpush2.xpose.msra.mxu0 0.0
  %3176 = vmatprep.subr.mxu0 0.0
  %3177 = vmatpush2.xpose.msra.mxu0 0.0
  %3178 = vmatprep.subr.mxu0 0.0
  %3179 = vmatpush2.xpose.msra.mxu0 0.0
  %3180 = vmatprep.subr.mxu0 0.0
  %3181 = vmatpush2.xpose.msra.mxu0 0.0
  %3182 = vmatprep.subr.mxu0 0.0
  %3183 = vmatpush2.xpose.msra.mxu0 0.0
  %3184 = vmatprep.subr.mxu0 0.0
  %3185 = vmatpush2.xpose.msra.mxu0 0.0
  %3186 = vmatprep.subr.mxu0 0.0
  %3187 = vmatpush2.xpose.msra.mxu0 0.0
  %3188 = vmatprep.subr.mxu0 0.0
  %3189 = vmatpush2.xpose.msra.mxu0 0.0
  %3190 = vmatprep.subr.mxu0 0.0
  %3191 = vmatpush2.xpose.msra.mxu0 0.0
  %3192 = vmatprep.subr.mxu0 0.0
  %3193 = vmatpush2.xpose.msra.mxu0 0.0
  %3194 = vmatprep.subr.mxu0 0.0
  %3195 = vmatpush2.xpose.msra.mxu0 0.0
  %3196 = vmatprep.subr.mxu0 0.0
  %3197 = vmatpush2.xpose.msra.mxu0 0.0
  %3198 = vmatprep.subr.mxu0 0.0
  %3199 = vmatpush2.xpose.msra.mxu0 0.0
  %3200 = vmatprep.subr.mxu0 0.0
  %3201 = vmatpush2.xpose.msra.mxu0 0.0
  %3202 = vmatprep.mubr.f32.mxu0 %v25
  %3203 = vmatmul.mubr.f32.gmra.mxu0 %v24
  %v3204 = vpop.f32.mrf.mxu0
  %v3205 = vadd.f32 %v3130, %v3204
  %v3206 = vpop.f32.mrf.mxu0
  %3207 = vmatprep.mubr.f32.mxu0 %v57
  %3208 = vmatmul.mubr.f32.gmra.mxu0 %v56
  %v3209 = vpop.f32.mrf.mxu0
  %v3210 = vadd.f32 %v3135, %v3209
  %v3211 = vpop.f32.mrf.mxu0
  %3212 = vdwg.mxu0
  %3213 = vmatprep.subr.mxu0 0.0
  %3214 = vmatpush1.xpose.msra.mxu0 0.0
  %3215 = vmatprep.subr.mxu0 0.0
  %3216 = vmatpush1.xpose.msra.mxu0 0.0
  %3217 = vmatprep.subr.mxu0 0.0
  %3218 = vmatpush1.xpose.msra.mxu0 0.0
  %3219 = vmatprep.subr.mxu0 0.0
  %3220 = vmatpush1.xpose.msra.mxu0 0.0
  %3221 = vmatprep.subr.mxu0 0.0
  %3222 = vmatpush1.xpose.msra.mxu0 0.0
  %3223 = vmatprep.subr.mxu0 0.0
  %3224 = vmatpush1.xpose.msra.mxu0 0.0
  %3225 = vmatprep.subr.mxu0 0.0
  %3226 = vmatpush1.xpose.msra.mxu0 0.0
  %3227 = vmatprep.subr.mxu0 0.0
  %3228 = vmatpush1.xpose.msra.mxu0 0.0
  %3229 = vmatprep.subr.mxu0 0.0
  %3230 = vmatpush1.xpose.msra.mxu0 0.0
  %3231 = vmatprep.subr.mxu0 0.0
  %3232 = vmatpush1.xpose.msra.mxu0 0.0
  %3233 = vmatprep.subr.mxu0 0.0
  %3234 = vmatpush1.xpose.msra.mxu0 0.0
  %3235 = vmatprep.subr.mxu0 0.0
  %3236 = vmatpush1.xpose.msra.mxu0 0.0
  %3237 = vmatprep.subr.mxu0 0.0
  %3238 = vmatpush1.xpose.msra.mxu0 0.0
  %3239 = vmatprep.subr.mxu0 0.0
  %3240 = vmatpush1.xpose.msra.mxu0 0.0
  %3241 = vmatprep.subr.mxu0 %v123
  %3242 = vmatpush1.xpose.msra.mxu0 %v122
  %3243 = vmatprep.subr.mxu0 %v91
  %3244 = vmatpush1.xpose.msra.mxu0 %v90
  %3245 = vmatprep.subr.mxu0 0.0
  %3246 = vmatpush2.xpose.msra.mxu0 0.0
  %3247 = vmatprep.subr.mxu0 0.0
  %3248 = vmatpush2.xpose.msra.mxu0 0.0
  %3249 = vmatprep.subr.mxu0 0.0
  %3250 = vmatpush2.xpose.msra.mxu0 0.0
  %3251 = vmatprep.subr.mxu0 0.0
  %3252 = vmatpush2.xpose.msra.mxu0 0.0
  %3253 = vmatprep.subr.mxu0 0.0
  %3254 = vmatpush2.xpose.msra.mxu0 0.0
  %3255 = vmatprep.subr.mxu0 0.0
  %3256 = vmatpush2.xpose.msra.mxu0 0.0
  %3257 = vmatprep.subr.mxu0 0.0
  %3258 = vmatpush2.xpose.msra.mxu0 0.0
  %3259 = vmatprep.subr.mxu0 0.0
  %3260 = vmatpush2.xpose.msra.mxu0 0.0
  %3261 = vmatprep.subr.mxu0 0.0
  %3262 = vmatpush2.xpose.msra.mxu0 0.0
  %3263 = vmatprep.subr.mxu0 0.0
  %3264 = vmatpush2.xpose.msra.mxu0 0.0
  %3265 = vmatprep.subr.mxu0 0.0
  %3266 = vmatpush2.xpose.msra.mxu0 0.0
  %3267 = vmatprep.subr.mxu0 0.0
  %3268 = vmatpush2.xpose.msra.mxu0 0.0
  %3269 = vmatprep.subr.mxu0 0.0
  %3270 = vmatpush2.xpose.msra.mxu0 0.0
  %3271 = vmatprep.subr.mxu0 0.0
  %3272 = vmatpush2.xpose.msra.mxu0 0.0
  %3273 = vmatprep.subr.mxu0 0.0
  %3274 = vmatpush2.xpose.msra.mxu0 0.0
  %3275 = vmatprep.subr.mxu0 0.0
  %3276 = vmatpush2.xpose.msra.mxu0 0.0
  %3277 = vmatprep.mubr.f32.mxu0 %v27
  %3278 = vmatmul.mubr.f32.gmra.mxu0 %v26
  %v3279 = vpop.f32.mrf.mxu0
  %v3280 = vadd.f32 %v3205, %v3279
  %v3281 = vpop.f32.mrf.mxu0
  %3282 = vmatprep.mubr.f32.mxu0 %v59
  %3283 = vmatmul.mubr.f32.gmra.mxu0 %v58
  %v3284 = vpop.f32.mrf.mxu0
  %v3285 = vadd.f32 %v3210, %v3284
  %v3286 = vpop.f32.mrf.mxu0
  %3287 = vdwg.mxu0
  %3288 = vmatprep.subr.mxu0 0.0
  %3289 = vmatpush1.xpose.msra.mxu0 0.0
  %3290 = vmatprep.subr.mxu0 0.0
  %3291 = vmatpush1.xpose.msra.mxu0 0.0
  %3292 = vmatprep.subr.mxu0 0.0
  %3293 = vmatpush1.xpose.msra.mxu0 0.0
  %3294 = vmatprep.subr.mxu0 0.0
  %3295 = vmatpush1.xpose.msra.mxu0 0.0
  %3296 = vmatprep.subr.mxu0 0.0
  %3297 = vmatpush1.xpose.msra.mxu0 0.0
  %3298 = vmatprep.subr.mxu0 0.0
  %3299 = vmatpush1.xpose.msra.mxu0 0.0
  %3300 = vmatprep.subr.mxu0 0.0
  %3301 = vmatpush1.xpose.msra.mxu0 0.0
  %3302 = vmatprep.subr.mxu0 0.0
  %3303 = vmatpush1.xpose.msra.mxu0 0.0
  %3304 = vmatprep.subr.mxu0 0.0
  %3305 = vmatpush1.xpose.msra.mxu0 0.0
  %3306 = vmatprep.subr.mxu0 0.0
  %3307 = vmatpush1.xpose.msra.mxu0 0.0
  %3308 = vmatprep.subr.mxu0 0.0
  %3309 = vmatpush1.xpose.msra.mxu0 0.0
  %3310 = vmatprep.subr.mxu0 0.0
  %3311 = vmatpush1.xpose.msra.mxu0 0.0
  %3312 = vmatprep.subr.mxu0 0.0
  %3313 = vmatpush1.xpose.msra.mxu0 0.0
  %3314 = vmatprep.subr.mxu0 0.0
  %3315 = vmatpush1.xpose.msra.mxu0 0.0
  %3316 = vmatprep.subr.mxu0 %v125
  %3317 = vmatpush1.xpose.msra.mxu0 %v124
  %3318 = vmatprep.subr.mxu0 %v93
  %3319 = vmatpush1.xpose.msra.mxu0 %v92
  %3320 = vmatprep.subr.mxu0 0.0
  %3321 = vmatpush2.xpose.msra.mxu0 0.0
  %3322 = vmatprep.subr.mxu0 0.0
  %3323 = vmatpush2.xpose.msra.mxu0 0.0
  %3324 = vmatprep.subr.mxu0 0.0
  %3325 = vmatpush2.xpose.msra.mxu0 0.0
  %3326 = vmatprep.subr.mxu0 0.0
  %3327 = vmatpush2.xpose.msra.mxu0 0.0
  %3328 = vmatprep.subr.mxu0 0.0
  %3329 = vmatpush2.xpose.msra.mxu0 0.0
  %3330 = vmatprep.subr.mxu0 0.0
  %3331 = vmatpush2.xpose.msra.mxu0 0.0
  %3332 = vmatprep.subr.mxu0 0.0
  %3333 = vmatpush2.xpose.msra.mxu0 0.0
  %3334 = vmatprep.subr.mxu0 0.0
  %3335 = vmatpush2.xpose.msra.mxu0 0.0
  %3336 = vmatprep.subr.mxu0 0.0
  %3337 = vmatpush2.xpose.msra.mxu0 0.0
  %3338 = vmatprep.subr.mxu0 0.0
  %3339 = vmatpush2.xpose.msra.mxu0 0.0
  %3340 = vmatprep.subr.mxu0 0.0
  %3341 = vmatpush2.xpose.msra.mxu0 0.0
  %3342 = vmatprep.subr.mxu0 0.0
  %3343 = vmatpush2.xpose.msra.mxu0 0.0
  %3344 = vmatprep.subr.mxu0 0.0
  %3345 = vmatpush2.xpose.msra.mxu0 0.0
  %3346 = vmatprep.subr.mxu0 0.0
  %3347 = vmatpush2.xpose.msra.mxu0 0.0
  %3348 = vmatprep.subr.mxu0 0.0
  %3349 = vmatpush2.xpose.msra.mxu0 0.0
  %3350 = vmatprep.subr.mxu0 0.0
  %3351 = vmatpush2.xpose.msra.mxu0 0.0
  %3352 = vmatprep.mubr.f32.mxu0 %v29
  %3353 = vmatmul.mubr.f32.gmra.mxu0 %v28
  %v3354 = vpop.f32.mrf.mxu0
  %v3355 = vadd.f32 %v3280, %v3354
  %v3356 = vpop.f32.mrf.mxu0
  %3357 = vmatprep.mubr.f32.mxu0 %v61
  %3358 = vmatmul.mubr.f32.gmra.mxu0 %v60
  %v3359 = vpop.f32.mrf.mxu0
  %v3360 = vadd.f32 %v3285, %v3359
  %v3361 = vpop.f32.mrf.mxu0
  %3362 = vdwg.mxu0
  %3363 = vmatprep.subr.mxu0 0.0
  %3364 = vmatpush1.xpose.msra.mxu0 0.0
  %3365 = vmatprep.subr.mxu0 0.0
  %3366 = vmatpush1.xpose.msra.mxu0 0.0
  %3367 = vmatprep.subr.mxu0 0.0
  %3368 = vmatpush1.xpose.msra.mxu0 0.0
  %3369 = vmatprep.subr.mxu0 0.0
  %3370 = vmatpush1.xpose.msra.mxu0 0.0
  %3371 = vmatprep.subr.mxu0 0.0
  %3372 = vmatpush1.xpose.msra.mxu0 0.0
  %3373 = vmatprep.subr.mxu0 0.0
  %3374 = vmatpush1.xpose.msra.mxu0 0.0
  %3375 = vmatprep.subr.mxu0 0.0
  %3376 = vmatpush1.xpose.msra.mxu0 0.0
  %3377 = vmatprep.subr.mxu0 0.0
  %3378 = vmatpush1.xpose.msra.mxu0 0.0
  %3379 = vmatprep.subr.mxu0 0.0
  %3380 = vmatpush1.xpose.msra.mxu0 0.0
  %3381 = vmatprep.subr.mxu0 0.0
  %3382 = vmatpush1.xpose.msra.mxu0 0.0
  %3383 = vmatprep.subr.mxu0 0.0
  %3384 = vmatpush1.xpose.msra.mxu0 0.0
  %3385 = vmatprep.subr.mxu0 0.0
  %3386 = vmatpush1.xpose.msra.mxu0 0.0
  %3387 = vmatprep.subr.mxu0 0.0
  %3388 = vmatpush1.xpose.msra.mxu0 0.0
  %3389 = vmatprep.subr.mxu0 0.0
  %3390 = vmatpush1.xpose.msra.mxu0 0.0
  %3391 = vmatprep.subr.mxu0 %v127
  %3392 = vmatpush1.xpose.msra.mxu0 %v126
  %3393 = vmatprep.subr.mxu0 %v95
  %3394 = vmatpush1.xpose.msra.mxu0 %v94
  %3395 = vmatprep.subr.mxu0 0.0
  %3396 = vmatpush2.xpose.msra.mxu0 0.0
  %3397 = vmatprep.subr.mxu0 0.0
  %3398 = vmatpush2.xpose.msra.mxu0 0.0
  %3399 = vmatprep.subr.mxu0 0.0
  %3400 = vmatpush2.xpose.msra.mxu0 0.0
  %3401 = vmatprep.subr.mxu0 0.0
  %3402 = vmatpush2.xpose.msra.mxu0 0.0
  %3403 = vmatprep.subr.mxu0 0.0
  %3404 = vmatpush2.xpose.msra.mxu0 0.0
  %3405 = vmatprep.subr.mxu0 0.0
  %3406 = vmatpush2.xpose.msra.mxu0 0.0
  %3407 = vmatprep.subr.mxu0 0.0
  %3408 = vmatpush2.xpose.msra.mxu0 0.0
  %3409 = vmatprep.subr.mxu0 0.0
  %3410 = vmatpush2.xpose.msra.mxu0 0.0
  %3411 = vmatprep.subr.mxu0 0.0
  %3412 = vmatpush2.xpose.msra.mxu0 0.0
  %3413 = vmatprep.subr.mxu0 0.0
  %3414 = vmatpush2.xpose.msra.mxu0 0.0
  %3415 = vmatprep.subr.mxu0 0.0
  %3416 = vmatpush2.xpose.msra.mxu0 0.0
  %3417 = vmatprep.subr.mxu0 0.0
  %3418 = vmatpush2.xpose.msra.mxu0 0.0
  %3419 = vmatprep.subr.mxu0 0.0
  %3420 = vmatpush2.xpose.msra.mxu0 0.0
  %3421 = vmatprep.subr.mxu0 0.0
  %3422 = vmatpush2.xpose.msra.mxu0 0.0
  %3423 = vmatprep.subr.mxu0 0.0
  %3424 = vmatpush2.xpose.msra.mxu0 0.0
  %3425 = vmatprep.subr.mxu0 0.0
  %3426 = vmatpush2.xpose.msra.mxu0 0.0
  %3427 = vmatprep.mubr.f32.mxu0 %v31
  %3428 = vmatmul.mubr.f32.gmra.mxu0 %v30
  %v3429 = vpop.f32.mrf.mxu0
  %v3430 = vadd.f32 %v3355, %v3429
  %v3431 = vpop.f32.mrf.mxu0
  %3432 = vmatprep.mubr.f32.mxu0 %v63
  %3433 = vmatmul.mubr.f32.gmra.mxu0 %v62
  %v3434 = vpop.f32.mrf.mxu0
  %v3435 = vadd.f32 %v3360, %v3434
  %v3436 = vpop.f32.mrf.mxu0
  %3437 = vdwg.mxu0
  %3438 = vmatprep.subr.mxu0 0.0
  %3439 = vmatpush1.xpose.msra.mxu0 0.0
  %3440 = vmatprep.subr.mxu0 0.0
  %3441 = vmatpush1.xpose.msra.mxu0 0.0
  %3442 = vmatprep.subr.mxu0 0.0
  %3443 = vmatpush1.xpose.msra.mxu0 0.0
  %3444 = vmatprep.subr.mxu0 0.0
  %3445 = vmatpush1.xpose.msra.mxu0 0.0
  %3446 = vmatprep.subr.mxu0 0.0
  %3447 = vmatpush1.xpose.msra.mxu0 0.0
  %3448 = vmatprep.subr.mxu0 0.0
  %3449 = vmatpush1.xpose.msra.mxu0 0.0
  %3450 = vmatprep.subr.mxu0 0.0
  %3451 = vmatpush1.xpose.msra.mxu0 0.0
  %3452 = vmatprep.subr.mxu0 0.0
  %3453 = vmatpush1.xpose.msra.mxu0 0.0
  %3454 = vmatprep.subr.mxu0 0.0
  %3455 = vmatpush1.xpose.msra.mxu0 0.0
  %3456 = vmatprep.subr.mxu0 0.0
  %3457 = vmatpush1.xpose.msra.mxu0 0.0
  %3458 = vmatprep.subr.mxu0 0.0
  %3459 = vmatpush1.xpose.msra.mxu0 0.0
  %3460 = vmatprep.subr.mxu0 0.0
  %3461 = vmatpush1.xpose.msra.mxu0 0.0
  %3462 = vmatprep.subr.mxu0 0.0
  %3463 = vmatpush1.xpose.msra.mxu0 0.0
  %3464 = vmatprep.subr.mxu0 0.0
  %3465 = vmatpush1.xpose.msra.mxu0 0.0
  %3466 = vmatprep.subr.mxu0 %v129
  %3467 = vmatpush1.xpose.msra.mxu0 %v128
  %3468 = vmatprep.subr.mxu0 %v97
  %3469 = vmatpush1.xpose.msra.mxu0 %v96
  %3470 = vmatprep.subr.mxu0 0.0
  %3471 = vmatpush2.xpose.msra.mxu0 0.0
  %3472 = vmatprep.subr.mxu0 0.0
  %3473 = vmatpush2.xpose.msra.mxu0 0.0
  %3474 = vmatprep.subr.mxu0 0.0
  %3475 = vmatpush2.xpose.msra.mxu0 0.0
  %3476 = vmatprep.subr.mxu0 0.0
  %3477 = vmatpush2.xpose.msra.mxu0 0.0
  %3478 = vmatprep.subr.mxu0 0.0
  %3479 = vmatpush2.xpose.msra.mxu0 0.0
  %3480 = vmatprep.subr.mxu0 0.0
  %3481 = vmatpush2.xpose.msra.mxu0 0.0
  %3482 = vmatprep.subr.mxu0 0.0
  %3483 = vmatpush2.xpose.msra.mxu0 0.0
  %3484 = vmatprep.subr.mxu0 0.0
  %3485 = vmatpush2.xpose.msra.mxu0 0.0
  %3486 = vmatprep.subr.mxu0 0.0
  %3487 = vmatpush2.xpose.msra.mxu0 0.0
  %3488 = vmatprep.subr.mxu0 0.0
  %3489 = vmatpush2.xpose.msra.mxu0 0.0
  %3490 = vmatprep.subr.mxu0 0.0
  %3491 = vmatpush2.xpose.msra.mxu0 0.0
  %3492 = vmatprep.subr.mxu0 0.0
  %3493 = vmatpush2.xpose.msra.mxu0 0.0
  %3494 = vmatprep.subr.mxu0 0.0
  %3495 = vmatpush2.xpose.msra.mxu0 0.0
  %3496 = vmatprep.subr.mxu0 0.0
  %3497 = vmatpush2.xpose.msra.mxu0 0.0
  %3498 = vmatprep.subr.mxu0 0.0
  %3499 = vmatpush2.xpose.msra.mxu0 0.0
  %3500 = vmatprep.subr.mxu0 0.0
  %3501 = vmatpush2.xpose.msra.mxu0 0.0
  %3502 = vmatprep.mubr.f32.mxu0 %v33
  %3503 = vmatmul.mubr.f32.gmra.mxu0 %v32
  %v3504 = vpop.f32.mrf.mxu0
  %v3505 = vadd.f32 %v3430, %v3504
  %v3506 = vpop.f32.mrf.mxu0
  %3507 = vmatprep.mubr.f32.mxu0 %v65
  %3508 = vmatmul.mubr.f32.gmra.mxu0 %v64
  %v3509 = vpop.f32.mrf.mxu0
  %v3510 = vadd.f32 %v3435, %v3509
  %v3511 = vpop.f32.mrf.mxu0
  %3512 = vdwg.mxu0
  %3513 = vmatprep.subr.mxu0 0.0
  %3514 = vmatpush1.xpose.msra.mxu0 0.0
  %3515 = vmatprep.subr.mxu0 0.0
  %3516 = vmatpush1.xpose.msra.mxu0 0.0
  %3517 = vmatprep.subr.mxu0 0.0
  %3518 = vmatpush1.xpose.msra.mxu0 0.0
  %3519 = vmatprep.subr.mxu0 0.0
  %3520 = vmatpush1.xpose.msra.mxu0 0.0
  %3521 = vmatprep.subr.mxu0 0.0
  %3522 = vmatpush1.xpose.msra.mxu0 0.0
  %3523 = vmatprep.subr.mxu0 0.0
  %3524 = vmatpush1.xpose.msra.mxu0 0.0
  %3525 = vmatprep.subr.mxu0 0.0
  %3526 = vmatpush1.xpose.msra.mxu0 0.0
  %3527 = vmatprep.subr.mxu0 0.0
  %3528 = vmatpush1.xpose.msra.mxu0 0.0
  %3529 = vmatprep.subr.mxu0 0.0
  %3530 = vmatpush1.xpose.msra.mxu0 0.0
  %3531 = vmatprep.subr.mxu0 0.0
  %3532 = vmatpush1.xpose.msra.mxu0 0.0
  %3533 = vmatprep.subr.mxu0 0.0
  %3534 = vmatpush1.xpose.msra.mxu0 0.0
  %3535 = vmatprep.subr.mxu0 0.0
  %3536 = vmatpush1.xpose.msra.mxu0 0.0
  %3537 = vmatprep.subr.mxu0 0.0
  %3538 = vmatpush1.xpose.msra.mxu0 0.0
  %3539 = vmatprep.subr.mxu0 0.0
  %3540 = vmatpush1.xpose.msra.mxu0 0.0
  %3541 = vmatprep.subr.mxu0 %v131
  %3542 = vmatpush1.xpose.msra.mxu0 %v130
  %3543 = vmatprep.subr.mxu0 %v99
  %3544 = vmatpush1.xpose.msra.mxu0 %v98
  %3545 = vmatprep.subr.mxu0 0.0
  %3546 = vmatpush2.xpose.msra.mxu0 0.0
  %3547 = vmatprep.subr.mxu0 0.0
  %3548 = vmatpush2.xpose.msra.mxu0 0.0
  %3549 = vmatprep.subr.mxu0 0.0
  %3550 = vmatpush2.xpose.msra.mxu0 0.0
  %3551 = vmatprep.subr.mxu0 0.0
  %3552 = vmatpush2.xpose.msra.mxu0 0.0
  %3553 = vmatprep.subr.mxu0 0.0
  %3554 = vmatpush2.xpose.msra.mxu0 0.0
  %3555 = vmatprep.subr.mxu0 0.0
  %3556 = vmatpush2.xpose.msra.mxu0 0.0
  %3557 = vmatprep.subr.mxu0 0.0
  %3558 = vmatpush2.xpose.msra.mxu0 0.0
  %3559 = vmatprep.subr.mxu0 0.0
  %3560 = vmatpush2.xpose.msra.mxu0 0.0
  %3561 = vmatprep.subr.mxu0 0.0
  %3562 = vmatpush2.xpose.msra.mxu0 0.0
  %3563 = vmatprep.subr.mxu0 0.0
  %3564 = vmatpush2.xpose.msra.mxu0 0.0
  %3565 = vmatprep.subr.mxu0 0.0
  %3566 = vmatpush2.xpose.msra.mxu0 0.0
  %3567 = vmatprep.subr.mxu0 0.0
  %3568 = vmatpush2.xpose.msra.mxu0 0.0
  %3569 = vmatprep.subr.mxu0 0.0
  %3570 = vmatpush2.xpose.msra.mxu0 0.0
  %3571 = vmatprep.subr.mxu0 0.0
  %3572 = vmatpush2.xpose.msra.mxu0 0.0
  %3573 = vmatprep.subr.mxu0 0.0
  %3574 = vmatpush2.xpose.msra.mxu0 0.0
  %3575 = vmatprep.subr.mxu0 0.0
  %3576 = vmatpush2.xpose.msra.mxu0 0.0
  %3577 = vmatprep.mubr.f32.mxu0 %v35
  %3578 = vmatmul.mubr.f32.gmra.mxu0 %v34
  %v3579 = vpop.f32.mrf.mxu0
  %v3580 = vadd.f32 %v3505, %v3579
  %v3581 = vpop.f32.mrf.mxu0
  %3582 = vmatprep.mubr.f32.mxu0 %v67
  %3583 = vmatmul.mubr.f32.gmra.mxu0 %v66
  %v3584 = vpop.f32.mrf.mxu0
  %v3585 = vadd.f32 %v3510, %v3584
  %v3586 = vpop.f32.mrf.mxu0
  %3587 = vdwg.mxu0
  %3588 = vmatprep.subr.mxu0 0.0
  %3589 = vmatpush1.xpose.msra.mxu0 0.0
  %3590 = vmatprep.subr.mxu0 0.0
  %3591 = vmatpush1.xpose.msra.mxu0 0.0
  %3592 = vmatprep.subr.mxu0 0.0
  %3593 = vmatpush1.xpose.msra.mxu0 0.0
  %3594 = vmatprep.subr.mxu0 0.0
  %3595 = vmatpush1.xpose.msra.mxu0 0.0
  %3596 = vmatprep.subr.mxu0 0.0
  %3597 = vmatpush1.xpose.msra.mxu0 0.0
  %3598 = vmatprep.subr.mxu0 0.0
  %3599 = vmatpush1.xpose.msra.mxu0 0.0
  %3600 = vmatprep.subr.mxu0 0.0
  %3601 = vmatpush1.xpose.msra.mxu0 0.0
  %3602 = vmatprep.subr.mxu0 0.0
  %3603 = vmatpush1.xpose.msra.mxu0 0.0
  %3604 = vmatprep.subr.mxu0 0.0
  %3605 = vmatpush1.xpose.msra.mxu0 0.0
  %3606 = vmatprep.subr.mxu0 0.0
  %3607 = vmatpush1.xpose.msra.mxu0 0.0
  %3608 = vmatprep.subr.mxu0 0.0
  %3609 = vmatpush1.xpose.msra.mxu0 0.0
  %3610 = vmatprep.subr.mxu0 0.0
  %3611 = vmatpush1.xpose.msra.mxu0 0.0
  %3612 = vmatprep.subr.mxu0 0.0
  %3613 = vmatpush1.xpose.msra.mxu0 0.0
  %3614 = vmatprep.subr.mxu0 0.0
  %3615 = vmatpush1.xpose.msra.mxu0 0.0
  %3616 = vmatprep.subr.mxu0 %v133
  %3617 = vmatpush1.xpose.msra.mxu0 %v132
  %3618 = vmatprep.subr.mxu0 %v101
  %3619 = vmatpush1.xpose.msra.mxu0 %v100
  %3620 = vmatprep.subr.mxu0 0.0
  %3621 = vmatpush2.xpose.msra.mxu0 0.0
  %3622 = vmatprep.subr.mxu0 0.0
  %3623 = vmatpush2.xpose.msra.mxu0 0.0
  %3624 = vmatprep.subr.mxu0 0.0
  %3625 = vmatpush2.xpose.msra.mxu0 0.0
  %3626 = vmatprep.subr.mxu0 0.0
  %3627 = vmatpush2.xpose.msra.mxu0 0.0
  %3628 = vmatprep.subr.mxu0 0.0
  %3629 = vmatpush2.xpose.msra.mxu0 0.0
  %3630 = vmatprep.subr.mxu0 0.0
  %3631 = vmatpush2.xpose.msra.mxu0 0.0
  %3632 = vmatprep.subr.mxu0 0.0
  %3633 = vmatpush2.xpose.msra.mxu0 0.0
  %3634 = vmatprep.subr.mxu0 0.0
  %3635 = vmatpush2.xpose.msra.mxu0 0.0
  %3636 = vmatprep.subr.mxu0 0.0
  %3637 = vmatpush2.xpose.msra.mxu0 0.0
  %3638 = vmatprep.subr.mxu0 0.0
  %3639 = vmatpush2.xpose.msra.mxu0 0.0
  %3640 = vmatprep.subr.mxu0 0.0
  %3641 = vmatpush2.xpose.msra.mxu0 0.0
  %3642 = vmatprep.subr.mxu0 0.0
  %3643 = vmatpush2.xpose.msra.mxu0 0.0
  %3644 = vmatprep.subr.mxu0 0.0
  %3645 = vmatpush2.xpose.msra.mxu0 0.0
  %3646 = vmatprep.subr.mxu0 0.0
  %3647 = vmatpush2.xpose.msra.mxu0 0.0
  %3648 = vmatprep.subr.mxu0 0.0
  %3649 = vmatpush2.xpose.msra.mxu0 0.0
  %3650 = vmatprep.subr.mxu0 0.0
  %3651 = vmatpush2.xpose.msra.mxu0 0.0
  %3652 = vmatprep.mubr.f32.mxu0 %v37
  %3653 = vmatmul.mubr.f32.gmra.mxu0 %v36
  %v3654 = vpop.f32.mrf.mxu0
  %v3655 = vadd.f32 %v3580, %v3654
  %v3656 = vpop.f32.mrf.mxu0
  %3657 = vmatprep.mubr.f32.mxu0 %v69
  %3658 = vmatmul.mubr.f32.gmra.mxu0 %v68
  %v3659 = vpop.f32.mrf.mxu0
  %v3660 = vadd.f32 %v3585, %v3659
  %v3661 = vpop.f32.mrf.mxu0
  %3662 = vdwg.mxu0
  %3663 = vmatprep.subr.mxu0 0.0
  %3664 = vmatpush1.xpose.msra.mxu0 0.0
  %3665 = vmatprep.subr.mxu0 0.0
  %3666 = vmatpush1.xpose.msra.mxu0 0.0
  %3667 = vmatprep.subr.mxu0 0.0
  %3668 = vmatpush1.xpose.msra.mxu0 0.0
  %3669 = vmatprep.subr.mxu0 0.0
  %3670 = vmatpush1.xpose.msra.mxu0 0.0
  %3671 = vmatprep.subr.mxu0 0.0
  %3672 = vmatpush1.xpose.msra.mxu0 0.0
  %3673 = vmatprep.subr.mxu0 0.0
  %3674 = vmatpush1.xpose.msra.mxu0 0.0
  %3675 = vmatprep.subr.mxu0 0.0
  %3676 = vmatpush1.xpose.msra.mxu0 0.0
  %3677 = vmatprep.subr.mxu0 0.0
  %3678 = vmatpush1.xpose.msra.mxu0 0.0
  %3679 = vmatprep.subr.mxu0 0.0
  %3680 = vmatpush1.xpose.msra.mxu0 0.0
  %3681 = vmatprep.subr.mxu0 0.0
  %3682 = vmatpush1.xpose.msra.mxu0 0.0
  %3683 = vmatprep.subr.mxu0 0.0
  %3684 = vmatpush1.xpose.msra.mxu0 0.0
  %3685 = vmatprep.subr.mxu0 0.0
  %3686 = vmatpush1.xpose.msra.mxu0 0.0
  %3687 = vmatprep.subr.mxu0 0.0
  %3688 = vmatpush1.xpose.msra.mxu0 0.0
  %3689 = vmatprep.subr.mxu0 0.0
  %3690 = vmatpush1.xpose.msra.mxu0 0.0
  %3691 = vmatprep.subr.mxu0 %v135
  %3692 = vmatpush1.xpose.msra.mxu0 %v134
  %3693 = vmatprep.subr.mxu0 %v103
  %3694 = vmatpush1.xpose.msra.mxu0 %v102
  %3695 = vmatprep.subr.mxu0 0.0
  %3696 = vmatpush2.xpose.msra.mxu0 0.0
  %3697 = vmatprep.subr.mxu0 0.0
  %3698 = vmatpush2.xpose.msra.mxu0 0.0
  %3699 = vmatprep.subr.mxu0 0.0
  %3700 = vmatpush2.xpose.msra.mxu0 0.0
  %3701 = vmatprep.subr.mxu0 0.0
  %3702 = vmatpush2.xpose.msra.mxu0 0.0
  %3703 = vmatprep.subr.mxu0 0.0
  %3704 = vmatpush2.xpose.msra.mxu0 0.0
  %3705 = vmatprep.subr.mxu0 0.0
  %3706 = vmatpush2.xpose.msra.mxu0 0.0
  %3707 = vmatprep.subr.mxu0 0.0
  %3708 = vmatpush2.xpose.msra.mxu0 0.0
  %3709 = vmatprep.subr.mxu0 0.0
  %3710 = vmatpush2.xpose.msra.mxu0 0.0
  %3711 = vmatprep.subr.mxu0 0.0
  %3712 = vmatpush2.xpose.msra.mxu0 0.0
  %3713 = vmatprep.subr.mxu0 0.0
  %3714 = vmatpush2.xpose.msra.mxu0 0.0
  %3715 = vmatprep.subr.mxu0 0.0
  %3716 = vmatpush2.xpose.msra.mxu0 0.0
  %3717 = vmatprep.subr.mxu0 0.0
  %3718 = vmatpush2.xpose.msra.mxu0 0.0
  %3719 = vmatprep.subr.mxu0 0.0
  %3720 = vmatpush2.xpose.msra.mxu0 0.0
  %3721 = vmatprep.subr.mxu0 0.0
  %3722 = vmatpush2.xpose.msra.mxu0 0.0
  %3723 = vmatprep.subr.mxu0 0.0
  %3724 = vmatpush2.xpose.msra.mxu0 0.0
  %3725 = vmatprep.subr.mxu0 0.0
  %3726 = vmatpush2.xpose.msra.mxu0 0.0
  %3727 = vmatprep.mubr.f32.mxu0 %v39
  %3728 = vmatmul.mubr.f32.gmra.mxu0 %v38
  %v3729 = vpop.f32.mrf.mxu0
  %v3730 = vadd.f32 %v3655, %v3729
  %v3731 = vpop.f32.mrf.mxu0
  %3732 = vmatprep.mubr.f32.mxu0 %v71
  %3733 = vmatmul.mubr.f32.gmra.mxu0 %v70
  %v3734 = vpop.f32.mrf.mxu0
  %v3735 = vadd.f32 %v3660, %v3734
  %v3736 = vpop.f32.mrf.mxu0
  %3737 = vdwg.mxu0
  %3738 = vmatprep.subr.mxu0 0.0
  %3739 = vmatpush1.xpose.msra.mxu0 0.0
  %3740 = vmatprep.subr.mxu0 0.0
  %3741 = vmatpush1.xpose.msra.mxu0 0.0
  %3742 = vmatprep.subr.mxu0 0.0
  %3743 = vmatpush1.xpose.msra.mxu0 0.0
  %3744 = vmatprep.subr.mxu0 0.0
  %3745 = vmatpush1.xpose.msra.mxu0 0.0
  %3746 = vmatprep.subr.mxu0 0.0
  %3747 = vmatpush1.xpose.msra.mxu0 0.0
  %3748 = vmatprep.subr.mxu0 0.0
  %3749 = vmatpush1.xpose.msra.mxu0 0.0
  %3750 = vmatprep.subr.mxu0 0.0
  %3751 = vmatpush1.xpose.msra.mxu0 0.0
  %3752 = vmatprep.subr.mxu0 0.0
  %3753 = vmatpush1.xpose.msra.mxu0 0.0
  %3754 = vmatprep.subr.mxu0 0.0
  %3755 = vmatpush1.xpose.msra.mxu0 0.0
  %3756 = vmatprep.subr.mxu0 0.0
  %3757 = vmatpush1.xpose.msra.mxu0 0.0
  %3758 = vmatprep.subr.mxu0 0.0
  %3759 = vmatpush1.xpose.msra.mxu0 0.0
  %3760 = vmatprep.subr.mxu0 0.0
  %3761 = vmatpush1.xpose.msra.mxu0 0.0
  %3762 = vmatprep.subr.mxu0 0.0
  %3763 = vmatpush1.xpose.msra.mxu0 0.0
  %3764 = vmatprep.subr.mxu0 0.0
  %3765 = vmatpush1.xpose.msra.mxu0 0.0
  %3766 = vmatprep.subr.mxu0 %v137
  %3767 = vmatpush1.xpose.msra.mxu0 %v136
  %3768 = vmatprep.subr.mxu0 %v105
  %3769 = vmatpush1.xpose.msra.mxu0 %v104
  %3770 = vmatprep.subr.mxu0 0.0
  %3771 = vmatpush2.xpose.msra.mxu0 0.0
  %3772 = vmatprep.subr.mxu0 0.0
  %3773 = vmatpush2.xpose.msra.mxu0 0.0
  %3774 = vmatprep.subr.mxu0 0.0
  %3775 = vmatpush2.xpose.msra.mxu0 0.0
  %3776 = vmatprep.subr.mxu0 0.0
  %3777 = vmatpush2.xpose.msra.mxu0 0.0
  %3778 = vmatprep.subr.mxu0 0.0
  %3779 = vmatpush2.xpose.msra.mxu0 0.0
  %3780 = vmatprep.subr.mxu0 0.0
  %3781 = vmatpush2.xpose.msra.mxu0 0.0
  %3782 = vmatprep.subr.mxu0 0.0
  %3783 = vmatpush2.xpose.msra.mxu0 0.0
  %3784 = vmatprep.subr.mxu0 0.0
  %3785 = vmatpush2.xpose.msra.mxu0 0.0
  %3786 = vmatprep.subr.mxu0 0.0
  %3787 = vmatpush2.xpose.msra.mxu0 0.0
  %3788 = vmatprep.subr.mxu0 0.0
  %3789 = vmatpush2.xpose.msra.mxu0 0.0
  %3790 = vmatprep.subr.mxu0 0.0
  %3791 = vmatpush2.xpose.msra.mxu0 0.0
  %3792 = vmatprep.subr.mxu0 0.0
  %3793 = vmatpush2.xpose.msra.mxu0 0.0
  %3794 = vmatprep.subr.mxu0 0.0
  %3795 = vmatpush2.xpose.msra.mxu0 0.0
  %3796 = vmatprep.subr.mxu0 0.0
  %3797 = vmatpush2.xpose.msra.mxu0 0.0
  %3798 = vmatprep.subr.mxu0 0.0
  %3799 = vmatpush2.xpose.msra.mxu0 0.0
  %3800 = vmatprep.subr.mxu0 0.0
  %3801 = vmatpush2.xpose.msra.mxu0 0.0
  %3802 = vmatprep.mubr.f32.mxu0 %v41
  %3803 = vmatmul.mubr.f32.gmra.mxu0 %v40
  %v3804 = vpop.f32.mrf.mxu0
  %v3805 = vadd.f32 %v3730, %v3804
  %v3806 = vpop.f32.mrf.mxu0
  %3807 = vmatprep.mubr.f32.mxu0 %v73
  %3808 = vmatmul.mubr.f32.gmra.mxu0 %v72
  %v3809 = vpop.f32.mrf.mxu0
  %v3810 = vadd.f32 %v3735, %v3809
  %v3811 = vpop.f32.mrf.mxu0
  %3812 = vdwg.mxu0
  %3813 = vmatprep.subr.mxu0 0.0
  %3814 = vmatpush1.xpose.msra.mxu0 0.0
  %3815 = vmatprep.subr.mxu0 0.0
  %3816 = vmatpush1.xpose.msra.mxu0 0.0
  %3817 = vmatprep.subr.mxu0 0.0
  %3818 = vmatpush1.xpose.msra.mxu0 0.0
  %3819 = vmatprep.subr.mxu0 0.0
  %3820 = vmatpush1.xpose.msra.mxu0 0.0
  %3821 = vmatprep.subr.mxu0 0.0
  %3822 = vmatpush1.xpose.msra.mxu0 0.0
  %3823 = vmatprep.subr.mxu0 0.0
  %3824 = vmatpush1.xpose.msra.mxu0 0.0
  %3825 = vmatprep.subr.mxu0 0.0
  %3826 = vmatpush1.xpose.msra.mxu0 0.0
  %3827 = vmatprep.subr.mxu0 0.0
  %3828 = vmatpush1.xpose.msra.mxu0 0.0
  %3829 = vmatprep.subr.mxu0 0.0
  %3830 = vmatpush1.xpose.msra.mxu0 0.0
  %3831 = vmatprep.subr.mxu0 0.0
  %3832 = vmatpush1.xpose.msra.mxu0 0.0
  %3833 = vmatprep.subr.mxu0 0.0
  %3834 = vmatpush1.xpose.msra.mxu0 0.0
  %3835 = vmatprep.subr.mxu0 0.0
  %3836 = vmatpush1.xpose.msra.mxu0 0.0
  %3837 = vmatprep.subr.mxu0 0.0
  %3838 = vmatpush1.xpose.msra.mxu0 0.0
  %3839 = vmatprep.subr.mxu0 0.0
  %3840 = vmatpush1.xpose.msra.mxu0 0.0
  %3841 = vmatprep.subr.mxu0 %v139
  %3842 = vmatpush1.xpose.msra.mxu0 %v138
  %3843 = vmatprep.subr.mxu0 %v107
  %3844 = vmatpush1.xpose.msra.mxu0 %v106
  %3845 = vmatprep.subr.mxu0 0.0
  %3846 = vmatpush2.xpose.msra.mxu0 0.0
  %3847 = vmatprep.subr.mxu0 0.0
  %3848 = vmatpush2.xpose.msra.mxu0 0.0
  %3849 = vmatprep.subr.mxu0 0.0
  %3850 = vmatpush2.xpose.msra.mxu0 0.0
  %3851 = vmatprep.subr.mxu0 0.0
  %3852 = vmatpush2.xpose.msra.mxu0 0.0
  %3853 = vmatprep.subr.mxu0 0.0
  %3854 = vmatpush2.xpose.msra.mxu0 0.0
  %3855 = vmatprep.subr.mxu0 0.0
  %3856 = vmatpush2.xpose.msra.mxu0 0.0
  %3857 = vmatprep.subr.mxu0 0.0
  %3858 = vmatpush2.xpose.msra.mxu0 0.0
  %3859 = vmatprep.subr.mxu0 0.0
  %3860 = vmatpush2.xpose.msra.mxu0 0.0
  %3861 = vmatprep.subr.mxu0 0.0
  %3862 = vmatpush2.xpose.msra.mxu0 0.0
  %3863 = vmatprep.subr.mxu0 0.0
  %3864 = vmatpush2.xpose.msra.mxu0 0.0
  %3865 = vmatprep.subr.mxu0 0.0
  %3866 = vmatpush2.xpose.msra.mxu0 0.0
  %3867 = vmatprep.subr.mxu0 0.0
  %3868 = vmatpush2.xpose.msra.mxu0 0.0
  %3869 = vmatprep.subr.mxu0 0.0
  %3870 = vmatpush2.xpose.msra.mxu0 0.0
  %3871 = vmatprep.subr.mxu0 0.0
  %3872 = vmatpush2.xpose.msra.mxu0 0.0
  %3873 = vmatprep.subr.mxu0 0.0
  %3874 = vmatpush2.xpose.msra.mxu0 0.0
  %3875 = vmatprep.subr.mxu0 0.0
  %3876 = vmatpush2.xpose.msra.mxu0 0.0
  %3877 = vmatprep.mubr.f32.mxu0 %v43
  %3878 = vmatmul.mubr.f32.gmra.mxu0 %v42
  %v3879 = vpop.f32.mrf.mxu0
  %v3880 = vadd.f32 %v3805, %v3879
  %v3881 = vpop.f32.mrf.mxu0
  %3882 = vmatprep.mubr.f32.mxu0 %v75
  %3883 = vmatmul.mubr.f32.gmra.mxu0 %v74
  %v3884 = vpop.f32.mrf.mxu0
  %v3885 = vadd.f32 %v3810, %v3884
  %v3886 = vpop.f32.mrf.mxu0
  %3887 = vdwg.mxu0
  %3888 = vmatprep.subr.mxu0 0.0
  %3889 = vmatpush1.xpose.msra.mxu0 0.0
  %3890 = vmatprep.subr.mxu0 0.0
  %3891 = vmatpush1.xpose.msra.mxu0 0.0
  %3892 = vmatprep.subr.mxu0 0.0
  %3893 = vmatpush1.xpose.msra.mxu0 0.0
  %3894 = vmatprep.subr.mxu0 0.0
  %3895 = vmatpush1.xpose.msra.mxu0 0.0
  %3896 = vmatprep.subr.mxu0 0.0
  %3897 = vmatpush1.xpose.msra.mxu0 0.0
  %3898 = vmatprep.subr.mxu0 0.0
  %3899 = vmatpush1.xpose.msra.mxu0 0.0
  %3900 = vmatprep.subr.mxu0 0.0
  %3901 = vmatpush1.xpose.msra.mxu0 0.0
  %3902 = vmatprep.subr.mxu0 0.0
  %3903 = vmatpush1.xpose.msra.mxu0 0.0
  %3904 = vmatprep.subr.mxu0 0.0
  %3905 = vmatpush1.xpose.msra.mxu0 0.0
  %3906 = vmatprep.subr.mxu0 0.0
  %3907 = vmatpush1.xpose.msra.mxu0 0.0
  %3908 = vmatprep.subr.mxu0 0.0
  %3909 = vmatpush1.xpose.msra.mxu0 0.0
  %3910 = vmatprep.subr.mxu0 0.0
  %3911 = vmatpush1.xpose.msra.mxu0 0.0
  %3912 = vmatprep.subr.mxu0 0.0
  %3913 = vmatpush1.xpose.msra.mxu0 0.0
  %3914 = vmatprep.subr.mxu0 0.0
  %3915 = vmatpush1.xpose.msra.mxu0 0.0
  %3916 = vmatprep.subr.mxu0 %v141
  %3917 = vmatpush1.xpose.msra.mxu0 %v140
  %3918 = vmatprep.subr.mxu0 %v109
  %3919 = vmatpush1.xpose.msra.mxu0 %v108
  %3920 = vmatprep.subr.mxu0 0.0
  %3921 = vmatpush2.xpose.msra.mxu0 0.0
  %3922 = vmatprep.subr.mxu0 0.0
  %3923 = vmatpush2.xpose.msra.mxu0 0.0
  %3924 = vmatprep.subr.mxu0 0.0
  %3925 = vmatpush2.xpose.msra.mxu0 0.0
  %3926 = vmatprep.subr.mxu0 0.0
  %3927 = vmatpush2.xpose.msra.mxu0 0.0
  %3928 = vmatprep.subr.mxu0 0.0
  %3929 = vmatpush2.xpose.msra.mxu0 0.0
  %3930 = vmatprep.subr.mxu0 0.0
  %3931 = vmatpush2.xpose.msra.mxu0 0.0
  %3932 = vmatprep.subr.mxu0 0.0
  %3933 = vmatpush2.xpose.msra.mxu0 0.0
  %3934 = vmatprep.subr.mxu0 0.0
  %3935 = vmatpush2.xpose.msra.mxu0 0.0
  %3936 = vmatprep.subr.mxu0 0.0
  %3937 = vmatpush2.xpose.msra.mxu0 0.0
  %3938 = vmatprep.subr.mxu0 0.0
  %3939 = vmatpush2.xpose.msra.mxu0 0.0
  %3940 = vmatprep.subr.mxu0 0.0
  %3941 = vmatpush2.xpose.msra.mxu0 0.0
  %3942 = vmatprep.subr.mxu0 0.0
  %3943 = vmatpush2.xpose.msra.mxu0 0.0
  %3944 = vmatprep.subr.mxu0 0.0
  %3945 = vmatpush2.xpose.msra.mxu0 0.0
  %3946 = vmatprep.subr.mxu0 0.0
  %3947 = vmatpush2.xpose.msra.mxu0 0.0
  %3948 = vmatprep.subr.mxu0 0.0
  %3949 = vmatpush2.xpose.msra.mxu0 0.0
  %3950 = vmatprep.subr.mxu0 0.0
  %3951 = vmatpush2.xpose.msra.mxu0 0.0
  %3952 = vmatprep.mubr.f32.mxu0 %v45
  %3953 = vmatmul.mubr.f32.gmra.mxu0 %v44
  %v3954 = vpop.f32.mrf.mxu0
  %v3955 = vadd.f32 %v3880, %v3954
  %v3956 = vpop.f32.mrf.mxu0
  %3957 = vmatprep.mubr.f32.mxu0 %v77
  %3958 = vmatmul.mubr.f32.gmra.mxu0 %v76
  %v3959 = vpop.f32.mrf.mxu0
  %v3960 = vadd.f32 %v3885, %v3959
  %v3961 = vpop.f32.mrf.mxu0
  %3962 = vdwg.mxu0
  %v3963 = vmul.f32 %v174, %v2754
  %v3964 = vmul.f32 %v207, %v2754
  %v3965 = vmul.f32 %v3963, 0.00024414063
  %v3966 = vmul.f32 %v3964, 0.00024414063
  %v3967 = vsub.f32 %v3955, %v3965
  %v3968 = vsub.f32 %v3960, %v3966
  %3969 = vst.msk [vmem:[%s4] sm:$0xff] %vm1516, %v3967
  %3970 = vst.msk [vmem:[%s4 + $0x8] sm:$0xff] %vm1516, %v3968
  // Predicated region
  $region10: #{loss_fn.6} parent=0 // pred_check
    _
  $region11: #{loss_fn.6} parent=0 // pred_check_branch
    %3972 = sbr.rel (0) target = $region13
  $region12: #{loss_fn.6} parent=0 // pred_region
    _
  $region13: #{loss_fn.6} parent=0 // pred_fallthru
    _
  // Predicated region
  $region14: #{loss_fn.6} parent=0 // pred_check
    _
  $region15: #{loss_fn.6} parent=0 // pred_check_branch
    %3974 = sbr.rel (0) target = $region17
  $region16: #{loss_fn.6} parent=0 // pred_region
    _
  $region17: #{loss_fn.6} parent=0 // pred_fallthru
    _
  // Predicated region
  $region18: #{loss_fn.6} parent=0 // pred_check
    _
  $region19: #{loss_fn.6} parent=0 // pred_check_branch
    %3976 = sbr.rel (0) target = $region21
  $region20: #{loss_fn.6} parent=0 // pred_region
    _
  $region21: #{loss_fn.6} parent=0 // pred_fallthru
    _
  // Predicated region
  $region22: #{loss_fn.6} parent=0 // pred_check
    _
  $region23: #{loss_fn.6} parent=0 // pred_check_branch
    %3978 = sbr.rel (0) target = $region25
  $region24: #{loss_fn.6} parent=0 // pred_region
    _
  $region25: #{loss_fn.6} parent=0 // pred_fallthru
    _
  // Predicated region
  $region26: #{loss_fn.6} parent=0 // pred_check
    _
  $region27: #{loss_fn.6} parent=0 // pred_check_branch
    %3980 = sbr.rel (0) target = $region29
  $region28: #{loss_fn.6} parent=0 // pred_region
    _
  $region29: #{loss_fn.6} parent=0 // pred_fallthru
    _
  // Predicated region
  $region30: #{loss_fn.6} parent=0 // pred_check
    _
  $region31: #{loss_fn.6} parent=0 // pred_check_branch
    %3982 = sbr.rel (0) target = $region33
  $region32: #{loss_fn.6} parent=0 // pred_region
    _
  $region33: #{loss_fn.6} parent=0 // pred_fallthru
    _

// kernel: loss_fn.7
$region0: #{loss_fn.7}
  #allocation0 [shape = 'u32[]', space=smem, size = 0x4, offset = 0x4, fixed_abs, tag = 'smem constant byte address 0x4 - core index']
  #allocation1 [shape = 'u32[144,128]{1,0:T(1,128)}', space=vmem, size = 0x12000, scoped, tag = 'internal scratch']
  %s0 = inlined_call_operand.vmem [shape: f32[16,1024], index: 0, kind: input, shape index: {}]
  %s1 = inlined_call_operand.vmem [shape: f32[16,1024], index: 1, kind: input, shape index: {}]
  %s2 = inlined_call_operand.vmem [shape: f32[1,16,16], index: 2, kind: output, shape index: {0}]
  %s3 = inlined_call_operand.vmem [shape: f32[1,16,16], index: 3, kind: output, shape index: {1}]
  %s4 = inlined_call_operand.vmem [shape: f32[1,16,16], index: 4, kind: output, shape index: {2}]
  %5 = xla_tuple %s2, %s3, %s4
  %s6 = sld [smem:[#allocation0]]
  $region34: #{loss_fn.7} parent=0
    _
  %s8 = ssub.s32 1, %s6
  %s9 = scalar_select 0, %s8, %s6
  // Predicated region
  $region2: #{loss_fn.7} parent=0 // pred_check
    _
  $region3: #{loss_fn.7} parent=0 // pred_check_branch
    %11 = sbr.rel (0) target = $region5
  $region4: #{loss_fn.7} parent=0 // pred_region
    _
  $region5: #{loss_fn.7} parent=0 // pred_fallthru
    _
  // Predicated region
  $region6: #{loss_fn.7} parent=0 // pred_check
    _
  $region7: #{loss_fn.7} parent=0 // pred_check_branch
    %13 = sbr.rel (0) target = $region9
  $region8: #{loss_fn.7} parent=0 // pred_region
    _
  $region9: #{loss_fn.7} parent=0 // pred_fallthru
    _
  %v14 = vld [vmem:[%s0] sm:$0xff]
  %v15 = vld [vmem:[%s0 + $0x8] sm:$0xff]
  %v16 = vld [vmem:[%s0 + $0x10] sm:$0xff]
  %v17 = vld [vmem:[%s0 + $0x18] sm:$0xff]
  %v18 = vld [vmem:[%s0 + $0x20] sm:$0xff]
  %v19 = vld [vmem:[%s0 + $0x28] sm:$0xff]
  %v20 = vld [vmem:[%s0 + $0x30] sm:$0xff]
  %v21 = vld [vmem:[%s0 + $0x38] sm:$0xff]
  %v22 = vld [vmem:[%s0 + $0x40] sm:$0xff]
  %v23 = vld [vmem:[%s0 + $0x48] sm:$0xff]
  %v24 = vld [vmem:[%s0 + $0x50] sm:$0xff]
  %v25 = vld [vmem:[%s0 + $0x58] sm:$0xff]
  %v26 = vld [vmem:[%s0 + $0x60] sm:$0xff]
  %v27 = vld [vmem:[%s0 + $0x68] sm:$0xff]
  %v28 = vld [vmem:[%s0 + $0x70] sm:$0xff]
  %v29 = vld [vmem:[%s0 + $0x78] sm:$0xff]
  %v30 = vld [vmem:[%s1] sm:$0xff]
  %v31 = vld [vmem:[%s1 + $0x8] sm:$0xff]
  %v32 = vld [vmem:[%s1 + $0x10] sm:$0xff]
  %v33 = vld [vmem:[%s1 + $0x18] sm:$0xff]
  %v34 = vld [vmem:[%s1 + $0x20] sm:$0xff]
  %v35 = vld [vmem:[%s1 + $0x28] sm:$0xff]
  %v36 = vld [vmem:[%s1 + $0x30] sm:$0xff]
  %v37 = vld [vmem:[%s1 + $0x38] sm:$0xff]
  %v38 = vld [vmem:[%s1 + $0x40] sm:$0xff]
  %v39 = vld [vmem:[%s1 + $0x48] sm:$0xff]
  %v40 = vld [vmem:[%s1 + $0x50] sm:$0xff]
  %v41 = vld [vmem:[%s1 + $0x58] sm:$0xff]
  %v42 = vld [vmem:[%s1 + $0x60] sm:$0xff]
  %v43 = vld [vmem:[%s1 + $0x68] sm:$0xff]
  %v44 = vld [vmem:[%s1 + $0x70] sm:$0xff]
  %v45 = vld [vmem:[%s1 + $0x78] sm:$0xff]
  %v46 = vadd.f32 %v14, %v15
  %v47 = vadd.f32 %v46, %v16
  %v48 = vadd.f32 %v47, %v17
  %v49 = vadd.f32 %v48, %v18
  %v50 = vadd.f32 %v49, %v19
  %v51 = vadd.f32 %v50, %v20
  %v52 = vadd.f32 %v51, %v21
  %53 = vadd.xlane.f32.xlu0 %v52
  %v54 = vpop.xlane.xlu0 %53
  %v55 = vadd.f32 %v22, %v23
  %v56 = vadd.f32 %v55, %v24
  %v57 = vadd.f32 %v56, %v25
  %v58 = vadd.f32 %v57, %v26
  %v59 = vadd.f32 %v58, %v27
  %v60 = vadd.f32 %v59, %v28
  %v61 = vadd.f32 %v60, %v29
  %62 = vadd.xlane.f32.xlu0 %v61
  %v63 = vpop.xlane.xlu0 %62
  %v64 = vadd.f32 %v30, %v31
  %v65 = vadd.f32 %v64, %v32
  %v66 = vadd.f32 %v65, %v33
  %v67 = vadd.f32 %v66, %v34
  %v68 = vadd.f32 %v67, %v35
  %v69 = vadd.f32 %v68, %v36
  %v70 = vadd.f32 %v69, %v37
  %71 = vadd.xlane.f32.xlu0 %v70
  %v72 = vpop.xlane.xlu0 %71
  %v73 = vadd.f32 %v38, %v39
  %v74 = vadd.f32 %v73, %v40
  %v75 = vadd.f32 %v74, %v41
  %v76 = vadd.f32 %v75, %v42
  %v77 = vadd.f32 %v76, %v43
  %v78 = vadd.f32 %v77, %v44
  %v79 = vadd.f32 %v78, %v45
  %80 = vadd.xlane.f32.xlu0 %v79
  %v81 = vpop.xlane.xlu0 %80
  %82 = vmatprep.subr.mxu0 0.0
  %83 = vmatpush1.xpose.msra.mxu0 0.0
  %84 = vmatprep.subr.mxu0 0.0
  %85 = vmatpush1.xpose.msra.mxu0 0.0
  %86 = vmatprep.subr.mxu0 0.0
  %87 = vmatpush1.xpose.msra.mxu0 0.0
  %88 = vmatprep.subr.mxu0 0.0
  %89 = vmatpush1.xpose.msra.mxu0 0.0
  %90 = vmatprep.subr.mxu0 0.0
  %91 = vmatpush1.xpose.msra.mxu0 0.0
  %92 = vmatprep.subr.mxu0 0.0
  %93 = vmatpush1.xpose.msra.mxu0 0.0
  %94 = vmatprep.subr.mxu0 0.0
  %95 = vmatpush1.xpose.msra.mxu0 0.0
  %96 = vmatprep.subr.mxu0 0.0
  %97 = vmatpush1.xpose.msra.mxu0 0.0
  %98 = vmatprep.subr.mxu0 0.0
  %99 = vmatpush1.xpose.msra.mxu0 0.0
  %100 = vmatprep.subr.mxu0 0.0
  %101 = vmatpush1.xpose.msra.mxu0 0.0
  %102 = vmatprep.subr.mxu0 0.0
  %103 = vmatpush1.xpose.msra.mxu0 0.0
  %104 = vmatprep.subr.mxu0 0.0
  %105 = vmatpush1.xpose.msra.mxu0 0.0
  %106 = vmatprep.subr.mxu0 0.0
  %107 = vmatpush1.xpose.msra.mxu0 0.0
  %108 = vmatprep.subr.mxu0 0.0
  %109 = vmatpush1.xpose.msra.mxu0 0.0
  %110 = vmatprep.subr.mxu0 %v23
  %111 = vmatpush1.xpose.msra.mxu0 %v22
  %112 = vmatprep.subr.mxu0 %v15
  %113 = vmatpush1.xpose.msra.mxu0 %v14
  %114 = vmatprep.subr.mxu0 0.0
  %115 = vmatpush2.xpose.msra.mxu0 0.0
  %116 = vmatprep.subr.mxu0 0.0
  %117 = vmatpush2.xpose.msra.mxu0 0.0
  %118 = vmatprep.subr.mxu0 0.0
  %119 = vmatpush2.xpose.msra.mxu0 0.0
  %120 = vmatprep.subr.mxu0 0.0
  %121 = vmatpush2.xpose.msra.mxu0 0.0
  %122 = vmatprep.subr.mxu0 0.0
  %123 = vmatpush2.xpose.msra.mxu0 0.0
  %124 = vmatprep.subr.mxu0 0.0
  %125 = vmatpush2.xpose.msra.mxu0 0.0
  %126 = vmatprep.subr.mxu0 0.0
  %127 = vmatpush2.xpose.msra.mxu0 0.0
  %128 = vmatprep.subr.mxu0 0.0
  %129 = vmatpush2.xpose.msra.mxu0 0.0
  %130 = vmatprep.subr.mxu0 0.0
  %131 = vmatpush2.xpose.msra.mxu0 0.0
  %132 = vmatprep.subr.mxu0 0.0
  %133 = vmatpush2.xpose.msra.mxu0 0.0
  %134 = vmatprep.subr.mxu0 0.0
  %135 = vmatpush2.xpose.msra.mxu0 0.0
  %136 = vmatprep.subr.mxu0 0.0
  %137 = vmatpush2.xpose.msra.mxu0 0.0
  %138 = vmatprep.subr.mxu0 0.0
  %139 = vmatpush2.xpose.msra.mxu0 0.0
  %140 = vmatprep.subr.mxu0 0.0
  %141 = vmatpush2.xpose.msra.mxu0 0.0
  %142 = vmatprep.subr.mxu0 0.0
  %143 = vmatpush2.xpose.msra.mxu0 0.0
  %144 = vmatprep.subr.mxu0 0.0
  %145 = vmatpush2.xpose.msra.mxu0 0.0
  %146 = vmatprep.mubr.f32.mxu0 %v15
  %147 = vmatmul.mubr.f32.gmra.mxu0 %v14
  %v148 = vpop.f32.mrf.mxu0
  %v149 = vadd.f32 0.0, %v148
  %v150 = vpop.f32.mrf.mxu0
  %151 = vmatprep.mubr.f32.mxu0 %v23
  %152 = vmatmul.mubr.f32.gmra.mxu0 %v22
  %v153 = vpop.f32.mrf.mxu0
  %v154 = vadd.f32 0.0, %v153
  %v155 = vpop.f32.mrf.mxu0
  %156 = vdwg.mxu0
  %157 = vmatprep.subr.mxu0 0.0
  %158 = vmatpush1.xpose.msra.mxu0 0.0
  %159 = vmatprep.subr.mxu0 0.0
  %160 = vmatpush1.xpose.msra.mxu0 0.0
  %161 = vmatprep.subr.mxu0 0.0
  %162 = vmatpush1.xpose.msra.mxu0 0.0
  %163 = vmatprep.subr.mxu0 0.0
  %164 = vmatpush1.xpose.msra.mxu0 0.0
  %165 = vmatprep.subr.mxu0 0.0
  %166 = vmatpush1.xpose.msra.mxu0 0.0
  %167 = vmatprep.subr.mxu0 0.0
  %168 = vmatpush1.xpose.msra.mxu0 0.0
  %169 = vmatprep.subr.mxu0 0.0
  %170 = vmatpush1.xpose.msra.mxu0 0.0
  %171 = vmatprep.subr.mxu0 0.0
  %172 = vmatpush1.xpose.msra.mxu0 0.0
  %173 = vmatprep.subr.mxu0 0.0
  %174 = vmatpush1.xpose.msra.mxu0 0.0
  %175 = vmatprep.subr.mxu0 0.0
  %176 = vmatpush1.xpose.msra.mxu0 0.0
  %177 = vmatprep.subr.mxu0 0.0
  %178 = vmatpush1.xpose.msra.mxu0 0.0
  %179 = vmatprep.subr.mxu0 0.0
  %180 = vmatpush1.xpose.msra.mxu0 0.0
  %181 = vmatprep.subr.mxu0 0.0
  %182 = vmatpush1.xpose.msra.mxu0 0.0
  %183 = vmatprep.subr.mxu0 0.0
  %184 = vmatpush1.xpose.msra.mxu0 0.0
  %185 = vmatprep.subr.mxu0 %v25
  %186 = vmatpush1.xpose.msra.mxu0 %v24
  %187 = vmatprep.subr.mxu0 %v17
  %188 = vmatpush1.xpose.msra.mxu0 %v16
  %189 = vmatprep.subr.mxu0 0.0
  %190 = vmatpush2.xpose.msra.mxu0 0.0
  %191 = vmatprep.subr.mxu0 0.0
  %192 = vmatpush2.xpose.msra.mxu0 0.0
  %193 = vmatprep.subr.mxu0 0.0
  %194 = vmatpush2.xpose.msra.mxu0 0.0
  %195 = vmatprep.subr.mxu0 0.0
  %196 = vmatpush2.xpose.msra.mxu0 0.0
  %197 = vmatprep.subr.mxu0 0.0
  %198 = vmatpush2.xpose.msra.mxu0 0.0
  %199 = vmatprep.subr.mxu0 0.0
  %200 = vmatpush2.xpose.msra.mxu0 0.0
  %201 = vmatprep.subr.mxu0 0.0
  %202 = vmatpush2.xpose.msra.mxu0 0.0
  %203 = vmatprep.subr.mxu0 0.0
  %204 = vmatpush2.xpose.msra.mxu0 0.0
  %205 = vmatprep.subr.mxu0 0.0
  %206 = vmatpush2.xpose.msra.mxu0 0.0
  %207 = vmatprep.subr.mxu0 0.0
  %208 = vmatpush2.xpose.msra.mxu0 0.0
  %209 = vmatprep.subr.mxu0 0.0
  %210 = vmatpush2.xpose.msra.mxu0 0.0
  %211 = vmatprep.subr.mxu0 0.0
  %212 = vmatpush2.xpose.msra.mxu0 0.0
  %213 = vmatprep.subr.mxu0 0.0
  %214 = vmatpush2.xpose.msra.mxu0 0.0
  %215 = vmatprep.subr.mxu0 0.0
  %216 = vmatpush2.xpose.msra.mxu0 0.0
  %217 = vmatprep.subr.mxu0 0.0
  %218 = vmatpush2.xpose.msra.mxu0 0.0
  %219 = vmatprep.subr.mxu0 0.0
  %220 = vmatpush2.xpose.msra.mxu0 0.0
  %221 = vmatprep.mubr.f32.mxu0 %v17
  %222 = vmatmul.mubr.f32.gmra.mxu0 %v16
  %v223 = vpop.f32.mrf.mxu0
  %v224 = vadd.f32 %v149, %v223
  %v225 = vpop.f32.mrf.mxu0
  %226 = vmatprep.mubr.f32.mxu0 %v25
  %227 = vmatmul.mubr.f32.gmra.mxu0 %v24
  %v228 = vpop.f32.mrf.mxu0
  %v229 = vadd.f32 %v154, %v228
  %v230 = vpop.f32.mrf.mxu0
  %231 = vdwg.mxu0
  %232 = vmatprep.subr.mxu0 0.0
  %233 = vmatpush1.xpose.msra.mxu0 0.0
  %234 = vmatprep.subr.mxu0 0.0
  %235 = vmatpush1.xpose.msra.mxu0 0.0
  %236 = vmatprep.subr.mxu0 0.0
  %237 = vmatpush1.xpose.msra.mxu0 0.0
  %238 = vmatprep.subr.mxu0 0.0
  %239 = vmatpush1.xpose.msra.mxu0 0.0
  %240 = vmatprep.subr.mxu0 0.0
  %241 = vmatpush1.xpose.msra.mxu0 0.0
  %242 = vmatprep.subr.mxu0 0.0
  %243 = vmatpush1.xpose.msra.mxu0 0.0
  %244 = vmatprep.subr.mxu0 0.0
  %245 = vmatpush1.xpose.msra.mxu0 0.0
  %246 = vmatprep.subr.mxu0 0.0
  %247 = vmatpush1.xpose.msra.mxu0 0.0
  %248 = vmatprep.subr.mxu0 0.0
  %249 = vmatpush1.xpose.msra.mxu0 0.0
  %250 = vmatprep.subr.mxu0 0.0
  %251 = vmatpush1.xpose.msra.mxu0 0.0
  %252 = vmatprep.subr.mxu0 0.0
  %253 = vmatpush1.xpose.msra.mxu0 0.0
  %254 = vmatprep.subr.mxu0 0.0
  %255 = vmatpush1.xpose.msra.mxu0 0.0
  %256 = vmatprep.subr.mxu0 0.0
  %257 = vmatpush1.xpose.msra.mxu0 0.0
  %258 = vmatprep.subr.mxu0 0.0
  %259 = vmatpush1.xpose.msra.mxu0 0.0
  %260 = vmatprep.subr.mxu0 %v27
  %261 = vmatpush1.xpose.msra.mxu0 %v26
  %262 = vmatprep.subr.mxu0 %v19
  %263 = vmatpush1.xpose.msra.mxu0 %v18
  %264 = vmatprep.subr.mxu0 0.0
  %265 = vmatpush2.xpose.msra.mxu0 0.0
  %266 = vmatprep.subr.mxu0 0.0
  %267 = vmatpush2.xpose.msra.mxu0 0.0
  %268 = vmatprep.subr.mxu0 0.0
  %269 = vmatpush2.xpose.msra.mxu0 0.0
  %270 = vmatprep.subr.mxu0 0.0
  %271 = vmatpush2.xpose.msra.mxu0 0.0
  %272 = vmatprep.subr.mxu0 0.0
  %273 = vmatpush2.xpose.msra.mxu0 0.0
  %274 = vmatprep.subr.mxu0 0.0
  %275 = vmatpush2.xpose.msra.mxu0 0.0
  %276 = vmatprep.subr.mxu0 0.0
  %277 = vmatpush2.xpose.msra.mxu0 0.0
  %278 = vmatprep.subr.mxu0 0.0
  %279 = vmatpush2.xpose.msra.mxu0 0.0
  %280 = vmatprep.subr.mxu0 0.0
  %281 = vmatpush2.xpose.msra.mxu0 0.0
  %282 = vmatprep.subr.mxu0 0.0
  %283 = vmatpush2.xpose.msra.mxu0 0.0
  %284 = vmatprep.subr.mxu0 0.0
  %285 = vmatpush2.xpose.msra.mxu0 0.0
  %286 = vmatprep.subr.mxu0 0.0
  %287 = vmatpush2.xpose.msra.mxu0 0.0
  %288 = vmatprep.subr.mxu0 0.0
  %289 = vmatpush2.xpose.msra.mxu0 0.0
  %290 = vmatprep.subr.mxu0 0.0
  %291 = vmatpush2.xpose.msra.mxu0 0.0
  %292 = vmatprep.subr.mxu0 0.0
  %293 = vmatpush2.xpose.msra.mxu0 0.0
  %294 = vmatprep.subr.mxu0 0.0
  %295 = vmatpush2.xpose.msra.mxu0 0.0
  %296 = vmatprep.mubr.f32.mxu0 %v19
  %297 = vmatmul.mubr.f32.gmra.mxu0 %v18
  %v298 = vpop.f32.mrf.mxu0
  %v299 = vadd.f32 %v224, %v298
  %v300 = vpop.f32.mrf.mxu0
  %301 = vmatprep.mubr.f32.mxu0 %v27
  %302 = vmatmul.mubr.f32.gmra.mxu0 %v26
  %v303 = vpop.f32.mrf.mxu0
  %v304 = vadd.f32 %v229, %v303
  %v305 = vpop.f32.mrf.mxu0
  %306 = vdwg.mxu0
  %307 = vmatprep.subr.mxu0 0.0
  %308 = vmatpush1.xpose.msra.mxu0 0.0
  %309 = vmatprep.subr.mxu0 0.0
  %310 = vmatpush1.xpose.msra.mxu0 0.0
  %311 = vmatprep.subr.mxu0 0.0
  %312 = vmatpush1.xpose.msra.mxu0 0.0
  %313 = vmatprep.subr.mxu0 0.0
  %314 = vmatpush1.xpose.msra.mxu0 0.0
  %315 = vmatprep.subr.mxu0 0.0
  %316 = vmatpush1.xpose.msra.mxu0 0.0
  %317 = vmatprep.subr.mxu0 0.0
  %318 = vmatpush1.xpose.msra.mxu0 0.0
  %319 = vmatprep.subr.mxu0 0.0
  %320 = vmatpush1.xpose.msra.mxu0 0.0
  %321 = vmatprep.subr.mxu0 0.0
  %322 = vmatpush1.xpose.msra.mxu0 0.0
  %323 = vmatprep.subr.mxu0 0.0
  %324 = vmatpush1.xpose.msra.mxu0 0.0
  %325 = vmatprep.subr.mxu0 0.0
  %326 = vmatpush1.xpose.msra.mxu0 0.0
  %327 = vmatprep.subr.mxu0 0.0
  %328 = vmatpush1.xpose.msra.mxu0 0.0
  %329 = vmatprep.subr.mxu0 0.0
  %330 = vmatpush1.xpose.msra.mxu0 0.0
  %331 = vmatprep.subr.mxu0 0.0
  %332 = vmatpush1.xpose.msra.mxu0 0.0
  %333 = vmatprep.subr.mxu0 0.0
  %334 = vmatpush1.xpose.msra.mxu0 0.0
  %335 = vmatprep.subr.mxu0 %v29
  %336 = vmatpush1.xpose.msra.mxu0 %v28
  %337 = vmatprep.subr.mxu0 %v21
  %338 = vmatpush1.xpose.msra.mxu0 %v20
  %339 = vmatprep.subr.mxu0 0.0
  %340 = vmatpush2.xpose.msra.mxu0 0.0
  %341 = vmatprep.subr.mxu0 0.0
  %342 = vmatpush2.xpose.msra.mxu0 0.0
  %343 = vmatprep.subr.mxu0 0.0
  %344 = vmatpush2.xpose.msra.mxu0 0.0
  %345 = vmatprep.subr.mxu0 0.0
  %346 = vmatpush2.xpose.msra.mxu0 0.0
  %347 = vmatprep.subr.mxu0 0.0
  %348 = vmatpush2.xpose.msra.mxu0 0.0
  %349 = vmatprep.subr.mxu0 0.0
  %350 = vmatpush2.xpose.msra.mxu0 0.0
  %351 = vmatprep.subr.mxu0 0.0
  %352 = vmatpush2.xpose.msra.mxu0 0.0
  %353 = vmatprep.subr.mxu0 0.0
  %354 = vmatpush2.xpose.msra.mxu0 0.0
  %355 = vmatprep.subr.mxu0 0.0
  %356 = vmatpush2.xpose.msra.mxu0 0.0
  %357 = vmatprep.subr.mxu0 0.0
  %358 = vmatpush2.xpose.msra.mxu0 0.0
  %359 = vmatprep.subr.mxu0 0.0
  %360 = vmatpush2.xpose.msra.mxu0 0.0
  %361 = vmatprep.subr.mxu0 0.0
  %362 = vmatpush2.xpose.msra.mxu0 0.0
  %363 = vmatprep.subr.mxu0 0.0
  %364 = vmatpush2.xpose.msra.mxu0 0.0
  %365 = vmatprep.subr.mxu0 0.0
  %366 = vmatpush2.xpose.msra.mxu0 0.0
  %367 = vmatprep.subr.mxu0 0.0
  %368 = vmatpush2.xpose.msra.mxu0 0.0
  %369 = vmatprep.subr.mxu0 0.0
  %370 = vmatpush2.xpose.msra.mxu0 0.0
  %371 = vmatprep.mubr.f32.mxu0 %v21
  %372 = vmatmul.mubr.f32.gmra.mxu0 %v20
  %v373 = vpop.f32.mrf.mxu0
  %v374 = vadd.f32 %v299, %v373
  %v375 = vpop.f32.mrf.mxu0
  %376 = vmatprep.mubr.f32.mxu0 %v29
  %377 = vmatmul.mubr.f32.gmra.mxu0 %v28
  %v378 = vpop.f32.mrf.mxu0
  %v379 = vadd.f32 %v304, %v378
  %v380 = vpop.f32.mrf.mxu0
  %381 = vdwg.mxu0
  %382 = vxpose.xlu0.b32.start [1/16] %v54, 128
  %383 = vxpose.xlu0.b32.cont [2/16] %v63, 128
  %384 = vxpose.xlu0.b32.cont [3/16] 0.0, 128
  %385 = vxpose.xlu0.b32.cont [4/16] 0.0, 128
  %386 = vxpose.xlu0.b32.cont [5/16] 0.0, 128
  %387 = vxpose.xlu0.b32.cont [6/16] 0.0, 128
  %388 = vxpose.xlu0.b32.cont [7/16] 0.0, 128
  %389 = vxpose.xlu0.b32.cont [8/16] 0.0, 128
  %390 = vxpose.xlu0.b32.cont [9/16] 0.0, 128
  %391 = vxpose.xlu0.b32.cont [10/16] 0.0, 128
  %392 = vxpose.xlu0.b32.cont [11/16] 0.0, 128
  %393 = vxpose.xlu0.b32.cont [12/16] 0.0, 128
  %394 = vxpose.xlu0.b32.cont [13/16] 0.0, 128
  %395 = vxpose.xlu0.b32.cont [14/16] 0.0, 128
  %396 = vxpose.xlu0.b32.cont [15/16] 0.0, 128
  %397 = vxpose.xlu0.b32.end [16/16] 0.0, 128
  %v398 = vpop.trf.xlu0
  %v399 = vpop.trf.xlu0
  %v400 = vpop.trf.xlu0
  %v401 = vpop.trf.xlu0
  %v402 = vpop.trf.xlu0
  %v403 = vpop.trf.xlu0
  %v404 = vpop.trf.xlu0
  %v405 = vpop.trf.xlu0
  %v406 = vpop.trf.xlu0
  %v407 = vpop.trf.xlu0
  %v408 = vpop.trf.xlu0
  %v409 = vpop.trf.xlu0
  %v410 = vpop.trf.xlu0
  %v411 = vpop.trf.xlu0
  %v412 = vpop.trf.xlu0
  %v413 = vpop.trf.xlu0
  %v414 = vlaneseq
  %v415 = vshrl.u32 %v414, 7
  %v416 = vsub.s32 0, %v415
  %v417 = vrot.slane %v398, %v416
  %v418 = vmul.f32 %v54, %v417
  %v419 = vmul.f32 %v63, %v417
  %v420 = vmul.f32 %v418, 0.0009765625
  %v421 = vmul.f32 %v419, 0.0009765625
  %v422 = vsub.f32 %v374, %v420
  %v423 = vsub.f32 %v379, %v421
  %vm424 = vcmask 130048
  %425 = vst.msk [vmem:[%s2] sm:$0xff] %vm424, %v422
  %426 = vst.msk [vmem:[%s2 + $0x8] sm:$0xff] %vm424, %v423
  %427 = vmatprep.subr.mxu0 0.0
  %428 = vmatpush1.xpose.msra.mxu0 0.0
  %429 = vmatprep.subr.mxu0 0.0
  %430 = vmatpush1.xpose.msra.mxu0 0.0
  %431 = vmatprep.subr.mxu0 0.0
  %432 = vmatpush1.xpose.msra.mxu0 0.0
  %433 = vmatprep.subr.mxu0 0.0
  %434 = vmatpush1.xpose.msra.mxu0 0.0
  %435 = vmatprep.subr.mxu0 0.0
  %436 = vmatpush1.xpose.msra.mxu0 0.0
  %437 = vmatprep.subr.mxu0 0.0
  %438 = vmatpush1.xpose.msra.mxu0 0.0
  %439 = vmatprep.subr.mxu0 0.0
  %440 = vmatpush1.xpose.msra.mxu0 0.0
  %441 = vmatprep.subr.mxu0 0.0
  %442 = vmatpush1.xpose.msra.mxu0 0.0
  %443 = vmatprep.subr.mxu0 0.0
  %444 = vmatpush1.xpose.msra.mxu0 0.0
  %445 = vmatprep.subr.mxu0 0.0
  %446 = vmatpush1.xpose.msra.mxu0 0.0
  %447 = vmatprep.subr.mxu0 0.0
  %448 = vmatpush1.xpose.msra.mxu0 0.0
  %449 = vmatprep.subr.mxu0 0.0
  %450 = vmatpush1.xpose.msra.mxu0 0.0
  %451 = vmatprep.subr.mxu0 0.0
  %452 = vmatpush1.xpose.msra.mxu0 0.0
  %453 = vmatprep.subr.mxu0 0.0
  %454 = vmatpush1.xpose.msra.mxu0 0.0
  %455 = vmatprep.subr.mxu0 %v39
  %456 = vmatpush1.xpose.msra.mxu0 %v38
  %457 = vmatprep.subr.mxu0 %v31
  %458 = vmatpush1.xpose.msra.mxu0 %v30
  %459 = vmatprep.subr.mxu0 0.0
  %460 = vmatpush2.xpose.msra.mxu0 0.0
  %461 = vmatprep.subr.mxu0 0.0
  %462 = vmatpush2.xpose.msra.mxu0 0.0
  %463 = vmatprep.subr.mxu0 0.0
  %464 = vmatpush2.xpose.msra.mxu0 0.0
  %465 = vmatprep.subr.mxu0 0.0
  %466 = vmatpush2.xpose.msra.mxu0 0.0
  %467 = vmatprep.subr.mxu0 0.0
  %468 = vmatpush2.xpose.msra.mxu0 0.0
  %469 = vmatprep.subr.mxu0 0.0
  %470 = vmatpush2.xpose.msra.mxu0 0.0
  %471 = vmatprep.subr.mxu0 0.0
  %472 = vmatpush2.xpose.msra.mxu0 0.0
  %473 = vmatprep.subr.mxu0 0.0
  %474 = vmatpush2.xpose.msra.mxu0 0.0
  %475 = vmatprep.subr.mxu0 0.0
  %476 = vmatpush2.xpose.msra.mxu0 0.0
  %477 = vmatprep.subr.mxu0 0.0
  %478 = vmatpush2.xpose.msra.mxu0 0.0
  %479 = vmatprep.subr.mxu0 0.0
  %480 = vmatpush2.xpose.msra.mxu0 0.0
  %481 = vmatprep.subr.mxu0 0.0
  %482 = vmatpush2.xpose.msra.mxu0 0.0
  %483 = vmatprep.subr.mxu0 0.0
  %484 = vmatpush2.xpose.msra.mxu0 0.0
  %485 = vmatprep.subr.mxu0 0.0
  %486 = vmatpush2.xpose.msra.mxu0 0.0
  %487 = vmatprep.subr.mxu0 0.0
  %488 = vmatpush2.xpose.msra.mxu0 0.0
  %489 = vmatprep.subr.mxu0 0.0
  %490 = vmatpush2.xpose.msra.mxu0 0.0
  %491 = vmatprep.mubr.f32.mxu0 %v31
  %492 = vmatmul.mubr.f32.gmra.mxu0 %v30
  %v493 = vpop.f32.mrf.mxu0
  %v494 = vadd.f32 0.0, %v493
  %v495 = vpop.f32.mrf.mxu0
  %496 = vmatprep.mubr.f32.mxu0 %v39
  %497 = vmatmul.mubr.f32.gmra.mxu0 %v38
  %v498 = vpop.f32.mrf.mxu0
  %v499 = vadd.f32 0.0, %v498
  %v500 = vpop.f32.mrf.mxu0
  %501 = vdwg.mxu0
  %502 = vmatprep.subr.mxu0 0.0
  %503 = vmatpush1.xpose.msra.mxu0 0.0
  %504 = vmatprep.subr.mxu0 0.0
  %505 = vmatpush1.xpose.msra.mxu0 0.0
  %506 = vmatprep.subr.mxu0 0.0
  %507 = vmatpush1.xpose.msra.mxu0 0.0
  %508 = vmatprep.subr.mxu0 0.0
  %509 = vmatpush1.xpose.msra.mxu0 0.0
  %510 = vmatprep.subr.mxu0 0.0
  %511 = vmatpush1.xpose.msra.mxu0 0.0
  %512 = vmatprep.subr.mxu0 0.0
  %513 = vmatpush1.xpose.msra.mxu0 0.0
  %514 = vmatprep.subr.mxu0 0.0
  %515 = vmatpush1.xpose.msra.mxu0 0.0
  %516 = vmatprep.subr.mxu0 0.0
  %517 = vmatpush1.xpose.msra.mxu0 0.0
  %518 = vmatprep.subr.mxu0 0.0
  %519 = vmatpush1.xpose.msra.mxu0 0.0
  %520 = vmatprep.subr.mxu0 0.0
  %521 = vmatpush1.xpose.msra.mxu0 0.0
  %522 = vmatprep.subr.mxu0 0.0
  %523 = vmatpush1.xpose.msra.mxu0 0.0
  %524 = vmatprep.subr.mxu0 0.0
  %525 = vmatpush1.xpose.msra.mxu0 0.0
  %526 = vmatprep.subr.mxu0 0.0
  %527 = vmatpush1.xpose.msra.mxu0 0.0
  %528 = vmatprep.subr.mxu0 0.0
  %529 = vmatpush1.xpose.msra.mxu0 0.0
  %530 = vmatprep.subr.mxu0 %v41
  %531 = vmatpush1.xpose.msra.mxu0 %v40
  %532 = vmatprep.subr.mxu0 %v33
  %533 = vmatpush1.xpose.msra.mxu0 %v32
  %534 = vmatprep.subr.mxu0 0.0
  %535 = vmatpush2.xpose.msra.mxu0 0.0
  %536 = vmatprep.subr.mxu0 0.0
  %537 = vmatpush2.xpose.msra.mxu0 0.0
  %538 = vmatprep.subr.mxu0 0.0
  %539 = vmatpush2.xpose.msra.mxu0 0.0
  %540 = vmatprep.subr.mxu0 0.0
  %541 = vmatpush2.xpose.msra.mxu0 0.0
  %542 = vmatprep.subr.mxu0 0.0
  %543 = vmatpush2.xpose.msra.mxu0 0.0
  %544 = vmatprep.subr.mxu0 0.0
  %545 = vmatpush2.xpose.msra.mxu0 0.0
  %546 = vmatprep.subr.mxu0 0.0
  %547 = vmatpush2.xpose.msra.mxu0 0.0
  %548 = vmatprep.subr.mxu0 0.0
  %549 = vmatpush2.xpose.msra.mxu0 0.0
  %550 = vmatprep.subr.mxu0 0.0
  %551 = vmatpush2.xpose.msra.mxu0 0.0
  %552 = vmatprep.subr.mxu0 0.0
  %553 = vmatpush2.xpose.msra.mxu0 0.0
  %554 = vmatprep.subr.mxu0 0.0
  %555 = vmatpush2.xpose.msra.mxu0 0.0
  %556 = vmatprep.subr.mxu0 0.0
  %557 = vmatpush2.xpose.msra.mxu0 0.0
  %558 = vmatprep.subr.mxu0 0.0
  %559 = vmatpush2.xpose.msra.mxu0 0.0
  %560 = vmatprep.subr.mxu0 0.0
  %561 = vmatpush2.xpose.msra.mxu0 0.0
  %562 = vmatprep.subr.mxu0 0.0
  %563 = vmatpush2.xpose.msra.mxu0 0.0
  %564 = vmatprep.subr.mxu0 0.0
  %565 = vmatpush2.xpose.msra.mxu0 0.0
  %566 = vmatprep.mubr.f32.mxu0 %v33
  %567 = vmatmul.mubr.f32.gmra.mxu0 %v32
  %v568 = vpop.f32.mrf.mxu0
  %v569 = vadd.f32 %v494, %v568
  %v570 = vpop.f32.mrf.mxu0
  %571 = vmatprep.mubr.f32.mxu0 %v41
  %572 = vmatmul.mubr.f32.gmra.mxu0 %v40
  %v573 = vpop.f32.mrf.mxu0
  %v574 = vadd.f32 %v499, %v573
  %v575 = vpop.f32.mrf.mxu0
  %576 = vdwg.mxu0
  %577 = vmatprep.subr.mxu0 0.0
  %578 = vmatpush1.xpose.msra.mxu0 0.0
  %579 = vmatprep.subr.mxu0 0.0
  %580 = vmatpush1.xpose.msra.mxu0 0.0
  %581 = vmatprep.subr.mxu0 0.0
  %582 = vmatpush1.xpose.msra.mxu0 0.0
  %583 = vmatprep.subr.mxu0 0.0
  %584 = vmatpush1.xpose.msra.mxu0 0.0
  %585 = vmatprep.subr.mxu0 0.0
  %586 = vmatpush1.xpose.msra.mxu0 0.0
  %587 = vmatprep.subr.mxu0 0.0
  %588 = vmatpush1.xpose.msra.mxu0 0.0
  %589 = vmatprep.subr.mxu0 0.0
  %590 = vmatpush1.xpose.msra.mxu0 0.0
  %591 = vmatprep.subr.mxu0 0.0
  %592 = vmatpush1.xpose.msra.mxu0 0.0
  %593 = vmatprep.subr.mxu0 0.0
  %594 = vmatpush1.xpose.msra.mxu0 0.0
  %595 = vmatprep.subr.mxu0 0.0
  %596 = vmatpush1.xpose.msra.mxu0 0.0
  %597 = vmatprep.subr.mxu0 0.0
  %598 = vmatpush1.xpose.msra.mxu0 0.0
  %599 = vmatprep.subr.mxu0 0.0
  %600 = vmatpush1.xpose.msra.mxu0 0.0
  %601 = vmatprep.subr.mxu0 0.0
  %602 = vmatpush1.xpose.msra.mxu0 0.0
  %603 = vmatprep.subr.mxu0 0.0
  %604 = vmatpush1.xpose.msra.mxu0 0.0
  %605 = vmatprep.subr.mxu0 %v43
  %606 = vmatpush1.xpose.msra.mxu0 %v42
  %607 = vmatprep.subr.mxu0 %v35
  %608 = vmatpush1.xpose.msra.mxu0 %v34
  %609 = vmatprep.subr.mxu0 0.0
  %610 = vmatpush2.xpose.msra.mxu0 0.0
  %611 = vmatprep.subr.mxu0 0.0
  %612 = vmatpush2.xpose.msra.mxu0 0.0
  %613 = vmatprep.subr.mxu0 0.0
  %614 = vmatpush2.xpose.msra.mxu0 0.0
  %615 = vmatprep.subr.mxu0 0.0
  %616 = vmatpush2.xpose.msra.mxu0 0.0
  %617 = vmatprep.subr.mxu0 0.0
  %618 = vmatpush2.xpose.msra.mxu0 0.0
  %619 = vmatprep.subr.mxu0 0.0
  %620 = vmatpush2.xpose.msra.mxu0 0.0
  %621 = vmatprep.subr.mxu0 0.0
  %622 = vmatpush2.xpose.msra.mxu0 0.0
  %623 = vmatprep.subr.mxu0 0.0
  %624 = vmatpush2.xpose.msra.mxu0 0.0
  %625 = vmatprep.subr.mxu0 0.0
  %626 = vmatpush2.xpose.msra.mxu0 0.0
  %627 = vmatprep.subr.mxu0 0.0
  %628 = vmatpush2.xpose.msra.mxu0 0.0
  %629 = vmatprep.subr.mxu0 0.0
  %630 = vmatpush2.xpose.msra.mxu0 0.0
  %631 = vmatprep.subr.mxu0 0.0
  %632 = vmatpush2.xpose.msra.mxu0 0.0
  %633 = vmatprep.subr.mxu0 0.0
  %634 = vmatpush2.xpose.msra.mxu0 0.0
  %635 = vmatprep.subr.mxu0 0.0
  %636 = vmatpush2.xpose.msra.mxu0 0.0
  %637 = vmatprep.subr.mxu0 0.0
  %638 = vmatpush2.xpose.msra.mxu0 0.0
  %639 = vmatprep.subr.mxu0 0.0
  %640 = vmatpush2.xpose.msra.mxu0 0.0
  %641 = vmatprep.mubr.f32.mxu0 %v35
  %642 = vmatmul.mubr.f32.gmra.mxu0 %v34
  %v643 = vpop.f32.mrf.mxu0
  %v644 = vadd.f32 %v569, %v643
  %v645 = vpop.f32.mrf.mxu0
  %646 = vmatprep.mubr.f32.mxu0 %v43
  %647 = vmatmul.mubr.f32.gmra.mxu0 %v42
  %v648 = vpop.f32.mrf.mxu0
  %v649 = vadd.f32 %v574, %v648
  %v650 = vpop.f32.mrf.mxu0
  %651 = vdwg.mxu0
  %652 = vmatprep.subr.mxu0 0.0
  %653 = vmatpush1.xpose.msra.mxu0 0.0
  %654 = vmatprep.subr.mxu0 0.0
  %655 = vmatpush1.xpose.msra.mxu0 0.0
  %656 = vmatprep.subr.mxu0 0.0
  %657 = vmatpush1.xpose.msra.mxu0 0.0
  %658 = vmatprep.subr.mxu0 0.0
  %659 = vmatpush1.xpose.msra.mxu0 0.0
  %660 = vmatprep.subr.mxu0 0.0
  %661 = vmatpush1.xpose.msra.mxu0 0.0
  %662 = vmatprep.subr.mxu0 0.0
  %663 = vmatpush1.xpose.msra.mxu0 0.0
  %664 = vmatprep.subr.mxu0 0.0
  %665 = vmatpush1.xpose.msra.mxu0 0.0
  %666 = vmatprep.subr.mxu0 0.0
  %667 = vmatpush1.xpose.msra.mxu0 0.0
  %668 = vmatprep.subr.mxu0 0.0
  %669 = vmatpush1.xpose.msra.mxu0 0.0
  %670 = vmatprep.subr.mxu0 0.0
  %671 = vmatpush1.xpose.msra.mxu0 0.0
  %672 = vmatprep.subr.mxu0 0.0
  %673 = vmatpush1.xpose.msra.mxu0 0.0
  %674 = vmatprep.subr.mxu0 0.0
  %675 = vmatpush1.xpose.msra.mxu0 0.0
  %676 = vmatprep.subr.mxu0 0.0
  %677 = vmatpush1.xpose.msra.mxu0 0.0
  %678 = vmatprep.subr.mxu0 0.0
  %679 = vmatpush1.xpose.msra.mxu0 0.0
  %680 = vmatprep.subr.mxu0 %v45
  %681 = vmatpush1.xpose.msra.mxu0 %v44
  %682 = vmatprep.subr.mxu0 %v37
  %683 = vmatpush1.xpose.msra.mxu0 %v36
  %684 = vmatprep.subr.mxu0 0.0
  %685 = vmatpush2.xpose.msra.mxu0 0.0
  %686 = vmatprep.subr.mxu0 0.0
  %687 = vmatpush2.xpose.msra.mxu0 0.0
  %688 = vmatprep.subr.mxu0 0.0
  %689 = vmatpush2.xpose.msra.mxu0 0.0
  %690 = vmatprep.subr.mxu0 0.0
  %691 = vmatpush2.xpose.msra.mxu0 0.0
  %692 = vmatprep.subr.mxu0 0.0
  %693 = vmatpush2.xpose.msra.mxu0 0.0
  %694 = vmatprep.subr.mxu0 0.0
  %695 = vmatpush2.xpose.msra.mxu0 0.0
  %696 = vmatprep.subr.mxu0 0.0
  %697 = vmatpush2.xpose.msra.mxu0 0.0
  %698 = vmatprep.subr.mxu0 0.0
  %699 = vmatpush2.xpose.msra.mxu0 0.0
  %700 = vmatprep.subr.mxu0 0.0
  %701 = vmatpush2.xpose.msra.mxu0 0.0
  %702 = vmatprep.subr.mxu0 0.0
  %703 = vmatpush2.xpose.msra.mxu0 0.0
  %704 = vmatprep.subr.mxu0 0.0
  %705 = vmatpush2.xpose.msra.mxu0 0.0
  %706 = vmatprep.subr.mxu0 0.0
  %707 = vmatpush2.xpose.msra.mxu0 0.0
  %708 = vmatprep.subr.mxu0 0.0
  %709 = vmatpush2.xpose.msra.mxu0 0.0
  %710 = vmatprep.subr.mxu0 0.0
  %711 = vmatpush2.xpose.msra.mxu0 0.0
  %712 = vmatprep.subr.mxu0 0.0
  %713 = vmatpush2.xpose.msra.mxu0 0.0
  %714 = vmatprep.subr.mxu0 0.0
  %715 = vmatpush2.xpose.msra.mxu0 0.0
  %716 = vmatprep.mubr.f32.mxu0 %v37
  %717 = vmatmul.mubr.f32.gmra.mxu0 %v36
  %v718 = vpop.f32.mrf.mxu0
  %v719 = vadd.f32 %v644, %v718
  %v720 = vpop.f32.mrf.mxu0
  %721 = vmatprep.mubr.f32.mxu0 %v45
  %722 = vmatmul.mubr.f32.gmra.mxu0 %v44
  %v723 = vpop.f32.mrf.mxu0
  %v724 = vadd.f32 %v649, %v723
  %v725 = vpop.f32.mrf.mxu0
  %726 = vdwg.mxu0
  %727 = vxpose.xlu0.b32.start [1/16] %v72, 128
  %728 = vxpose.xlu0.b32.cont [2/16] %v81, 128
  %729 = vxpose.xlu0.b32.cont [3/16] 0.0, 128
  %730 = vxpose.xlu0.b32.cont [4/16] 0.0, 128
  %731 = vxpose.xlu0.b32.cont [5/16] 0.0, 128
  %732 = vxpose.xlu0.b32.cont [6/16] 0.0, 128
  %733 = vxpose.xlu0.b32.cont [7/16] 0.0, 128
  %734 = vxpose.xlu0.b32.cont [8/16] 0.0, 128
  %735 = vxpose.xlu0.b32.cont [9/16] 0.0, 128
  %736 = vxpose.xlu0.b32.cont [10/16] 0.0, 128
  %737 = vxpose.xlu0.b32.cont [11/16] 0.0, 128
  %738 = vxpose.xlu0.b32.cont [12/16] 0.0, 128
  %739 = vxpose.xlu0.b32.cont [13/16] 0.0, 128
  %740 = vxpose.xlu0.b32.cont [14/16] 0.0, 128
  %741 = vxpose.xlu0.b32.cont [15/16] 0.0, 128
  %742 = vxpose.xlu0.b32.end [16/16] 0.0, 128
  %v743 = vpop.trf.xlu0
  %v744 = vpop.trf.xlu0
  %v745 = vpop.trf.xlu0
  %v746 = vpop.trf.xlu0
  %v747 = vpop.trf.xlu0
  %v748 = vpop.trf.xlu0
  %v749 = vpop.trf.xlu0
  %v750 = vpop.trf.xlu0
  %v751 = vpop.trf.xlu0
  %v752 = vpop.trf.xlu0
  %v753 = vpop.trf.xlu0
  %v754 = vpop.trf.xlu0
  %v755 = vpop.trf.xlu0
  %v756 = vpop.trf.xlu0
  %v757 = vpop.trf.xlu0
  %v758 = vpop.trf.xlu0
  %v759 = vlaneseq
  %v760 = vshrl.u32 %v759, 7
  %v761 = vsub.s32 0, %v760
  %v762 = vrot.slane %v743, %v761
  %v763 = vmul.f32 %v72, %v762
  %v764 = vmul.f32 %v81, %v762
  %v765 = vmul.f32 %v763, 0.0009765625
  %v766 = vmul.f32 %v764, 0.0009765625
  %v767 = vsub.f32 %v719, %v765
  %v768 = vsub.f32 %v724, %v766
  %769 = vst.msk [vmem:[%s3] sm:$0xff] %vm424, %v767
  %770 = vst.msk [vmem:[%s3 + $0x8] sm:$0xff] %vm424, %v768
  %771 = vmatprep.subr.mxu0 0.0
  %772 = vmatpush1.xpose.msra.mxu0 0.0
  %773 = vmatprep.subr.mxu0 0.0
  %774 = vmatpush1.xpose.msra.mxu0 0.0
  %775 = vmatprep.subr.mxu0 0.0
  %776 = vmatpush1.xpose.msra.mxu0 0.0
  %777 = vmatprep.subr.mxu0 0.0
  %778 = vmatpush1.xpose.msra.mxu0 0.0
  %779 = vmatprep.subr.mxu0 0.0
  %780 = vmatpush1.xpose.msra.mxu0 0.0
  %781 = vmatprep.subr.mxu0 0.0
  %782 = vmatpush1.xpose.msra.mxu0 0.0
  %783 = vmatprep.subr.mxu0 0.0
  %784 = vmatpush1.xpose.msra.mxu0 0.0
  %785 = vmatprep.subr.mxu0 0.0
  %786 = vmatpush1.xpose.msra.mxu0 0.0
  %787 = vmatprep.subr.mxu0 0.0
  %788 = vmatpush1.xpose.msra.mxu0 0.0
  %789 = vmatprep.subr.mxu0 0.0
  %790 = vmatpush1.xpose.msra.mxu0 0.0
  %791 = vmatprep.subr.mxu0 0.0
  %792 = vmatpush1.xpose.msra.mxu0 0.0
  %793 = vmatprep.subr.mxu0 0.0
  %794 = vmatpush1.xpose.msra.mxu0 0.0
  %795 = vmatprep.subr.mxu0 0.0
  %796 = vmatpush1.xpose.msra.mxu0 0.0
  %797 = vmatprep.subr.mxu0 0.0
  %798 = vmatpush1.xpose.msra.mxu0 0.0
  %799 = vmatprep.subr.mxu0 %v39
  %800 = vmatpush1.xpose.msra.mxu0 %v38
  %801 = vmatprep.subr.mxu0 %v31
  %802 = vmatpush1.xpose.msra.mxu0 %v30
  %803 = vmatprep.subr.mxu0 0.0
  %804 = vmatpush2.xpose.msra.mxu0 0.0
  %805 = vmatprep.subr.mxu0 0.0
  %806 = vmatpush2.xpose.msra.mxu0 0.0
  %807 = vmatprep.subr.mxu0 0.0
  %808 = vmatpush2.xpose.msra.mxu0 0.0
  %809 = vmatprep.subr.mxu0 0.0
  %810 = vmatpush2.xpose.msra.mxu0 0.0
  %811 = vmatprep.subr.mxu0 0.0
  %812 = vmatpush2.xpose.msra.mxu0 0.0
  %813 = vmatprep.subr.mxu0 0.0
  %814 = vmatpush2.xpose.msra.mxu0 0.0
  %815 = vmatprep.subr.mxu0 0.0
  %816 = vmatpush2.xpose.msra.mxu0 0.0
  %817 = vmatprep.subr.mxu0 0.0
  %818 = vmatpush2.xpose.msra.mxu0 0.0
  %819 = vmatprep.subr.mxu0 0.0
  %820 = vmatpush2.xpose.msra.mxu0 0.0
  %821 = vmatprep.subr.mxu0 0.0
  %822 = vmatpush2.xpose.msra.mxu0 0.0
  %823 = vmatprep.subr.mxu0 0.0
  %824 = vmatpush2.xpose.msra.mxu0 0.0
  %825 = vmatprep.subr.mxu0 0.0
  %826 = vmatpush2.xpose.msra.mxu0 0.0
  %827 = vmatprep.subr.mxu0 0.0
  %828 = vmatpush2.xpose.msra.mxu0 0.0
  %829 = vmatprep.subr.mxu0 0.0
  %830 = vmatpush2.xpose.msra.mxu0 0.0
  %831 = vmatprep.subr.mxu0 0.0
  %832 = vmatpush2.xpose.msra.mxu0 0.0
  %833 = vmatprep.subr.mxu0 0.0
  %834 = vmatpush2.xpose.msra.mxu0 0.0
  %835 = vmatprep.mubr.f32.mxu0 %v15
  %836 = vmatmul.mubr.f32.gmra.mxu0 %v14
  %v837 = vpop.f32.mrf.mxu0
  %v838 = vadd.f32 0.0, %v837
  %v839 = vpop.f32.mrf.mxu0
  %840 = vmatprep.mubr.f32.mxu0 %v23
  %841 = vmatmul.mubr.f32.gmra.mxu0 %v22
  %v842 = vpop.f32.mrf.mxu0
  %v843 = vadd.f32 0.0, %v842
  %v844 = vpop.f32.mrf.mxu0
  %845 = vdwg.mxu0
  %846 = vmatprep.subr.mxu0 0.0
  %847 = vmatpush1.xpose.msra.mxu0 0.0
  %848 = vmatprep.subr.mxu0 0.0
  %849 = vmatpush1.xpose.msra.mxu0 0.0
  %850 = vmatprep.subr.mxu0 0.0
  %851 = vmatpush1.xpose.msra.mxu0 0.0
  %852 = vmatprep.subr.mxu0 0.0
  %853 = vmatpush1.xpose.msra.mxu0 0.0
  %854 = vmatprep.subr.mxu0 0.0
  %855 = vmatpush1.xpose.msra.mxu0 0.0
  %856 = vmatprep.subr.mxu0 0.0
  %857 = vmatpush1.xpose.msra.mxu0 0.0
  %858 = vmatprep.subr.mxu0 0.0
  %859 = vmatpush1.xpose.msra.mxu0 0.0
  %860 = vmatprep.subr.mxu0 0.0
  %861 = vmatpush1.xpose.msra.mxu0 0.0
  %862 = vmatprep.subr.mxu0 0.0
  %863 = vmatpush1.xpose.msra.mxu0 0.0
  %864 = vmatprep.subr.mxu0 0.0
  %865 = vmatpush1.xpose.msra.mxu0 0.0
  %866 = vmatprep.subr.mxu0 0.0
  %867 = vmatpush1.xpose.msra.mxu0 0.0
  %868 = vmatprep.subr.mxu0 0.0
  %869 = vmatpush1.xpose.msra.mxu0 0.0
  %870 = vmatprep.subr.mxu0 0.0
  %871 = vmatpush1.xpose.msra.mxu0 0.0
  %872 = vmatprep.subr.mxu0 0.0
  %873 = vmatpush1.xpose.msra.mxu0 0.0
  %874 = vmatprep.subr.mxu0 %v41
  %875 = vmatpush1.xpose.msra.mxu0 %v40
  %876 = vmatprep.subr.mxu0 %v33
  %877 = vmatpush1.xpose.msra.mxu0 %v32
  %878 = vmatprep.subr.mxu0 0.0
  %879 = vmatpush2.xpose.msra.mxu0 0.0
  %880 = vmatprep.subr.mxu0 0.0
  %881 = vmatpush2.xpose.msra.mxu0 0.0
  %882 = vmatprep.subr.mxu0 0.0
  %883 = vmatpush2.xpose.msra.mxu0 0.0
  %884 = vmatprep.subr.mxu0 0.0
  %885 = vmatpush2.xpose.msra.mxu0 0.0
  %886 = vmatprep.subr.mxu0 0.0
  %887 = vmatpush2.xpose.msra.mxu0 0.0
  %888 = vmatprep.subr.mxu0 0.0
  %889 = vmatpush2.xpose.msra.mxu0 0.0
  %890 = vmatprep.subr.mxu0 0.0
  %891 = vmatpush2.xpose.msra.mxu0 0.0
  %892 = vmatprep.subr.mxu0 0.0
  %893 = vmatpush2.xpose.msra.mxu0 0.0
  %894 = vmatprep.subr.mxu0 0.0
  %895 = vmatpush2.xpose.msra.mxu0 0.0
  %896 = vmatprep.subr.mxu0 0.0
  %897 = vmatpush2.xpose.msra.mxu0 0.0
  %898 = vmatprep.subr.mxu0 0.0
  %899 = vmatpush2.xpose.msra.mxu0 0.0
  %900 = vmatprep.subr.mxu0 0.0
  %901 = vmatpush2.xpose.msra.mxu0 0.0
  %902 = vmatprep.subr.mxu0 0.0
  %903 = vmatpush2.xpose.msra.mxu0 0.0
  %904 = vmatprep.subr.mxu0 0.0
  %905 = vmatpush2.xpose.msra.mxu0 0.0
  %906 = vmatprep.subr.mxu0 0.0
  %907 = vmatpush2.xpose.msra.mxu0 0.0
  %908 = vmatprep.subr.mxu0 0.0
  %909 = vmatpush2.xpose.msra.mxu0 0.0
  %910 = vmatprep.mubr.f32.mxu0 %v17
  %911 = vmatmul.mubr.f32.gmra.mxu0 %v16
  %v912 = vpop.f32.mrf.mxu0
  %v913 = vadd.f32 %v838, %v912
  %v914 = vpop.f32.mrf.mxu0
  %915 = vmatprep.mubr.f32.mxu0 %v25
  %916 = vmatmul.mubr.f32.gmra.mxu0 %v24
  %v917 = vpop.f32.mrf.mxu0
  %v918 = vadd.f32 %v843, %v917
  %v919 = vpop.f32.mrf.mxu0
  %920 = vdwg.mxu0
  %921 = vmatprep.subr.mxu0 0.0
  %922 = vmatpush1.xpose.msra.mxu0 0.0
  %923 = vmatprep.subr.mxu0 0.0
  %924 = vmatpush1.xpose.msra.mxu0 0.0
  %925 = vmatprep.subr.mxu0 0.0
  %926 = vmatpush1.xpose.msra.mxu0 0.0
  %927 = vmatprep.subr.mxu0 0.0
  %928 = vmatpush1.xpose.msra.mxu0 0.0
  %929 = vmatprep.subr.mxu0 0.0
  %930 = vmatpush1.xpose.msra.mxu0 0.0
  %931 = vmatprep.subr.mxu0 0.0
  %932 = vmatpush1.xpose.msra.mxu0 0.0
  %933 = vmatprep.subr.mxu0 0.0
  %934 = vmatpush1.xpose.msra.mxu0 0.0
  %935 = vmatprep.subr.mxu0 0.0
  %936 = vmatpush1.xpose.msra.mxu0 0.0
  %937 = vmatprep.subr.mxu0 0.0
  %938 = vmatpush1.xpose.msra.mxu0 0.0
  %939 = vmatprep.subr.mxu0 0.0
  %940 = vmatpush1.xpose.msra.mxu0 0.0
  %941 = vmatprep.subr.mxu0 0.0
  %942 = vmatpush1.xpose.msra.mxu0 0.0
  %943 = vmatprep.subr.mxu0 0.0
  %944 = vmatpush1.xpose.msra.mxu0 0.0
  %945 = vmatprep.subr.mxu0 0.0
  %946 = vmatpush1.xpose.msra.mxu0 0.0
  %947 = vmatprep.subr.mxu0 0.0
  %948 = vmatpush1.xpose.msra.mxu0 0.0
  %949 = vmatprep.subr.mxu0 %v43
  %950 = vmatpush1.xpose.msra.mxu0 %v42
  %951 = vmatprep.subr.mxu0 %v35
  %952 = vmatpush1.xpose.msra.mxu0 %v34
  %953 = vmatprep.subr.mxu0 0.0
  %954 = vmatpush2.xpose.msra.mxu0 0.0
  %955 = vmatprep.subr.mxu0 0.0
  %956 = vmatpush2.xpose.msra.mxu0 0.0
  %957 = vmatprep.subr.mxu0 0.0
  %958 = vmatpush2.xpose.msra.mxu0 0.0
  %959 = vmatprep.subr.mxu0 0.0
  %960 = vmatpush2.xpose.msra.mxu0 0.0
  %961 = vmatprep.subr.mxu0 0.0
  %962 = vmatpush2.xpose.msra.mxu0 0.0
  %963 = vmatprep.subr.mxu0 0.0
  %964 = vmatpush2.xpose.msra.mxu0 0.0
  %965 = vmatprep.subr.mxu0 0.0
  %966 = vmatpush2.xpose.msra.mxu0 0.0
  %967 = vmatprep.subr.mxu0 0.0
  %968 = vmatpush2.xpose.msra.mxu0 0.0
  %969 = vmatprep.subr.mxu0 0.0
  %970 = vmatpush2.xpose.msra.mxu0 0.0
  %971 = vmatprep.subr.mxu0 0.0
  %972 = vmatpush2.xpose.msra.mxu0 0.0
  %973 = vmatprep.subr.mxu0 0.0
  %974 = vmatpush2.xpose.msra.mxu0 0.0
  %975 = vmatprep.subr.mxu0 0.0
  %976 = vmatpush2.xpose.msra.mxu0 0.0
  %977 = vmatprep.subr.mxu0 0.0
  %978 = vmatpush2.xpose.msra.mxu0 0.0
  %979 = vmatprep.subr.mxu0 0.0
  %980 = vmatpush2.xpose.msra.mxu0 0.0
  %981 = vmatprep.subr.mxu0 0.0
  %982 = vmatpush2.xpose.msra.mxu0 0.0
  %983 = vmatprep.subr.mxu0 0.0
  %984 = vmatpush2.xpose.msra.mxu0 0.0
  %985 = vmatprep.mubr.f32.mxu0 %v19
  %986 = vmatmul.mubr.f32.gmra.mxu0 %v18
  %v987 = vpop.f32.mrf.mxu0
  %v988 = vadd.f32 %v913, %v987
  %v989 = vpop.f32.mrf.mxu0
  %990 = vmatprep.mubr.f32.mxu0 %v27
  %991 = vmatmul.mubr.f32.gmra.mxu0 %v26
  %v992 = vpop.f32.mrf.mxu0
  %v993 = vadd.f32 %v918, %v992
  %v994 = vpop.f32.mrf.mxu0
  %995 = vdwg.mxu0
  %996 = vmatprep.subr.mxu0 0.0
  %997 = vmatpush1.xpose.msra.mxu0 0.0
  %998 = vmatprep.subr.mxu0 0.0
  %999 = vmatpush1.xpose.msra.mxu0 0.0
  %1000 = vmatprep.subr.mxu0 0.0
  %1001 = vmatpush1.xpose.msra.mxu0 0.0
  %1002 = vmatprep.subr.mxu0 0.0
  %1003 = vmatpush1.xpose.msra.mxu0 0.0
  %1004 = vmatprep.subr.mxu0 0.0
  %1005 = vmatpush1.xpose.msra.mxu0 0.0
  %1006 = vmatprep.subr.mxu0 0.0
  %1007 = vmatpush1.xpose.msra.mxu0 0.0
  %1008 = vmatprep.subr.mxu0 0.0
  %1009 = vmatpush1.xpose.msra.mxu0 0.0
  %1010 = vmatprep.subr.mxu0 0.0
  %1011 = vmatpush1.xpose.msra.mxu0 0.0
  %1012 = vmatprep.subr.mxu0 0.0
  %1013 = vmatpush1.xpose.msra.mxu0 0.0
  %1014 = vmatprep.subr.mxu0 0.0
  %1015 = vmatpush1.xpose.msra.mxu0 0.0
  %1016 = vmatprep.subr.mxu0 0.0
  %1017 = vmatpush1.xpose.msra.mxu0 0.0
  %1018 = vmatprep.subr.mxu0 0.0
  %1019 = vmatpush1.xpose.msra.mxu0 0.0
  %1020 = vmatprep.subr.mxu0 0.0
  %1021 = vmatpush1.xpose.msra.mxu0 0.0
  %1022 = vmatprep.subr.mxu0 0.0
  %1023 = vmatpush1.xpose.msra.mxu0 0.0
  %1024 = vmatprep.subr.mxu0 %v45
  %1025 = vmatpush1.xpose.msra.mxu0 %v44
  %1026 = vmatprep.subr.mxu0 %v37
  %1027 = vmatpush1.xpose.msra.mxu0 %v36
  %1028 = vmatprep.subr.mxu0 0.0
  %1029 = vmatpush2.xpose.msra.mxu0 0.0
  %1030 = vmatprep.subr.mxu0 0.0
  %1031 = vmatpush2.xpose.msra.mxu0 0.0
  %1032 = vmatprep.subr.mxu0 0.0
  %1033 = vmatpush2.xpose.msra.mxu0 0.0
  %1034 = vmatprep.subr.mxu0 0.0
  %1035 = vmatpush2.xpose.msra.mxu0 0.0
  %1036 = vmatprep.subr.mxu0 0.0
  %1037 = vmatpush2.xpose.msra.mxu0 0.0
  %1038 = vmatprep.subr.mxu0 0.0
  %1039 = vmatpush2.xpose.msra.mxu0 0.0
  %1040 = vmatprep.subr.mxu0 0.0
  %1041 = vmatpush2.xpose.msra.mxu0 0.0
  %1042 = vmatprep.subr.mxu0 0.0
  %1043 = vmatpush2.xpose.msra.mxu0 0.0
  %1044 = vmatprep.subr.mxu0 0.0
  %1045 = vmatpush2.xpose.msra.mxu0 0.0
  %1046 = vmatprep.subr.mxu0 0.0
  %1047 = vmatpush2.xpose.msra.mxu0 0.0
  %1048 = vmatprep.subr.mxu0 0.0
  %1049 = vmatpush2.xpose.msra.mxu0 0.0
  %1050 = vmatprep.subr.mxu0 0.0
  %1051 = vmatpush2.xpose.msra.mxu0 0.0
  %1052 = vmatprep.subr.mxu0 0.0
  %1053 = vmatpush2.xpose.msra.mxu0 0.0
  %1054 = vmatprep.subr.mxu0 0.0
  %1055 = vmatpush2.xpose.msra.mxu0 0.0
  %1056 = vmatprep.subr.mxu0 0.0
  %1057 = vmatpush2.xpose.msra.mxu0 0.0
  %1058 = vmatprep.subr.mxu0 0.0
  %1059 = vmatpush2.xpose.msra.mxu0 0.0
  %1060 = vmatprep.mubr.f32.mxu0 %v21
  %1061 = vmatmul.mubr.f32.gmra.mxu0 %v20
  %v1062 = vpop.f32.mrf.mxu0
  %v1063 = vadd.f32 %v988, %v1062
  %v1064 = vpop.f32.mrf.mxu0
  %1065 = vmatprep.mubr.f32.mxu0 %v29
  %1066 = vmatmul.mubr.f32.gmra.mxu0 %v28
  %v1067 = vpop.f32.mrf.mxu0
  %v1068 = vadd.f32 %v993, %v1067
  %v1069 = vpop.f32.mrf.mxu0
  %1070 = vdwg.mxu0
  %v1071 = vmul.f32 %v54, %v762
  %v1072 = vmul.f32 %v63, %v762
  %v1073 = vmul.f32 %v1071, 0.0009765625
  %v1074 = vmul.f32 %v1072, 0.0009765625
  %v1075 = vsub.f32 %v1063, %v1073
  %v1076 = vsub.f32 %v1068, %v1074
  %1077 = vst.msk [vmem:[%s4] sm:$0xff] %vm424, %v1075
  %1078 = vst.msk [vmem:[%s4 + $0x8] sm:$0xff] %vm424, %v1076
  // Predicated region
  $region10: #{loss_fn.7} parent=0 // pred_check
    _
  $region11: #{loss_fn.7} parent=0 // pred_check_branch
    %1080 = sbr.rel (0) target = $region13
  $region12: #{loss_fn.7} parent=0 // pred_region
    _
  $region13: #{loss_fn.7} parent=0 // pred_fallthru
    _
  // Predicated region
  $region14: #{loss_fn.7} parent=0 // pred_check
    _
  $region15: #{loss_fn.7} parent=0 // pred_check_branch
    %1082 = sbr.rel (0) target = $region17
  $region16: #{loss_fn.7} parent=0 // pred_region
    _
  $region17: #{loss_fn.7} parent=0 // pred_fallthru
    _
  // Predicated region
  $region18: #{loss_fn.7} parent=0 // pred_check
    _
  $region19: #{loss_fn.7} parent=0 // pred_check_branch
    %1084 = sbr.rel (0) target = $region21
  $region20: #{loss_fn.7} parent=0 // pred_region
    _
  $region21: #{loss_fn.7} parent=0 // pred_fallthru
    _
  // Predicated region
  $region22: #{loss_fn.7} parent=0 // pred_check
    _
  $region23: #{loss_fn.7} parent=0 // pred_check_branch
    %1086 = sbr.rel (0) target = $region25
  $region24: #{loss_fn.7} parent=0 // pred_region
    _
  $region25: #{loss_fn.7} parent=0 // pred_fallthru
    _
  // Predicated region
  $region26: #{loss_fn.7} parent=0 // pred_check
    _
  $region27: #{loss_fn.7} parent=0 // pred_check_branch
    %1088 = sbr.rel (0) target = $region29
  $region28: #{loss_fn.7} parent=0 // pred_region
    _
  $region29: #{loss_fn.7} parent=0 // pred_fallthru
    _
  // Predicated region
  $region30: #{loss_fn.7} parent=0 // pred_check
    _
  $region31: #{loss_fn.7} parent=0 // pred_check_branch
    %1090 = sbr.rel (0) target = $region33
  $region32: #{loss_fn.7} parent=0 // pred_region
    _
  $region33: #{loss_fn.7} parent=0 // pred_fallthru
    _

// kernel: loss_fn.8
$region0: #{loss_fn.8}
  #allocation0 [shape = 'u32[]', space=smem, size = 0x4, offset = 0x4, fixed_abs, tag = 'smem constant byte address 0x4 - core index']
  #allocation1 [shape = 'u32[144,128]{1,0:T(1,128)}', space=vmem, size = 0x12000, scoped, tag = 'internal scratch']
  %s0 = inlined_call_operand.vmem [shape: f32[16,256], index: 0, kind: input, shape index: {}]
  %s1 = inlined_call_operand.vmem [shape: f32[16,256], index: 1, kind: input, shape index: {}]
  %s2 = inlined_call_operand.vmem [shape: f32[1,16,16], index: 2, kind: output, shape index: {0}]
  %s3 = inlined_call_operand.vmem [shape: f32[1,16,16], index: 3, kind: output, shape index: {1}]
  %s4 = inlined_call_operand.vmem [shape: f32[1,16,16], index: 4, kind: output, shape index: {2}]
  %5 = xla_tuple %s2, %s3, %s4
  %s6 = sld [smem:[#allocation0]]
  $region34: #{loss_fn.8} parent=0
    _
  %s8 = ssub.s32 1, %s6
  %s9 = scalar_select 0, %s8, %s6
  // Predicated region
  $region2: #{loss_fn.8} parent=0 // pred_check
    _
  $region3: #{loss_fn.8} parent=0 // pred_check_branch
    %11 = sbr.rel (0) target = $region5
  $region4: #{loss_fn.8} parent=0 // pred_region
    _
  $region5: #{loss_fn.8} parent=0 // pred_fallthru
    _
  // Predicated region
  $region6: #{loss_fn.8} parent=0 // pred_check
    _
  $region7: #{loss_fn.8} parent=0 // pred_check_branch
    %13 = sbr.rel (0) target = $region9
  $region8: #{loss_fn.8} parent=0 // pred_region
    _
  $region9: #{loss_fn.8} parent=0 // pred_fallthru
    _
  %v14 = vld [vmem:[%s0] sm:$0xff]
  %v15 = vld [vmem:[%s0 + $0x8] sm:$0xff]
  %v16 = vld [vmem:[%s0 + $0x10] sm:$0xff]
  %v17 = vld [vmem:[%s0 + $0x18] sm:$0xff]
  %v18 = vld [vmem:[%s1] sm:$0xff]
  %v19 = vld [vmem:[%s1 + $0x8] sm:$0xff]
  %v20 = vld [vmem:[%s1 + $0x10] sm:$0xff]
  %v21 = vld [vmem:[%s1 + $0x18] sm:$0xff]
  %v22 = vadd.f32 %v14, %v15
  %23 = vadd.xlane.f32.xlu0 %v22
  %v24 = vpop.xlane.xlu0 %23
  %v25 = vadd.f32 %v16, %v17
  %26 = vadd.xlane.f32.xlu0 %v25
  %v27 = vpop.xlane.xlu0 %26
  %v28 = vadd.f32 %v18, %v19
  %29 = vadd.xlane.f32.xlu0 %v28
  %v30 = vpop.xlane.xlu0 %29
  %v31 = vadd.f32 %v20, %v21
  %32 = vadd.xlane.f32.xlu0 %v31
  %v33 = vpop.xlane.xlu0 %32
  %34 = vmatprep.subr.mxu0 0.0
  %35 = vmatpush1.xpose.msra.mxu0 0.0
  %36 = vmatprep.subr.mxu0 0.0
  %37 = vmatpush1.xpose.msra.mxu0 0.0
  %38 = vmatprep.subr.mxu0 0.0
  %39 = vmatpush1.xpose.msra.mxu0 0.0
  %40 = vmatprep.subr.mxu0 0.0
  %41 = vmatpush1.xpose.msra.mxu0 0.0
  %42 = vmatprep.subr.mxu0 0.0
  %43 = vmatpush1.xpose.msra.mxu0 0.0
  %44 = vmatprep.subr.mxu0 0.0
  %45 = vmatpush1.xpose.msra.mxu0 0.0
  %46 = vmatprep.subr.mxu0 0.0
  %47 = vmatpush1.xpose.msra.mxu0 0.0
  %48 = vmatprep.subr.mxu0 0.0
  %49 = vmatpush1.xpose.msra.mxu0 0.0
  %50 = vmatprep.subr.mxu0 0.0
  %51 = vmatpush1.xpose.msra.mxu0 0.0
  %52 = vmatprep.subr.mxu0 0.0
  %53 = vmatpush1.xpose.msra.mxu0 0.0
  %54 = vmatprep.subr.mxu0 0.0
  %55 = vmatpush1.xpose.msra.mxu0 0.0
  %56 = vmatprep.subr.mxu0 0.0
  %57 = vmatpush1.xpose.msra.mxu0 0.0
  %58 = vmatprep.subr.mxu0 0.0
  %59 = vmatpush1.xpose.msra.mxu0 0.0
  %60 = vmatprep.subr.mxu0 0.0
  %61 = vmatpush1.xpose.msra.mxu0 0.0
  %62 = vmatprep.subr.mxu0 %v17
  %63 = vmatpush1.xpose.msra.mxu0 %v16
  %64 = vmatprep.subr.mxu0 %v15
  %65 = vmatpush1.xpose.msra.mxu0 %v14
  %66 = vmatprep.subr.mxu0 0.0
  %67 = vmatpush2.xpose.msra.mxu0 0.0
  %68 = vmatprep.subr.mxu0 0.0
  %69 = vmatpush2.xpose.msra.mxu0 0.0
  %70 = vmatprep.subr.mxu0 0.0
  %71 = vmatpush2.xpose.msra.mxu0 0.0
  %72 = vmatprep.subr.mxu0 0.0
  %73 = vmatpush2.xpose.msra.mxu0 0.0
  %74 = vmatprep.subr.mxu0 0.0
  %75 = vmatpush2.xpose.msra.mxu0 0.0
  %76 = vmatprep.subr.mxu0 0.0
  %77 = vmatpush2.xpose.msra.mxu0 0.0
  %78 = vmatprep.subr.mxu0 0.0
  %79 = vmatpush2.xpose.msra.mxu0 0.0
  %80 = vmatprep.subr.mxu0 0.0
  %81 = vmatpush2.xpose.msra.mxu0 0.0
  %82 = vmatprep.subr.mxu0 0.0
  %83 = vmatpush2.xpose.msra.mxu0 0.0
  %84 = vmatprep.subr.mxu0 0.0
  %85 = vmatpush2.xpose.msra.mxu0 0.0
  %86 = vmatprep.subr.mxu0 0.0
  %87 = vmatpush2.xpose.msra.mxu0 0.0
  %88 = vmatprep.subr.mxu0 0.0
  %89 = vmatpush2.xpose.msra.mxu0 0.0
  %90 = vmatprep.subr.mxu0 0.0
  %91 = vmatpush2.xpose.msra.mxu0 0.0
  %92 = vmatprep.subr.mxu0 0.0
  %93 = vmatpush2.xpose.msra.mxu0 0.0
  %94 = vmatprep.subr.mxu0 0.0
  %95 = vmatpush2.xpose.msra.mxu0 0.0
  %96 = vmatprep.subr.mxu0 0.0
  %97 = vmatpush2.xpose.msra.mxu0 0.0
  %98 = vmatprep.mubr.f32.mxu0 %v15
  %99 = vmatmul.mubr.f32.gmra.mxu0 %v14
  %v100 = vpop.f32.mrf.mxu0
  %v101 = vadd.f32 0.0, %v100
  %v102 = vpop.f32.mrf.mxu0
  %103 = vmatprep.mubr.f32.mxu0 %v17
  %104 = vmatmul.mubr.f32.gmra.mxu0 %v16
  %v105 = vpop.f32.mrf.mxu0
  %v106 = vadd.f32 0.0, %v105
  %v107 = vpop.f32.mrf.mxu0
  %108 = vdwg.mxu0
  %109 = vxpose.xlu0.b32.start [1/16] %v24, 128
  %110 = vxpose.xlu0.b32.cont [2/16] %v27, 128
  %111 = vxpose.xlu0.b32.cont [3/16] 0.0, 128
  %112 = vxpose.xlu0.b32.cont [4/16] 0.0, 128
  %113 = vxpose.xlu0.b32.cont [5/16] 0.0, 128
  %114 = vxpose.xlu0.b32.cont [6/16] 0.0, 128
  %115 = vxpose.xlu0.b32.cont [7/16] 0.0, 128
  %116 = vxpose.xlu0.b32.cont [8/16] 0.0, 128
  %117 = vxpose.xlu0.b32.cont [9/16] 0.0, 128
  %118 = vxpose.xlu0.b32.cont [10/16] 0.0, 128
  %119 = vxpose.xlu0.b32.cont [11/16] 0.0, 128
  %120 = vxpose.xlu0.b32.cont [12/16] 0.0, 128
  %121 = vxpose.xlu0.b32.cont [13/16] 0.0, 128
  %122 = vxpose.xlu0.b32.cont [14/16] 0.0, 128
  %123 = vxpose.xlu0.b32.cont [15/16] 0.0, 128
  %124 = vxpose.xlu0.b32.end [16/16] 0.0, 128
  %v125 = vpop.trf.xlu0
  %v126 = vpop.trf.xlu0
  %v127 = vpop.trf.xlu0
  %v128 = vpop.trf.xlu0
  %v129 = vpop.trf.xlu0
  %v130 = vpop.trf.xlu0
  %v131 = vpop.trf.xlu0
  %v132 = vpop.trf.xlu0
  %v133 = vpop.trf.xlu0
  %v134 = vpop.trf.xlu0
  %v135 = vpop.trf.xlu0
  %v136 = vpop.trf.xlu0
  %v137 = vpop.trf.xlu0
  %v138 = vpop.trf.xlu0
  %v139 = vpop.trf.xlu0
  %v140 = vpop.trf.xlu0
  %v141 = vlaneseq
  %v142 = vshrl.u32 %v141, 7
  %v143 = vsub.s32 0, %v142
  %v144 = vrot.slane %v125, %v143
  %v145 = vmul.f32 %v24, %v144
  %v146 = vmul.f32 %v27, %v144
  %v147 = vmul.f32 %v145, 0.00390625
  %v148 = vmul.f32 %v146, 0.00390625
  %v149 = vsub.f32 %v101, %v147
  %v150 = vsub.f32 %v106, %v148
  %vm151 = vcmask 130048
  %152 = vst.msk [vmem:[%s2] sm:$0xff] %vm151, %v149
  %153 = vst.msk [vmem:[%s2 + $0x8] sm:$0xff] %vm151, %v150
  %154 = vmatprep.subr.mxu0 0.0
  %155 = vmatpush1.xpose.msra.mxu0 0.0
  %156 = vmatprep.subr.mxu0 0.0
  %157 = vmatpush1.xpose.msra.mxu0 0.0
  %158 = vmatprep.subr.mxu0 0.0
  %159 = vmatpush1.xpose.msra.mxu0 0.0
  %160 = vmatprep.subr.mxu0 0.0
  %161 = vmatpush1.xpose.msra.mxu0 0.0
  %162 = vmatprep.subr.mxu0 0.0
  %163 = vmatpush1.xpose.msra.mxu0 0.0
  %164 = vmatprep.subr.mxu0 0.0
  %165 = vmatpush1.xpose.msra.mxu0 0.0
  %166 = vmatprep.subr.mxu0 0.0
  %167 = vmatpush1.xpose.msra.mxu0 0.0
  %168 = vmatprep.subr.mxu0 0.0
  %169 = vmatpush1.xpose.msra.mxu0 0.0
  %170 = vmatprep.subr.mxu0 0.0
  %171 = vmatpush1.xpose.msra.mxu0 0.0
  %172 = vmatprep.subr.mxu0 0.0
  %173 = vmatpush1.xpose.msra.mxu0 0.0
  %174 = vmatprep.subr.mxu0 0.0
  %175 = vmatpush1.xpose.msra.mxu0 0.0
  %176 = vmatprep.subr.mxu0 0.0
  %177 = vmatpush1.xpose.msra.mxu0 0.0
  %178 = vmatprep.subr.mxu0 0.0
  %179 = vmatpush1.xpose.msra.mxu0 0.0
  %180 = vmatprep.subr.mxu0 0.0
  %181 = vmatpush1.xpose.msra.mxu0 0.0
  %182 = vmatprep.subr.mxu0 %v21
  %183 = vmatpush1.xpose.msra.mxu0 %v20
  %184 = vmatprep.subr.mxu0 %v19
  %185 = vmatpush1.xpose.msra.mxu0 %v18
  %186 = vmatprep.subr.mxu0 0.0
  %187 = vmatpush2.xpose.msra.mxu0 0.0
  %188 = vmatprep.subr.mxu0 0.0
  %189 = vmatpush2.xpose.msra.mxu0 0.0
  %190 = vmatprep.subr.mxu0 0.0
  %191 = vmatpush2.xpose.msra.mxu0 0.0
  %192 = vmatprep.subr.mxu0 0.0
  %193 = vmatpush2.xpose.msra.mxu0 0.0
  %194 = vmatprep.subr.mxu0 0.0
  %195 = vmatpush2.xpose.msra.mxu0 0.0
  %196 = vmatprep.subr.mxu0 0.0
  %197 = vmatpush2.xpose.msra.mxu0 0.0
  %198 = vmatprep.subr.mxu0 0.0
  %199 = vmatpush2.xpose.msra.mxu0 0.0
  %200 = vmatprep.subr.mxu0 0.0
  %201 = vmatpush2.xpose.msra.mxu0 0.0
  %202 = vmatprep.subr.mxu0 0.0
  %203 = vmatpush2.xpose.msra.mxu0 0.0
  %204 = vmatprep.subr.mxu0 0.0
  %205 = vmatpush2.xpose.msra.mxu0 0.0
  %206 = vmatprep.subr.mxu0 0.0
  %207 = vmatpush2.xpose.msra.mxu0 0.0
  %208 = vmatprep.subr.mxu0 0.0
  %209 = vmatpush2.xpose.msra.mxu0 0.0
  %210 = vmatprep.subr.mxu0 0.0
  %211 = vmatpush2.xpose.msra.mxu0 0.0
  %212 = vmatprep.subr.mxu0 0.0
  %213 = vmatpush2.xpose.msra.mxu0 0.0
  %214 = vmatprep.subr.mxu0 0.0
  %215 = vmatpush2.xpose.msra.mxu0 0.0
  %216 = vmatprep.subr.mxu0 0.0
  %217 = vmatpush2.xpose.msra.mxu0 0.0
  %218 = vmatprep.mubr.f32.mxu0 %v19
  %219 = vmatmul.mubr.f32.gmra.mxu0 %v18
  %v220 = vpop.f32.mrf.mxu0
  %v221 = vadd.f32 0.0, %v220
  %v222 = vpop.f32.mrf.mxu0
  %223 = vmatprep.mubr.f32.mxu0 %v21
  %224 = vmatmul.mubr.f32.gmra.mxu0 %v20
  %v225 = vpop.f32.mrf.mxu0
  %v226 = vadd.f32 0.0, %v225
  %v227 = vpop.f32.mrf.mxu0
  %228 = vdwg.mxu0
  %229 = vxpose.xlu0.b32.start [1/16] %v30, 128
  %230 = vxpose.xlu0.b32.cont [2/16] %v33, 128
  %231 = vxpose.xlu0.b32.cont [3/16] 0.0, 128
  %232 = vxpose.xlu0.b32.cont [4/16] 0.0, 128
  %233 = vxpose.xlu0.b32.cont [5/16] 0.0, 128
  %234 = vxpose.xlu0.b32.cont [6/16] 0.0, 128
  %235 = vxpose.xlu0.b32.cont [7/16] 0.0, 128
  %236 = vxpose.xlu0.b32.cont [8/16] 0.0, 128
  %237 = vxpose.xlu0.b32.cont [9/16] 0.0, 128
  %238 = vxpose.xlu0.b32.cont [10/16] 0.0, 128
  %239 = vxpose.xlu0.b32.cont [11/16] 0.0, 128
  %240 = vxpose.xlu0.b32.cont [12/16] 0.0, 128
  %241 = vxpose.xlu0.b32.cont [13/16] 0.0, 128
  %242 = vxpose.xlu0.b32.cont [14/16] 0.0, 128
  %243 = vxpose.xlu0.b32.cont [15/16] 0.0, 128
  %244 = vxpose.xlu0.b32.end [16/16] 0.0, 128
  %v245 = vpop.trf.xlu0
  %v246 = vpop.trf.xlu0
  %v247 = vpop.trf.xlu0
  %v248 = vpop.trf.xlu0
  %v249 = vpop.trf.xlu0
  %v250 = vpop.trf.xlu0
  %v251 = vpop.trf.xlu0
  %v252 = vpop.trf.xlu0
  %v253 = vpop.trf.xlu0
  %v254 = vpop.trf.xlu0
  %v255 = vpop.trf.xlu0
  %v256 = vpop.trf.xlu0
  %v257 = vpop.trf.xlu0
  %v258 = vpop.trf.xlu0
  %v259 = vpop.trf.xlu0
  %v260 = vpop.trf.xlu0
  %v261 = vlaneseq
  %v262 = vshrl.u32 %v261, 7
  %v263 = vsub.s32 0, %v262
  %v264 = vrot.slane %v245, %v263
  %v265 = vmul.f32 %v30, %v264
  %v266 = vmul.f32 %v33, %v264
  %v267 = vmul.f32 %v265, 0.00390625
  %v268 = vmul.f32 %v266, 0.00390625
  %v269 = vsub.f32 %v221, %v267
  %v270 = vsub.f32 %v226, %v268
  %271 = vst.msk [vmem:[%s3] sm:$0xff] %vm151, %v269
  %272 = vst.msk [vmem:[%s3 + $0x8] sm:$0xff] %vm151, %v270
  %273 = vmatprep.subr.mxu0 0.0
  %274 = vmatpush1.xpose.msra.mxu0 0.0
  %275 = vmatprep.subr.mxu0 0.0
  %276 = vmatpush1.xpose.msra.mxu0 0.0
  %277 = vmatprep.subr.mxu0 0.0
  %278 = vmatpush1.xpose.msra.mxu0 0.0
  %279 = vmatprep.subr.mxu0 0.0
  %280 = vmatpush1.xpose.msra.mxu0 0.0
  %281 = vmatprep.subr.mxu0 0.0
  %282 = vmatpush1.xpose.msra.mxu0 0.0
  %283 = vmatprep.subr.mxu0 0.0
  %284 = vmatpush1.xpose.msra.mxu0 0.0
  %285 = vmatprep.subr.mxu0 0.0
  %286 = vmatpush1.xpose.msra.mxu0 0.0
  %287 = vmatprep.subr.mxu0 0.0
  %288 = vmatpush1.xpose.msra.mxu0 0.0
  %289 = vmatprep.subr.mxu0 0.0
  %290 = vmatpush1.xpose.msra.mxu0 0.0
  %291 = vmatprep.subr.mxu0 0.0
  %292 = vmatpush1.xpose.msra.mxu0 0.0
  %293 = vmatprep.subr.mxu0 0.0
  %294 = vmatpush1.xpose.msra.mxu0 0.0
  %295 = vmatprep.subr.mxu0 0.0
  %296 = vmatpush1.xpose.msra.mxu0 0.0
  %297 = vmatprep.subr.mxu0 0.0
  %298 = vmatpush1.xpose.msra.mxu0 0.0
  %299 = vmatprep.subr.mxu0 0.0
  %300 = vmatpush1.xpose.msra.mxu0 0.0
  %301 = vmatprep.subr.mxu0 %v21
  %302 = vmatpush1.xpose.msra.mxu0 %v20
  %303 = vmatprep.subr.mxu0 %v19
  %304 = vmatpush1.xpose.msra.mxu0 %v18
  %305 = vmatprep.subr.mxu0 0.0
  %306 = vmatpush2.xpose.msra.mxu0 0.0
  %307 = vmatprep.subr.mxu0 0.0
  %308 = vmatpush2.xpose.msra.mxu0 0.0
  %309 = vmatprep.subr.mxu0 0.0
  %310 = vmatpush2.xpose.msra.mxu0 0.0
  %311 = vmatprep.subr.mxu0 0.0
  %312 = vmatpush2.xpose.msra.mxu0 0.0
  %313 = vmatprep.subr.mxu0 0.0
  %314 = vmatpush2.xpose.msra.mxu0 0.0
  %315 = vmatprep.subr.mxu0 0.0
  %316 = vmatpush2.xpose.msra.mxu0 0.0
  %317 = vmatprep.subr.mxu0 0.0
  %318 = vmatpush2.xpose.msra.mxu0 0.0
  %319 = vmatprep.subr.mxu0 0.0
  %320 = vmatpush2.xpose.msra.mxu0 0.0
  %321 = vmatprep.subr.mxu0 0.0
  %322 = vmatpush2.xpose.msra.mxu0 0.0
  %323 = vmatprep.subr.mxu0 0.0
  %324 = vmatpush2.xpose.msra.mxu0 0.0
  %325 = vmatprep.subr.mxu0 0.0
  %326 = vmatpush2.xpose.msra.mxu0 0.0
  %327 = vmatprep.subr.mxu0 0.0
  %328 = vmatpush2.xpose.msra.mxu0 0.0
  %329 = vmatprep.subr.mxu0 0.0
  %330 = vmatpush2.xpose.msra.mxu0 0.0
  %331 = vmatprep.subr.mxu0 0.0
  %332 = vmatpush2.xpose.msra.mxu0 0.0
  %333 = vmatprep.subr.mxu0 0.0
  %334 = vmatpush2.xpose.msra.mxu0 0.0
  %335 = vmatprep.subr.mxu0 0.0
  %336 = vmatpush2.xpose.msra.mxu0 0.0
  %337 = vmatprep.mubr.f32.mxu0 %v15
  %338 = vmatmul.mubr.f32.gmra.mxu0 %v14
  %v339 = vpop.f32.mrf.mxu0
  %v340 = vadd.f32 0.0, %v339
  %v341 = vpop.f32.mrf.mxu0
  %342 = vmatprep.mubr.f32.mxu0 %v17
  %343 = vmatmul.mubr.f32.gmra.mxu0 %v16
  %v344 = vpop.f32.mrf.mxu0
  %v345 = vadd.f32 0.0, %v344
  %v346 = vpop.f32.mrf.mxu0
  %347 = vdwg.mxu0
  %v348 = vmul.f32 %v24, %v264
  %v349 = vmul.f32 %v27, %v264
  %v350 = vmul.f32 %v348, 0.00390625
  %v351 = vmul.f32 %v349, 0.00390625
  %v352 = vsub.f32 %v340, %v350
  %v353 = vsub.f32 %v345, %v351
  %354 = vst.msk [vmem:[%s4] sm:$0xff] %vm151, %v352
  %355 = vst.msk [vmem:[%s4 + $0x8] sm:$0xff] %vm151, %v353
  // Predicated region
  $region10: #{loss_fn.8} parent=0 // pred_check
    _
  $region11: #{loss_fn.8} parent=0 // pred_check_branch
    %357 = sbr.rel (0) target = $region13
  $region12: #{loss_fn.8} parent=0 // pred_region
    _
  $region13: #{loss_fn.8} parent=0 // pred_fallthru
    _
  // Predicated region
  $region14: #{loss_fn.8} parent=0 // pred_check
    _
  $region15: #{loss_fn.8} parent=0 // pred_check_branch
    %359 = sbr.rel (0) target = $region17
  $region16: #{loss_fn.8} parent=0 // pred_region
    _
  $region17: #{loss_fn.8} parent=0 // pred_fallthru
    _
  // Predicated region
  $region18: #{loss_fn.8} parent=0 // pred_check
    _
  $region19: #{loss_fn.8} parent=0 // pred_check_branch
    %361 = sbr.rel (0) target = $region21
  $region20: #{loss_fn.8} parent=0 // pred_region
    _
  $region21: #{loss_fn.8} parent=0 // pred_fallthru
    _
  // Predicated region
  $region22: #{loss_fn.8} parent=0 // pred_check
    _
  $region23: #{loss_fn.8} parent=0 // pred_check_branch
    %363 = sbr.rel (0) target = $region25
  $region24: #{loss_fn.8} parent=0 // pred_region
    _
  $region25: #{loss_fn.8} parent=0 // pred_fallthru
    _
  // Predicated region
  $region26: #{loss_fn.8} parent=0 // pred_check
    _
  $region27: #{loss_fn.8} parent=0 // pred_check_branch
    %365 = sbr.rel (0) target = $region29
  $region28: #{loss_fn.8} parent=0 // pred_region
    _
  $region29: #{loss_fn.8} parent=0 // pred_fallthru
    _
  // Predicated region
  $region30: #{loss_fn.8} parent=0 // pred_check
    _
  $region31: #{loss_fn.8} parent=0 // pred_check_branch
    %367 = sbr.rel (0) target = $region33
  $region32: #{loss_fn.8} parent=0 // pred_region
    _
  $region33: #{loss_fn.8} parent=0 // pred_fallthru
    _

// kernel: loss_fn.9
$region0: #{loss_fn.9}
  #allocation0 [shape = 'u32[]', space=smem, size = 0x4, offset = 0x4, fixed_abs, tag = 'smem constant byte address 0x4 - core index']
  #allocation1 [shape = 'u32[144,128]{1,0:T(1,128)}', space=vmem, size = 0x12000, scoped, tag = 'internal scratch']
  %s0 = inlined_call_operand.vmem [shape: f32[16,64], index: 0, kind: input, shape index: {}]
  %s1 = inlined_call_operand.vmem [shape: f32[16,64], index: 1, kind: input, shape index: {}]
  %s2 = inlined_call_operand.vmem [shape: f32[1,16,16], index: 2, kind: output, shape index: {0}]
  %s3 = inlined_call_operand.vmem [shape: f32[1,16,16], index: 3, kind: output, shape index: {1}]
  %s4 = inlined_call_operand.vmem [shape: f32[1,16,16], index: 4, kind: output, shape index: {2}]
  %5 = xla_tuple %s2, %s3, %s4
  %s6 = sld [smem:[#allocation0]]
  $region34: #{loss_fn.9} parent=0
    _
  %s8 = ssub.s32 1, %s6
  %s9 = scalar_select 0, %s8, %s6
  // Predicated region
  $region2: #{loss_fn.9} parent=0 // pred_check
    _
  $region3: #{loss_fn.9} parent=0 // pred_check_branch
    %11 = sbr.rel (0) target = $region5
  $region4: #{loss_fn.9} parent=0 // pred_region
    _
  $region5: #{loss_fn.9} parent=0 // pred_fallthru
    _
  // Predicated region
  $region6: #{loss_fn.9} parent=0 // pred_check
    _
  $region7: #{loss_fn.9} parent=0 // pred_check_branch
    %13 = sbr.rel (0) target = $region9
  $region8: #{loss_fn.9} parent=0 // pred_region
    _
  $region9: #{loss_fn.9} parent=0 // pred_fallthru
    _
  %v14 = vld [vmem:[%s0] sm:$0xff]
  %v15 = vld [vmem:[%s0 + $0x8] sm:$0xff]
  %v16 = vld [vmem:[%s1] sm:$0xff]
  %v17 = vld [vmem:[%s1 + $0x8] sm:$0xff]
  %vm18 = vcmask 523264
  %v19 = vsel %vm18, %v14, 0.0
  %20 = vadd.xlane.f32.xlu0 %v19
  %v21 = vpop.xlane.xlu0 %20
  %v22 = vsel %vm18, %v15, 0.0
  %23 = vadd.xlane.f32.xlu0 %v22
  %v24 = vpop.xlane.xlu0 %23
  %v25 = vsel %vm18, %v16, 0.0
  %26 = vadd.xlane.f32.xlu0 %v25
  %v27 = vpop.xlane.xlu0 %26
  %v28 = vsel %vm18, %v17, 0.0
  %29 = vadd.xlane.f32.xlu0 %v28
  %v30 = vpop.xlane.xlu0 %29
  %v32 = vsel %vm18, %v14, 0
  %v35 = vsel %vm18, %v15, 0
  %37 = vmatprep.subr.mxu0 0.0
  %38 = vmatpush1.xpose.msra.mxu0 0.0
  %39 = vmatprep.subr.mxu0 0.0
  %40 = vmatpush1.xpose.msra.mxu0 0.0
  %41 = vmatprep.subr.mxu0 0.0
  %42 = vmatpush1.xpose.msra.mxu0 0.0
  %43 = vmatprep.subr.mxu0 0.0
  %44 = vmatpush1.xpose.msra.mxu0 0.0
  %45 = vmatprep.subr.mxu0 0.0
  %46 = vmatpush1.xpose.msra.mxu0 0.0
  %47 = vmatprep.subr.mxu0 0.0
  %48 = vmatpush1.xpose.msra.mxu0 0.0
  %49 = vmatprep.subr.mxu0 0.0
  %50 = vmatpush1.xpose.msra.mxu0 0.0
  %51 = vmatprep.subr.mxu0 0.0
  %52 = vmatpush1.xpose.msra.mxu0 0.0
  %53 = vmatprep.subr.mxu0 0.0
  %54 = vmatpush1.xpose.msra.mxu0 0.0
  %55 = vmatprep.subr.mxu0 0.0
  %56 = vmatpush1.xpose.msra.mxu0 0.0
  %57 = vmatprep.subr.mxu0 0.0
  %58 = vmatpush1.xpose.msra.mxu0 0.0
  %59 = vmatprep.subr.mxu0 0.0
  %60 = vmatpush1.xpose.msra.mxu0 0.0
  %61 = vmatprep.subr.mxu0 0.0
  %62 = vmatpush1.xpose.msra.mxu0 0.0
  %63 = vmatprep.subr.mxu0 0.0
  %64 = vmatpush1.xpose.msra.mxu0 0.0
  %65 = vmatprep.subr.mxu0 0.0
  %66 = vmatpush1.xpose.msra.mxu0 %v35
  %67 = vmatprep.subr.mxu0 0.0
  %68 = vmatpush1.xpose.msra.mxu0 %v32
  %69 = vmatprep.subr.mxu0 0.0
  %70 = vmatpush2.xpose.msra.mxu0 0.0
  %71 = vmatprep.subr.mxu0 0.0
  %72 = vmatpush2.xpose.msra.mxu0 0.0
  %73 = vmatprep.subr.mxu0 0.0
  %74 = vmatpush2.xpose.msra.mxu0 0.0
  %75 = vmatprep.subr.mxu0 0.0
  %76 = vmatpush2.xpose.msra.mxu0 0.0
  %77 = vmatprep.subr.mxu0 0.0
  %78 = vmatpush2.xpose.msra.mxu0 0.0
  %79 = vmatprep.subr.mxu0 0.0
  %80 = vmatpush2.xpose.msra.mxu0 0.0
  %81 = vmatprep.subr.mxu0 0.0
  %82 = vmatpush2.xpose.msra.mxu0 0.0
  %83 = vmatprep.subr.mxu0 0.0
  %84 = vmatpush2.xpose.msra.mxu0 0.0
  %85 = vmatprep.subr.mxu0 0.0
  %86 = vmatpush2.xpose.msra.mxu0 0.0
  %87 = vmatprep.subr.mxu0 0.0
  %88 = vmatpush2.xpose.msra.mxu0 0.0
  %89 = vmatprep.subr.mxu0 0.0
  %90 = vmatpush2.xpose.msra.mxu0 0.0
  %91 = vmatprep.subr.mxu0 0.0
  %92 = vmatpush2.xpose.msra.mxu0 0.0
  %93 = vmatprep.subr.mxu0 0.0
  %94 = vmatpush2.xpose.msra.mxu0 0.0
  %95 = vmatprep.subr.mxu0 0.0
  %96 = vmatpush2.xpose.msra.mxu0 0.0
  %97 = vmatprep.subr.mxu0 0.0
  %98 = vmatpush2.xpose.msra.mxu0 0.0
  %99 = vmatprep.subr.mxu0 0.0
  %100 = vmatpush2.xpose.msra.mxu0 0.0
  %101 = vmatprep.mubr.f32.mxu0 0.0
  %102 = vmatmul.mubr.f32.gmra.mxu0 %v32
  %v103 = vpop.f32.mrf.mxu0
  %v104 = vadd.f32 0.0, %v103
  %v105 = vpop.f32.mrf.mxu0
  %106 = vmatprep.mubr.f32.mxu0 0.0
  %107 = vmatmul.mubr.f32.gmra.mxu0 %v35
  %v108 = vpop.f32.mrf.mxu0
  %v109 = vadd.f32 0.0, %v108
  %v110 = vpop.f32.mrf.mxu0
  %111 = vdwg.mxu0
  %112 = vxpose.xlu0.b32.start [1/16] %v21, 128
  %113 = vxpose.xlu0.b32.cont [2/16] %v24, 128
  %114 = vxpose.xlu0.b32.cont [3/16] 0.0, 128
  %115 = vxpose.xlu0.b32.cont [4/16] 0.0, 128
  %116 = vxpose.xlu0.b32.cont [5/16] 0.0, 128
  %117 = vxpose.xlu0.b32.cont [6/16] 0.0, 128
  %118 = vxpose.xlu0.b32.cont [7/16] 0.0, 128
  %119 = vxpose.xlu0.b32.cont [8/16] 0.0, 128
  %120 = vxpose.xlu0.b32.cont [9/16] 0.0, 128
  %121 = vxpose.xlu0.b32.cont [10/16] 0.0, 128
  %122 = vxpose.xlu0.b32.cont [11/16] 0.0, 128
  %123 = vxpose.xlu0.b32.cont [12/16] 0.0, 128
  %124 = vxpose.xlu0.b32.cont [13/16] 0.0, 128
  %125 = vxpose.xlu0.b32.cont [14/16] 0.0, 128
  %126 = vxpose.xlu0.b32.cont [15/16] 0.0, 128
  %127 = vxpose.xlu0.b32.end [16/16] 0.0, 128
  %v128 = vpop.trf.xlu0
  %v129 = vpop.trf.xlu0
  %v130 = vpop.trf.xlu0
  %v131 = vpop.trf.xlu0
  %v132 = vpop.trf.xlu0
  %v133 = vpop.trf.xlu0
  %v134 = vpop.trf.xlu0
  %v135 = vpop.trf.xlu0
  %v136 = vpop.trf.xlu0
  %v137 = vpop.trf.xlu0
  %v138 = vpop.trf.xlu0
  %v139 = vpop.trf.xlu0
  %v140 = vpop.trf.xlu0
  %v141 = vpop.trf.xlu0
  %v142 = vpop.trf.xlu0
  %v143 = vpop.trf.xlu0
  %v144 = vlaneseq
  %v145 = vshrl.u32 %v144, 7
  %v146 = vsub.s32 0, %v145
  %v147 = vrot.slane %v128, %v146
  %v148 = vmul.f32 %v21, %v147
  %v149 = vmul.f32 %v24, %v147
  %v150 = vmul.f32 %v148, 0.015625
  %v151 = vmul.f32 %v149, 0.015625
  %v152 = vsub.f32 %v104, %v150
  %v153 = vsub.f32 %v109, %v151
  %vm154 = vcmask 130048
  %155 = vst.msk [vmem:[%s2] sm:$0xff] %vm154, %v152
  %156 = vst.msk [vmem:[%s2 + $0x8] sm:$0xff] %vm154, %v153
  %v158 = vsel %vm18, %v16, 0
  %v161 = vsel %vm18, %v17, 0
  %163 = vmatprep.subr.mxu0 0.0
  %164 = vmatpush1.xpose.msra.mxu0 0.0
  %165 = vmatprep.subr.mxu0 0.0
  %166 = vmatpush1.xpose.msra.mxu0 0.0
  %167 = vmatprep.subr.mxu0 0.0
  %168 = vmatpush1.xpose.msra.mxu0 0.0
  %169 = vmatprep.subr.mxu0 0.0
  %170 = vmatpush1.xpose.msra.mxu0 0.0
  %171 = vmatprep.subr.mxu0 0.0
  %172 = vmatpush1.xpose.msra.mxu0 0.0
  %173 = vmatprep.subr.mxu0 0.0
  %174 = vmatpush1.xpose.msra.mxu0 0.0
  %175 = vmatprep.subr.mxu0 0.0
  %176 = vmatpush1.xpose.msra.mxu0 0.0
  %177 = vmatprep.subr.mxu0 0.0
  %178 = vmatpush1.xpose.msra.mxu0 0.0
  %179 = vmatprep.subr.mxu0 0.0
  %180 = vmatpush1.xpose.msra.mxu0 0.0
  %181 = vmatprep.subr.mxu0 0.0
  %182 = vmatpush1.xpose.msra.mxu0 0.0
  %183 = vmatprep.subr.mxu0 0.0
  %184 = vmatpush1.xpose.msra.mxu0 0.0
  %185 = vmatprep.subr.mxu0 0.0
  %186 = vmatpush1.xpose.msra.mxu0 0.0
  %187 = vmatprep.subr.mxu0 0.0
  %188 = vmatpush1.xpose.msra.mxu0 0.0
  %189 = vmatprep.subr.mxu0 0.0
  %190 = vmatpush1.xpose.msra.mxu0 0.0
  %191 = vmatprep.subr.mxu0 0.0
  %192 = vmatpush1.xpose.msra.mxu0 %v161
  %193 = vmatprep.subr.mxu0 0.0
  %194 = vmatpush1.xpose.msra.mxu0 %v158
  %195 = vmatprep.subr.mxu0 0.0
  %196 = vmatpush2.xpose.msra.mxu0 0.0
  %197 = vmatprep.subr.mxu0 0.0
  %198 = vmatpush2.xpose.msra.mxu0 0.0
  %199 = vmatprep.subr.mxu0 0.0
  %200 = vmatpush2.xpose.msra.mxu0 0.0
  %201 = vmatprep.subr.mxu0 0.0
  %202 = vmatpush2.xpose.msra.mxu0 0.0
  %203 = vmatprep.subr.mxu0 0.0
  %204 = vmatpush2.xpose.msra.mxu0 0.0
  %205 = vmatprep.subr.mxu0 0.0
  %206 = vmatpush2.xpose.msra.mxu0 0.0
  %207 = vmatprep.subr.mxu0 0.0
  %208 = vmatpush2.xpose.msra.mxu0 0.0
  %209 = vmatprep.subr.mxu0 0.0
  %210 = vmatpush2.xpose.msra.mxu0 0.0
  %211 = vmatprep.subr.mxu0 0.0
  %212 = vmatpush2.xpose.msra.mxu0 0.0
  %213 = vmatprep.subr.mxu0 0.0
  %214 = vmatpush2.xpose.msra.mxu0 0.0
  %215 = vmatprep.subr.mxu0 0.0
  %216 = vmatpush2.xpose.msra.mxu0 0.0
  %217 = vmatprep.subr.mxu0 0.0
  %218 = vmatpush2.xpose.msra.mxu0 0.0
  %219 = vmatprep.subr.mxu0 0.0
  %220 = vmatpush2.xpose.msra.mxu0 0.0
  %221 = vmatprep.subr.mxu0 0.0
  %222 = vmatpush2.xpose.msra.mxu0 0.0
  %223 = vmatprep.subr.mxu0 0.0
  %224 = vmatpush2.xpose.msra.mxu0 0.0
  %225 = vmatprep.subr.mxu0 0.0
  %226 = vmatpush2.xpose.msra.mxu0 0.0
  %227 = vmatprep.mubr.f32.mxu0 0.0
  %228 = vmatmul.mubr.f32.gmra.mxu0 %v158
  %v229 = vpop.f32.mrf.mxu0
  %v230 = vadd.f32 0.0, %v229
  %v231 = vpop.f32.mrf.mxu0
  %232 = vmatprep.mubr.f32.mxu0 0.0
  %233 = vmatmul.mubr.f32.gmra.mxu0 %v161
  %v234 = vpop.f32.mrf.mxu0
  %v235 = vadd.f32 0.0, %v234
  %v236 = vpop.f32.mrf.mxu0
  %237 = vdwg.mxu0
  %238 = vxpose.xlu0.b32.start [1/16] %v27, 128
  %239 = vxpose.xlu0.b32.cont [2/16] %v30, 128
  %240 = vxpose.xlu0.b32.cont [3/16] 0.0, 128
  %241 = vxpose.xlu0.b32.cont [4/16] 0.0, 128
  %242 = vxpose.xlu0.b32.cont [5/16] 0.0, 128
  %243 = vxpose.xlu0.b32.cont [6/16] 0.0, 128
  %244 = vxpose.xlu0.b32.cont [7/16] 0.0, 128
  %245 = vxpose.xlu0.b32.cont [8/16] 0.0, 128
  %246 = vxpose.xlu0.b32.cont [9/16] 0.0, 128
  %247 = vxpose.xlu0.b32.cont [10/16] 0.0, 128
  %248 = vxpose.xlu0.b32.cont [11/16] 0.0, 128
  %249 = vxpose.xlu0.b32.cont [12/16] 0.0, 128
  %250 = vxpose.xlu0.b32.cont [13/16] 0.0, 128
  %251 = vxpose.xlu0.b32.cont [14/16] 0.0, 128
  %252 = vxpose.xlu0.b32.cont [15/16] 0.0, 128
  %253 = vxpose.xlu0.b32.end [16/16] 0.0, 128
  %v254 = vpop.trf.xlu0
  %v255 = vpop.trf.xlu0
  %v256 = vpop.trf.xlu0
  %v257 = vpop.trf.xlu0
  %v258 = vpop.trf.xlu0
  %v259 = vpop.trf.xlu0
  %v260 = vpop.trf.xlu0
  %v261 = vpop.trf.xlu0
  %v262 = vpop.trf.xlu0
  %v263 = vpop.trf.xlu0
  %v264 = vpop.trf.xlu0
  %v265 = vpop.trf.xlu0
  %v266 = vpop.trf.xlu0
  %v267 = vpop.trf.xlu0
  %v268 = vpop.trf.xlu0
  %v269 = vpop.trf.xlu0
  %v270 = vlaneseq
  %v271 = vshrl.u32 %v270, 7
  %v272 = vsub.s32 0, %v271
  %v273 = vrot.slane %v254, %v272
  %v274 = vmul.f32 %v27, %v273
  %v275 = vmul.f32 %v30, %v273
  %v276 = vmul.f32 %v274, 0.015625
  %v277 = vmul.f32 %v275, 0.015625
  %v278 = vsub.f32 %v230, %v276
  %v279 = vsub.f32 %v235, %v277
  %280 = vst.msk [vmem:[%s3] sm:$0xff] %vm154, %v278
  %281 = vst.msk [vmem:[%s3 + $0x8] sm:$0xff] %vm154, %v279
  %282 = vmatprep.subr.mxu0 0.0
  %283 = vmatpush1.xpose.msra.mxu0 0.0
  %284 = vmatprep.subr.mxu0 0.0
  %285 = vmatpush1.xpose.msra.mxu0 0.0
  %286 = vmatprep.subr.mxu0 0.0
  %287 = vmatpush1.xpose.msra.mxu0 0.0
  %288 = vmatprep.subr.mxu0 0.0
  %289 = vmatpush1.xpose.msra.mxu0 0.0
  %290 = vmatprep.subr.mxu0 0.0
  %291 = vmatpush1.xpose.msra.mxu0 0.0
  %292 = vmatprep.subr.mxu0 0.0
  %293 = vmatpush1.xpose.msra.mxu0 0.0
  %294 = vmatprep.subr.mxu0 0.0
  %295 = vmatpush1.xpose.msra.mxu0 0.0
  %296 = vmatprep.subr.mxu0 0.0
  %297 = vmatpush1.xpose.msra.mxu0 0.0
  %298 = vmatprep.subr.mxu0 0.0
  %299 = vmatpush1.xpose.msra.mxu0 0.0
  %300 = vmatprep.subr.mxu0 0.0
  %301 = vmatpush1.xpose.msra.mxu0 0.0
  %302 = vmatprep.subr.mxu0 0.0
  %303 = vmatpush1.xpose.msra.mxu0 0.0
  %304 = vmatprep.subr.mxu0 0.0
  %305 = vmatpush1.xpose.msra.mxu0 0.0
  %306 = vmatprep.subr.mxu0 0.0
  %307 = vmatpush1.xpose.msra.mxu0 0.0
  %308 = vmatprep.subr.mxu0 0.0
  %309 = vmatpush1.xpose.msra.mxu0 0.0
  %310 = vmatprep.subr.mxu0 0.0
  %311 = vmatpush1.xpose.msra.mxu0 %v161
  %312 = vmatprep.subr.mxu0 0.0
  %313 = vmatpush1.xpose.msra.mxu0 %v158
  %314 = vmatprep.subr.mxu0 0.0
  %315 = vmatpush2.xpose.msra.mxu0 0.0
  %316 = vmatprep.subr.mxu0 0.0
  %317 = vmatpush2.xpose.msra.mxu0 0.0
  %318 = vmatprep.subr.mxu0 0.0
  %319 = vmatpush2.xpose.msra.mxu0 0.0
  %320 = vmatprep.subr.mxu0 0.0
  %321 = vmatpush2.xpose.msra.mxu0 0.0
  %322 = vmatprep.subr.mxu0 0.0
  %323 = vmatpush2.xpose.msra.mxu0 0.0
  %324 = vmatprep.subr.mxu0 0.0
  %325 = vmatpush2.xpose.msra.mxu0 0.0
  %326 = vmatprep.subr.mxu0 0.0
  %327 = vmatpush2.xpose.msra.mxu0 0.0
  %328 = vmatprep.subr.mxu0 0.0
  %329 = vmatpush2.xpose.msra.mxu0 0.0
  %330 = vmatprep.subr.mxu0 0.0
  %331 = vmatpush2.xpose.msra.mxu0 0.0
  %332 = vmatprep.subr.mxu0 0.0
  %333 = vmatpush2.xpose.msra.mxu0 0.0
  %334 = vmatprep.subr.mxu0 0.0
  %335 = vmatpush2.xpose.msra.mxu0 0.0
  %336 = vmatprep.subr.mxu0 0.0
  %337 = vmatpush2.xpose.msra.mxu0 0.0
  %338 = vmatprep.subr.mxu0 0.0
  %339 = vmatpush2.xpose.msra.mxu0 0.0
  %340 = vmatprep.subr.mxu0 0.0
  %341 = vmatpush2.xpose.msra.mxu0 0.0
  %342 = vmatprep.subr.mxu0 0.0
  %343 = vmatpush2.xpose.msra.mxu0 0.0
  %344 = vmatprep.subr.mxu0 0.0
  %345 = vmatpush2.xpose.msra.mxu0 0.0
  %346 = vmatprep.mubr.f32.mxu0 0.0
  %347 = vmatmul.mubr.f32.gmra.mxu0 %v32
  %v348 = vpop.f32.mrf.mxu0
  %v349 = vadd.f32 0.0, %v348
  %v350 = vpop.f32.mrf.mxu0
  %351 = vmatprep.mubr.f32.mxu0 0.0
  %352 = vmatmul.mubr.f32.gmra.mxu0 %v35
  %v353 = vpop.f32.mrf.mxu0
  %v354 = vadd.f32 0.0, %v353
  %v355 = vpop.f32.mrf.mxu0
  %356 = vdwg.mxu0
  %v357 = vmul.f32 %v21, %v273
  %v358 = vmul.f32 %v24, %v273
  %v359 = vmul.f32 %v357, 0.015625
  %v360 = vmul.f32 %v358, 0.015625
  %v361 = vsub.f32 %v349, %v359
  %v362 = vsub.f32 %v354, %v360
  %363 = vst.msk [vmem:[%s4] sm:$0xff] %vm154, %v361
  %364 = vst.msk [vmem:[%s4 + $0x8] sm:$0xff] %vm154, %v362
  // Predicated region
  $region10: #{loss_fn.9} parent=0 // pred_check
    _
  $region11: #{loss_fn.9} parent=0 // pred_check_branch
    %366 = sbr.rel (0) target = $region13
  $region12: #{loss_fn.9} parent=0 // pred_region
    _
  $region13: #{loss_fn.9} parent=0 // pred_fallthru
    _
  // Predicated region
  $region14: #{loss_fn.9} parent=0 // pred_check
    _
  $region15: #{loss_fn.9} parent=0 // pred_check_branch
    %368 = sbr.rel (0) target = $region17
  $region16: #{loss_fn.9} parent=0 // pred_region
    _
  $region17: #{loss_fn.9} parent=0 // pred_fallthru
    _
  // Predicated region
  $region18: #{loss_fn.9} parent=0 // pred_check
    _
  $region19: #{loss_fn.9} parent=0 // pred_check_branch
    %370 = sbr.rel (0) target = $region21
  $region20: #{loss_fn.9} parent=0 // pred_region
    _
  $region21: #{loss_fn.9} parent=0 // pred_fallthru
    _
  // Predicated region
  $region22: #{loss_fn.9} parent=0 // pred_check
    _
  $region23: #{loss_fn.9} parent=0 // pred_check_branch
    %372 = sbr.rel (0) target = $region25
  $region24: #{loss_fn.9} parent=0 // pred_region
    _
  $region25: #{loss_fn.9} parent=0 // pred_fallthru
    _
  // Predicated region
  $region26: #{loss_fn.9} parent=0 // pred_check
    _
  $region27: #{loss_fn.9} parent=0 // pred_check_branch
    %374 = sbr.rel (0) target = $region29
  $region28: #{loss_fn.9} parent=0 // pred_region
    _
  $region29: #{loss_fn.9} parent=0 // pred_fallthru
    _
  // Predicated region
  $region30: #{loss_fn.9} parent=0 // pred_check
    _
  $region31: #{loss_fn.9} parent=0 // pred_check_branch
    %376 = sbr.rel (0) target = $region33
  $region32: #{loss_fn.9} parent=0 // pred_region
    _
  $region33: #{loss_fn.9} parent=0 // pred_fallthru
    _

// kernel: custom-call.81
$region0: #{custom-call.81}
  %s0 = inlined_call_operand.vmem [shape: f32[4,4,4], index: 0, kind: input, shape index: {}]
  %s1 = inlined_call_operand.vmem [shape: f32[4,4,4], index: 1, kind: output, shape index: {0}]
  %s2 = inlined_call_operand.hbm [shape: s32[4,4], index: 2, kind: output, shape index: {1}]
  %s3 = inlined_call_operand.vmem [shape: s32[4,4], index: 3, kind: output, shape index: {2}]
  %4 = xla_tuple %s1, %s2, %s3
  $region1: #{custom-call.81} parent=0
    #allocation0 [shape = 'u8[4096]{0}', space=vmem, size = 0x1000, scoped, tag = 'operand span for operand 0']
    #allocation1 [shape = 'u8[4096]{0}', space=vmem, size = 0x1000, scoped, tag = 'packed  for operand 0']
    #allocation2 [shape = 'u8[4096]{0}', space=vmem, size = 0x1000, scoped, tag = 'operand span for operand 1']
    #allocation3 [shape = 'u8[4096]{0}', space=vmem, size = 0x1000, scoped, tag = 'packed  for operand 1']
    #allocation4 [shape = 'u8[4096]{0}', space=vmem, size = 0x1000, scoped, tag = 'operand span for operand 2']
    #allocation5 [shape = 'u8[4096]{0}', space=vmem, size = 0x1000, scoped, tag = 'packed  for operand 2']
    #allocation6 [shape = 's32[2]{0}', space=sflag, size = 0x8, scoped, tag = 'scoped memory for custom-call.81']
    #allocation7 [shape = 'u8[4096]{0}', space=vmem, size = 0x1000, scoped, tag = 'operand span for operand 3']
    #allocation8 [shape = 'u8[4096]{0}', space=vmem, size = 0x1000, scoped, tag = 'packed  for operand 3']
    %5 = vsyncpa [#allocation6], 0
    %s6 = scalar_lea.sflag [#allocation6], 1
    %7 = vsyncpa %s6, 0
    loop: start=0, step=1, limit=6
    $region2: #{custom-call.81} parent=1 // loop_pre_header
      _
    $region3: #{custom-call.81} parent=1 // loop_header
      %s9 = sphi 0, %s13
      %p10 = scmp.ge.s32.totalorder %s9, 6
      %s21 = sphi 0, %s23
      %s24 = sphi 0, %s21
      %s25 = sphi 0, %s24
      %s41 = sphi 0, %s25
      %s49 = sphi 0, %s51
      %s52 = sphi 0, %s49
      %s53 = sphi 0, %s52
      %s69 = sphi 0, %s53
    $region4: #{custom-call.81} parent=1 // loop_header_branch
      %12 = sbr.rel (%p10) target = $region8
    $region5: #{custom-call.81} parent=1 // loop_body
      %s14 = ssub.s32 %s9, 1
      %s15 = ssub.s32 %s9, 2
      %s16 = sadd.s32 %s9, 1
      %s17 = sshrl.u32 %s9, 3
      %s18 = sshrl.u32 %s16, 3
      %s19 = ssub.s32 %s17, %s18
      %p20 = scmp.eq.s32.totalorder %s19, 0
      %s22 = sadd.s32 %s21, 1
      %s23 = scalar_select %p20, %s21, %s22
      %p26 = pneg %p20
      %p27 = scmp.eq.s32.totalorder %s9, 3
      %p28 = por %p26, %p27
      %p29 = scmp.ne.s32.totalorder %s21, %s24
      %p30 = scmp.eq.s32.totalorder %s9, 0
      %p31 = por %p29, %p30
      %p32 = scmp.ne.s32.totalorder %s21, %s24
      %p33 = scmp.eq.s32.totalorder %s14, 3
      %p34 = por %p32, %p33
      %p35 = scmp.ne.s32.totalorder %s24, %s25
      %p36 = scmp.eq.s32.totalorder %s14, 0
      %p37 = por %p35, %p36
      %p38 = scmp.ne.s32.totalorder %s24, %s25
      %p39 = scmp.eq.s32.totalorder %s15, 3
      %p40 = por %p38, %p39
      %p42 = scmp.ne.s32.totalorder %s25, %s41
      %p43 = scmp.eq.s32.totalorder %s15, 0
      %p44 = por %p42, %p43
      %s45 = sshrl.u32 %s9, 3
      %s46 = sshrl.u32 %s16, 3
      %s47 = ssub.s32 %s45, %s46
      %p48 = scmp.eq.s32.totalorder %s47, 0
      %s50 = sadd.s32 %s49, 1
      %s51 = scalar_select %p48, %s49, %s50
      %p54 = pneg %p48
      %p55 = scmp.eq.s32.totalorder %s9, 3
      %p56 = por %p54, %p55
      %p57 = scmp.ne.s32.totalorder %s49, %s52
      %p58 = scmp.eq.s32.totalorder %s9, 0
      %p59 = por %p57, %p58
      %p60 = scmp.ne.s32.totalorder %s49, %s52
      %p61 = scmp.eq.s32.totalorder %s14, 3
      %p62 = por %p60, %p61
      %p63 = scmp.ne.s32.totalorder %s52, %s53
      %p64 = scmp.eq.s32.totalorder %s14, 0
      %p65 = por %p63, %p64
      %p66 = scmp.ne.s32.totalorder %s52, %s53
      %p67 = scmp.eq.s32.totalorder %s15, 3
      %p68 = por %p66, %p67
      %p70 = scmp.ne.s32.totalorder %s53, %s69
      %p71 = scmp.eq.s32.totalorder %s15, 0
      %p72 = por %p70, %p71
      %p73 = scmp.le.s32.totalorder 1, %s9
      %p74 = scmp.lt.s32.totalorder %s9, 5
      %p75 = pnand %p73, %p74
      %p76 = pneg %p75
      // Predicated region
      $region9: #{custom-call.81} parent=5 // pred_check
        _
      $region10: #{custom-call.81} parent=5 // pred_check_branch
        %78 = sbr.rel (%p75) target = $region12
      $region11: #{custom-call.81} parent=5 // pred_region
        %s79 = ssub.s32 %s9, 1
      $region12: #{custom-call.81} parent=5 // pred_fallthru
        _
      %p80 = scmp.lt.s32.totalorder %s9, 4
      // Predicated region
      $region13: #{custom-call.81} parent=5 // pred_check
        %p81 = pneg %p80
      $region14: #{custom-call.81} parent=5 // pred_check_branch
        %83 = sbr.rel (%p81) target = $region16
      $region15: #{custom-call.81} parent=5 // pred_region
        %s84 = sand.u32 %s9, 1
        %s85 = sand.u32 %s9, 1
        %s86 = smul.addr %s85, 4
        %s87 = scalar_lea.vmem [#allocation1], %s86
        %s88 = smul.addr %s9, 4
        %s89 = scalar_lea.vmem %s0, %s88
        // Predicated region
        $region17: #{custom-call.81} parent=15 // pred_check
          _
        $region18: #{custom-call.81} parent=15 // pred_check_branch
          %91 = sbr.rel (0) target = $region20
        $region19: #{custom-call.81} parent=15 // pred_region
          // Predicated region
          $region21: #{custom-call.81} parent=19 // pred_check
            _
          $region22: #{custom-call.81} parent=19 // pred_check_branch
            %93 = sbr.rel target = $region24
          $region23: #{custom-call.81} parent=19 // pred_region
            // Predicated region
            $region36: #{custom-call.81} parent=23 // pred_check
              _
            $region37: #{custom-call.81} parent=23 // pred_check_branch
              %109 = sbr.rel (0) target = $region39
            $region38: #{custom-call.81} parent=23 // pred_region
              %s111 = ssub.s32 16, 1
              loop: start=0, step=1, limit=1
              $region40: #{custom-call.81} parent=38 // loop_pre_header
                _
              $region41: #{custom-call.81} parent=38 // loop_header
                %s113 = sphi 0, %s117
                %p114 = scmp.ge.s32.totalorder %s113, 1
                %s118 = sphi %s89, %s89
                %s119 = sphi %s87, %s87
              $region42: #{custom-call.81} parent=38 // loop_header_branch
                %116 = sbr.rel (%p114) target = $region46
              $region43: #{custom-call.81} parent=38 // loop_body
                %v120 = vld [vmem:[%s118] sm:%s111]
                %121 = vst [vmem:[%s119] sm:%s111] %v120
              $region44: #{custom-call.81} parent=38 // loop_footer
                %s117 = sadd.s32 1, %s113
              $region45: #{custom-call.81} parent=38 // loop_footer_branch
                %112 = sbr.rel target = $region41
              $region46: #{custom-call.81} parent=38 // loop_exit
                _
            $region39: #{custom-call.81} parent=23 // pred_fallthru
              _
          $region24: #{custom-call.81} parent=19 // pred_fallthru
            _
          // Predicated region
          $region25: #{custom-call.81} parent=19 // pred_check
            _
          $region26: #{custom-call.81} parent=19 // pred_check_branch
            %95 = sbr.rel (0) target = $region28
          $region27: #{custom-call.81} parent=19 // pred_region
            %s97 = ssub.s32 16, 1
            loop: start=0, step=1, limit=1
            $region29: #{custom-call.81} parent=27 // loop_pre_header
              _
            $region30: #{custom-call.81} parent=27 // loop_header
              %s99 = sphi 0, %s103
              %p100 = scmp.ge.s32.totalorder %s99, 1
              %s104 = sphi %s89, %s89
              %s105 = sphi %s87, %s87
            $region31: #{custom-call.81} parent=27 // loop_header_branch
              %102 = sbr.rel (%p100) target = $region35
            $region32: #{custom-call.81} parent=27 // loop_body
              %v106 = vld [vmem:[%s104] sm:%s97]
              %107 = vst [vmem:[%s105] sm:%s97] %v106
            $region33: #{custom-call.81} parent=27 // loop_footer
              %s103 = sadd.s32 1, %s99
            $region34: #{custom-call.81} parent=27 // loop_footer_branch
              %98 = sbr.rel target = $region30
            $region35: #{custom-call.81} parent=27 // loop_exit
              _
          $region28: #{custom-call.81} parent=19 // pred_fallthru
            _
        $region20: #{custom-call.81} parent=15 // pred_fallthru
          _
        %122 = vnop
      $region16: #{custom-call.81} parent=5 // pred_fallthru
        _
      %p123 = scmp.le.s32.totalorder 1, %s9
      %p124 = scmp.lt.s32.totalorder %s9, 5
      %p125 = pnand %p123, %p124
      %p126 = pneg %p125
      // Predicated region
      $region47: #{custom-call.81} parent=5 // pred_check
        _
      $region48: #{custom-call.81} parent=5 // pred_check_branch
        %128 = sbr.rel (%p125) target = $region50
      $region49: #{custom-call.81} parent=5 // pred_region
        #allocation9 [shape = 's32[4,128]{1,0}', space=vmem, size = 0x1000, scoped, tag = 'scratch for permutations']
        %s129 = ssub.s32 %s9, 1
        %s130 = sand.u32 %s14, 1
        %s131 = sand.u32 %s14, 1
        %s132 = smul.addr %s131, 4
        %s133 = scalar_lea.vmem [#allocation1], %s132
        %s134 = sand.u32 %s14, 1
        %s135 = sand.u32 %s14, 1
        %s136 = smul.addr %s135, 4
        %s137 = scalar_lea.vmem [#allocation1], %s136
        %s138 = sand.u32 %s14, 1
        %s139 = sand.u32 %s14, 1
        %s140 = smul.addr %s139, 4
        %s141 = scalar_lea.vmem [#allocation3], %s140
        %p142 = pneg %p37
        %p143 = pneg %p34
        %s144 = sand.u32 %s24, 1
        %s145 = scalar_lea.sflag [#allocation6], %s144
        %s146 = sand.u32 %s24, 1
        %s147 = smul.addr %s146, 4
        %s148 = scalar_lea.vmem [#allocation5], %s147
        %p149 = pneg %p65
        %p150 = pneg %p62
        %s151 = sand.u32 %s52, 1
        %s152 = sand.u32 %s52, 1
        %s153 = smul.addr %s152, 4
        %s154 = scalar_lea.vmem [#allocation8], %s153
        %s156 = sshll.u32 1, 4
        %s157 = ssub.s32 %s156, 1
        %v158 = vld [vmem:[%s137] sm:%s157]
        %159 = vst [vmem:[#allocation0] sm:%s157] %v158
        %s160 = sshrl.u32 %s14, 3
        %s161 = sshrl.u32 %s14, 3
        %v162 = vld [vmem:[#allocation0] sm:$0xff]
        %163 = vst [vmem:[#allocation2] sm:$0xff] %v162
        %s164 = sand.u32 %s14, 7
        %s165 = scalar_lea.vmem [#allocation4], %s164
        %s166 = sand.u32 %s14, 7
        %s167 = scalar_lea.vmem [#allocation7], %s166
        %168 = vst [vmem:[%s165] sm:$0x1] 0
        %v169 = vlaneseq
        %v170 = vshrl.u32 %v169, 7
        %v171 = vmov %v170
        %173 = vst [vmem:[#allocation9] sm:$0xff] %v171
        loop: start=0, step=1, limit=4
        $region52: #{custom-call.81} parent=49 // loop_pre_header
          _
        $region53: #{custom-call.81} parent=49 // loop_header
          %s175 = sphi 0, %s179
          %p176 = scmp.ge.s32.totalorder %s175, 4
        $region54: #{custom-call.81} parent=49 // loop_header_branch
          %178 = sbr.rel (%p176) target = $region58
        $region55: #{custom-call.81} parent=49 // loop_body
          %v180 = vstv %s175
          %v181 = vlaneseq
          %v182 = vshrl.u32 %v181, 7
          %v183 = vmov %v182
          %v184 = vld [vmem:[#allocation2] sm:$0xff]
          %v185 = vand.u32 2147483647, %v184
          %v187 = vstv %s175
          %vm188 = vcmp.ge.s32.totalorder %v183, %v187
          %vm189 = vcmp.lt.s32.totalorder %v183, 4
          %vm190 = vmand %vm188, %vm189
          %vm191 = vcmp.lt.f32.partialorder -inf, %v185
          %vm192 = vmand %vm190, %vm191
          %v193 = vsel %vm192, %v183, %v180
          %v194 = vsel %vm192, %v185, -inf
          %v195 = vrot.slane %v194, 1
          %v196 = vrot.slane %v193, 1
          %vm197 = vcmp.ge.f32.partialorder %v195, %v194
          %v198 = vsel %vm197, %v195, %v194
          %v199 = vsel %vm197, %v196, %v193
          %v200 = vrot.slane %v195, 1
          %v201 = vrot.slane %v196, 1
          %vm202 = vcmp.ge.f32.partialorder %v200, %v198
          %v203 = vsel %vm202, %v200, %v198
          %v204 = vsel %vm202, %v201, %v199
          %v205 = vrot.slane %v200, 1
          %v206 = vrot.slane %v201, 1
          %vm207 = vcmp.ge.f32.partialorder %v205, %v203
          %v208 = vsel %vm207, %v205, %v203
          %v209 = vsel %vm207, %v206, %v204
          %v210 = vrot.slane %v205, 1
          %v211 = vrot.slane %v206, 1
          %vm212 = vcmp.ge.f32.partialorder %v210, %v208
          %v213 = vsel %vm212, %v210, %v208
          %v214 = vsel %vm212, %v211, %v209
          %v215 = vrot.slane %v210, 1
          %v216 = vrot.slane %v211, 1
          %vm217 = vcmp.ge.f32.partialorder %v215, %v213
          %v218 = vsel %vm217, %v215, %v213
          %v219 = vsel %vm217, %v216, %v214
          %v220 = vrot.slane %v215, 1
          %v221 = vrot.slane %v216, 1
          %vm222 = vcmp.ge.f32.partialorder %v220, %v218
          %v223 = vsel %vm222, %v220, %v218
          %v224 = vsel %vm222, %v221, %v219
          %v225 = vrot.slane %v220, 1
          %v226 = vrot.slane %v221, 1
          %vm227 = vcmp.ge.f32.partialorder %v225, %v223
          %v228 = vsel %vm227, %v225, %v223
          %v229 = vsel %vm227, %v226, %v224
          %s230 = ssub.s32 128, %s175
          %231 = vrot.lane.b32.xlu0 %v229, %s230
          %v232 = vpop.permute.xlu0 %231
          %s233 = vtos %v232
          %v234 = vstv %s175
          %v235 = vlaneseq
          %v236 = vand.u32 %v235, 127
          %vm237 = vcmp.eq.s32.totalorder %v236, %v234
          %v238 = vstv %s233
          %v239 = vld [vmem:[%s165] ss:$0 sm:$0xff]
          %v240 = vsel %vm237, %v238, %v239
          %241 = vst [vmem:[%s165] sm:$0x1] %v240
          %s242 = scalar_lea.vmem [#allocation2], %s175
          %s243 = scalar_lea.vmem [#allocation2], %s233
          %v244 = vld [vmem:[%s242] ss:$0 sm:$0xff]
          %v245 = vld [vmem:[%s243] ss:$0 sm:$0xff]
          %246 = vst [vmem:[%s243] sm:$0x1] %v244
          %247 = vst [vmem:[%s242] sm:$0x1] %v245
          %s248 = scalar_lea.vmem [#allocation9], %s175
          %s249 = scalar_lea.vmem [#allocation9], %s233
          %v250 = vld [vmem:[%s248] ss:$0 sm:$0xff]
          %v251 = vld [vmem:[%s249] ss:$0 sm:$0xff]
          %252 = vst [vmem:[%s249] sm:$0x1] %v250
          %253 = vst [vmem:[%s248] sm:$0x1] %v251
          %vm254 = vcmp.ne.f32.partialorder %v245, 0.0
          %vm255 = vmand %vm237, %vm254
          %v256 = vsel %vm255, %v245, 1.0
          %v257 = vlaneseq
          %v258 = vand.u32 %v257, 127
          %v259 = vstv %s175
          %vm260 = vcmp.gt.s32.totalorder %v258, %v259
          %v261 = vsel %vm260, %v245, 0.0
          %v262 = vlaneseq
          %v263 = vshrl.u32 %v262, 7
          %v264 = vmov %v263
          %v265 = vld [vmem:[#allocation2] sm:$0xff]
          %v267 = vstv %s175
          %vm268 = vcmp.gt.s32.totalorder %v264, %v267
          %v269 = vsel %vm268, %v256, 1.0
          %v270 = vrcp.pop %v269
          %v271 = vmul.f32 %v265, %v270
          %vm272 = vmand %vm268, %vm237
          %v273 = vsel %vm272, %v271, 0.0
          %274 = vadd.xlane.f32.xlu0 %v273
          %v275 = vpop.xlane.xlu0 %274
          %v276 = vmul.f32 %v275, %v261
          %v277 = vsub.f32 %v271, %v276
          %278 = vst [vmem:[#allocation2] sm:$0xff] %v277
        $region56: #{custom-call.81} parent=49 // loop_footer
          %s179 = sadd.s32 1, %s175
        $region57: #{custom-call.81} parent=49 // loop_footer_branch
          %174 = sbr.rel target = $region53
        $region58: #{custom-call.81} parent=49 // loop_exit
          _
        %v279 = vld [vmem:[#allocation9] sm:$0xff]
        %s280 = scalar_lea.vmem [#allocation9], 8
        %s281 = scalar_lea.vmem [#allocation9], 16
        %s282 = scalar_lea.vmem [#allocation9], 24
        %s283 = scalar_lea.vmem [#allocation9], 32
        %s284 = scalar_lea.vmem [#allocation9], 40
        %s285 = scalar_lea.vmem [#allocation9], 48
        %s286 = scalar_lea.vmem [#allocation9], 56
        %s287 = scalar_lea.vmem [#allocation9], 64
        %s288 = scalar_lea.vmem [#allocation9], 72
        %s289 = scalar_lea.vmem [#allocation9], 80
        %s290 = scalar_lea.vmem [#allocation9], 88
        %s291 = scalar_lea.vmem [#allocation9], 96
        %s292 = scalar_lea.vmem [#allocation9], 104
        %s293 = scalar_lea.vmem [#allocation9], 112
        %s294 = scalar_lea.vmem [#allocation9], 120
        %295 = vxpose.xlu0.b32.start [1/16] %v279, 128
        %296 = vxpose.xlu0.b32.cont [2/16] 0, 128
        %297 = vxpose.xlu0.b32.cont [3/16] 0, 128
        %298 = vxpose.xlu0.b32.cont [4/16] 0, 128
        %299 = vxpose.xlu0.b32.cont [5/16] 0, 128
        %300 = vxpose.xlu0.b32.cont [6/16] 0, 128
        %301 = vxpose.xlu0.b32.cont [7/16] 0, 128
        %302 = vxpose.xlu0.b32.cont [8/16] 0, 128
        %303 = vxpose.xlu0.b32.cont [9/16] 0, 128
        %304 = vxpose.xlu0.b32.cont [10/16] 0, 128
        %305 = vxpose.xlu0.b32.cont [11/16] 0, 128
        %306 = vxpose.xlu0.b32.cont [12/16] 0, 128
        %307 = vxpose.xlu0.b32.cont [13/16] 0, 128
        %308 = vxpose.xlu0.b32.cont [14/16] 0, 128
        %309 = vxpose.xlu0.b32.cont [15/16] 0, 128
        %310 = vxpose.xlu0.b32.end [16/16] 0, 128
        %v311 = vpop.trf.xlu0
        %v312 = vpop.trf.xlu0
        %v313 = vpop.trf.xlu0
        %v314 = vpop.trf.xlu0
        %v315 = vpop.trf.xlu0
        %v316 = vpop.trf.xlu0
        %v317 = vpop.trf.xlu0
        %v318 = vpop.trf.xlu0
        %v319 = vpop.trf.xlu0
        %v320 = vpop.trf.xlu0
        %v321 = vpop.trf.xlu0
        %v322 = vpop.trf.xlu0
        %v323 = vpop.trf.xlu0
        %v324 = vpop.trf.xlu0
        %v325 = vpop.trf.xlu0
        %v326 = vpop.trf.xlu0
        %327 = vst [vmem:[%s167] sm:$0x1] %v311
        %s329 = sshll.u32 1, 4
        %s330 = ssub.s32 %s329, 1
        %v332 = vld [vmem:[#allocation2] sm:%s330]
        %s333 = sshll.u32 1, 4
        %s334 = ssub.s32 %s333, 1
        %335 = vst [vmem:[%s141] sm:%s334] %v332
        %s337 = sshll.u32 1, 4
        %s338 = ssub.s32 %s337, 1
        %v340 = vld [vmem:[#allocation4] sm:%s338]
        %s341 = sshll.u32 1, 4
        %s342 = ssub.s32 %s341, 1
        %343 = vst [vmem:[%s148] sm:%s342] %v340
        %s345 = sshll.u32 1, 4
        %s346 = ssub.s32 %s345, 1
        %v348 = vld [vmem:[#allocation7] sm:%s346]
        %s349 = sshll.u32 1, 4
        %s350 = ssub.s32 %s349, 1
        %351 = vst [vmem:[%s154] sm:%s350] %v348
        %s352 = sand.u32 %s14, 1
        %s353 = sand.u32 %s14, 1
        %s354 = smul.addr %s353, 4
        %s355 = scalar_lea.vmem [#allocation3], %s354
        %s356 = sand.u32 %s24, 1
        %s357 = scalar_lea.sflag [#allocation6], %s356
        %s358 = sand.u32 %s24, 1
        %s359 = smul.addr %s358, 4
        %s360 = scalar_lea.vmem [#allocation5], %s359
        %s361 = sand.u32 %s52, 1
        %s362 = sand.u32 %s52, 1
        %s363 = smul.addr %s362, 4
        %s364 = scalar_lea.vmem [#allocation8], %s363
        %s365 = smul.addr %s14, 4
        %s366 = scalar_lea.vmem %s1, %s365
        // Predicated region
        $region59: #{custom-call.81} parent=49 // pred_check
          _
        $region60: #{custom-call.81} parent=49 // pred_check_branch
          %368 = sbr.rel (0) target = $region62
        $region61: #{custom-call.81} parent=49 // pred_region
          // Predicated region
          $region63: #{custom-call.81} parent=61 // pred_check
            _
          $region64: #{custom-call.81} parent=61 // pred_check_branch
            %370 = sbr.rel target = $region66
          $region65: #{custom-call.81} parent=61 // pred_region
            // Predicated region
            $region78: #{custom-call.81} parent=65 // pred_check
              _
            $region79: #{custom-call.81} parent=65 // pred_check_branch
              %386 = sbr.rel (0) target = $region81
            $region80: #{custom-call.81} parent=65 // pred_region
              %s388 = ssub.s32 16, 1
              loop: start=0, step=1, limit=1
              $region82: #{custom-call.81} parent=80 // loop_pre_header
                _
              $region83: #{custom-call.81} parent=80 // loop_header
                %s390 = sphi 0, %s394
                %p391 = scmp.ge.s32.totalorder %s390, 1
                %s395 = sphi %s355, %s355
                %s396 = sphi %s366, %s366
              $region84: #{custom-call.81} parent=80 // loop_header_branch
                %393 = sbr.rel (%p391) target = $region88
              $region85: #{custom-call.81} parent=80 // loop_body
                %v397 = vld [vmem:[%s395] sm:%s388]
                %398 = vst [vmem:[%s396] sm:%s388] %v397
              $region86: #{custom-call.81} parent=80 // loop_footer
                %s394 = sadd.s32 1, %s390
              $region87: #{custom-call.81} parent=80 // loop_footer_branch
                %389 = sbr.rel target = $region83
              $region88: #{custom-call.81} parent=80 // loop_exit
                _
            $region81: #{custom-call.81} parent=65 // pred_fallthru
              _
          $region66: #{custom-call.81} parent=61 // pred_fallthru
            _
          // Predicated region
          $region67: #{custom-call.81} parent=61 // pred_check
            _
          $region68: #{custom-call.81} parent=61 // pred_check_branch
            %372 = sbr.rel (0) target = $region70
          $region69: #{custom-call.81} parent=61 // pred_region
            %s374 = ssub.s32 16, 1
            loop: start=0, step=1, limit=1
            $region71: #{custom-call.81} parent=69 // loop_pre_header
              _
            $region72: #{custom-call.81} parent=69 // loop_header
              %s376 = sphi 0, %s380
              %p377 = scmp.ge.s32.totalorder %s376, 1
              %s381 = sphi %s355, %s355
              %s382 = sphi %s366, %s366
            $region73: #{custom-call.81} parent=69 // loop_header_branch
              %379 = sbr.rel (%p377) target = $region77
            $region74: #{custom-call.81} parent=69 // loop_body
              %v383 = vld [vmem:[%s381] sm:%s374]
              %384 = vst [vmem:[%s382] sm:%s374] %v383
            $region75: #{custom-call.81} parent=69 // loop_footer
              %s380 = sadd.s32 1, %s376
            $region76: #{custom-call.81} parent=69 // loop_footer_branch
              %375 = sbr.rel target = $region72
            $region77: #{custom-call.81} parent=69 // loop_exit
              _
          $region70: #{custom-call.81} parent=61 // pred_fallthru
            _
        $region62: #{custom-call.81} parent=49 // pred_fallthru
          _
        %399 = vnop
        // Predicated region
        $region89: #{custom-call.81} parent=49 // pred_check
          %p400 = pneg %p34
        $region90: #{custom-call.81} parent=49 // pred_check_branch
          %402 = sbr.rel (%p400) target = $region92
        $region91: #{custom-call.81} parent=49 // pred_region
          %s403 = sshrl.u32 %s14, 3
          %s405 = ssub.s32 64, 64
          %406 = vsyncadd %s357, %s405
          %s407 = smul.addr %s403, 64
          %s408 = scalar_lea.hbm %s2, %s407
          %s410 = sshll.u32 %s360, 4
          %s411 = int_to_ptr.vmem [resolvable:$true] %s410
          %413 = dma.vmem_to_hbm [thread:$0]  %s411, 64, %s408, %s357
        $region92: #{custom-call.81} parent=49 // pred_fallthru
          _
        // Predicated region
        $region93: #{custom-call.81} parent=49 // pred_check
          %p414 = pneg %p62
        $region94: #{custom-call.81} parent=49 // pred_check_branch
          %416 = sbr.rel (%p414) target = $region96
        $region95: #{custom-call.81} parent=49 // pred_region
          %s417 = sshrl.u32 %s14, 3
          %s418 = smul.addr %s417, 4
          %s419 = scalar_lea.vmem %s3, %s418
          // Predicated region
          $region97: #{custom-call.81} parent=95 // pred_check
            _
          $region98: #{custom-call.81} parent=95 // pred_check_branch
            %421 = sbr.rel (0) target = $region100
          $region99: #{custom-call.81} parent=95 // pred_region
            // Predicated region
            $region101: #{custom-call.81} parent=99 // pred_check
              _
            $region102: #{custom-call.81} parent=99 // pred_check_branch
              %423 = sbr.rel target = $region104
            $region103: #{custom-call.81} parent=99 // pred_region
              // Predicated region
              $region116: #{custom-call.81} parent=103 // pred_check
                _
              $region117: #{custom-call.81} parent=103 // pred_check_branch
                %439 = sbr.rel (0) target = $region119
              $region118: #{custom-call.81} parent=103 // pred_region
                %s441 = ssub.s32 16, 1
                loop: start=0, step=1, limit=1
                $region120: #{custom-call.81} parent=118 // loop_pre_header
                  _
                $region121: #{custom-call.81} parent=118 // loop_header
                  %s443 = sphi 0, %s447
                  %p444 = scmp.ge.s32.totalorder %s443, 1
                  %s448 = sphi %s364, %s364
                  %s449 = sphi %s419, %s419
                $region122: #{custom-call.81} parent=118 // loop_header_branch
                  %446 = sbr.rel (%p444) target = $region126
                $region123: #{custom-call.81} parent=118 // loop_body
                  %v450 = vld [vmem:[%s448] sm:%s441]
                  %451 = vst [vmem:[%s449] sm:%s441] %v450
                $region124: #{custom-call.81} parent=118 // loop_footer
                  %s447 = sadd.s32 1, %s443
                $region125: #{custom-call.81} parent=118 // loop_footer_branch
                  %442 = sbr.rel target = $region121
                $region126: #{custom-call.81} parent=118 // loop_exit
                  _
              $region119: #{custom-call.81} parent=103 // pred_fallthru
                _
            $region104: #{custom-call.81} parent=99 // pred_fallthru
              _
            // Predicated region
            $region105: #{custom-call.81} parent=99 // pred_check
              _
            $region106: #{custom-call.81} parent=99 // pred_check_branch
              %425 = sbr.rel (0) target = $region108
            $region107: #{custom-call.81} parent=99 // pred_region
              %s427 = ssub.s32 16, 1
              loop: start=0, step=1, limit=1
              $region109: #{custom-call.81} parent=107 // loop_pre_header
                _
              $region110: #{custom-call.81} parent=107 // loop_header
                %s429 = sphi 0, %s433
                %p430 = scmp.ge.s32.totalorder %s429, 1
                %s434 = sphi %s364, %s364
                %s435 = sphi %s419, %s419
              $region111: #{custom-call.81} parent=107 // loop_header_branch
                %432 = sbr.rel (%p430) target = $region115
              $region112: #{custom-call.81} parent=107 // loop_body
                %v436 = vld [vmem:[%s434] sm:%s427]
                %437 = vst [vmem:[%s435] sm:%s427] %v436
              $region113: #{custom-call.81} parent=107 // loop_footer
                %s433 = sadd.s32 1, %s429
              $region114: #{custom-call.81} parent=107 // loop_footer_branch
                %428 = sbr.rel target = $region110
              $region115: #{custom-call.81} parent=107 // loop_exit
                _
            $region108: #{custom-call.81} parent=99 // pred_fallthru
              _
          $region100: #{custom-call.81} parent=95 // pred_fallthru
            _
          %452 = vnop
        $region96: #{custom-call.81} parent=49 // pred_fallthru
          _
      $region50: #{custom-call.81} parent=5 // pred_fallthru
        _
      %p453 = scmp.le.s32.totalorder 2, %s9
      // Predicated region
      $region127: #{custom-call.81} parent=5 // pred_check
        %p454 = pneg %p453
      $region128: #{custom-call.81} parent=5 // pred_check_branch
        %456 = sbr.rel (%p454) target = $region130
      $region129: #{custom-call.81} parent=5 // pred_region
        %s457 = ssub.s32 %s9, 2
        %s458 = sand.u32 %s15, 1
        %s459 = sand.u32 %s15, 1
        %s460 = smul.addr %s459, 4
        %s461 = scalar_lea.vmem [#allocation3], %s460
        // Predicated region
        $region131: #{custom-call.81} parent=129 // pred_check
          %p462 = pneg %p40
        $region132: #{custom-call.81} parent=129 // pred_check_branch
          %464 = sbr.rel (%p462) target = $region134
        $region133: #{custom-call.81} parent=129 // pred_region
          %s465 = sand.u32 %s25, 1
          %s466 = scalar_lea.sflag [#allocation6], %s465
          %s467 = sand.u32 %s25, 1
          %s468 = smul.addr %s467, 4
          %s469 = scalar_lea.vmem [#allocation5], %s468
          %470 = dma.done %s466, 64
        $region134: #{custom-call.81} parent=129 // pred_fallthru
          _
        // Predicated region
        $region135: #{custom-call.81} parent=129 // pred_check
          %p471 = pneg %p68
        $region136: #{custom-call.81} parent=129 // pred_check_branch
          %473 = sbr.rel (%p471) target = $region138
        $region137: #{custom-call.81} parent=129 // pred_region
          %s474 = sand.u32 %s53, 1
          %s475 = sand.u32 %s53, 1
          %s476 = smul.addr %s475, 4
          %s477 = scalar_lea.vmem [#allocation8], %s476
        $region138: #{custom-call.81} parent=129 // pred_fallthru
          _
      $region130: #{custom-call.81} parent=5 // pred_fallthru
        _
    $region6: #{custom-call.81} parent=1 // loop_footer
      %s13 = sadd.s32 1, %s9
    $region7: #{custom-call.81} parent=1 // loop_footer_branch
      %8 = sbr.rel target = $region3
    $region8: #{custom-call.81} parent=1 // loop_exit
      _
    %478 = vsyncpa [#allocation6], 1
    %s479 = scalar_lea.sflag [#allocation6], 1
    %480 = vsyncpa %s479, 1

// kernel: custom-call.83
$region0: #{custom-call.83}
  %s0 = inlined_call_operand.vmem [shape: f32[4,1,4,4], index: 0, kind: input, shape index: {}]
  %s1 = inlined_call_operand.vmem [shape: f32[4,1,4,4], index: 1, kind: output, shape index: {}]
  $region1: #{custom-call.83} parent=0
    #allocation0 [shape = 'u8[4096]{0}', space=vmem, size = 0x1000, scoped, tag = 'operand span for operand 0']
    #allocation1 [shape = 'u8[4096]{0}', space=vmem, size = 0x1000, scoped, tag = 'packed  for operand 0']
    #allocation2 [shape = 'u8[4096]{0}', space=vmem, size = 0x1000, scoped, tag = 'operand span for operand 1']
    #allocation3 [shape = 'u8[4096]{0}', space=vmem, size = 0x1000, scoped, tag = 'packed  for operand 1']
    loop: start=0, step=1, limit=6
    $region2: #{custom-call.83} parent=1 // loop_pre_header
      _
    $region3: #{custom-call.83} parent=1 // loop_header
      %s3 = sphi 0, %s7
      %p4 = scmp.ge.s32.totalorder %s3, 6
      %s10 = sphi 0, %s36
      %s11 = sphi 0, %s32
      %s12 = sphi 0, %s28
      %s13 = sphi 0, %s24
      %s14 = sphi 0, %s10
      %s15 = sphi 0, %s11
      %s16 = sphi 0, %s12
      %s17 = sphi 0, %s13
      %s18 = sphi 0, %s14
      %s19 = sphi 0, %s15
      %s20 = sphi 0, %s16
      %s21 = sphi 0, %s17
    $region4: #{custom-call.83} parent=1 // loop_header_branch
      %6 = sbr.rel (%p4) target = $region8
    $region5: #{custom-call.83} parent=1 // loop_body
      %s8 = ssub.s32 %s3, 1
      %s9 = ssub.s32 %s3, 2
      %s22 = sadd.s32 1, %s13
      %p23 = scmp.ge.s32.totalorder %s22, 1
      %s24 = scalar_select %p23, 0, %s22
      %s25 = sadd.s32 1, %s12
      %s26 = scalar_select %p23, %s25, %s12
      %p27 = scmp.ge.s32.totalorder %s26, 1
      %s28 = scalar_select %p27, 0, %s26
      %s29 = sadd.s32 1, %s11
      %s30 = scalar_select %p27, %s29, %s11
      %p31 = scmp.ge.s32.totalorder %s30, 1
      %s32 = scalar_select %p31, 0, %s30
      %s33 = sadd.s32 1, %s10
      %s34 = scalar_select %p31, %s33, %s10
      %p35 = scmp.ge.s32.totalorder %s34, 4
      %s36 = scalar_select %p35, 0, %s34
      %p37 = scmp.le.s32.totalorder 1, %s3
      %p38 = scmp.lt.s32.totalorder %s3, 5
      %p39 = pnand %p37, %p38
      %p40 = pneg %p39
      // Predicated region
      $region9: #{custom-call.83} parent=5 // pred_check
        _
      $region10: #{custom-call.83} parent=5 // pred_check_branch
        %42 = sbr.rel (%p39) target = $region12
      $region11: #{custom-call.83} parent=5 // pred_region
        %s43 = ssub.s32 %s3, 1
      $region12: #{custom-call.83} parent=5 // pred_fallthru
        _
      %p44 = scmp.lt.s32.totalorder %s3, 4
      // Predicated region
      $region13: #{custom-call.83} parent=5 // pred_check
        %p45 = pneg %p44
      $region14: #{custom-call.83} parent=5 // pred_check_branch
        %47 = sbr.rel (%p45) target = $region16
      $region15: #{custom-call.83} parent=5 // pred_region
        %s48 = sand.u32 %s3, 1
        %s49 = sand.u32 %s3, 1
        %s50 = smul.addr %s49, 4
        %s51 = scalar_lea.vmem [#allocation1], %s50
        %s52 = sadd.s32 %s13, %s12
        %s53 = sadd.s32 %s52, %s11
        %s54 = sadd.s32 %s53, %s10
        %s55 = smul.addr %s54, 4
        %s56 = scalar_lea.vmem %s0, %s55
        // Predicated region
        $region17: #{custom-call.83} parent=15 // pred_check
          _
        $region18: #{custom-call.83} parent=15 // pred_check_branch
          %58 = sbr.rel (0) target = $region20
        $region19: #{custom-call.83} parent=15 // pred_region
          // Predicated region
          $region21: #{custom-call.83} parent=19 // pred_check
            _
          $region22: #{custom-call.83} parent=19 // pred_check_branch
            %60 = sbr.rel target = $region24
          $region23: #{custom-call.83} parent=19 // pred_region
            // Predicated region
            $region36: #{custom-call.83} parent=23 // pred_check
              _
            $region37: #{custom-call.83} parent=23 // pred_check_branch
              %76 = sbr.rel (0) target = $region39
            $region38: #{custom-call.83} parent=23 // pred_region
              %s78 = ssub.s32 16, 1
              loop: start=0, step=1, limit=1
              $region40: #{custom-call.83} parent=38 // loop_pre_header
                _
              $region41: #{custom-call.83} parent=38 // loop_header
                %s80 = sphi 0, %s84
                %p81 = scmp.ge.s32.totalorder %s80, 1
                %s85 = sphi %s56, %s56
                %s86 = sphi %s51, %s51
              $region42: #{custom-call.83} parent=38 // loop_header_branch
                %83 = sbr.rel (%p81) target = $region46
              $region43: #{custom-call.83} parent=38 // loop_body
                %v87 = vld [vmem:[%s85] sm:%s78]
                %88 = vst [vmem:[%s86] sm:%s78] %v87
              $region44: #{custom-call.83} parent=38 // loop_footer
                %s84 = sadd.s32 1, %s80
              $region45: #{custom-call.83} parent=38 // loop_footer_branch
                %79 = sbr.rel target = $region41
              $region46: #{custom-call.83} parent=38 // loop_exit
                _
            $region39: #{custom-call.83} parent=23 // pred_fallthru
              _
          $region24: #{custom-call.83} parent=19 // pred_fallthru
            _
          // Predicated region
          $region25: #{custom-call.83} parent=19 // pred_check
            _
          $region26: #{custom-call.83} parent=19 // pred_check_branch
            %62 = sbr.rel (0) target = $region28
          $region27: #{custom-call.83} parent=19 // pred_region
            %s64 = ssub.s32 16, 1
            loop: start=0, step=1, limit=1
            $region29: #{custom-call.83} parent=27 // loop_pre_header
              _
            $region30: #{custom-call.83} parent=27 // loop_header
              %s66 = sphi 0, %s70
              %p67 = scmp.ge.s32.totalorder %s66, 1
              %s71 = sphi %s56, %s56
              %s72 = sphi %s51, %s51
            $region31: #{custom-call.83} parent=27 // loop_header_branch
              %69 = sbr.rel (%p67) target = $region35
            $region32: #{custom-call.83} parent=27 // loop_body
              %v73 = vld [vmem:[%s71] sm:%s64]
              %74 = vst [vmem:[%s72] sm:%s64] %v73
            $region33: #{custom-call.83} parent=27 // loop_footer
              %s70 = sadd.s32 1, %s66
            $region34: #{custom-call.83} parent=27 // loop_footer_branch
              %65 = sbr.rel target = $region30
            $region35: #{custom-call.83} parent=27 // loop_exit
              _
          $region28: #{custom-call.83} parent=19 // pred_fallthru
            _
        $region20: #{custom-call.83} parent=15 // pred_fallthru
          _
        %89 = vnop
      $region16: #{custom-call.83} parent=5 // pred_fallthru
        _
      %p90 = scmp.le.s32.totalorder 1, %s3
      %p91 = scmp.lt.s32.totalorder %s3, 5
      %p92 = pnand %p90, %p91
      %p93 = pneg %p92
      // Predicated region
      $region47: #{custom-call.83} parent=5 // pred_check
        _
      $region48: #{custom-call.83} parent=5 // pred_check_branch
        %95 = sbr.rel (%p92) target = $region50
      $region49: #{custom-call.83} parent=5 // pred_region
        #allocation4 [shape = 'f32[4,4]{1,0}', space=vmem, size = 0x1000, scoped, tag = 'rescaled input a']
        %s96 = ssub.s32 %s3, 1
        %s97 = sand.u32 %s8, 1
        %s98 = sand.u32 %s8, 1
        %s99 = smul.addr %s98, 4
        %s100 = scalar_lea.vmem [#allocation1], %s99
        %s101 = sand.u32 %s8, 1
        %s102 = sand.u32 %s8, 1
        %s103 = smul.addr %s102, 4
        %s104 = scalar_lea.vmem [#allocation1], %s103
        %s105 = sand.u32 %s8, 1
        %s106 = sand.u32 %s8, 1
        %s107 = smul.addr %s106, 4
        %s108 = scalar_lea.vmem [#allocation3], %s107
        %s110 = sshll.u32 1, 4
        %s111 = ssub.s32 %s110, 1
        %v112 = vld [vmem:[%s104] sm:%s111]
        %113 = vst [vmem:[#allocation0] sm:%s111] %v112
        %v114 = vlaneseq
        %v115 = vand.u32 %v114, 127
        %vm116 = vcmp.lt.s32.totalorder %v115, 4
        %v117 = vlaneseq
        %v118 = vshrl.u32 %v117, 7
        %vm120 = vcmp.eq.s32.totalorder %v118, %v115
        %v121 = vld [vmem:[#allocation0] sm:$0xff]
        %v122 = vsel %vm120, %v121, 0.0
        %123 = vadd.xlane.f32.xlu0 %v122
        %v124 = vpop.xlane.xlu0 %123
        %vm125 = vcmp.ge.s32.totalorder %v118, %v115
        %vm126 = vmand %vm125, %vm116
        %v127 = vsel %vm126, %v121, 0.0
        %v128 = vrcp.pop %v124
        %v129 = vmul.f32 %v127, %v128
        %130 = vst [vmem:[#allocation4] sm:$0xff] %v129
        %v131 = vlaneseq
        %v132 = vand.u32 %v131, 127
        %v133 = vlaneseq
        %v134 = vshrl.u32 %v133, 7
        %vm136 = vcmp.eq.s32.totalorder %v132, %v134
        %v137 = vlaneseq
        %v138 = vand.u32 %v137, 127
        %vm139 = vcmp.eq.s32.totalorder %v138, 0
        %v140 = vsel %vm139, 1.0, -1.0
        %v141 = vsel %vm136, %v140, 0.0
        %s142 = scalar_lea.vmem [#allocation4], 1
        %v143 = vld [vmem:[%s142] ss:$0 sm:$0xff]
        %v144 = vxor.u32 %v143, 2147483648
        %v145 = vlaneseq
        %v146 = vand.u32 %v145, 127
        %vm147 = vcmp.eq.s32.totalorder %v146, 1
        %v148 = vmul.f32 %v144, %v141
        %149 = vadd.xlane.f32.xlu0 %v148
        %v150 = vpop.xlane.xlu0 %149
        %v151 = vsel %vm147, %v150, %v141
        %s152 = scalar_lea.vmem [#allocation4], 2
        %v153 = vld [vmem:[%s152] ss:$0 sm:$0xff]
        %v154 = vxor.u32 %v153, 2147483648
        %v155 = vlaneseq
        %v156 = vand.u32 %v155, 127
        %vm157 = vcmp.eq.s32.totalorder %v156, 2
        %v158 = vmul.f32 %v154, %v151
        %159 = vadd.xlane.f32.xlu0 %v158
        %v160 = vpop.xlane.xlu0 %159
        %v161 = vsel %vm157, %v160, %v151
        %s162 = scalar_lea.vmem [#allocation4], 3
        %v163 = vld [vmem:[%s162] ss:$0 sm:$0xff]
        %v164 = vxor.u32 %v163, 2147483648
        %v165 = vlaneseq
        %v166 = vand.u32 %v165, 127
        %vm167 = vcmp.eq.s32.totalorder %v166, 3
        %v168 = vmul.f32 %v164, %v161
        %169 = vadd.xlane.f32.xlu0 %v168
        %v170 = vpop.xlane.xlu0 %169
        %v171 = vsel %vm167, %v170, %v161
        %v172 = vrcp.pop %v124
        %v173 = vmul.f32 %v171, %v172
        %vm174 = vweird.f32 %v124
        %v175 = vsel %vm174, %v171, %v173
        %176 = vst [vmem:[#allocation2] sm:$0xff] %v175
        %s178 = sshll.u32 1, 4
        %s179 = ssub.s32 %s178, 1
        %v181 = vld [vmem:[#allocation2] sm:%s179]
        %s182 = sshll.u32 1, 4
        %s183 = ssub.s32 %s182, 1
        %184 = vst [vmem:[%s108] sm:%s183] %v181
        %s185 = sand.u32 %s8, 1
        %s186 = sand.u32 %s8, 1
        %s187 = smul.addr %s186, 4
        %s188 = scalar_lea.vmem [#allocation3], %s187
        %s189 = sadd.s32 %s17, %s16
        %s190 = sadd.s32 %s189, %s15
        %s191 = sadd.s32 %s190, %s14
        %s192 = smul.addr %s191, 4
        %s193 = scalar_lea.vmem %s1, %s192
        // Predicated region
        $region51: #{custom-call.83} parent=49 // pred_check
          _
        $region52: #{custom-call.83} parent=49 // pred_check_branch
          %195 = sbr.rel (0) target = $region54
        $region53: #{custom-call.83} parent=49 // pred_region
          // Predicated region
          $region55: #{custom-call.83} parent=53 // pred_check
            _
          $region56: #{custom-call.83} parent=53 // pred_check_branch
            %197 = sbr.rel target = $region58
          $region57: #{custom-call.83} parent=53 // pred_region
            // Predicated region
            $region70: #{custom-call.83} parent=57 // pred_check
              _
            $region71: #{custom-call.83} parent=57 // pred_check_branch
              %213 = sbr.rel (0) target = $region73
            $region72: #{custom-call.83} parent=57 // pred_region
              %s215 = ssub.s32 16, 1
              loop: start=0, step=1, limit=1
              $region74: #{custom-call.83} parent=72 // loop_pre_header
                _
              $region75: #{custom-call.83} parent=72 // loop_header
                %s217 = sphi 0, %s221
                %p218 = scmp.ge.s32.totalorder %s217, 1
                %s222 = sphi %s188, %s188
                %s223 = sphi %s193, %s193
              $region76: #{custom-call.83} parent=72 // loop_header_branch
                %220 = sbr.rel (%p218) target = $region80
              $region77: #{custom-call.83} parent=72 // loop_body
                %v224 = vld [vmem:[%s222] sm:%s215]
                %225 = vst [vmem:[%s223] sm:%s215] %v224
              $region78: #{custom-call.83} parent=72 // loop_footer
                %s221 = sadd.s32 1, %s217
              $region79: #{custom-call.83} parent=72 // loop_footer_branch
                %216 = sbr.rel target = $region75
              $region80: #{custom-call.83} parent=72 // loop_exit
                _
            $region73: #{custom-call.83} parent=57 // pred_fallthru
              _
          $region58: #{custom-call.83} parent=53 // pred_fallthru
            _
          // Predicated region
          $region59: #{custom-call.83} parent=53 // pred_check
            _
          $region60: #{custom-call.83} parent=53 // pred_check_branch
            %199 = sbr.rel (0) target = $region62
          $region61: #{custom-call.83} parent=53 // pred_region
            %s201 = ssub.s32 16, 1
            loop: start=0, step=1, limit=1
            $region63: #{custom-call.83} parent=61 // loop_pre_header
              _
            $region64: #{custom-call.83} parent=61 // loop_header
              %s203 = sphi 0, %s207
              %p204 = scmp.ge.s32.totalorder %s203, 1
              %s208 = sphi %s188, %s188
              %s209 = sphi %s193, %s193
            $region65: #{custom-call.83} parent=61 // loop_header_branch
              %206 = sbr.rel (%p204) target = $region69
            $region66: #{custom-call.83} parent=61 // loop_body
              %v210 = vld [vmem:[%s208] sm:%s201]
              %211 = vst [vmem:[%s209] sm:%s201] %v210
            $region67: #{custom-call.83} parent=61 // loop_footer
              %s207 = sadd.s32 1, %s203
            $region68: #{custom-call.83} parent=61 // loop_footer_branch
              %202 = sbr.rel target = $region64
            $region69: #{custom-call.83} parent=61 // loop_exit
              _
          $region62: #{custom-call.83} parent=53 // pred_fallthru
            _
        $region54: #{custom-call.83} parent=49 // pred_fallthru
          _
        %226 = vnop
      $region50: #{custom-call.83} parent=5 // pred_fallthru
        _
      %p227 = scmp.le.s32.totalorder 2, %s3
      // Predicated region
      $region81: #{custom-call.83} parent=5 // pred_check
        %p228 = pneg %p227
      $region82: #{custom-call.83} parent=5 // pred_check_branch
        %230 = sbr.rel (%p228) target = $region84
      $region83: #{custom-call.83} parent=5 // pred_region
        %s231 = ssub.s32 %s3, 2
        %s232 = sand.u32 %s9, 1
        %s233 = sand.u32 %s9, 1
        %s234 = smul.addr %s233, 4
        %s235 = scalar_lea.vmem [#allocation3], %s234
      $region84: #{custom-call.83} parent=5 // pred_fallthru
        _
    $region6: #{custom-call.83} parent=1 // loop_footer
      %s7 = sadd.s32 1, %s3
    $region7: #{custom-call.83} parent=1 // loop_footer_branch
      %2 = sbr.rel target = $region3
    $region8: #{custom-call.83} parent=1 // loop_exit
      _

// kernel: custom-call.82
$region0: #{custom-call.82}
  %s0 = inlined_call_operand.vmem [shape: f32[4,1,4,4], index: 0, kind: input, shape index: {}]
  %s1 = inlined_call_operand.vmem [shape: f32[4,1,4,4], index: 1, kind: output, shape index: {}]
  $region1: #{custom-call.82} parent=0
    #allocation0 [shape = 'u8[4096]{0}', space=vmem, size = 0x1000, scoped, tag = 'operand span for operand 0']
    #allocation1 [shape = 'u8[4096]{0}', space=vmem, size = 0x1000, scoped, tag = 'packed  for operand 0']
    #allocation2 [shape = 'u8[4096]{0}', space=vmem, size = 0x1000, scoped, tag = 'operand span for operand 1']
    #allocation3 [shape = 'u8[4096]{0}', space=vmem, size = 0x1000, scoped, tag = 'packed  for operand 1']
    loop: start=0, step=1, limit=6
    $region2: #{custom-call.82} parent=1 // loop_pre_header
      _
    $region3: #{custom-call.82} parent=1 // loop_header
      %s3 = sphi 0, %s7
      %p4 = scmp.ge.s32.totalorder %s3, 6
      %s10 = sphi 0, %s36
      %s11 = sphi 0, %s32
      %s12 = sphi 0, %s28
      %s13 = sphi 0, %s24
      %s14 = sphi 0, %s10
      %s15 = sphi 0, %s11
      %s16 = sphi 0, %s12
      %s17 = sphi 0, %s13
      %s18 = sphi 0, %s14
      %s19 = sphi 0, %s15
      %s20 = sphi 0, %s16
      %s21 = sphi 0, %s17
    $region4: #{custom-call.82} parent=1 // loop_header_branch
      %6 = sbr.rel (%p4) target = $region8
    $region5: #{custom-call.82} parent=1 // loop_body
      %s8 = ssub.s32 %s3, 1
      %s9 = ssub.s32 %s3, 2
      %s22 = sadd.s32 1, %s13
      %p23 = scmp.ge.s32.totalorder %s22, 1
      %s24 = scalar_select %p23, 0, %s22
      %s25 = sadd.s32 1, %s12
      %s26 = scalar_select %p23, %s25, %s12
      %p27 = scmp.ge.s32.totalorder %s26, 1
      %s28 = scalar_select %p27, 0, %s26
      %s29 = sadd.s32 1, %s11
      %s30 = scalar_select %p27, %s29, %s11
      %p31 = scmp.ge.s32.totalorder %s30, 1
      %s32 = scalar_select %p31, 0, %s30
      %s33 = sadd.s32 1, %s10
      %s34 = scalar_select %p31, %s33, %s10
      %p35 = scmp.ge.s32.totalorder %s34, 4
      %s36 = scalar_select %p35, 0, %s34
      %p37 = scmp.le.s32.totalorder 1, %s3
      %p38 = scmp.lt.s32.totalorder %s3, 5
      %p39 = pnand %p37, %p38
      %p40 = pneg %p39
      // Predicated region
      $region9: #{custom-call.82} parent=5 // pred_check
        _
      $region10: #{custom-call.82} parent=5 // pred_check_branch
        %42 = sbr.rel (%p39) target = $region12
      $region11: #{custom-call.82} parent=5 // pred_region
        %s43 = ssub.s32 %s3, 1
      $region12: #{custom-call.82} parent=5 // pred_fallthru
        _
      %p44 = scmp.lt.s32.totalorder %s3, 4
      // Predicated region
      $region13: #{custom-call.82} parent=5 // pred_check
        %p45 = pneg %p44
      $region14: #{custom-call.82} parent=5 // pred_check_branch
        %47 = sbr.rel (%p45) target = $region16
      $region15: #{custom-call.82} parent=5 // pred_region
        %s48 = sand.u32 %s3, 1
        %s49 = sand.u32 %s3, 1
        %s50 = smul.addr %s49, 4
        %s51 = scalar_lea.vmem [#allocation1], %s50
        %s52 = sadd.s32 %s13, %s12
        %s53 = sadd.s32 %s52, %s11
        %s54 = sadd.s32 %s53, %s10
        %s55 = smul.addr %s54, 4
        %s56 = scalar_lea.vmem %s0, %s55
        // Predicated region
        $region17: #{custom-call.82} parent=15 // pred_check
          _
        $region18: #{custom-call.82} parent=15 // pred_check_branch
          %58 = sbr.rel (0) target = $region20
        $region19: #{custom-call.82} parent=15 // pred_region
          // Predicated region
          $region21: #{custom-call.82} parent=19 // pred_check
            _
          $region22: #{custom-call.82} parent=19 // pred_check_branch
            %60 = sbr.rel target = $region24
          $region23: #{custom-call.82} parent=19 // pred_region
            // Predicated region
            $region36: #{custom-call.82} parent=23 // pred_check
              _
            $region37: #{custom-call.82} parent=23 // pred_check_branch
              %76 = sbr.rel (0) target = $region39
            $region38: #{custom-call.82} parent=23 // pred_region
              %s78 = ssub.s32 16, 1
              loop: start=0, step=1, limit=1
              $region40: #{custom-call.82} parent=38 // loop_pre_header
                _
              $region41: #{custom-call.82} parent=38 // loop_header
                %s80 = sphi 0, %s84
                %p81 = scmp.ge.s32.totalorder %s80, 1
                %s85 = sphi %s56, %s56
                %s86 = sphi %s51, %s51
              $region42: #{custom-call.82} parent=38 // loop_header_branch
                %83 = sbr.rel (%p81) target = $region46
              $region43: #{custom-call.82} parent=38 // loop_body
                %v87 = vld [vmem:[%s85] sm:%s78]
                %88 = vst [vmem:[%s86] sm:%s78] %v87
              $region44: #{custom-call.82} parent=38 // loop_footer
                %s84 = sadd.s32 1, %s80
              $region45: #{custom-call.82} parent=38 // loop_footer_branch
                %79 = sbr.rel target = $region41
              $region46: #{custom-call.82} parent=38 // loop_exit
                _
            $region39: #{custom-call.82} parent=23 // pred_fallthru
              _
          $region24: #{custom-call.82} parent=19 // pred_fallthru
            _
          // Predicated region
          $region25: #{custom-call.82} parent=19 // pred_check
            _
          $region26: #{custom-call.82} parent=19 // pred_check_branch
            %62 = sbr.rel (0) target = $region28
          $region27: #{custom-call.82} parent=19 // pred_region
            %s64 = ssub.s32 16, 1
            loop: start=0, step=1, limit=1
            $region29: #{custom-call.82} parent=27 // loop_pre_header
              _
            $region30: #{custom-call.82} parent=27 // loop_header
              %s66 = sphi 0, %s70
              %p67 = scmp.ge.s32.totalorder %s66, 1
              %s71 = sphi %s56, %s56
              %s72 = sphi %s51, %s51
            $region31: #{custom-call.82} parent=27 // loop_header_branch
              %69 = sbr.rel (%p67) target = $region35
            $region32: #{custom-call.82} parent=27 // loop_body
              %v73 = vld [vmem:[%s71] sm:%s64]
              %74 = vst [vmem:[%s72] sm:%s64] %v73
            $region33: #{custom-call.82} parent=27 // loop_footer
              %s70 = sadd.s32 1, %s66
            $region34: #{custom-call.82} parent=27 // loop_footer_branch
              %65 = sbr.rel target = $region30
            $region35: #{custom-call.82} parent=27 // loop_exit
              _
          $region28: #{custom-call.82} parent=19 // pred_fallthru
            _
        $region20: #{custom-call.82} parent=15 // pred_fallthru
          _
        %89 = vnop
      $region16: #{custom-call.82} parent=5 // pred_fallthru
        _
      %p90 = scmp.le.s32.totalorder 1, %s3
      %p91 = scmp.lt.s32.totalorder %s3, 5
      %p92 = pnand %p90, %p91
      %p93 = pneg %p92
      // Predicated region
      $region47: #{custom-call.82} parent=5 // pred_check
        _
      $region48: #{custom-call.82} parent=5 // pred_check_branch
        %95 = sbr.rel (%p92) target = $region50
      $region49: #{custom-call.82} parent=5 // pred_region
        #allocation4 [shape = 'f32[4,4]{1,0}', space=vmem, size = 0x1000, scoped, tag = 'rescaled input a']
        %s96 = ssub.s32 %s3, 1
        %s97 = sand.u32 %s8, 1
        %s98 = sand.u32 %s8, 1
        %s99 = smul.addr %s98, 4
        %s100 = scalar_lea.vmem [#allocation1], %s99
        %s101 = sand.u32 %s8, 1
        %s102 = sand.u32 %s8, 1
        %s103 = smul.addr %s102, 4
        %s104 = scalar_lea.vmem [#allocation1], %s103
        %s105 = sand.u32 %s8, 1
        %s106 = sand.u32 %s8, 1
        %s107 = smul.addr %s106, 4
        %s108 = scalar_lea.vmem [#allocation3], %s107
        %s110 = sshll.u32 1, 4
        %s111 = ssub.s32 %s110, 1
        %v112 = vld [vmem:[%s104] sm:%s111]
        %113 = vst [vmem:[#allocation0] sm:%s111] %v112
        %v114 = vlaneseq
        %v115 = vand.u32 %v114, 127
        %vm116 = vcmp.lt.s32.totalorder %v115, 4
        %v117 = vlaneseq
        %v118 = vshrl.u32 %v117, 7
        %vm120 = vcmp.eq.s32.totalorder %v118, %v115
        %v121 = vld [vmem:[#allocation0] sm:$0xff]
        %v122 = vsel %vm120, %v121, 0.0
        %123 = vadd.xlane.f32.xlu0 %v122
        %v124 = vpop.xlane.xlu0 %123
        %vm125 = vcmp.le.s32.totalorder %v118, %v115
        %vm126 = vmand %vm125, %vm116
        %v127 = vsel %vm126, %v121, 0.0
        %v128 = vrcp.pop %v124
        %v129 = vmul.f32 %v127, %v128
        %130 = vst [vmem:[#allocation4] sm:$0xff] %v129
        %v131 = vlaneseq
        %v132 = vand.u32 %v131, 127
        %v133 = vlaneseq
        %v134 = vshrl.u32 %v133, 7
        %vm136 = vcmp.eq.s32.totalorder %v132, %v134
        %v137 = vlaneseq
        %v138 = vand.u32 %v137, 127
        %vm139 = vcmp.eq.s32.totalorder %v138, 3
        %v140 = vsel %vm139, 1.0, -1.0
        %v141 = vsel %vm136, %v140, 0.0
        %s142 = scalar_lea.vmem [#allocation4], 2
        %v143 = vld [vmem:[%s142] ss:$0 sm:$0xff]
        %v144 = vxor.u32 %v143, 2147483648
        %v145 = vlaneseq
        %v146 = vand.u32 %v145, 127
        %vm147 = vcmp.eq.s32.totalorder %v146, 2
        %v148 = vmul.f32 %v144, %v141
        %149 = vadd.xlane.f32.xlu0 %v148
        %v150 = vpop.xlane.xlu0 %149
        %v151 = vsel %vm147, %v150, %v141
        %s152 = scalar_lea.vmem [#allocation4], 1
        %v153 = vld [vmem:[%s152] ss:$0 sm:$0xff]
        %v154 = vxor.u32 %v153, 2147483648
        %v155 = vlaneseq
        %v156 = vand.u32 %v155, 127
        %vm157 = vcmp.eq.s32.totalorder %v156, 1
        %v158 = vmul.f32 %v154, %v151
        %159 = vadd.xlane.f32.xlu0 %v158
        %v160 = vpop.xlane.xlu0 %159
        %v161 = vsel %vm157, %v160, %v151
        %v162 = vld [vmem:[#allocation4] ss:$0 sm:$0xff]
        %v163 = vxor.u32 %v162, 2147483648
        %v164 = vlaneseq
        %v165 = vand.u32 %v164, 127
        %vm166 = vcmp.eq.s32.totalorder %v165, 0
        %v167 = vmul.f32 %v163, %v161
        %168 = vadd.xlane.f32.xlu0 %v167
        %v169 = vpop.xlane.xlu0 %168
        %v170 = vsel %vm166, %v169, %v161
        %v171 = vrcp.pop %v124
        %v172 = vmul.f32 %v170, %v171
        %vm173 = vweird.f32 %v124
        %v174 = vsel %vm173, %v170, %v172
        %175 = vst [vmem:[#allocation2] sm:$0xff] %v174
        %s177 = sshll.u32 1, 4
        %s178 = ssub.s32 %s177, 1
        %v180 = vld [vmem:[#allocation2] sm:%s178]
        %s181 = sshll.u32 1, 4
        %s182 = ssub.s32 %s181, 1
        %183 = vst [vmem:[%s108] sm:%s182] %v180
        %s184 = sand.u32 %s8, 1
        %s185 = sand.u32 %s8, 1
        %s186 = smul.addr %s185, 4
        %s187 = scalar_lea.vmem [#allocation3], %s186
        %s188 = sadd.s32 %s17, %s16
        %s189 = sadd.s32 %s188, %s15
        %s190 = sadd.s32 %s189, %s14
        %s191 = smul.addr %s190, 4
        %s192 = scalar_lea.vmem %s1, %s191
        // Predicated region
        $region51: #{custom-call.82} parent=49 // pred_check
          _
        $region52: #{custom-call.82} parent=49 // pred_check_branch
          %194 = sbr.rel (0) target = $region54
        $region53: #{custom-call.82} parent=49 // pred_region
          // Predicated region
          $region55: #{custom-call.82} parent=53 // pred_check
            _
          $region56: #{custom-call.82} parent=53 // pred_check_branch
            %196 = sbr.rel target = $region58
          $region57: #{custom-call.82} parent=53 // pred_region
            // Predicated region
            $region70: #{custom-call.82} parent=57 // pred_check
              _
            $region71: #{custom-call.82} parent=57 // pred_check_branch
              %212 = sbr.rel (0) target = $region73
            $region72: #{custom-call.82} parent=57 // pred_region
              %s214 = ssub.s32 16, 1
              loop: start=0, step=1, limit=1
              $region74: #{custom-call.82} parent=72 // loop_pre_header
                _
              $region75: #{custom-call.82} parent=72 // loop_header
                %s216 = sphi 0, %s220
                %p217 = scmp.ge.s32.totalorder %s216, 1
                %s221 = sphi %s187, %s187
                %s222 = sphi %s192, %s192
              $region76: #{custom-call.82} parent=72 // loop_header_branch
                %219 = sbr.rel (%p217) target = $region80
              $region77: #{custom-call.82} parent=72 // loop_body
                %v223 = vld [vmem:[%s221] sm:%s214]
                %224 = vst [vmem:[%s222] sm:%s214] %v223
              $region78: #{custom-call.82} parent=72 // loop_footer
                %s220 = sadd.s32 1, %s216
              $region79: #{custom-call.82} parent=72 // loop_footer_branch
                %215 = sbr.rel target = $region75
              $region80: #{custom-call.82} parent=72 // loop_exit
                _
            $region73: #{custom-call.82} parent=57 // pred_fallthru
              _
          $region58: #{custom-call.82} parent=53 // pred_fallthru
            _
          // Predicated region
          $region59: #{custom-call.82} parent=53 // pred_check
            _
          $region60: #{custom-call.82} parent=53 // pred_check_branch
            %198 = sbr.rel (0) target = $region62
          $region61: #{custom-call.82} parent=53 // pred_region
            %s200 = ssub.s32 16, 1
            loop: start=0, step=1, limit=1
            $region63: #{custom-call.82} parent=61 // loop_pre_header
              _
            $region64: #{custom-call.82} parent=61 // loop_header
              %s202 = sphi 0, %s206
              %p203 = scmp.ge.s32.totalorder %s202, 1
              %s207 = sphi %s187, %s187
              %s208 = sphi %s192, %s192
            $region65: #{custom-call.82} parent=61 // loop_header_branch
              %205 = sbr.rel (%p203) target = $region69
            $region66: #{custom-call.82} parent=61 // loop_body
              %v209 = vld [vmem:[%s207] sm:%s200]
              %210 = vst [vmem:[%s208] sm:%s200] %v209
            $region67: #{custom-call.82} parent=61 // loop_footer
              %s206 = sadd.s32 1, %s202
            $region68: #{custom-call.82} parent=61 // loop_footer_branch
              %201 = sbr.rel target = $region64
            $region69: #{custom-call.82} parent=61 // loop_exit
              _
          $region62: #{custom-call.82} parent=53 // pred_fallthru
            _
        $region54: #{custom-call.82} parent=49 // pred_fallthru
          _
        %225 = vnop
      $region50: #{custom-call.82} parent=5 // pred_fallthru
        _
      %p226 = scmp.le.s32.totalorder 2, %s3
      // Predicated region
      $region81: #{custom-call.82} parent=5 // pred_check
        %p227 = pneg %p226
      $region82: #{custom-call.82} parent=5 // pred_check_branch
        %229 = sbr.rel (%p227) target = $region84
      $region83: #{custom-call.82} parent=5 // pred_region
        %s230 = ssub.s32 %s3, 2
        %s231 = sand.u32 %s9, 1
        %s232 = sand.u32 %s9, 1
        %s233 = smul.addr %s232, 4
        %s234 = scalar_lea.vmem [#allocation3], %s233
      $region84: #{custom-call.82} parent=5 // pred_fallthru
        _
    $region6: #{custom-call.82} parent=1 // loop_footer
      %s7 = sadd.s32 1, %s3
    $region7: #{custom-call.82} parent=1 // loop_footer_branch
      %2 = sbr.rel target = $region3
    $region8: #{custom-call.82} parent=1 // loop_exit
      _

// kernel: custom-call.86
$region0: #{custom-call.86}
  %s0 = inlined_call_operand.vmem [shape: f32[4,4,4], index: 0, kind: input, shape index: {}]
  %s1 = inlined_call_operand.vmem [shape: f32[4,4,4], index: 1, kind: output, shape index: {}]
  $region1: #{custom-call.86} parent=0
    #allocation0 [shape = 'u8[4096]{0}', space=vmem, size = 0x1000, scoped, tag = 'operand span for operand 0']
    #allocation1 [shape = 'u8[4096]{0}', space=vmem, size = 0x1000, scoped, tag = 'packed  for operand 0']
    #allocation2 [shape = 'u8[4096]{0}', space=vmem, size = 0x1000, scoped, tag = 'operand span for operand 1']
    #allocation3 [shape = 'u8[4096]{0}', space=vmem, size = 0x1000, scoped, tag = 'packed  for operand 1']
    loop: start=0, step=1, limit=6
    $region2: #{custom-call.86} parent=1 // loop_pre_header
      _
    $region3: #{custom-call.86} parent=1 // loop_header
      %s3 = sphi 0, %s7
      %p4 = scmp.ge.s32.totalorder %s3, 6
      %s10 = sphi 0, %s29
      %s11 = sphi 0, %s25
      %s12 = sphi 0, %s21
      %s13 = sphi 0, %s10
      %s14 = sphi 0, %s11
      %s15 = sphi 0, %s12
      %s16 = sphi 0, %s13
      %s17 = sphi 0, %s14
      %s18 = sphi 0, %s15
    $region4: #{custom-call.86} parent=1 // loop_header_branch
      %6 = sbr.rel (%p4) target = $region8
    $region5: #{custom-call.86} parent=1 // loop_body
      %s8 = ssub.s32 %s3, 1
      %s9 = ssub.s32 %s3, 2
      %s19 = sadd.s32 1, %s12
      %p20 = scmp.ge.s32.totalorder %s19, 1
      %s21 = scalar_select %p20, 0, %s19
      %s22 = sadd.s32 1, %s11
      %s23 = scalar_select %p20, %s22, %s11
      %p24 = scmp.ge.s32.totalorder %s23, 1
      %s25 = scalar_select %p24, 0, %s23
      %s26 = sadd.s32 1, %s10
      %s27 = scalar_select %p24, %s26, %s10
      %p28 = scmp.ge.s32.totalorder %s27, 4
      %s29 = scalar_select %p28, 0, %s27
      %p30 = scmp.le.s32.totalorder 1, %s3
      %p31 = scmp.lt.s32.totalorder %s3, 5
      %p32 = pnand %p30, %p31
      %p33 = pneg %p32
      // Predicated region
      $region9: #{custom-call.86} parent=5 // pred_check
        _
      $region10: #{custom-call.86} parent=5 // pred_check_branch
        %35 = sbr.rel (%p32) target = $region12
      $region11: #{custom-call.86} parent=5 // pred_region
        %s36 = ssub.s32 %s3, 1
      $region12: #{custom-call.86} parent=5 // pred_fallthru
        _
      %p37 = scmp.lt.s32.totalorder %s3, 4
      // Predicated region
      $region13: #{custom-call.86} parent=5 // pred_check
        %p38 = pneg %p37
      $region14: #{custom-call.86} parent=5 // pred_check_branch
        %40 = sbr.rel (%p38) target = $region16
      $region15: #{custom-call.86} parent=5 // pred_region
        %s41 = sand.u32 %s3, 1
        %s42 = sand.u32 %s3, 1
        %s43 = smul.addr %s42, 4
        %s44 = scalar_lea.vmem [#allocation1], %s43
        %s45 = sadd.s32 %s12, %s11
        %s46 = sadd.s32 %s45, %s10
        %s47 = smul.addr %s46, 4
        %s48 = scalar_lea.vmem %s0, %s47
        // Predicated region
        $region17: #{custom-call.86} parent=15 // pred_check
          _
        $region18: #{custom-call.86} parent=15 // pred_check_branch
          %50 = sbr.rel (0) target = $region20
        $region19: #{custom-call.86} parent=15 // pred_region
          // Predicated region
          $region21: #{custom-call.86} parent=19 // pred_check
            _
          $region22: #{custom-call.86} parent=19 // pred_check_branch
            %52 = sbr.rel target = $region24
          $region23: #{custom-call.86} parent=19 // pred_region
            // Predicated region
            $region36: #{custom-call.86} parent=23 // pred_check
              _
            $region37: #{custom-call.86} parent=23 // pred_check_branch
              %68 = sbr.rel (0) target = $region39
            $region38: #{custom-call.86} parent=23 // pred_region
              %s70 = ssub.s32 16, 1
              loop: start=0, step=1, limit=1
              $region40: #{custom-call.86} parent=38 // loop_pre_header
                _
              $region41: #{custom-call.86} parent=38 // loop_header
                %s72 = sphi 0, %s76
                %p73 = scmp.ge.s32.totalorder %s72, 1
                %s77 = sphi %s48, %s48
                %s78 = sphi %s44, %s44
              $region42: #{custom-call.86} parent=38 // loop_header_branch
                %75 = sbr.rel (%p73) target = $region46
              $region43: #{custom-call.86} parent=38 // loop_body
                %v79 = vld [vmem:[%s77] sm:%s70]
                %80 = vst [vmem:[%s78] sm:%s70] %v79
              $region44: #{custom-call.86} parent=38 // loop_footer
                %s76 = sadd.s32 1, %s72
              $region45: #{custom-call.86} parent=38 // loop_footer_branch
                %71 = sbr.rel target = $region41
              $region46: #{custom-call.86} parent=38 // loop_exit
                _
            $region39: #{custom-call.86} parent=23 // pred_fallthru
              _
          $region24: #{custom-call.86} parent=19 // pred_fallthru
            _
          // Predicated region
          $region25: #{custom-call.86} parent=19 // pred_check
            _
          $region26: #{custom-call.86} parent=19 // pred_check_branch
            %54 = sbr.rel (0) target = $region28
          $region27: #{custom-call.86} parent=19 // pred_region
            %s56 = ssub.s32 16, 1
            loop: start=0, step=1, limit=1
            $region29: #{custom-call.86} parent=27 // loop_pre_header
              _
            $region30: #{custom-call.86} parent=27 // loop_header
              %s58 = sphi 0, %s62
              %p59 = scmp.ge.s32.totalorder %s58, 1
              %s63 = sphi %s48, %s48
              %s64 = sphi %s44, %s44
            $region31: #{custom-call.86} parent=27 // loop_header_branch
              %61 = sbr.rel (%p59) target = $region35
            $region32: #{custom-call.86} parent=27 // loop_body
              %v65 = vld [vmem:[%s63] sm:%s56]
              %66 = vst [vmem:[%s64] sm:%s56] %v65
            $region33: #{custom-call.86} parent=27 // loop_footer
              %s62 = sadd.s32 1, %s58
            $region34: #{custom-call.86} parent=27 // loop_footer_branch
              %57 = sbr.rel target = $region30
            $region35: #{custom-call.86} parent=27 // loop_exit
              _
          $region28: #{custom-call.86} parent=19 // pred_fallthru
            _
        $region20: #{custom-call.86} parent=15 // pred_fallthru
          _
        %81 = vnop
      $region16: #{custom-call.86} parent=5 // pred_fallthru
        _
      %p82 = scmp.le.s32.totalorder 1, %s3
      %p83 = scmp.lt.s32.totalorder %s3, 5
      %p84 = pnand %p82, %p83
      %p85 = pneg %p84
      // Predicated region
      $region47: #{custom-call.86} parent=5 // pred_check
        _
      $region48: #{custom-call.86} parent=5 // pred_check_branch
        %87 = sbr.rel (%p84) target = $region50
      $region49: #{custom-call.86} parent=5 // pred_region
        %s88 = ssub.s32 %s3, 1
        %s89 = sand.u32 %s8, 1
        %s90 = sand.u32 %s8, 1
        %s91 = smul.addr %s90, 4
        %s92 = scalar_lea.vmem [#allocation1], %s91
        %s93 = sand.u32 %s8, 1
        %s94 = sand.u32 %s8, 1
        %s95 = smul.addr %s94, 4
        %s96 = scalar_lea.vmem [#allocation1], %s95
        %s97 = sand.u32 %s8, 1
        %s98 = sand.u32 %s8, 1
        %s99 = smul.addr %s98, 4
        %s100 = scalar_lea.vmem [#allocation3], %s99
        %s102 = sshll.u32 1, 4
        %s103 = ssub.s32 %s102, 1
        %v104 = vld [vmem:[%s96] sm:%s103]
        %105 = vst [vmem:[#allocation0] sm:%s103] %v104
        %106 = vst [vmem:[#allocation2] sm:$0xff] 0.0
        %vm107 = vcmask 7168
        %v108 = vld [vmem:[#allocation2] ss:$0 sm:$0xff]
        %v109 = vld [vmem:[#allocation0] ss:$0 sm:$0xff]
        %v110 = vmul.f32 %v108, %v108
        %111 = vadd.xlane.f32.xlu0 %v110
        %v112 = vpop.xlane.xlu0 %111
        %v113 = vsub.f32 %v109, %v112
        %v114 = vrsqrt.pop %v113
        %v115 = vld [vmem:[#allocation0] sm:$0xff]
        %v116 = vld [vmem:[#allocation2] sm:$0xff]
        %v117 = vmul.f32 %v116, %v108
        %118 = vadd.xlane.f32.xlu0 %v117
        %v119 = vpop.xlane.xlu0 %118
        %v120 = vsub.f32 %v115, %v119
        %v121 = vmul.f32 %v120, %v114
        %v122 = vsel %vm107, %v121, 0.0
        %v123 = vadd.f32 %v116, %v122
        %124 = vst [vmem:[#allocation2] sm:$0xff] %v123
        %vm125 = vcmask 15368
        %s126 = scalar_lea.vmem [#allocation2], 1
        %v127 = vld [vmem:[%s126] ss:$0 sm:$0xff]
        %s128 = scalar_lea.vmem [#allocation0], 1
        %v129 = vld [vmem:[%s128] ss:$0 sm:$0xff]
        %v130 = vmul.f32 %v127, %v127
        %131 = vadd.xlane.f32.xlu0 %v130
        %v132 = vpop.xlane.xlu0 %131
        %v133 = vsub.f32 %v129, %v132
        %v134 = vrsqrt.pop %v133
        %v135 = vld [vmem:[#allocation0] sm:$0xff]
        %v136 = vld [vmem:[#allocation2] sm:$0xff]
        %v137 = vmul.f32 %v136, %v127
        %138 = vadd.xlane.f32.xlu0 %v137
        %v139 = vpop.xlane.xlu0 %138
        %v140 = vsub.f32 %v135, %v139
        %v141 = vmul.f32 %v140, %v134
        %vm142 = vcmask 1047553
        %vm143 = vmand %vm125, %vm142
        %v144 = vsel %vm143, %v141, 0.0
        %v145 = vadd.f32 %v136, %v144
        %146 = vst [vmem:[#allocation2] sm:$0xff] %v145
        %vm147 = vcmask 23568
        %s148 = scalar_lea.vmem [#allocation2], 2
        %v149 = vld [vmem:[%s148] ss:$0 sm:$0xff]
        %s150 = scalar_lea.vmem [#allocation0], 2
        %v151 = vld [vmem:[%s150] ss:$0 sm:$0xff]
        %v152 = vmul.f32 %v149, %v149
        %153 = vadd.xlane.f32.xlu0 %v152
        %v154 = vpop.xlane.xlu0 %153
        %v155 = vsub.f32 %v151, %v154
        %v156 = vrsqrt.pop %v155
        %v157 = vld [vmem:[#allocation0] sm:$0xff]
        %v158 = vld [vmem:[#allocation2] sm:$0xff]
        %v159 = vmul.f32 %v158, %v149
        %160 = vadd.xlane.f32.xlu0 %v159
        %v161 = vpop.xlane.xlu0 %160
        %v162 = vsub.f32 %v157, %v161
        %v163 = vmul.f32 %v162, %v156
        %vm164 = vcmask 1047554
        %vm165 = vmand %vm147, %vm164
        %v166 = vsel %vm165, %v163, 0.0
        %v167 = vadd.f32 %v158, %v166
        %168 = vst [vmem:[#allocation2] sm:$0xff] %v167
        %vm169 = vcmask 31768
        %s170 = scalar_lea.vmem [#allocation2], 3
        %v171 = vld [vmem:[%s170] ss:$0 sm:$0xff]
        %s172 = scalar_lea.vmem [#allocation0], 3
        %v173 = vld [vmem:[%s172] ss:$0 sm:$0xff]
        %v174 = vmul.f32 %v171, %v171
        %175 = vadd.xlane.f32.xlu0 %v174
        %v176 = vpop.xlane.xlu0 %175
        %v177 = vsub.f32 %v173, %v176
        %v178 = vrsqrt.pop %v177
        %v179 = vld [vmem:[#allocation0] sm:$0xff]
        %v180 = vld [vmem:[#allocation2] sm:$0xff]
        %v181 = vmul.f32 %v180, %v171
        %182 = vadd.xlane.f32.xlu0 %v181
        %v183 = vpop.xlane.xlu0 %182
        %v184 = vsub.f32 %v179, %v183
        %v185 = vmul.f32 %v184, %v178
        %vm186 = vcmask 1047555
        %vm187 = vmand %vm169, %vm186
        %v188 = vsel %vm187, %v185, 0.0
        %v189 = vadd.f32 %v180, %v188
        %190 = vst [vmem:[#allocation2] sm:$0xff] %v189
        %s192 = sshll.u32 1, 4
        %s193 = ssub.s32 %s192, 1
        %v195 = vld [vmem:[#allocation2] sm:%s193]
        %s196 = sshll.u32 1, 4
        %s197 = ssub.s32 %s196, 1
        %198 = vst [vmem:[%s100] sm:%s197] %v195
        %s199 = sand.u32 %s8, 1
        %s200 = sand.u32 %s8, 1
        %s201 = smul.addr %s200, 4
        %s202 = scalar_lea.vmem [#allocation3], %s201
        %s203 = sadd.s32 %s15, %s14
        %s204 = sadd.s32 %s203, %s13
        %s205 = smul.addr %s204, 4
        %s206 = scalar_lea.vmem %s1, %s205
        // Predicated region
        $region51: #{custom-call.86} parent=49 // pred_check
          _
        $region52: #{custom-call.86} parent=49 // pred_check_branch
          %208 = sbr.rel (0) target = $region54
        $region53: #{custom-call.86} parent=49 // pred_region
          // Predicated region
          $region55: #{custom-call.86} parent=53 // pred_check
            _
          $region56: #{custom-call.86} parent=53 // pred_check_branch
            %210 = sbr.rel target = $region58
          $region57: #{custom-call.86} parent=53 // pred_region
            // Predicated region
            $region70: #{custom-call.86} parent=57 // pred_check
              _
            $region71: #{custom-call.86} parent=57 // pred_check_branch
              %226 = sbr.rel (0) target = $region73
            $region72: #{custom-call.86} parent=57 // pred_region
              %s228 = ssub.s32 16, 1
              loop: start=0, step=1, limit=1
              $region74: #{custom-call.86} parent=72 // loop_pre_header
                _
              $region75: #{custom-call.86} parent=72 // loop_header
                %s230 = sphi 0, %s234
                %p231 = scmp.ge.s32.totalorder %s230, 1
                %s235 = sphi %s202, %s202
                %s236 = sphi %s206, %s206
              $region76: #{custom-call.86} parent=72 // loop_header_branch
                %233 = sbr.rel (%p231) target = $region80
              $region77: #{custom-call.86} parent=72 // loop_body
                %v237 = vld [vmem:[%s235] sm:%s228]
                %238 = vst [vmem:[%s236] sm:%s228] %v237
              $region78: #{custom-call.86} parent=72 // loop_footer
                %s234 = sadd.s32 1, %s230
              $region79: #{custom-call.86} parent=72 // loop_footer_branch
                %229 = sbr.rel target = $region75
              $region80: #{custom-call.86} parent=72 // loop_exit
                _
            $region73: #{custom-call.86} parent=57 // pred_fallthru
              _
          $region58: #{custom-call.86} parent=53 // pred_fallthru
            _
          // Predicated region
          $region59: #{custom-call.86} parent=53 // pred_check
            _
          $region60: #{custom-call.86} parent=53 // pred_check_branch
            %212 = sbr.rel (0) target = $region62
          $region61: #{custom-call.86} parent=53 // pred_region
            %s214 = ssub.s32 16, 1
            loop: start=0, step=1, limit=1
            $region63: #{custom-call.86} parent=61 // loop_pre_header
              _
            $region64: #{custom-call.86} parent=61 // loop_header
              %s216 = sphi 0, %s220
              %p217 = scmp.ge.s32.totalorder %s216, 1
              %s221 = sphi %s202, %s202
              %s222 = sphi %s206, %s206
            $region65: #{custom-call.86} parent=61 // loop_header_branch
              %219 = sbr.rel (%p217) target = $region69
            $region66: #{custom-call.86} parent=61 // loop_body
              %v223 = vld [vmem:[%s221] sm:%s214]
              %224 = vst [vmem:[%s222] sm:%s214] %v223
            $region67: #{custom-call.86} parent=61 // loop_footer
              %s220 = sadd.s32 1, %s216
            $region68: #{custom-call.86} parent=61 // loop_footer_branch
              %215 = sbr.rel target = $region64
            $region69: #{custom-call.86} parent=61 // loop_exit
              _
          $region62: #{custom-call.86} parent=53 // pred_fallthru
            _
        $region54: #{custom-call.86} parent=49 // pred_fallthru
          _
        %239 = vnop
      $region50: #{custom-call.86} parent=5 // pred_fallthru
        _
      %p240 = scmp.le.s32.totalorder 2, %s3
      // Predicated region
      $region81: #{custom-call.86} parent=5 // pred_check
        %p241 = pneg %p240
      $region82: #{custom-call.86} parent=5 // pred_check_branch
        %243 = sbr.rel (%p241) target = $region84
      $region83: #{custom-call.86} parent=5 // pred_region
        %s244 = ssub.s32 %s3, 2
        %s245 = sand.u32 %s9, 1
        %s246 = sand.u32 %s9, 1
        %s247 = smul.addr %s246, 4
        %s248 = scalar_lea.vmem [#allocation3], %s247
      $region84: #{custom-call.86} parent=5 // pred_fallthru
        _
    $region6: #{custom-call.86} parent=1 // loop_footer
      %s7 = sadd.s32 1, %s3
    $region7: #{custom-call.86} parent=1 // loop_footer_branch
      %2 = sbr.rel target = $region3
    $region8: #{custom-call.86} parent=1 // loop_exit
      _

// kernel: loss_fn.5
$region0: #{loss_fn.5}
  #allocation0 [shape = 'u32[]', space=smem, size = 0x4, offset = 0x4, fixed_abs, tag = 'smem constant byte address 0x4 - core index']
  #allocation1 [shape = 'u32[144,128]{1,0:T(1,128)}', space=vmem, size = 0x12000, scoped, tag = 'internal scratch']
  #allocation2 [shape = 's32[1]{0:T(128)S(6)}', space=smem, size = 0x200, scoped, tag = 'scoped memory for loss_fn.5']
  %s0 = inlined_call_operand.vmem [shape: f32[2], index: 0, kind: input, shape index: {}]
  %s1 = inlined_call_operand.<no memory space> [shape: s32[1], index: 1, kind: input, shape index: {}]
  %s2 = inlined_call_operand.vmem [shape: f32[128,128], index: 2, kind: input, shape index: {}]
  %s3 = inlined_call_operand.vmem [shape: f32[128,128], index: 3, kind: input, shape index: {}]
  %s4 = inlined_call_operand.vmem [shape: f32[1,8,128], index: 4, kind: output, shape index: {}]
  %s5 = sld [smem:[#allocation0]]
  $region42: #{loss_fn.5} parent=0
    _
  %s7 = ssub.s32 1, %s5
  %s8 = scalar_select 0, %s7, %s5
  %9 = sst [smem:[#allocation2]] %s1
  $region1: #{loss_fn.5} parent=0
    #allocation3 [shape = 'u8[512]{0}', space=smem, size = 0x200, scoped, tag = 'input window, operand 0, single buffered']
    #allocation4 [shape = 's32[1]{0}', space=sflag, size = 0x4, scoped, tag = 'scoped memory for loss_fn.5']
    %10 = vsyncpa [#allocation4], 0
    // Predicated region
    $region2: #{loss_fn.5} parent=1 // pred_check
      _
    $region3: #{loss_fn.5} parent=1 // pred_check_branch
      %12 = sbr.rel (0) target = $region5
    $region4: #{loss_fn.5} parent=1 // pred_region
      %s14 = ssub.s32 16, 16
      %15 = vsyncadd [#allocation4], %s14
      %s17 = sshll.u32 %s0, 4
      %s18 = int_to_ptr.vmem [resolvable:$true] %s17
      %20 = dma.vmem_to_smem %s18, 16, [#allocation3], [#allocation4]
    $region5: #{loss_fn.5} parent=1 // pred_fallthru
      _
    // Predicated region
    $region6: #{loss_fn.5} parent=1 // pred_check
      _
    $region7: #{loss_fn.5} parent=1 // pred_check_branch
      %22 = sbr.rel (0) target = $region9
    $region8: #{loss_fn.5} parent=1 // pred_region
      _
    $region9: #{loss_fn.5} parent=1 // pred_fallthru
      _
    // Predicated region
    $region10: #{loss_fn.5} parent=1 // pred_check
      _
    $region11: #{loss_fn.5} parent=1 // pred_check_branch
      %24 = sbr.rel (0) target = $region13
    $region12: #{loss_fn.5} parent=1 // pred_region
      %s25 = sadd.s32 0, 0
      %p26 = scmp.lt.s32.totalorder %s25, 0
      %s27 = scalar_select %p26, %s25, 0
      %s28 = smul.u32 16, %s27
      %p29 = scmp.lt.s32.totalorder %s28, 15
      %s30 = scalar_select %p29, %s28, 15
      %s31 = smul.addr %s30, 8
      %s32 = scalar_lea.vmem %s2, %s31
      %s33 = sadd.s32 0, 0
      %p34 = scmp.lt.s32.totalorder %s33, 0
      %s35 = scalar_select %p34, %s33, 0
      %s36 = smul.u32 16, %s35
    $region13: #{loss_fn.5} parent=1 // pred_fallthru
      _
    // Predicated region
    $region14: #{loss_fn.5} parent=1 // pred_check
      _
    $region15: #{loss_fn.5} parent=1 // pred_check_branch
      %38 = sbr.rel (0) target = $region17
    $region16: #{loss_fn.5} parent=1 // pred_region
      %s39 = sadd.s32 0, 0
      %p40 = scmp.lt.s32.totalorder %s39, 0
      %s41 = scalar_select %p40, %s39, 0
      %s42 = smul.u32 16, %s41
      %p43 = scmp.lt.s32.totalorder %s42, 15
      %s44 = scalar_select %p43, %s42, 15
      %s45 = smul.addr %s44, 8
      %s46 = scalar_lea.vmem %s3, %s45
      %s47 = sadd.s32 0, 0
      %p48 = scmp.lt.s32.totalorder %s47, 0
      %s49 = scalar_select %p48, %s47, 0
      %s50 = smul.u32 16, %s49
    $region17: #{loss_fn.5} parent=1 // pred_fallthru
      _
    // Predicated region
    $region18: #{loss_fn.5} parent=1 // pred_check
      _
    $region19: #{loss_fn.5} parent=1 // pred_check_branch
      %52 = sbr.rel (0) target = $region21
    $region20: #{loss_fn.5} parent=1 // pred_region
      %53 = dma.done [#allocation4], 16
    $region21: #{loss_fn.5} parent=1 // pred_fallthru
      _
    %54 = sfence
    %s55 = sadd.s32 0, 0
    %p56 = scmp.lt.s32.totalorder %s55, 0
    %s57 = scalar_select %p56, %s55, 0
    %s58 = smul.u32 16, %s57
    %p59 = scmp.lt.s32.totalorder %s58, 15
    %s60 = scalar_select %p59, %s58, 15
    %s61 = smul.addr %s60, 8
    %s62 = scalar_lea.vmem %s2, %s61
    %s63 = sadd.s32 0, 0
    %p64 = scmp.lt.s32.totalorder %s63, 0
    %s65 = scalar_select %p64, %s63, 0
    %s66 = smul.u32 16, %s65
    %p67 = scmp.lt.s32.totalorder %s66, 15
    %s68 = scalar_select %p67, %s66, 15
    %s69 = smul.addr %s68, 8
    %s70 = scalar_lea.vmem %s3, %s69
    %s71 = sadd.s32 0, 0
    %p72 = scmp.lt.s32.totalorder %s71, 0
    %s73 = scalar_select %p72, %s71, 0
    %s74 = smul.u32 16, %s73
    %p75 = scmp.lt.s32.totalorder %s74, 15
    %s76 = scalar_select %p75, %s74, 15
    %s77 = smul.addr %s76, 8
    %s78 = scalar_lea.vmem %s2, %s77
    %s79 = sadd.s32 0, 0
    %p80 = scmp.lt.s32.totalorder %s79, 0
    %s81 = scalar_select %p80, %s79, 0
    %s82 = smul.u32 16, %s81
    %s83 = sadd.s32 0, 0
    %p84 = scmp.lt.s32.totalorder %s83, 0
    %s85 = scalar_select %p84, %s83, 0
    %s86 = smul.u32 16, %s85
    %p87 = scmp.lt.s32.totalorder %s86, 15
    %s88 = scalar_select %p87, %s86, 15
    %s89 = smul.addr %s88, 8
    %s90 = scalar_lea.vmem %s3, %s89
    %s91 = sadd.s32 0, 0
    %p92 = scmp.lt.s32.totalorder %s91, 0
    %s93 = scalar_select %p92, %s91, 0
    %s94 = smul.u32 16, %s93
    %p95 = scmp.eq.s32.totalorder 0, 0
    // Predicated region
    $region22: #{loss_fn.5} parent=1 // pred_check
      %p96 = pneg %p95
    $region23: #{loss_fn.5} parent=1 // pred_check_branch
      %98 = sbr.rel (%p96) target = $region25
    $region24: #{loss_fn.5} parent=1 // pred_region
      %99 = vst [vmem:[%s4] sm:$0xff] 0.0
    $region25: #{loss_fn.5} parent=1 // pred_fallthru
      _
    %s100 = sld [smem:[#allocation3]]
    %s101 = sld [smem:[#allocation3 + $0x1]]
    %s102 = sld [smem:[#allocation2]]
    %v103 = vld [vmem:[%s78] sm:$0xff]
    %v104 = vld [vmem:[%s78 + $0x8] sm:$0xff]
    %v105 = vld [vmem:[%s78 + $0x10] sm:$0xff]
    %v106 = vld [vmem:[%s78 + $0x18] sm:$0xff]
    %v107 = vld [vmem:[%s78 + $0x20] sm:$0xff]
    %v108 = vld [vmem:[%s78 + $0x28] sm:$0xff]
    %v109 = vld [vmem:[%s78 + $0x30] sm:$0xff]
    %v110 = vld [vmem:[%s78 + $0x38] sm:$0xff]
    %v111 = vld [vmem:[%s78 + $0x40] sm:$0xff]
    %v112 = vld [vmem:[%s78 + $0x48] sm:$0xff]
    %v113 = vld [vmem:[%s78 + $0x50] sm:$0xff]
    %v114 = vld [vmem:[%s78 + $0x58] sm:$0xff]
    %v115 = vld [vmem:[%s78 + $0x60] sm:$0xff]
    %v116 = vld [vmem:[%s78 + $0x68] sm:$0xff]
    %v117 = vld [vmem:[%s78 + $0x70] sm:$0xff]
    %v118 = vld [vmem:[%s78 + $0x78] sm:$0xff]
    %v119 = vld [vmem:[%s90] sm:$0xff]
    %v120 = vld [vmem:[%s90 + $0x8] sm:$0xff]
    %v121 = vld [vmem:[%s90 + $0x10] sm:$0xff]
    %v122 = vld [vmem:[%s90 + $0x18] sm:$0xff]
    %v123 = vld [vmem:[%s90 + $0x20] sm:$0xff]
    %v124 = vld [vmem:[%s90 + $0x28] sm:$0xff]
    %v125 = vld [vmem:[%s90 + $0x30] sm:$0xff]
    %v126 = vld [vmem:[%s90 + $0x38] sm:$0xff]
    %v127 = vld [vmem:[%s90 + $0x40] sm:$0xff]
    %v128 = vld [vmem:[%s90 + $0x48] sm:$0xff]
    %v129 = vld [vmem:[%s90 + $0x50] sm:$0xff]
    %v130 = vld [vmem:[%s90 + $0x58] sm:$0xff]
    %v131 = vld [vmem:[%s90 + $0x60] sm:$0xff]
    %v132 = vld [vmem:[%s90 + $0x68] sm:$0xff]
    %v133 = vld [vmem:[%s90 + $0x70] sm:$0xff]
    %v134 = vld [vmem:[%s90 + $0x78] sm:$0xff]
    %v135 = vmax.f32 %v119, 1e-07
    %v136 = vmax.f32 %v120, 1e-07
    %v137 = vmax.f32 %v121, 1e-07
    %v138 = vmax.f32 %v122, 1e-07
    %v139 = vmax.f32 %v123, 1e-07
    %v140 = vmax.f32 %v124, 1e-07
    %v141 = vmax.f32 %v125, 1e-07
    %v142 = vmax.f32 %v126, 1e-07
    %v143 = vmax.f32 %v127, 1e-07
    %v144 = vmax.f32 %v128, 1e-07
    %v145 = vmax.f32 %v129, 1e-07
    %v146 = vmax.f32 %v130, 1e-07
    %v147 = vmax.f32 %v131, 1e-07
    %v148 = vmax.f32 %v132, 1e-07
    %v149 = vmax.f32 %v133, 1e-07
    %v150 = vmax.f32 %v134, 1e-07
    %v151 = vmin.f32 %v135, 0.9999999
    %v152 = vmin.f32 %v136, 0.9999999
    %v153 = vmin.f32 %v137, 0.9999999
    %v154 = vmin.f32 %v138, 0.9999999
    %v155 = vmin.f32 %v139, 0.9999999
    %v156 = vmin.f32 %v140, 0.9999999
    %v157 = vmin.f32 %v141, 0.9999999
    %v158 = vmin.f32 %v142, 0.9999999
    %v159 = vmin.f32 %v143, 0.9999999
    %v160 = vmin.f32 %v144, 0.9999999
    %v161 = vmin.f32 %v145, 0.9999999
    %v162 = vmin.f32 %v146, 0.9999999
    %v163 = vmin.f32 %v147, 0.9999999
    %v164 = vmin.f32 %v148, 0.9999999
    %v165 = vmin.f32 %v149, 0.9999999
    %v166 = vmin.f32 %v150, 0.9999999
    %v167 = vstv %s101
    %v168 = vmul.f32 %v167, %v103
    %v169 = vmul.f32 %v167, %v104
    %v170 = vmul.f32 %v167, %v105
    %v171 = vmul.f32 %v167, %v106
    %v172 = vmul.f32 %v167, %v107
    %v173 = vmul.f32 %v167, %v108
    %v174 = vmul.f32 %v167, %v109
    %v175 = vmul.f32 %v167, %v110
    %v176 = vmul.f32 %v167, %v111
    %v177 = vmul.f32 %v167, %v112
    %v178 = vmul.f32 %v167, %v113
    %v179 = vmul.f32 %v167, %v114
    %v180 = vmul.f32 %v167, %v115
    %v181 = vmul.f32 %v167, %v116
    %v182 = vmul.f32 %v167, %v117
    %v183 = vmul.f32 %v167, %v118
    %v184 = vlog2.pop %v151
    %v185 = vmul.f32 %v184, 0.6931472
    %v186 = vlog2.pop %v152
    %v187 = vmul.f32 %v186, 0.6931472
    %v188 = vlog2.pop %v153
    %v189 = vmul.f32 %v188, 0.6931472
    %v190 = vlog2.pop %v154
    %v191 = vmul.f32 %v190, 0.6931472
    %v192 = vlog2.pop %v155
    %v193 = vmul.f32 %v192, 0.6931472
    %v194 = vlog2.pop %v156
    %v195 = vmul.f32 %v194, 0.6931472
    %v196 = vlog2.pop %v157
    %v197 = vmul.f32 %v196, 0.6931472
    %v198 = vlog2.pop %v158
    %v199 = vmul.f32 %v198, 0.6931472
    %v200 = vlog2.pop %v159
    %v201 = vmul.f32 %v200, 0.6931472
    %v202 = vlog2.pop %v160
    %v203 = vmul.f32 %v202, 0.6931472
    %v204 = vlog2.pop %v161
    %v205 = vmul.f32 %v204, 0.6931472
    %v206 = vlog2.pop %v162
    %v207 = vmul.f32 %v206, 0.6931472
    %v208 = vlog2.pop %v163
    %v209 = vmul.f32 %v208, 0.6931472
    %v210 = vlog2.pop %v164
    %v211 = vmul.f32 %v210, 0.6931472
    %v212 = vlog2.pop %v165
    %v213 = vmul.f32 %v212, 0.6931472
    %v214 = vlog2.pop %v166
    %v215 = vmul.f32 %v214, 0.6931472
    %v216 = vmul.f32 %v168, %v185
    %v217 = vmul.f32 %v169, %v187
    %v218 = vmul.f32 %v170, %v189
    %v219 = vmul.f32 %v171, %v191
    %v220 = vmul.f32 %v172, %v193
    %v221 = vmul.f32 %v173, %v195
    %v222 = vmul.f32 %v174, %v197
    %v223 = vmul.f32 %v175, %v199
    %v224 = vmul.f32 %v176, %v201
    %v225 = vmul.f32 %v177, %v203
    %v226 = vmul.f32 %v178, %v205
    %v227 = vmul.f32 %v179, %v207
    %v228 = vmul.f32 %v180, %v209
    %v229 = vmul.f32 %v181, %v211
    %v230 = vmul.f32 %v182, %v213
    %v231 = vmul.f32 %v183, %v215
    %v232 = vsub.f32 1.0, %v103
    %v233 = vsub.f32 1.0, %v104
    %v234 = vsub.f32 1.0, %v105
    %v235 = vsub.f32 1.0, %v106
    %v236 = vsub.f32 1.0, %v107
    %v237 = vsub.f32 1.0, %v108
    %v238 = vsub.f32 1.0, %v109
    %v239 = vsub.f32 1.0, %v110
    %v240 = vsub.f32 1.0, %v111
    %v241 = vsub.f32 1.0, %v112
    %v242 = vsub.f32 1.0, %v113
    %v243 = vsub.f32 1.0, %v114
    %v244 = vsub.f32 1.0, %v115
    %v245 = vsub.f32 1.0, %v116
    %v246 = vsub.f32 1.0, %v117
    %v247 = vsub.f32 1.0, %v118
    %v248 = vstv %s100
    %v249 = vmul.f32 %v248, %v232
    %v250 = vmul.f32 %v248, %v233
    %v251 = vmul.f32 %v248, %v234
    %v252 = vmul.f32 %v248, %v235
    %v253 = vmul.f32 %v248, %v236
    %v254 = vmul.f32 %v248, %v237
    %v255 = vmul.f32 %v248, %v238
    %v256 = vmul.f32 %v248, %v239
    %v257 = vmul.f32 %v248, %v240
    %v258 = vmul.f32 %v248, %v241
    %v259 = vmul.f32 %v248, %v242
    %v260 = vmul.f32 %v248, %v243
    %v261 = vmul.f32 %v248, %v244
    %v262 = vmul.f32 %v248, %v245
    %v263 = vmul.f32 %v248, %v246
    %v264 = vmul.f32 %v248, %v247
    %v265 = vsub.f32 1.0, %v151
    %v266 = vsub.f32 1.0, %v152
    %v267 = vsub.f32 1.0, %v153
    %v268 = vsub.f32 1.0, %v154
    %v269 = vsub.f32 1.0, %v155
    %v270 = vsub.f32 1.0, %v156
    %v271 = vsub.f32 1.0, %v157
    %v272 = vsub.f32 1.0, %v158
    %v273 = vsub.f32 1.0, %v159
    %v274 = vsub.f32 1.0, %v160
    %v275 = vsub.f32 1.0, %v161
    %v276 = vsub.f32 1.0, %v162
    %v277 = vsub.f32 1.0, %v163
    %v278 = vsub.f32 1.0, %v164
    %v279 = vsub.f32 1.0, %v165
    %v280 = vsub.f32 1.0, %v166
    %v281 = vlog2.pop %v265
    %v282 = vmul.f32 %v281, 0.6931472
    %v283 = vlog2.pop %v266
    %v284 = vmul.f32 %v283, 0.6931472
    %v285 = vlog2.pop %v267
    %v286 = vmul.f32 %v285, 0.6931472
    %v287 = vlog2.pop %v268
    %v288 = vmul.f32 %v287, 0.6931472
    %v289 = vlog2.pop %v269
    %v290 = vmul.f32 %v289, 0.6931472
    %v291 = vlog2.pop %v270
    %v292 = vmul.f32 %v291, 0.6931472
    %v293 = vlog2.pop %v271
    %v294 = vmul.f32 %v293, 0.6931472
    %v295 = vlog2.pop %v272
    %v296 = vmul.f32 %v295, 0.6931472
    %v297 = vlog2.pop %v273
    %v298 = vmul.f32 %v297, 0.6931472
    %v299 = vlog2.pop %v274
    %v300 = vmul.f32 %v299, 0.6931472
    %v301 = vlog2.pop %v275
    %v302 = vmul.f32 %v301, 0.6931472
    %v303 = vlog2.pop %v276
    %v304 = vmul.f32 %v303, 0.6931472
    %v305 = vlog2.pop %v277
    %v306 = vmul.f32 %v305, 0.6931472
    %v307 = vlog2.pop %v278
    %v308 = vmul.f32 %v307, 0.6931472
    %v309 = vlog2.pop %v279
    %v310 = vmul.f32 %v309, 0.6931472
    %v311 = vlog2.pop %v280
    %v312 = vmul.f32 %v311, 0.6931472
    %v313 = vmul.f32 %v249, %v282
    %v314 = vmul.f32 %v250, %v284
    %v315 = vmul.f32 %v251, %v286
    %v316 = vmul.f32 %v252, %v288
    %v317 = vmul.f32 %v253, %v290
    %v318 = vmul.f32 %v254, %v292
    %v319 = vmul.f32 %v255, %v294
    %v320 = vmul.f32 %v256, %v296
    %v321 = vmul.f32 %v257, %v298
    %v322 = vmul.f32 %v258, %v300
    %v323 = vmul.f32 %v259, %v302
    %v324 = vmul.f32 %v260, %v304
    %v325 = vmul.f32 %v261, %v306
    %v326 = vmul.f32 %v262, %v308
    %v327 = vmul.f32 %v263, %v310
    %v328 = vmul.f32 %v264, %v312
    %v329 = vadd.f32 %v216, %v313
    %v330 = vadd.f32 %v217, %v314
    %v331 = vadd.f32 %v218, %v315
    %v332 = vadd.f32 %v219, %v316
    %v333 = vadd.f32 %v220, %v317
    %v334 = vadd.f32 %v221, %v318
    %v335 = vadd.f32 %v222, %v319
    %v336 = vadd.f32 %v223, %v320
    %v337 = vadd.f32 %v224, %v321
    %v338 = vadd.f32 %v225, %v322
    %v339 = vadd.f32 %v226, %v323
    %v340 = vadd.f32 %v227, %v324
    %v341 = vadd.f32 %v228, %v325
    %v342 = vadd.f32 %v229, %v326
    %v343 = vadd.f32 %v230, %v327
    %v344 = vadd.f32 %v231, %v328
    %v345 = vsub.f32 0.0, %v329
    %v346 = vsub.f32 0.0, %v330
    %v347 = vsub.f32 0.0, %v331
    %v348 = vsub.f32 0.0, %v332
    %v349 = vsub.f32 0.0, %v333
    %v350 = vsub.f32 0.0, %v334
    %v351 = vsub.f32 0.0, %v335
    %v352 = vsub.f32 0.0, %v336
    %v353 = vsub.f32 0.0, %v337
    %v354 = vsub.f32 0.0, %v338
    %v355 = vsub.f32 0.0, %v339
    %v356 = vsub.f32 0.0, %v340
    %v357 = vsub.f32 0.0, %v341
    %v358 = vsub.f32 0.0, %v342
    %v359 = vsub.f32 0.0, %v343
    %v360 = vsub.f32 0.0, %v344
    %s361 = sadd.s32 0, 0
    %s362 = smul.u32 %s361, 128
    %s363 = sadd.s32 %s362, 128
    %s364 = smul.u32 %s363, 128
    %p365 = scmp.le.s32.totalorder %s364, %s102
    // Predicated region
    $region26: #{loss_fn.5} parent=1 // pred_check
      %p366 = pneg %p365
    $region27: #{loss_fn.5} parent=1 // pred_check_branch
      %368 = sbr.rel (%p366) target = $region29
    $region28: #{loss_fn.5} parent=1 // pred_region
      %v369 = vld [vmem:[%s4] sm:$0xff]
      %v370 = vadd.f32 %v345, %v346
      %v371 = vadd.f32 %v370, %v347
      %v372 = vadd.f32 %v371, %v348
      %v373 = vadd.f32 %v372, %v349
      %v374 = vadd.f32 %v373, %v350
      %v375 = vadd.f32 %v374, %v351
      %v376 = vadd.f32 %v375, %v352
      %v377 = vadd.f32 %v376, %v353
      %v378 = vadd.f32 %v377, %v354
      %v379 = vadd.f32 %v378, %v355
      %v380 = vadd.f32 %v379, %v356
      %v381 = vadd.f32 %v380, %v357
      %v382 = vadd.f32 %v381, %v358
      %v383 = vadd.f32 %v382, %v359
      %v384 = vadd.f32 %v383, %v360
      %v385 = vadd.f32 %v369, %v384
      %386 = vst [vmem:[%s4] sm:$0xff] %v385
    $region29: #{loss_fn.5} parent=1 // pred_fallthru
      _
    %p387 = scmp.gt.s32.totalorder %s364, %s102
    // Predicated region
    $region30: #{loss_fn.5} parent=1 // pred_check
      %p388 = pneg %p387
    $region31: #{loss_fn.5} parent=1 // pred_check_branch
      %390 = sbr.rel (%p388) target = $region33
    $region32: #{loss_fn.5} parent=1 // pred_region
      %v391 = vlaneseq
      %v392 = vshrl.u32 %v391, 7
      %v393 = vadd.s32 %v392, 8
      %v394 = vadd.s32 %v392, 16
      %v395 = vadd.s32 %v392, 24
      %v396 = vadd.s32 %v392, 32
      %v397 = vadd.s32 %v392, 40
      %v398 = vadd.s32 %v392, 48
      %v399 = vadd.s32 %v392, 56
      %v400 = vadd.s32 %v392, 64
      %v401 = vadd.s32 %v392, 72
      %v402 = vadd.s32 %v392, 80
      %v403 = vadd.s32 %v392, 88
      %v404 = vadd.s32 %v392, 96
      %v405 = vadd.s32 %v392, 104
      %v406 = vadd.s32 %v392, 112
      %v407 = vadd.s32 %v392, 120
      %v408 = vstv %s362
      %v409 = vadd.s32 %v392, %v408
      %v410 = vadd.s32 %v393, %v408
      %v411 = vadd.s32 %v394, %v408
      %v412 = vadd.s32 %v395, %v408
      %v413 = vadd.s32 %v396, %v408
      %v414 = vadd.s32 %v397, %v408
      %v415 = vadd.s32 %v398, %v408
      %v416 = vadd.s32 %v399, %v408
      %v417 = vadd.s32 %v400, %v408
      %v418 = vadd.s32 %v401, %v408
      %v419 = vadd.s32 %v402, %v408
      %v420 = vadd.s32 %v403, %v408
      %v421 = vadd.s32 %v404, %v408
      %v422 = vadd.s32 %v405, %v408
      %v423 = vadd.s32 %v406, %v408
      %v424 = vadd.s32 %v407, %v408
      %v425 = vlaneseq
      %v426 = vand.u32 %v425, 127
      %v427 = vmul.u32 %v409, 128
      %v428 = vmul.u32 %v410, 128
      %v429 = vmul.u32 %v411, 128
      %v430 = vmul.u32 %v412, 128
      %v431 = vmul.u32 %v413, 128
      %v432 = vmul.u32 %v414, 128
      %v433 = vmul.u32 %v415, 128
      %v434 = vmul.u32 %v416, 128
      %v435 = vmul.u32 %v417, 128
      %v436 = vmul.u32 %v418, 128
      %v437 = vmul.u32 %v419, 128
      %v438 = vmul.u32 %v420, 128
      %v439 = vmul.u32 %v421, 128
      %v440 = vmul.u32 %v422, 128
      %v441 = vmul.u32 %v423, 128
      %v442 = vmul.u32 %v424, 128
      %v443 = vadd.s32 %v427, %v426
      %v444 = vadd.s32 %v428, %v426
      %v445 = vadd.s32 %v429, %v426
      %v446 = vadd.s32 %v430, %v426
      %v447 = vadd.s32 %v431, %v426
      %v448 = vadd.s32 %v432, %v426
      %v449 = vadd.s32 %v433, %v426
      %v450 = vadd.s32 %v434, %v426
      %v451 = vadd.s32 %v435, %v426
      %v452 = vadd.s32 %v436, %v426
      %v453 = vadd.s32 %v437, %v426
      %v454 = vadd.s32 %v438, %v426
      %v455 = vadd.s32 %v439, %v426
      %v456 = vadd.s32 %v440, %v426
      %v457 = vadd.s32 %v441, %v426
      %v458 = vadd.s32 %v442, %v426
      %v459 = vstv %s102
      %vm460 = vcmp.lt.s32.totalorder %v443, %v459
      %vm461 = vcmp.lt.s32.totalorder %v444, %v459
      %vm462 = vcmp.lt.s32.totalorder %v445, %v459
      %vm463 = vcmp.lt.s32.totalorder %v446, %v459
      %vm464 = vcmp.lt.s32.totalorder %v447, %v459
      %vm465 = vcmp.lt.s32.totalorder %v448, %v459
      %vm466 = vcmp.lt.s32.totalorder %v449, %v459
      %vm467 = vcmp.lt.s32.totalorder %v450, %v459
      %vm468 = vcmp.lt.s32.totalorder %v451, %v459
      %vm469 = vcmp.lt.s32.totalorder %v452, %v459
      %vm470 = vcmp.lt.s32.totalorder %v453, %v459
      %vm471 = vcmp.lt.s32.totalorder %v454, %v459
      %vm472 = vcmp.lt.s32.totalorder %v455, %v459
      %vm473 = vcmp.lt.s32.totalorder %v456, %v459
      %vm474 = vcmp.lt.s32.totalorder %v457, %v459
      %vm475 = vcmp.lt.s32.totalorder %v458, %v459
      %v476 = vsel %vm460, %v345, 0.0
      %v477 = vsel %vm461, %v346, 0.0
      %v478 = vsel %vm462, %v347, 0.0
      %v479 = vsel %vm463, %v348, 0.0
      %v480 = vsel %vm464, %v349, 0.0
      %v481 = vsel %vm465, %v350, 0.0
      %v482 = vsel %vm466, %v351, 0.0
      %v483 = vsel %vm467, %v352, 0.0
      %v484 = vsel %vm468, %v353, 0.0
      %v485 = vsel %vm469, %v354, 0.0
      %v486 = vsel %vm470, %v355, 0.0
      %v487 = vsel %vm471, %v356, 0.0
      %v488 = vsel %vm472, %v357, 0.0
      %v489 = vsel %vm473, %v358, 0.0
      %v490 = vsel %vm474, %v359, 0.0
      %v491 = vsel %vm475, %v360, 0.0
      %v492 = vld [vmem:[%s4] sm:$0xff]
      %v493 = vadd.f32 %v476, %v477
      %v494 = vadd.f32 %v493, %v478
      %v495 = vadd.f32 %v494, %v479
      %v496 = vadd.f32 %v495, %v480
      %v497 = vadd.f32 %v496, %v481
      %v498 = vadd.f32 %v497, %v482
      %v499 = vadd.f32 %v498, %v483
      %v500 = vadd.f32 %v499, %v484
      %v501 = vadd.f32 %v500, %v485
      %v502 = vadd.f32 %v501, %v486
      %v503 = vadd.f32 %v502, %v487
      %v504 = vadd.f32 %v503, %v488
      %v505 = vadd.f32 %v504, %v489
      %v506 = vadd.f32 %v505, %v490
      %v507 = vadd.f32 %v506, %v491
      %v508 = vadd.f32 %v492, %v507
      %509 = vst [vmem:[%s4] sm:$0xff] %v508
    $region33: #{loss_fn.5} parent=1 // pred_fallthru
      _
    // Predicated region
    $region34: #{loss_fn.5} parent=1 // pred_check
      _
    $region35: #{loss_fn.5} parent=1 // pred_check_branch
      %511 = sbr.rel (0) target = $region37
    $region36: #{loss_fn.5} parent=1 // pred_region
      _
    $region37: #{loss_fn.5} parent=1 // pred_fallthru
      _
    // Predicated region
    $region38: #{loss_fn.5} parent=1 // pred_check
      _
    $region39: #{loss_fn.5} parent=1 // pred_check_branch
      %513 = sbr.rel (0) target = $region41
    $region40: #{loss_fn.5} parent=1 // pred_region
      _
    $region41: #{loss_fn.5} parent=1 // pred_fallthru
      _
    %514 = vsyncpa [#allocation4], 1

</llo_original>
